<compile_context>
chip_gen: v6e
topology: v6e:2x2x1
jax: 0.10.0
libtpu: 0.0.40
codegen_flags: <defaults>
</compile_context>

<pallas_src>
import functools
import math

import jax
import jax.numpy as jnp
from jax.experimental import pallas as pl
from jax.experimental.pallas import tpu as pltpu


# ----------------------------------------------------------------------------- utils
def _round_up(x, m):
    return ((x + m - 1) // m) * m


_SQRT_HALF = 1.0 / math.sqrt(2.0)


def _erf_approx(z):
    # TODO(synk): exact lax.erf lowering in Mosaic is not guaranteed; use the A&S 7.1.26
    # rational approximation (|err| <= 1.5e-7, below f32 noise) built only from
    # exp / div / select which always lower on TPU.
    za = jnp.where(z >= 0.0, z, -z)
    t = 1.0 / (1.0 + 0.3275911 * za)
    poly = t * (0.254829592 + t * (-0.284496736 + t * (1.421413741
               + t * (-1.453152027 + t * 1.061405429))))
    e = 1.0 - poly * jnp.exp(-za * za)
    return jnp.where(z >= 0.0, e, -e)


def _gelu(x):
    # nn.GELU() default is the exact (erf) variant.
    return 0.5 * x * (1.0 + _erf_approx(x * _SQRT_HALF))


# ----------------------------------------------------------------------------- Pallas kernels
def _single_block_call(kernel, out_struct, *inputs):
    """One grid step, block_shape == full array shape => no padding, no masked ragged blocks."""
    in_specs = [pl.BlockSpec(x.shape, lambda i, n=x.ndim: (0,) * n) for x in inputs]
    out_specs = pl.BlockSpec(out_struct.shape, lambda i, n=len(out_struct.shape): (0,) * n)
    return pl.pallas_call(
        kernel, out_shape=out_struct, grid=(1,), in_specs=in_specs, out_specs=out_specs
    )(*inputs)


def _make_fused_mm_kernel(has_bias, has_ln, act, has_residual):
    """matmul with fused epilogue: bias -> LayerNorm -> activation -> residual add."""

    def kernel(*refs):
        it = iter(refs)
        a = next(it)[...]
        w = next(it)[...]
        y = jnp.dot(a, w, preferred_element_type=jnp.float32)
        if has_bias:
            y = y + next(it)[...]
        if has_ln:
            g = next(it)[...]
            b = next(it)[...]
            mean = jnp.mean(y, axis=-1, keepdims=True)
            yc = y - mean
            var = jnp.mean(yc * yc, axis=-1, keepdims=True)
            y = yc * jax.lax.rsqrt(var + 1e-5) * g + b
        if act == "gelu":
            y = _gelu(y)
        elif act == "softmax":
            m = jnp.max(y, axis=-1, keepdims=True)
            e = jnp.exp(y - m)
            y = e * pl.reciprocal(jnp.sum(e, axis=-1, keepdims=True), approx=True)
        elif act == "sigmoid":
            y = 1.0 / (1.0 + jnp.exp(-y))
        if has_residual:
            y = y + next(it)[...]
        o_ref = next(it)
        o_ref[...] = y

    return kernel


def fused_matmul(a, w, bias=None, ln=None, act=None, residual=None):
    """(M,K)@(K,N) with fused bias/LayerNorm/activation/residual epilogue."""
    M, K = a.shape
    N = w.shape[1]
    kernel = _make_fused_mm_kernel(bias is not None, ln is not None, act, residual is not None)

    inputs = [a, w]
    rowwise = [True, False]
    if bias is not None:
        inputs.append(bias.reshape(1, N)); rowwise.append(False)
    if ln is not None:
        inputs += [ln["g"].reshape(1, N), ln["b"].reshape(1, N)]; rowwise += [False, False]
    if residual is not None:
        inputs.append(residual); rowwise.append(True)

    out_struct = jax.ShapeDtypeStruct((M, N), jnp.float32)
    if M <= 512:
        # single full-array block: no pad / slice HBM copies around the kernel.
        return _single_block_call(kernel, out_struct, *inputs)

    # Row-tiled fallback for large M (row axis parallel across TensorCores on v7x).
    # TODO(synk): add K/N tiling with a VMEM accumulator for realistic channel counts.
    bm = 256
    Mp = _round_up(M, bm)
    padded = [jnp.pad(x, ((0, Mp - M), (0, 0))) if rw else x for x, rw in zip(inputs, rowwise)]
    in_specs = []
    for x, rw in zip(padded, rowwise):
        if rw:
            in_specs.append(pl.BlockSpec((bm, x.shape[1]), lambda i: (i, 0)))
        else:
            in_specs.append(pl.BlockSpec(x.shape, lambda i, n=x.ndim: (0,) * n))
    out = pl.pallas_call(
        kernel,
        out_shape=jax.ShapeDtypeStruct((Mp, N), jnp.float32),
        grid=(Mp // bm,),
        in_specs=in_specs,
        out_specs=pl.BlockSpec((bm, N), lambda i: (i, 0)),
        compiler_params=pltpu.CompilerParams(dimension_semantics=("parallel",)),
    )(*padded)
    return out[:M]


def _ln_kernel(x_ref, g_ref, b_ref, o_ref):
    x = x_ref[...]
    mean = jnp.mean(x, axis=-1, keepdims=True)
    xc = x - mean
    var = jnp.mean(xc * xc, axis=-1, keepdims=True)
    o_ref[...] = xc * jax.lax.rsqrt(var + 1e-5) * g_ref[...] + b_ref[...]


def pallas_layernorm(x2d, gamma, beta):
    M, C = x2d.shape
    return _single_block_call(_ln_kernel, jax.ShapeDtypeStruct((M, C), jnp.float32),
                              x2d, gamma.reshape(1, C), beta.reshape(1, C))


def _attn_ln_kernel(a_ref, x_ref, g_ref, b_ref, o_ref):
    # fused: t = attn * x + x ; LayerNorm(t)
    t = (a_ref[...] + 1.0) * x_ref[...]
    mean = jnp.mean(t, axis=-1, keepdims=True)
    tc = t - mean
    var = jnp.mean(tc * tc, axis=-1, keepdims=True)
    o_ref[...] = tc * jax.lax.rsqrt(var + 1e-5) * g_ref[...] + b_ref[...]


def pallas_attn_layernorm(attn2d, x2d, gamma, beta):
    M, C = x2d.shape
    return _single_block_call(_attn_ln_kernel, jax.ShapeDtypeStruct((M, C), jnp.float32),
                              attn2d, x2d, gamma.reshape(1, C), beta.reshape(1, C))


def _bmm_kernel(a_ref, b_ref, o_ref):
    o_ref[...] = jnp.dot(a_ref[...], b_ref[...], preferred_element_type=jnp.float32)


def pallas_bmm(a, b):
    """Batched (B,M,K)@(B,K,N): one pallas_call, grid over B with squeezed leading dim."""
    B, M, K = a.shape
    N = b.shape[2]
    return pl.pallas_call(
        _bmm_kernel,
        out_shape=jax.ShapeDtypeStruct((B, M, N), jnp.float32),
        grid=(B,),
        in_specs=[pl.BlockSpec((None, M, K), lambda i: (i, 0, 0)),
                  pl.BlockSpec((None, K, N), lambda i: (i, 0, 0))],
        out_specs=pl.BlockSpec((None, M, N), lambda i: (i, 0, 0)),
        compiler_params=pltpu.CompilerParams(dimension_semantics=("parallel",)),
    )(a, b)


# ----------------------------------------------------------------------------- JAX glue ops
def im2col(x, kh, kw, stride, pad, dilation):
    B, H, W, C = x.shape
    xp = jnp.pad(x, ((0, 0), (pad, pad), (pad, pad), (0, 0)))
    Hp, Wp = H + 2 * pad, W + 2 * pad
    Ho = (Hp - (dilation * (kh - 1) + 1)) // stride + 1
    Wo = (Wp - (dilation * (kw - 1) + 1)) // stride + 1
    cols = []
    for i in range(kh):
        for j in range(kw):
            patch = xp[:,
                       i * dilation: i * dilation + (Ho - 1) * stride + 1: stride,
                       j * dilation: j * dilation + (Wo - 1) * stride + 1: stride, :]
            cols.append(patch)
    return jnp.concatenate(cols, axis=-1), Ho, Wo


def conv2d_fused(x_nhwc, conv_p, stride=1, pad=0, dilation=1, ln=None, act=None, residual=None):
    """conv (via im2col + one fused Pallas matmul) with fused bias/LN/activation/residual."""
    w = conv_p["w"]
    b = conv_p.get("b", None)
    Cout, Cin, kh, kw = w.shape
    cols, Ho, Wo = im2col(x_nhwc, kh, kw, stride, pad, dilation)
    B = x_nhwc.shape[0]
    w2d = jnp.transpose(w, (2, 3, 1, 0)).reshape(kh * kw * Cin, Cout)
    res2d = residual.reshape(-1, Cout) if residual is not None else None
    out = fused_matmul(cols.reshape(-1, kh * kw * Cin), w2d,
                       bias=b, ln=ln, act=act, residual=res2d)
    return out.reshape(B, Ho, Wo, Cout)


def conv_ln_fused(x, p, stride=1, pad=1, dilation=1, act=None, residual=None):
    pad_eff = dilation if dilation > 1 else pad
    return conv2d_fused(x, p["conv"], stride, pad_eff, dilation,
                        ln=p["ln"], act=act, residual=residual)


def basic_block(x, p):
    out = conv_ln_fused(x, p["c1"], act="gelu")
    out = conv_ln_fused(out, p["c2"], act=None, residual=x)   # residual add fused in epilogue
    return out


def avg_pool(x, k):
    if k == 1:
        return x
    B, H, W, C = x.shape
    Ho, Wo = H // k, W // k
    xr = x[:, :Ho * k, :Wo * k, :].reshape(B, Ho, k, Wo, k, C)
    return xr.mean(axis=(2, 4))


def interp_bilinear_ac(x, out_h, out_w):
    """F.interpolate(mode='bilinear', align_corners=True) on NHWC."""
    B, H, W, C = x.shape

    def axis(out_s, in_s):
        if out_s == 1:
            src = jnp.zeros((1,), jnp.float32)
        else:
            src = jnp.arange(out_s, dtype=jnp.float32) * (float(in_s - 1) / float(out_s - 1))
        i0 = jnp.clip(jnp.floor(src).astype(jnp.int32), 0, in_s - 1)
        i1 = jnp.clip(i0 + 1, 0, in_s - 1)
        w1 = src - i0.astype(jnp.float32)
        return i0, i1, 1.0 - w1, w1

    y0, y1, wy0, wy1 = axis(out_h, H)
    x0, x1, wx0, wx1 = axis(out_w, W)

    def g(iy, ix):
        return x[:, iy][:, :, ix]

    def wmat(wy, wx):
        return (wy[:, None] * wx[None, :])[None, :, :, None]

    return (g(y0, x0) * wmat(wy0, wx0) + g(y0, x1) * wmat(wy0, wx1)
            + g(y1, x0) * wmat(wy1, wx0) + g(y1, x1) * wmat(wy1, wx1))


def grid_sample_bilinear(x_nchw, grid):
    """F.grid_sample(mode='bilinear', padding_mode='zeros', align_corners=False)."""
    B, C, H, W = x_nchw.shape
    Hg, Wg = grid.shape[1], grid.shape[2]
    gx, gy = grid[..., 0], grid[..., 1]
    ix = ((gx + 1.0) * W - 1.0) * 0.5
    iy = ((gy + 1.0) * H - 1.0) * 0.5
    ix0, iy0 = jnp.floor(ix), jnp.floor(iy)
    ix1, iy1 = ix0 + 1.0, iy0 + 1.0
    wx1, wy1 = ix - ix0, iy - iy0
    wx0, wy0 = 1.0 - wx1, 1.0 - wy1
    xf = x_nchw.reshape(B, C, H * W)
    K = Hg * Wg

    def gather(iyf, ixf):
        valid = ((ixf >= 0) & (ixf <= W - 1) & (iyf >= 0) & (iyf <= H - 1)).astype(x_nchw.dtype)
        ixc = jnp.clip(ixf, 0, W - 1).astype(jnp.int32)
        iyc = jnp.clip(iyf, 0, H - 1).astype(jnp.int32)
        idx = jnp.broadcast_to((iyc * W + ixc).reshape(B, 1, K), (B, C, K))
        v = jnp.take_along_axis(xf, idx, axis=2).reshape(B, C, Hg, Wg)
        return v * valid.reshape(B, 1, Hg, Wg)

    def wb(w):
        return w.reshape(B, 1, Hg, Wg)

    return (gather(iy0, ix0) * wb(wy0 * wx0) + gather(iy0, ix1) * wb(wy0 * wx1)
            + gather(iy1, ix0) * wb(wy1 * wx0) + gather(iy1, ix1) * wb(wy1 * wx1))


# ----------------------------------------------------------------------------- device convex hull
def convex_hull_areas(pts):
    """Exact convex-hull area of 2-D point sets pts[..., P, 2] (general position).

    TODO(synk): replaces scipy.spatial.ConvexHull (host-only in the reference). Uses the
    O(P^3) edge test: (i->j) is a CCW hull edge iff every k lies left of it; summing the
    shoelace terms over those edges gives 2*area. Fully vectorised, stays on device.
    """
    x = pts[..., 0]
    y = pts[..., 1]
    xi, yi = x[..., :, None], y[..., :, None]            # (..., P, 1)
    xj, yj = x[..., None, :], y[..., None, :]            # (..., 1, P)
    dxij = (xj - xi)[..., :, :, None]                    # (..., P, P, 1)
    dyij = (yj - yi)[..., :, :, None]
    dxik = x[..., None, None, :] - x[..., :, None, None]  # (..., P, 1, P)
    dyik = y[..., None, None, :] - y[..., :, None, None]
    cross = dxij * dyik - dyij * dxik                    # (..., P, P, P)
    is_edge = jnp.all(cross >= -1e-7, axis=-1)           # (..., P, P)
    shoelace = xi * yj - yi * xj                         # (..., P, P)
    return 0.5 * jnp.abs(jnp.sum(jnp.where(is_edge, shoelace, 0.0), axis=(-2, -1)))


# ----------------------------------------------------------------------------- PyramidLayer
def pyramid_forward(p, x_nhwc, pool_sizes):
    x = conv_ln_fused(x_nhwc, p["fc1"], act="gelu")
    x = conv_ln_fused(x, p["fc2"], act="gelu")
    for blk in p["layer1"]:
        x = basic_block(x, blk)
    for blk in p["layer2"]:
        x = basic_block(x, blk)
    for blk in p["layer3"]:
        x = basic_block(x, blk)
    # (layer4 exists in __init__ but is never used in forward, as in the reference)
    H, W = x.shape[1], x.shape[2]
    bottom = int(math.ceil(pool_sizes[0] - H)) if H - pool_sizes[0] < 0 else 0
    right = int(math.ceil(pool_sizes[0] - W)) if W - pool_sizes[0] < 0 else 0
    if bottom > 0 or right > 0:
        x = jnp.pad(x, ((0, 0), (0, bottom), (0, right), (0, 0)))
    H, W = x.shape[1], x.shape[2]
    outs = [x]
    for bi in range(4):
        xi = avg_pool(x, pool_sizes[bi])
        xi = conv_ln_fused(xi, p["branches"][bi], act="gelu")
        xi = interp_bilinear_ac(xi, H, W)
        outs.append(xi)
    xx = jnp.concatenate(outs, axis=-1)
    y = conv_ln_fused(xx, p["last1"], act="gelu")
    # final 1x1 conv; the downstream F.sigmoid is elementwise and commutes with the
    # flatten/permute that follows, so it is fused into this conv's epilogue.
    y = conv2d_fused(y, p["last2"], 1, 0, 1, act="sigmoid")
    return y


# ----------------------------------------------------------------------------- parameters
class _Rng:
    def __init__(self, key):
        self._key = key

    def next(self):
        self._key, k = jax.random.split(self._key)
        return k

    def n(self, shape, scale):
        return scale * jax.random.normal(self.next(), shape, jnp.float32)


def init_params(key, x_dim, class_dim, num_ref_points):
    rng = _Rng(key)

    def conv(cout, cin, k, bias=True):
        p = {"w": rng.n((cout, cin, k, k), 1.0 / math.sqrt(cin * k * k))}
        p["b"] = rng.n((cout,), 0.02) if bias else None
        return p

    def ln(c):
        return {"g": jnp.ones((c,), jnp.float32), "b": jnp.zeros((c,), jnp.float32)}

    def lin(cin, cout):
        return {"w": rng.n((cin, cout), 0.02), "b": jnp.zeros((cout,), jnp.float32)}

    def convln(cout, cin, k=3):
        return {"conv": conv(cout, cin, k, bias=False), "ln": ln(cout)}

    def block(c):
        return {"c1": convln(c, c), "c2": convln(c, c)}

    cd = class_dim
    P = num_ref_points
    bd = 2 * P  # pyramid branch_dim
    return {
        # TODO(synk): `Olp` is not defined in the reference file; assumed to be nn.Linear(class_dim, class_dim).
        "ch_fc": lin(cd, cd),
        "backbone_norm": ln(x_dim),
        "bfc1": conv(x_dim // 2, x_dim, 3),
        "bfc2": conv(cd, x_dim // 2, 1),
        "global_norm": ln(cd),
        "go": [conv(cd // 2, cd, 1), conv(cd // 2, cd // 2, 3), conv(cd // 2, cd // 2, 3),
               conv(cd // 2, cd // 2, 3), conv(cd // 2, cd // 2, 3), conv(cd // 4, cd // 2, 1),
               conv(cd // 4, cd // 4, 1)],
        "refer_proj": lin(x_dim, cd // 4),
        "pyramid": {
            "fc1": convln(P, P),
            "fc2": convln(bd, P),
            "layer1": [block(bd)],
            "layer2": [block(bd), block(bd)],
            "layer3": [block(bd), block(bd)],
            "branches": [convln(bd, bd) for _ in range(4)],
            "last1": convln(2 * bd, 5 * bd),
            "last2": conv(P, 2 * bd, 1, bias=False),
        },
    }


# ----------------------------------------------------------------------------- forward (fully on device)
@functools.partial(jax.jit, static_argnames=("size", "pool_sizes", "with_pos"))
def offset_generation_forward(params, x, depth_token, refer_coords, token_pos,
                              size, pool_sizes, with_pos=True):
    H, W = size
    B, N, C = x.shape
    cd = params["ch_fc"]["w"].shape[1]

    # channel attention: Linear + bias + softmax fused into one Pallas call
    ca = fused_matmul(depth_token.reshape(-1, cd), params["ch_fc"]["w"],
                      bias=params["ch_fc"]["b"], act="softmax")
    ch_attn = ca.reshape(B, H, W, -1)                                   # NHWC

    # backbone norm + spatial reshape
    xn = pallas_layernorm(x.reshape(-1, C),
                          params["backbone_norm"]["g"], params["backbone_norm"]["b"])
    x_spatial = xn.reshape(B, H, W, C)                                  # NHWC

    # backbone_fc: conv+bias+GELU fused
    t = conv2d_fused(x_spatial, params["bfc1"], 1, 1, 1, act="gelu")
    x_off = conv2d_fused(t, params["bfc2"], 1, 0, 1, act="gelu")

    # (ch_attn * x + x) + global_norm LayerNorm fused into one kernel
    x_off = pallas_attn_layernorm(ch_attn.reshape(-1, cd), x_off.reshape(-1, cd),
                                  params["global_norm"]["g"],
                                  params["global_norm"]["b"]).reshape(B, H, W, cd)

    # global_offset conv stack (bias / GELU fused per conv)
    go = params["go"]
    g = conv2d_fused(x_off, go[0], 1, 0, 1, act="gelu")
    g = conv2d_fused(g, go[1], 1, 1, 1)
    g = conv2d_fused(g, go[2], 1, 6, 6)
    g = conv2d_fused(g, go[3], 1, 16, 16)
    g = conv2d_fused(g, go[4], 1, 1, 1)
    g = conv2d_fused(g, go[5], 1, 0, 1, act="gelu")
    g = conv2d_fused(g, go[6], 1, 0, 1)                                 # (B,H,W,cd//4)

    # reference-point sampling
    x_nchw = jnp.transpose(x_spatial, (0, 3, 1, 2))
    refer_x = grid_sample_bilinear(x_nchw, refer_coords)                # (B,C,ln,2)
    if with_pos:
        refer_x = refer_x + grid_sample_bilinear(token_pos, refer_coords)
    refer_x = jnp.transpose(refer_x.reshape(B, C, -1), (0, 2, 1))       # (B,P,C)
    P = refer_x.shape[1]
    refer_x = fused_matmul(refer_x.reshape(-1, C), params["refer_proj"]["w"],
                           bias=params["refer_proj"]["b"]).reshape(B, P, -1)

    # refer_x @ global_offset: one batched Pallas call (no per-B Python loop)
    g_flat = jnp.transpose(g, (0, 3, 1, 2)).reshape(B, -1, H * W)       # (B,cd//4,H*W)
    ref_g = pallas_bmm(refer_x, g_flat).reshape(B, P, H, W)             # NCHW

    # pyramid (sigmoid fused into its final 1x1 conv)
    sig = pyramid_forward(params["pyramid"], jnp.transpose(ref_g, (0, 2, 3, 1)), pool_sizes)
    # ref_g_c.flatten(3).permute(0,3,1,2) on NCHW  ->  (B, Wp, P, Hp)
    g_coords = jnp.transpose(sig, (0, 2, 3, 1))

    # convex-hull-area selection, entirely on device (was host scipy + Python loops)
    areas = convex_hull_areas(g_coords)                                 # (B, Wp)
    max_area_id = jnp.argmax(areas, axis=-1)                            # (B,)
    choosen = g_coords[:, max_area_id]                                  # (B,B,P,Hp) adv. indexing
    if choosen.shape[1] == 1:
        choosen = choosen[:, 0]                                         # torch .squeeze(1)
    choosen = choosen.reshape(B, -1, 2, 2) * 2.0 - 1.0
    all_coords = jnp.concatenate([refer_coords, choosen], axis=1)
    return all_coords


# ----------------------------------------------------------------------------- main
if __name__ == "__main__":
    B = 2
    x_dim = 8               # token feature dim C
    class_dim = 8           # args.class_token_dim
    num_ref_points = 6
    line_num = 3            # refer_coords lines, 2 points each -> 6 = num_ref_points
    H, W = 2, 8             # size; H=2 so the hull points are 2-D, matching the reference
    pool_sizes = (2, 2, 1, 1)
    N = H * W

    key = jax.random.PRNGKey(0)
    kp, kx, kd, kr, kt = jax.random.split(key, 5)
    params = init_params(kp, x_dim, class_dim, num_ref_points)

    x = jax.random.normal(kx, (B, N, x_dim), jnp.float32)
    depth_token = jax.random.normal(kd, (B, N, class_dim), jnp.float32)
    refer_coords = jax.random.uniform(kr, (B, line_num, 2, 2), jnp.float32, -1.0, 1.0)
    token_pos = jax.random.normal(kt, (B, x_dim, H, W), jnp.float32)

    all_coords = offset_generation_forward(params, x, depth_token, refer_coords, token_pos,
                                           size=(H, W), pool_sizes=pool_sizes, with_pos=True)
    all_coords = jax.block_until_ready(all_coords)
    assert all_coords.shape == (B, line_num + (B * num_ref_points * 2) // 4, 2, 2), all_coords.shape
    assert bool(jnp.all(jnp.isfinite(all_coords)))
    print("KERNEL_OK")
</pallas_src>

<mosaic_0001>
module attributes {stable_mosaic.version = 11 : i64} {
  func.func @_ln_kernel(%arg0: i32, %arg1: memref<32x8xf32, #tpu.memory_space<vmem>>, %arg2: memref<1x8xf32, #tpu.memory_space<vmem>>, %arg3: memref<1x8xf32, #tpu.memory_space<vmem>>, %arg4: memref<32x8xf32, #tpu.memory_space<vmem>>) attributes {dimension_semantics = [#tpu.dimension_semantics<arbitrary>], iteration_bounds = array<i64: 1>, scalar_prefetch = 0 : i64, scratch_operands = 0 : i64, tpu.core_type = #tpu.core_type<tc>, window_params = [{pipeline_mode = #tpu.pipeline_mode<synchronous>, transform_indices = @transform_0, window_bounds = array<i64: 32, 8>}, {pipeline_mode = #tpu.pipeline_mode<synchronous>, transform_indices = @transform_1, window_bounds = array<i64: 1, 8>}, {pipeline_mode = #tpu.pipeline_mode<synchronous>, transform_indices = @transform_2, window_bounds = array<i64: 1, 8>}, {pipeline_mode = #tpu.pipeline_mode<synchronous>, transform_indices = @transform_3, window_bounds = array<i64: 32, 8>}]} {
    %c0 = arith.constant 0 : index
    %c0_0 = arith.constant 0 : index
    %0 = vector.load %arg1[%c0, %c0_0] : memref<32x8xf32, #tpu.memory_space<vmem>>, vector<32x8xf32>
    %cst = arith.constant dense<0.000000e+00> : vector<32xf32>
    %1 = vector.multi_reduction <add>, %0, %cst [1] : vector<32x8xf32> to vector<32xf32>
    %2 = vector.shape_cast %1 : vector<32xf32> to vector<32x1xf32>
    %cst_1 = arith.constant 8.000000e+00 : f32
    %3 = vector.broadcast %cst_1 : f32 to vector<32x1xf32>
    %4 = arith.divf %2, %3 : vector<32x1xf32>
    %5 = vector.broadcast %4 : vector<32x1xf32> to vector<32x8xf32>
    %6 = arith.subf %0, %5 : vector<32x8xf32>
    %7 = arith.mulf %6, %6 : vector<32x8xf32>
    %cst_2 = arith.constant dense<0.000000e+00> : vector<32xf32>
    %8 = vector.multi_reduction <add>, %7, %cst_2 [1] : vector<32x8xf32> to vector<32xf32>
    %9 = vector.shape_cast %8 : vector<32xf32> to vector<32x1xf32>
    %cst_3 = arith.constant 8.000000e+00 : f32
    %10 = vector.broadcast %cst_3 : f32 to vector<32x1xf32>
    %11 = arith.divf %9, %10 : vector<32x1xf32>
    %cst_4 = arith.constant 9.99999974E-6 : f32
    %12 = vector.broadcast %cst_4 : f32 to vector<32x1xf32>
    %13 = arith.addf %11, %12 : vector<32x1xf32>
    %14 = math.rsqrt %13 : vector<32x1xf32>
    %15 = vector.broadcast %14 : vector<32x1xf32> to vector<32x8xf32>
    %16 = arith.mulf %6, %15 : vector<32x8xf32>
    %c0_5 = arith.constant 0 : index
    %c0_6 = arith.constant 0 : index
    %17 = vector.load %arg2[%c0_5, %c0_6] : memref<1x8xf32, #tpu.memory_space<vmem>>, vector<1x8xf32>
    %18 = vector.broadcast %17 : vector<1x8xf32> to vector<32x8xf32>
    %19 = arith.mulf %16, %18 : vector<32x8xf32>
    %c0_7 = arith.constant 0 : index
    %c0_8 = arith.constant 0 : index
    %20 = vector.load %arg3[%c0_7, %c0_8] : memref<1x8xf32, #tpu.memory_space<vmem>>, vector<1x8xf32>
    %21 = vector.broadcast %20 : vector<1x8xf32> to vector<32x8xf32>
    %22 = arith.addf %19, %21 : vector<32x8xf32>
    %c0_9 = arith.constant 0 : index
    %c0_10 = arith.constant 0 : index
    %23 = vector.load %arg4[%c0_9, %c0_10] : memref<32x8xf32, #tpu.memory_space<vmem>>, vector<32x8xf32>
    tpu.vector_store %arg4[%c0_9, %c0_10], %22 {strides = array<i32>} : memref<32x8xf32, #tpu.memory_space<vmem>>, vector<32x8xf32>,
    return
  }
  func.func @transform_0(%arg0: i32) -> (i32, i32) {
    %c0_i32 = arith.constant 0 : i32
    %c0_i32_0 = arith.constant 0 : i32
    %c0_i32_1 = arith.constant 0 : i32
    return %c0_i32, %c0_i32_0 : i32, i32
  }
  func.func @transform_1(%arg0: i32) -> (i32, i32) {
    %c0_i32 = arith.constant 0 : i32
    %c0_i32_0 = arith.constant 0 : i32
    %c0_i32_1 = arith.constant 0 : i32
    return %c0_i32, %c0_i32_0 : i32, i32
  }
  func.func @transform_2(%arg0: i32) -> (i32, i32) {
    %c0_i32 = arith.constant 0 : i32
    %c0_i32_0 = arith.constant 0 : i32
    %c0_i32_1 = arith.constant 0 : i32
    return %c0_i32, %c0_i32_0 : i32, i32
  }
  func.func @transform_3(%arg0: i32) -> (i32, i32) {
    %c0_i32 = arith.constant 0 : i32
    %c0_i32_0 = arith.constant 0 : i32
    %c0_i32_1 = arith.constant 0 : i32
    return %c0_i32, %c0_i32_0 : i32, i32
  }
}

module attributes {stable_mosaic.version = 11 : i64} {
  func.func @kernel(%arg0: i32, %arg1: memref<32x72xf32, #tpu.memory_space<vmem>>, %arg2: memref<72x4xf32, #tpu.memory_space<vmem>>, %arg3: memref<1x4xf32, #tpu.memory_space<vmem>>, %arg4: memref<32x4xf32, #tpu.memory_space<vmem>>) attributes {dimension_semantics = [#tpu.dimension_semantics<arbitrary>], iteration_bounds = array<i64: 1>, scalar_prefetch = 0 : i64, scratch_operands = 0 : i64, tpu.core_type = #tpu.core_type<tc>, window_params = [{pipeline_mode = #tpu.pipeline_mode<synchronous>, transform_indices = @transform_0, window_bounds = array<i64: 32, 72>}, {pipeline_mode = #tpu.pipeline_mode<synchronous>, transform_indices = @transform_1, window_bounds = array<i64: 72, 4>}, {pipeline_mode = #tpu.pipeline_mode<synchronous>, transform_indices = @transform_2, window_bounds = array<i64: 1, 4>}, {pipeline_mode = #tpu.pipeline_mode<synchronous>, transform_indices = @transform_3, window_bounds = array<i64: 32, 4>}]} {
    %c0 = arith.constant 0 : index
    %c0_0 = arith.constant 0 : index
    %0 = vector.load %arg1[%c0, %c0_0] : memref<32x72xf32, #tpu.memory_space<vmem>>, vector<32x72xf32>
    %c0_1 = arith.constant 0 : index
    %c0_2 = arith.constant 0 : index
    %1 = vector.load %arg2[%c0_1, %c0_2] : memref<72x4xf32, #tpu.memory_space<vmem>>, vector<72x4xf32>
    %cst = arith.constant dense<0.000000e+00> : vector<32x4xf32>
    %2 = tpu.matmul %0, %1, %cst {dimension_numbers = #tpu.dot_dimension_numbers<[1], [0], [0], [1], [0, 0, 1, 1], [], []>} : vector<32x72xf32>, vector<72x4xf32>, vector<32x4xf32> -> vector<32x4xf32>
    %c0_3 = arith.constant 0 : index
    %c0_4 = arith.constant 0 : index
    %3 = vector.load %arg3[%c0_3, %c0_4] : memref<1x4xf32, #tpu.memory_space<vmem>>, vector<1x4xf32>
    %4 = vector.broadcast %3 : vector<1x4xf32> to vector<32x4xf32>
    %5 = arith.addf %2, %4 : vector<32x4xf32>
    %cst_5 = arith.constant 5.000000e-01 : f32
    %6 = vector.broadcast %cst_5 : f32 to vector<32x4xf32>
    %7 = arith.mulf %6, %5 : vector<32x4xf32>
    %cst_6 = arith.constant 0.707106769 : f32
    %8 = vector.broadcast %cst_6 : f32 to vector<32x4xf32>
    %9 = arith.mulf %5, %8 : vector<32x4xf32>
    %cst_7 = arith.constant 0.000000e+00 : f32
    %10 = vector.broadcast %cst_7 : f32 to vector<32x4xf32>
    %11 = arith.cmpf oge, %9, %10 : vector<32x4xf32>
    %cst_8 = arith.constant 0.000000e+00 : f32
    %12 = vector.broadcast %cst_8 : f32 to vector<32x4xf32>
    %13 = arith.subf %12, %9 : vector<32x4xf32>
    %14 = arith.select %11, %9, %13 : vector<32x4xi1>, vector<32x4xf32>
    %cst_9 = arith.constant 0.327591091 : f32
    %15 = vector.broadcast %cst_9 : f32 to vector<32x4xf32>
    %16 = arith.mulf %15, %14 : vector<32x4xf32>
    %cst_10 = arith.constant 1.000000e+00 : f32
    %17 = vector.broadcast %cst_10 : f32 to vector<32x4xf32>
    %18 = arith.addf %17, %16 : vector<32x4xf32>
    %cst_11 = arith.constant 1.000000e+00 : f32
    %19 = vector.broadcast %cst_11 : f32 to vector<32x4xf32>
    %20 = arith.divf %19, %18 : vector<32x4xf32>
    %cst_12 = arith.constant 1.06140542 : f32
    %21 = vector.broadcast %cst_12 : f32 to vector<32x4xf32>
    %22 = arith.mulf %20, %21 : vector<32x4xf32>
    %cst_13 = arith.constant -1.45315206 : f32
    %23 = vector.broadcast %cst_13 : f32 to vector<32x4xf32>
    %24 = arith.addf %23, %22 : vector<32x4xf32>
    %25 = arith.mulf %20, %24 : vector<32x4xf32>
    %cst_14 = arith.constant 1.42141378 : f32
    %26 = vector.broadcast %cst_14 : f32 to vector<32x4xf32>
    %27 = arith.addf %26, %25 : vector<32x4xf32>
    %28 = arith.mulf %20, %27 : vector<32x4xf32>
    %cst_15 = arith.constant -0.284496725 : f32
    %29 = vector.broadcast %cst_15 : f32 to vector<32x4xf32>
    %30 = arith.addf %29, %28 : vector<32x4xf32>
    %31 = arith.mulf %20, %30 : vector<32x4xf32>
    %cst_16 = arith.constant 0.254829586 : f32
    %32 = vector.broadcast %cst_16 : f32 to vector<32x4xf32>
    %33 = arith.addf %32, %31 : vector<32x4xf32>
    %34 = arith.mulf %20, %33 : vector<32x4xf32>
    %cst_17 = arith.constant 0.000000e+00 : f32
    %35 = vector.broadcast %cst_17 : f32 to vector<32x4xf32>
    %36 = arith.subf %35, %14 : vector<32x4xf32>
    %37 = arith.mulf %36, %14 : vector<32x4xf32>
    %38 = math.exp %37 : vector<32x4xf32>
    %39 = arith.mulf %34, %38 : vector<32x4xf32>
    %cst_18 = arith.constant 1.000000e+00 : f32
    %40 = vector.broadcast %cst_18 : f32 to vector<32x4xf32>
    %41 = arith.subf %40, %39 : vector<32x4xf32>
    %cst_19 = arith.constant 0.000000e+00 : f32
    %42 = vector.broadcast %cst_19 : f32 to vector<32x4xf32>
    %43 = arith.cmpf oge, %9, %42 : vector<32x4xf32>
    %cst_20 = arith.constant 0.000000e+00 : f32
    %44 = vector.broadcast %cst_20 : f32 to vector<32x4xf32>
    %45 = arith.subf %44, %41 : vector<32x4xf32>
    %46 = arith.select %43, %41, %45 : vector<32x4xi1>, vector<32x4xf32>
    %cst_21 = arith.constant 1.000000e+00 : f32
    %47 = vector.broadcast %cst_21 : f32 to vector<32x4xf32>
    %48 = arith.addf %47, %46 : vector<32x4xf32>
    %49 = arith.mulf %7, %48 : vector<32x4xf32>
    %c0_22 = arith.constant 0 : index
    %c0_23 = arith.constant 0 : index
    %50 = vector.load %arg4[%c0_22, %c0_23] : memref<32x4xf32, #tpu.memory_space<vmem>>, vector<32x4xf32>
    tpu.vector_store %arg4[%c0_22, %c0_23], %49 {strides = array<i32>} : memref<32x4xf32, #tpu.memory_space<vmem>>, vector<32x4xf32>,
    return
  }
  func.func @transform_0(%arg0: i32) -> (i32, i32) {
    %c0_i32 = arith.constant 0 : i32
    %c0_i32_0 = arith.constant 0 : i32
    %c0_i32_1 = arith.constant 0 : i32
    return %c0_i32, %c0_i32_0 : i32, i32
  }
  func.func @transform_1(%arg0: i32) -> (i32, i32) {
    %c0_i32 = arith.constant 0 : i32
    %c0_i32_0 = arith.constant 0 : i32
    %c0_i32_1 = arith.constant 0 : i32
    return %c0_i32, %c0_i32_0 : i32, i32
  }
  func.func @transform_2(%arg0: i32) -> (i32, i32) {
    %c0_i32 = arith.constant 0 : i32
    %c0_i32_0 = arith.constant 0 : i32
    %c0_i32_1 = arith.constant 0 : i32
    return %c0_i32, %c0_i32_0 : i32, i32
  }
  func.func @transform_3(%arg0: i32) -> (i32, i32) {
    %c0_i32 = arith.constant 0 : i32
    %c0_i32_0 = arith.constant 0 : i32
    %c0_i32_1 = arith.constant 0 : i32
    return %c0_i32, %c0_i32_0 : i32, i32
  }
}

module attributes {stable_mosaic.version = 11 : i64} {
  func.func @kernel(%arg0: i32, %arg1: memref<32x4xf32, #tpu.memory_space<vmem>>, %arg2: memref<4x8xf32, #tpu.memory_space<vmem>>, %arg3: memref<1x8xf32, #tpu.memory_space<vmem>>, %arg4: memref<32x8xf32, #tpu.memory_space<vmem>>) attributes {dimension_semantics = [#tpu.dimension_semantics<arbitrary>], iteration_bounds = array<i64: 1>, scalar_prefetch = 0 : i64, scratch_operands = 0 : i64, tpu.core_type = #tpu.core_type<tc>, window_params = [{pipeline_mode = #tpu.pipeline_mode<synchronous>, transform_indices = @transform_0, window_bounds = array<i64: 32, 4>}, {pipeline_mode = #tpu.pipeline_mode<synchronous>, transform_indices = @transform_1, window_bounds = array<i64: 4, 8>}, {pipeline_mode = #tpu.pipeline_mode<synchronous>, transform_indices = @transform_2, window_bounds = array<i64: 1, 8>}, {pipeline_mode = #tpu.pipeline_mode<synchronous>, transform_indices = @transform_3, window_bounds = array<i64: 32, 8>}]} {
    %c0 = arith.constant 0 : index
    %c0_0 = arith.constant 0 : index
    %0 = vector.load %arg1[%c0, %c0_0] : memref<32x4xf32, #tpu.memory_space<vmem>>, vector<32x4xf32>
    %c0_1 = arith.constant 0 : index
    %c0_2 = arith.constant 0 : index
    %1 = vector.load %arg2[%c0_1, %c0_2] : memref<4x8xf32, #tpu.memory_space<vmem>>, vector<4x8xf32>
    %cst = arith.constant dense<0.000000e+00> : vector<32x8xf32>
    %2 = tpu.matmul %0, %1, %cst {dimension_numbers = #tpu.dot_dimension_numbers<[1], [0], [0], [1], [0, 0, 1, 1], [], []>} : vector<32x4xf32>, vector<4x8xf32>, vector<32x8xf32> -> vector<32x8xf32>
    %c0_3 = arith.constant 0 : index
    %c0_4 = arith.constant 0 : index
    %3 = vector.load %arg3[%c0_3, %c0_4] : memref<1x8xf32, #tpu.memory_space<vmem>>, vector<1x8xf32>
    %4 = vector.broadcast %3 : vector<1x8xf32> to vector<32x8xf32>
    %5 = arith.addf %2, %4 : vector<32x8xf32>
    %cst_5 = arith.constant 5.000000e-01 : f32
    %6 = vector.broadcast %cst_5 : f32 to vector<32x8xf32>
    %7 = arith.mulf %6, %5 : vector<32x8xf32>
    %cst_6 = arith.constant 0.707106769 : f32
    %8 = vector.broadcast %cst_6 : f32 to vector<32x8xf32>
    %9 = arith.mulf %5, %8 : vector<32x8xf32>
    %cst_7 = arith.constant 0.000000e+00 : f32
    %10 = vector.broadcast %cst_7 : f32 to vector<32x8xf32>
    %11 = arith.cmpf oge, %9, %10 : vector<32x8xf32>
    %cst_8 = arith.constant 0.000000e+00 : f32
    %12 = vector.broadcast %cst_8 : f32 to vector<32x8xf32>
    %13 = arith.subf %12, %9 : vector<32x8xf32>
    %14 = arith.select %11, %9, %13 : vector<32x8xi1>, vector<32x8xf32>
    %cst_9 = arith.constant 0.327591091 : f32
    %15 = vector.broadcast %cst_9 : f32 to vector<32x8xf32>
    %16 = arith.mulf %15, %14 : vector<32x8xf32>
    %cst_10 = arith.constant 1.000000e+00 : f32
    %17 = vector.broadcast %cst_10 : f32 to vector<32x8xf32>
    %18 = arith.addf %17, %16 : vector<32x8xf32>
    %cst_11 = arith.constant 1.000000e+00 : f32
    %19 = vector.broadcast %cst_11 : f32 to vector<32x8xf32>
    %20 = arith.divf %19, %18 : vector<32x8xf32>
    %cst_12 = arith.constant 1.06140542 : f32
    %21 = vector.broadcast %cst_12 : f32 to vector<32x8xf32>
    %22 = arith.mulf %20, %21 : vector<32x8xf32>
    %cst_13 = arith.constant -1.45315206 : f32
    %23 = vector.broadcast %cst_13 : f32 to vector<32x8xf32>
    %24 = arith.addf %23, %22 : vector<32x8xf32>
    %25 = arith.mulf %20, %24 : vector<32x8xf32>
    %cst_14 = arith.constant 1.42141378 : f32
    %26 = vector.broadcast %cst_14 : f32 to vector<32x8xf32>
    %27 = arith.addf %26, %25 : vector<32x8xf32>
    %28 = arith.mulf %20, %27 : vector<32x8xf32>
    %cst_15 = arith.constant -0.284496725 : f32
    %29 = vector.broadcast %cst_15 : f32 to vector<32x8xf32>
    %30 = arith.addf %29, %28 : vector<32x8xf32>
    %31 = arith.mulf %20, %30 : vector<32x8xf32>
    %cst_16 = arith.constant 0.254829586 : f32
    %32 = vector.broadcast %cst_16 : f32 to vector<32x8xf32>
    %33 = arith.addf %32, %31 : vector<32x8xf32>
    %34 = arith.mulf %20, %33 : vector<32x8xf32>
    %cst_17 = arith.constant 0.000000e+00 : f32
    %35 = vector.broadcast %cst_17 : f32 to vector<32x8xf32>
    %36 = arith.subf %35, %14 : vector<32x8xf32>
    %37 = arith.mulf %36, %14 : vector<32x8xf32>
    %38 = math.exp %37 : vector<32x8xf32>
    %39 = arith.mulf %34, %38 : vector<32x8xf32>
    %cst_18 = arith.constant 1.000000e+00 : f32
    %40 = vector.broadcast %cst_18 : f32 to vector<32x8xf32>
    %41 = arith.subf %40, %39 : vector<32x8xf32>
    %cst_19 = arith.constant 0.000000e+00 : f32
    %42 = vector.broadcast %cst_19 : f32 to vector<32x8xf32>
    %43 = arith.cmpf oge, %9, %42 : vector<32x8xf32>
    %cst_20 = arith.constant 0.000000e+00 : f32
    %44 = vector.broadcast %cst_20 : f32 to vector<32x8xf32>
    %45 = arith.subf %44, %41 : vector<32x8xf32>
    %46 = arith.select %43, %41, %45 : vector<32x8xi1>, vector<32x8xf32>
    %cst_21 = arith.constant 1.000000e+00 : f32
    %47 = vector.broadcast %cst_21 : f32 to vector<32x8xf32>
    %48 = arith.addf %47, %46 : vector<32x8xf32>
    %49 = arith.mulf %7, %48 : vector<32x8xf32>
    %c0_22 = arith.constant 0 : index
    %c0_23 = arith.constant 0 : index
    %50 = vector.load %arg4[%c0_22, %c0_23] : memref<32x8xf32, #tpu.memory_space<vmem>>, vector<32x8xf32>
    tpu.vector_store %arg4[%c0_22, %c0_23], %49 {strides = array<i32>} : memref<32x8xf32, #tpu.memory_space<vmem>>, vector<32x8xf32>,
    return
  }
  func.func @transform_0(%arg0: i32) -> (i32, i32) {
    %c0_i32 = arith.constant 0 : i32
    %c0_i32_0 = arith.constant 0 : i32
    %c0_i32_1 = arith.constant 0 : i32
    return %c0_i32, %c0_i32_0 : i32, i32
  }
  func.func @transform_1(%arg0: i32) -> (i32, i32) {
    %c0_i32 = arith.constant 0 : i32
    %c0_i32_0 = arith.constant 0 : i32
    %c0_i32_1 = arith.constant 0 : i32
    return %c0_i32, %c0_i32_0 : i32, i32
  }
  func.func @transform_2(%arg0: i32) -> (i32, i32) {
    %c0_i32 = arith.constant 0 : i32
    %c0_i32_0 = arith.constant 0 : i32
    %c0_i32_1 = arith.constant 0 : i32
    return %c0_i32, %c0_i32_0 : i32, i32
  }
  func.func @transform_3(%arg0: i32) -> (i32, i32) {
    %c0_i32 = arith.constant 0 : i32
    %c0_i32_0 = arith.constant 0 : i32
    %c0_i32_1 = arith.constant 0 : i32
    return %c0_i32, %c0_i32_0 : i32, i32
  }
}

module attributes {stable_mosaic.version = 11 : i64} {
  func.func @kernel(%arg0: i32, %arg1: memref<32x8xf32, #tpu.memory_space<vmem>>, %arg2: memref<8x8xf32, #tpu.memory_space<vmem>>, %arg3: memref<1x8xf32, #tpu.memory_space<vmem>>, %arg4: memref<32x8xf32, #tpu.memory_space<vmem>>) attributes {dimension_semantics = [#tpu.dimension_semantics<arbitrary>], iteration_bounds = array<i64: 1>, scalar_prefetch = 0 : i64, scratch_operands = 0 : i64, tpu.core_type = #tpu.core_type<tc>, window_params = [{pipeline_mode = #tpu.pipeline_mode<synchronous>, transform_indices = @transform_0, window_bounds = array<i64: 32, 8>}, {pipeline_mode = #tpu.pipeline_mode<synchronous>, transform_indices = @transform_1, window_bounds = array<i64: 8, 8>}, {pipeline_mode = #tpu.pipeline_mode<synchronous>, transform_indices = @transform_2, window_bounds = array<i64: 1, 8>}, {pipeline_mode = #tpu.pipeline_mode<synchronous>, transform_indices = @transform_3, window_bounds = array<i64: 32, 8>}]} {
    %c0 = arith.constant 0 : index
    %c0_0 = arith.constant 0 : index
    %0 = vector.load %arg1[%c0, %c0_0] : memref<32x8xf32, #tpu.memory_space<vmem>>, vector<32x8xf32>
    %c0_1 = arith.constant 0 : index
    %c0_2 = arith.constant 0 : index
    %1 = vector.load %arg2[%c0_1, %c0_2] : memref<8x8xf32, #tpu.memory_space<vmem>>, vector<8x8xf32>
    %cst = arith.constant dense<0.000000e+00> : vector<32x8xf32>
    %2 = tpu.matmul %0, %1, %cst {dimension_numbers = #tpu.dot_dimension_numbers<[1], [0], [0], [1], [0, 0, 1, 1], [], []>} : vector<32x8xf32>, vector<8x8xf32>, vector<32x8xf32> -> vector<32x8xf32>
    %c0_3 = arith.constant 0 : index
    %c0_4 = arith.constant 0 : index
    %3 = vector.load %arg3[%c0_3, %c0_4] : memref<1x8xf32, #tpu.memory_space<vmem>>, vector<1x8xf32>
    %4 = vector.broadcast %3 : vector<1x8xf32> to vector<32x8xf32>
    %5 = arith.addf %2, %4 : vector<32x8xf32>
    %cst_5 = arith.constant dense<0xFF800000> : vector<32xf32>
    %6 = vector.multi_reduction <maximumf>, %5, %cst_5 [1] : vector<32x8xf32> to vector<32xf32>
    %7 = vector.shape_cast %6 : vector<32xf32> to vector<32x1xf32>
    %8 = vector.broadcast %7 : vector<32x1xf32> to vector<32x8xf32>
    %9 = arith.subf %5, %8 : vector<32x8xf32>
    %10 = math.exp %9 : vector<32x8xf32>
    %cst_6 = arith.constant dense<0.000000e+00> : vector<32xf32>
    %11 = vector.multi_reduction <add>, %10, %cst_6 [1] : vector<32x8xf32> to vector<32xf32>
    %12 = vector.shape_cast %11 : vector<32xf32> to vector<32x1xf32>
    %13 = tpu.reciprocal %12 {approx = true} : vector<32x1xf32> -> vector<32x1xf32>
    %14 = vector.broadcast %13 : vector<32x1xf32> to vector<32x8xf32>
    %15 = arith.mulf %10, %14 : vector<32x8xf32>
    %c0_7 = arith.constant 0 : index
    %c0_8 = arith.constant 0 : index
    %16 = vector.load %arg4[%c0_7, %c0_8] : memref<32x8xf32, #tpu.memory_space<vmem>>, vector<32x8xf32>
    tpu.vector_store %arg4[%c0_7, %c0_8], %15 {strides = array<i32>} : memref<32x8xf32, #tpu.memory_space<vmem>>, vector<32x8xf32>,
    return
  }
  func.func @transform_0(%arg0: i32) -> (i32, i32) {
    %c0_i32 = arith.constant 0 : i32
    %c0_i32_0 = arith.constant 0 : i32
    %c0_i32_1 = arith.constant 0 : i32
    return %c0_i32, %c0_i32_0 : i32, i32
  }
  func.func @transform_1(%arg0: i32) -> (i32, i32) {
    %c0_i32 = arith.constant 0 : i32
    %c0_i32_0 = arith.constant 0 : i32
    %c0_i32_1 = arith.constant 0 : i32
    return %c0_i32, %c0_i32_0 : i32, i32
  }
  func.func @transform_2(%arg0: i32) -> (i32, i32) {
    %c0_i32 = arith.constant 0 : i32
    %c0_i32_0 = arith.constant 0 : i32
    %c0_i32_1 = arith.constant 0 : i32
    return %c0_i32, %c0_i32_0 : i32, i32
  }
  func.func @transform_3(%arg0: i32) -> (i32, i32) {
    %c0_i32 = arith.constant 0 : i32
    %c0_i32_0 = arith.constant 0 : i32
    %c0_i32_1 = arith.constant 0 : i32
    return %c0_i32, %c0_i32_0 : i32, i32
  }
}

module attributes {stable_mosaic.version = 11 : i64} {
  func.func @_attn_ln_kernel(%arg0: i32, %arg1: memref<32x8xf32, #tpu.memory_space<vmem>>, %arg2: memref<32x8xf32, #tpu.memory_space<vmem>>, %arg3: memref<1x8xf32, #tpu.memory_space<vmem>>, %arg4: memref<1x8xf32, #tpu.memory_space<vmem>>, %arg5: memref<32x8xf32, #tpu.memory_space<vmem>>) attributes {dimension_semantics = [#tpu.dimension_semantics<arbitrary>], iteration_bounds = array<i64: 1>, scalar_prefetch = 0 : i64, scratch_operands = 0 : i64, tpu.core_type = #tpu.core_type<tc>, window_params = [{pipeline_mode = #tpu.pipeline_mode<synchronous>, transform_indices = @transform_0, window_bounds = array<i64: 32, 8>}, {pipeline_mode = #tpu.pipeline_mode<synchronous>, transform_indices = @transform_1, window_bounds = array<i64: 32, 8>}, {pipeline_mode = #tpu.pipeline_mode<synchronous>, transform_indices = @transform_2, window_bounds = array<i64: 1, 8>}, {pipeline_mode = #tpu.pipeline_mode<synchronous>, transform_indices = @transform_3, window_bounds = array<i64: 1, 8>}, {pipeline_mode = #tpu.pipeline_mode<synchronous>, transform_indices = @transform_4, window_bounds = array<i64: 32, 8>}]} {
    %c0 = arith.constant 0 : index
    %c0_0 = arith.constant 0 : index
    %0 = vector.load %arg1[%c0, %c0_0] : memref<32x8xf32, #tpu.memory_space<vmem>>, vector<32x8xf32>
    %cst = arith.constant 1.000000e+00 : f32
    %1 = vector.broadcast %cst : f32 to vector<32x8xf32>
    %2 = arith.addf %0, %1 : vector<32x8xf32>
    %c0_1 = arith.constant 0 : index
    %c0_2 = arith.constant 0 : index
    %3 = vector.load %arg2[%c0_1, %c0_2] : memref<32x8xf32, #tpu.memory_space<vmem>>, vector<32x8xf32>
    %4 = arith.mulf %2, %3 : vector<32x8xf32>
    %cst_3 = arith.constant dense<0.000000e+00> : vector<32xf32>
    %5 = vector.multi_reduction <add>, %4, %cst_3 [1] : vector<32x8xf32> to vector<32xf32>
    %6 = vector.shape_cast %5 : vector<32xf32> to vector<32x1xf32>
    %cst_4 = arith.constant 8.000000e+00 : f32
    %7 = vector.broadcast %cst_4 : f32 to vector<32x1xf32>
    %8 = arith.divf %6, %7 : vector<32x1xf32>
    %9 = vector.broadcast %8 : vector<32x1xf32> to vector<32x8xf32>
    %10 = arith.subf %4, %9 : vector<32x8xf32>
    %11 = arith.mulf %10, %10 : vector<32x8xf32>
    %cst_5 = arith.constant dense<0.000000e+00> : vector<32xf32>
    %12 = vector.multi_reduction <add>, %11, %cst_5 [1] : vector<32x8xf32> to vector<32xf32>
    %13 = vector.shape_cast %12 : vector<32xf32> to vector<32x1xf32>
    %cst_6 = arith.constant 8.000000e+00 : f32
    %14 = vector.broadcast %cst_6 : f32 to vector<32x1xf32>
    %15 = arith.divf %13, %14 : vector<32x1xf32>
    %cst_7 = arith.constant 9.99999974E-6 : f32
    %16 = vector.broadcast %cst_7 : f32 to vector<32x1xf32>
    %17 = arith.addf %15, %16 : vector<32x1xf32>
    %18 = math.rsqrt %17 : vector<32x1xf32>
    %19 = vector.broadcast %18 : vector<32x1xf32> to vector<32x8xf32>
    %20 = arith.mulf %10, %19 : vector<32x8xf32>
    %c0_8 = arith.constant 0 : index
    %c0_9 = arith.constant 0 : index
    %21 = vector.load %arg3[%c0_8, %c0_9] : memref<1x8xf32, #tpu.memory_space<vmem>>, vector<1x8xf32>
    %22 = vector.broadcast %21 : vector<1x8xf32> to vector<32x8xf32>
    %23 = arith.mulf %20, %22 : vector<32x8xf32>
    %c0_10 = arith.constant 0 : index
    %c0_11 = arith.constant 0 : index
    %24 = vector.load %arg4[%c0_10, %c0_11] : memref<1x8xf32, #tpu.memory_space<vmem>>, vector<1x8xf32>
    %25 = vector.broadcast %24 : vector<1x8xf32> to vector<32x8xf32>
    %26 = arith.addf %23, %25 : vector<32x8xf32>
    %c0_12 = arith.constant 0 : index
    %c0_13 = arith.constant 0 : index
    %27 = vector.load %arg5[%c0_12, %c0_13] : memref<32x8xf32, #tpu.memory_space<vmem>>, vector<32x8xf32>
    tpu.vector_store %arg5[%c0_12, %c0_13], %26 {strides = array<i32>} : memref<32x8xf32, #tpu.memory_space<vmem>>, vector<32x8xf32>,
    return
  }
  func.func @transform_0(%arg0: i32) -> (i32, i32) {
    %c0_i32 = arith.constant 0 : i32
    %c0_i32_0 = arith.constant 0 : i32
    %c0_i32_1 = arith.constant 0 : i32
    return %c0_i32, %c0_i32_0 : i32, i32
  }
  func.func @transform_1(%arg0: i32) -> (i32, i32) {
    %c0_i32 = arith.constant 0 : i32
    %c0_i32_0 = arith.constant 0 : i32
    %c0_i32_1 = arith.constant 0 : i32
    return %c0_i32, %c0_i32_0 : i32, i32
  }
  func.func @transform_2(%arg0: i32) -> (i32, i32) {
    %c0_i32 = arith.constant 0 : i32
    %c0_i32_0 = arith.constant 0 : i32
    %c0_i32_1 = arith.constant 0 : i32
    return %c0_i32, %c0_i32_0 : i32, i32
  }
  func.func @transform_3(%arg0: i32) -> (i32, i32) {
    %c0_i32 = arith.constant 0 : i32
    %c0_i32_0 = arith.constant 0 : i32
    %c0_i32_1 = arith.constant 0 : i32
    return %c0_i32, %c0_i32_0 : i32, i32
  }
  func.func @transform_4(%arg0: i32) -> (i32, i32) {
    %c0_i32 = arith.constant 0 : i32
    %c0_i32_0 = arith.constant 0 : i32
    %c0_i32_1 = arith.constant 0 : i32
    return %c0_i32, %c0_i32_0 : i32, i32
  }
}

module attributes {stable_mosaic.version = 11 : i64} {
  func.func @kernel(%arg0: i32, %arg1: memref<32x8xf32, #tpu.memory_space<vmem>>, %arg2: memref<8x4xf32, #tpu.memory_space<vmem>>, %arg3: memref<1x4xf32, #tpu.memory_space<vmem>>, %arg4: memref<32x4xf32, #tpu.memory_space<vmem>>) attributes {dimension_semantics = [#tpu.dimension_semantics<arbitrary>], iteration_bounds = array<i64: 1>, scalar_prefetch = 0 : i64, scratch_operands = 0 : i64, tpu.core_type = #tpu.core_type<tc>, window_params = [{pipeline_mode = #tpu.pipeline_mode<synchronous>, transform_indices = @transform_0, window_bounds = array<i64: 32, 8>}, {pipeline_mode = #tpu.pipeline_mode<synchronous>, transform_indices = @transform_1, window_bounds = array<i64: 8, 4>}, {pipeline_mode = #tpu.pipeline_mode<synchronous>, transform_indices = @transform_2, window_bounds = array<i64: 1, 4>}, {pipeline_mode = #tpu.pipeline_mode<synchronous>, transform_indices = @transform_3, window_bounds = array<i64: 32, 4>}]} {
    %c0 = arith.constant 0 : index
    %c0_0 = arith.constant 0 : index
    %0 = vector.load %arg1[%c0, %c0_0] : memref<32x8xf32, #tpu.memory_space<vmem>>, vector<32x8xf32>
    %c0_1 = arith.constant 0 : index
    %c0_2 = arith.constant 0 : index
    %1 = vector.load %arg2[%c0_1, %c0_2] : memref<8x4xf32, #tpu.memory_space<vmem>>, vector<8x4xf32>
    %cst = arith.constant dense<0.000000e+00> : vector<32x4xf32>
    %2 = tpu.matmul %0, %1, %cst {dimension_numbers = #tpu.dot_dimension_numbers<[1], [0], [0], [1], [0, 0, 1, 1], [], []>} : vector<32x8xf32>, vector<8x4xf32>, vector<32x4xf32> -> vector<32x4xf32>
    %c0_3 = arith.constant 0 : index
    %c0_4 = arith.constant 0 : index
    %3 = vector.load %arg3[%c0_3, %c0_4] : memref<1x4xf32, #tpu.memory_space<vmem>>, vector<1x4xf32>
    %4 = vector.broadcast %3 : vector<1x4xf32> to vector<32x4xf32>
    %5 = arith.addf %2, %4 : vector<32x4xf32>
    %cst_5 = arith.constant 5.000000e-01 : f32
    %6 = vector.broadcast %cst_5 : f32 to vector<32x4xf32>
    %7 = arith.mulf %6, %5 : vector<32x4xf32>
    %cst_6 = arith.constant 0.707106769 : f32
    %8 = vector.broadcast %cst_6 : f32 to vector<32x4xf32>
    %9 = arith.mulf %5, %8 : vector<32x4xf32>
    %cst_7 = arith.constant 0.000000e+00 : f32
    %10 = vector.broadcast %cst_7 : f32 to vector<32x4xf32>
    %11 = arith.cmpf oge, %9, %10 : vector<32x4xf32>
    %cst_8 = arith.constant 0.000000e+00 : f32
    %12 = vector.broadcast %cst_8 : f32 to vector<32x4xf32>
    %13 = arith.subf %12, %9 : vector<32x4xf32>
    %14 = arith.select %11, %9, %13 : vector<32x4xi1>, vector<32x4xf32>
    %cst_9 = arith.constant 0.327591091 : f32
    %15 = vector.broadcast %cst_9 : f32 to vector<32x4xf32>
    %16 = arith.mulf %15, %14 : vector<32x4xf32>
    %cst_10 = arith.constant 1.000000e+00 : f32
    %17 = vector.broadcast %cst_10 : f32 to vector<32x4xf32>
    %18 = arith.addf %17, %16 : vector<32x4xf32>
    %cst_11 = arith.constant 1.000000e+00 : f32
    %19 = vector.broadcast %cst_11 : f32 to vector<32x4xf32>
    %20 = arith.divf %19, %18 : vector<32x4xf32>
    %cst_12 = arith.constant 1.06140542 : f32
    %21 = vector.broadcast %cst_12 : f32 to vector<32x4xf32>
    %22 = arith.mulf %20, %21 : vector<32x4xf32>
    %cst_13 = arith.constant -1.45315206 : f32
    %23 = vector.broadcast %cst_13 : f32 to vector<32x4xf32>
    %24 = arith.addf %23, %22 : vector<32x4xf32>
    %25 = arith.mulf %20, %24 : vector<32x4xf32>
    %cst_14 = arith.constant 1.42141378 : f32
    %26 = vector.broadcast %cst_14 : f32 to vector<32x4xf32>
    %27 = arith.addf %26, %25 : vector<32x4xf32>
    %28 = arith.mulf %20, %27 : vector<32x4xf32>
    %cst_15 = arith.constant -0.284496725 : f32
    %29 = vector.broadcast %cst_15 : f32 to vector<32x4xf32>
    %30 = arith.addf %29, %28 : vector<32x4xf32>
    %31 = arith.mulf %20, %30 : vector<32x4xf32>
    %cst_16 = arith.constant 0.254829586 : f32
    %32 = vector.broadcast %cst_16 : f32 to vector<32x4xf32>
    %33 = arith.addf %32, %31 : vector<32x4xf32>
    %34 = arith.mulf %20, %33 : vector<32x4xf32>
    %cst_17 = arith.constant 0.000000e+00 : f32
    %35 = vector.broadcast %cst_17 : f32 to vector<32x4xf32>
    %36 = arith.subf %35, %14 : vector<32x4xf32>
    %37 = arith.mulf %36, %14 : vector<32x4xf32>
    %38 = math.exp %37 : vector<32x4xf32>
    %39 = arith.mulf %34, %38 : vector<32x4xf32>
    %cst_18 = arith.constant 1.000000e+00 : f32
    %40 = vector.broadcast %cst_18 : f32 to vector<32x4xf32>
    %41 = arith.subf %40, %39 : vector<32x4xf32>
    %cst_19 = arith.constant 0.000000e+00 : f32
    %42 = vector.broadcast %cst_19 : f32 to vector<32x4xf32>
    %43 = arith.cmpf oge, %9, %42 : vector<32x4xf32>
    %cst_20 = arith.constant 0.000000e+00 : f32
    %44 = vector.broadcast %cst_20 : f32 to vector<32x4xf32>
    %45 = arith.subf %44, %41 : vector<32x4xf32>
    %46 = arith.select %43, %41, %45 : vector<32x4xi1>, vector<32x4xf32>
    %cst_21 = arith.constant 1.000000e+00 : f32
    %47 = vector.broadcast %cst_21 : f32 to vector<32x4xf32>
    %48 = arith.addf %47, %46 : vector<32x4xf32>
    %49 = arith.mulf %7, %48 : vector<32x4xf32>
    %c0_22 = arith.constant 0 : index
    %c0_23 = arith.constant 0 : index
    %50 = vector.load %arg4[%c0_22, %c0_23] : memref<32x4xf32, #tpu.memory_space<vmem>>, vector<32x4xf32>
    tpu.vector_store %arg4[%c0_22, %c0_23], %49 {strides = array<i32>} : memref<32x4xf32, #tpu.memory_space<vmem>>, vector<32x4xf32>,
    return
  }
  func.func @transform_0(%arg0: i32) -> (i32, i32) {
    %c0_i32 = arith.constant 0 : i32
    %c0_i32_0 = arith.constant 0 : i32
    %c0_i32_1 = arith.constant 0 : i32
    return %c0_i32, %c0_i32_0 : i32, i32
  }
  func.func @transform_1(%arg0: i32) -> (i32, i32) {
    %c0_i32 = arith.constant 0 : i32
    %c0_i32_0 = arith.constant 0 : i32
    %c0_i32_1 = arith.constant 0 : i32
    return %c0_i32, %c0_i32_0 : i32, i32
  }
  func.func @transform_2(%arg0: i32) -> (i32, i32) {
    %c0_i32 = arith.constant 0 : i32
    %c0_i32_0 = arith.constant 0 : i32
    %c0_i32_1 = arith.constant 0 : i32
    return %c0_i32, %c0_i32_0 : i32, i32
  }
  func.func @transform_3(%arg0: i32) -> (i32, i32) {
    %c0_i32 = arith.constant 0 : i32
    %c0_i32_0 = arith.constant 0 : i32
    %c0_i32_1 = arith.constant 0 : i32
    return %c0_i32, %c0_i32_0 : i32, i32
  }
}

module attributes {stable_mosaic.version = 11 : i64} {
  func.func @kernel(%arg0: i32, %arg1: memref<32x36xf32, #tpu.memory_space<vmem>>, %arg2: memref<36x4xf32, #tpu.memory_space<vmem>>, %arg3: memref<1x4xf32, #tpu.memory_space<vmem>>, %arg4: memref<32x4xf32, #tpu.memory_space<vmem>>) attributes {dimension_semantics = [#tpu.dimension_semantics<arbitrary>], iteration_bounds = array<i64: 1>, scalar_prefetch = 0 : i64, scratch_operands = 0 : i64, tpu.core_type = #tpu.core_type<tc>, window_params = [{pipeline_mode = #tpu.pipeline_mode<synchronous>, transform_indices = @transform_0, window_bounds = array<i64: 32, 36>}, {pipeline_mode = #tpu.pipeline_mode<synchronous>, transform_indices = @transform_1, window_bounds = array<i64: 36, 4>}, {pipeline_mode = #tpu.pipeline_mode<synchronous>, transform_indices = @transform_2, window_bounds = array<i64: 1, 4>}, {pipeline_mode = #tpu.pipeline_mode<synchronous>, transform_indices = @transform_3, window_bounds = array<i64: 32, 4>}]} {
    %c0 = arith.constant 0 : index
    %c0_0 = arith.constant 0 : index
    %0 = vector.load %arg1[%c0, %c0_0] : memref<32x36xf32, #tpu.memory_space<vmem>>, vector<32x36xf32>
    %c0_1 = arith.constant 0 : index
    %c0_2 = arith.constant 0 : index
    %1 = vector.load %arg2[%c0_1, %c0_2] : memref<36x4xf32, #tpu.memory_space<vmem>>, vector<36x4xf32>
    %cst = arith.constant dense<0.000000e+00> : vector<32x4xf32>
    %2 = tpu.matmul %0, %1, %cst {dimension_numbers = #tpu.dot_dimension_numbers<[1], [0], [0], [1], [0, 0, 1, 1], [], []>} : vector<32x36xf32>, vector<36x4xf32>, vector<32x4xf32> -> vector<32x4xf32>
    %c0_3 = arith.constant 0 : index
    %c0_4 = arith.constant 0 : index
    %3 = vector.load %arg3[%c0_3, %c0_4] : memref<1x4xf32, #tpu.memory_space<vmem>>, vector<1x4xf32>
    %4 = vector.broadcast %3 : vector<1x4xf32> to vector<32x4xf32>
    %5 = arith.addf %2, %4 : vector<32x4xf32>
    %c0_5 = arith.constant 0 : index
    %c0_6 = arith.constant 0 : index
    %6 = vector.load %arg4[%c0_5, %c0_6] : memref<32x4xf32, #tpu.memory_space<vmem>>, vector<32x4xf32>
    tpu.vector_store %arg4[%c0_5, %c0_6], %5 {strides = array<i32>} : memref<32x4xf32, #tpu.memory_space<vmem>>, vector<32x4xf32>,
    return
  }
  func.func @transform_0(%arg0: i32) -> (i32, i32) {
    %c0_i32 = arith.constant 0 : i32
    %c0_i32_0 = arith.constant 0 : i32
    %c0_i32_1 = arith.constant 0 : i32
    return %c0_i32, %c0_i32_0 : i32, i32
  }
  func.func @transform_1(%arg0: i32) -> (i32, i32) {
    %c0_i32 = arith.constant 0 : i32
    %c0_i32_0 = arith.constant 0 : i32
    %c0_i32_1 = arith.constant 0 : i32
    return %c0_i32, %c0_i32_0 : i32, i32
  }
  func.func @transform_2(%arg0: i32) -> (i32, i32) {
    %c0_i32 = arith.constant 0 : i32
    %c0_i32_0 = arith.constant 0 : i32
    %c0_i32_1 = arith.constant 0 : i32
    return %c0_i32, %c0_i32_0 : i32, i32
  }
  func.func @transform_3(%arg0: i32) -> (i32, i32) {
    %c0_i32 = arith.constant 0 : i32
    %c0_i32_0 = arith.constant 0 : i32
    %c0_i32_1 = arith.constant 0 : i32
    return %c0_i32, %c0_i32_0 : i32, i32
  }
}

module attributes {stable_mosaic.version = 11 : i64} {
  func.func @kernel(%arg0: i32, %arg1: memref<32x2xf32, #tpu.memory_space<vmem>>, %arg2: memref<2x2xf32, #tpu.memory_space<vmem>>, %arg3: memref<1x2xf32, #tpu.memory_space<vmem>>, %arg4: memref<32x2xf32, #tpu.memory_space<vmem>>) attributes {dimension_semantics = [#tpu.dimension_semantics<arbitrary>], iteration_bounds = array<i64: 1>, scalar_prefetch = 0 : i64, scratch_operands = 0 : i64, tpu.core_type = #tpu.core_type<tc>, window_params = [{pipeline_mode = #tpu.pipeline_mode<synchronous>, transform_indices = @transform_0, window_bounds = array<i64: 32, 2>}, {pipeline_mode = #tpu.pipeline_mode<synchronous>, transform_indices = @transform_1, window_bounds = array<i64: 2, 2>}, {pipeline_mode = #tpu.pipeline_mode<synchronous>, transform_indices = @transform_2, window_bounds = array<i64: 1, 2>}, {pipeline_mode = #tpu.pipeline_mode<synchronous>, transform_indices = @transform_3, window_bounds = array<i64: 32, 2>}]} {
    %c0 = arith.constant 0 : index
    %c0_0 = arith.constant 0 : index
    %0 = vector.load %arg1[%c0, %c0_0] : memref<32x2xf32, #tpu.memory_space<vmem>>, vector<32x2xf32>
    %c0_1 = arith.constant 0 : index
    %c0_2 = arith.constant 0 : index
    %1 = vector.load %arg2[%c0_1, %c0_2] : memref<2x2xf32, #tpu.memory_space<vmem>>, vector<2x2xf32>
    %cst = arith.constant dense<0.000000e+00> : vector<32x2xf32>
    %2 = tpu.matmul %0, %1, %cst {dimension_numbers = #tpu.dot_dimension_numbers<[1], [0], [0], [1], [0, 0, 1, 1], [], []>} : vector<32x2xf32>, vector<2x2xf32>, vector<32x2xf32> -> vector<32x2xf32>
    %c0_3 = arith.constant 0 : index
    %c0_4 = arith.constant 0 : index
    %3 = vector.load %arg3[%c0_3, %c0_4] : memref<1x2xf32, #tpu.memory_space<vmem>>, vector<1x2xf32>
    %4 = vector.broadcast %3 : vector<1x2xf32> to vector<32x2xf32>
    %5 = arith.addf %2, %4 : vector<32x2xf32>
    %c0_5 = arith.constant 0 : index
    %c0_6 = arith.constant 0 : index
    %6 = vector.load %arg4[%c0_5, %c0_6] : memref<32x2xf32, #tpu.memory_space<vmem>>, vector<32x2xf32>
    tpu.vector_store %arg4[%c0_5, %c0_6], %5 {strides = array<i32>} : memref<32x2xf32, #tpu.memory_space<vmem>>, vector<32x2xf32>,
    return
  }
  func.func @transform_0(%arg0: i32) -> (i32, i32) {
    %c0_i32 = arith.constant 0 : i32
    %c0_i32_0 = arith.constant 0 : i32
    %c0_i32_1 = arith.constant 0 : i32
    return %c0_i32, %c0_i32_0 : i32, i32
  }
  func.func @transform_1(%arg0: i32) -> (i32, i32) {
    %c0_i32 = arith.constant 0 : i32
    %c0_i32_0 = arith.constant 0 : i32
    %c0_i32_1 = arith.constant 0 : i32
    return %c0_i32, %c0_i32_0 : i32, i32
  }
  func.func @transform_2(%arg0: i32) -> (i32, i32) {
    %c0_i32 = arith.constant 0 : i32
    %c0_i32_0 = arith.constant 0 : i32
    %c0_i32_1 = arith.constant 0 : i32
    return %c0_i32, %c0_i32_0 : i32, i32
  }
  func.func @transform_3(%arg0: i32) -> (i32, i32) {
    %c0_i32 = arith.constant 0 : i32
    %c0_i32_0 = arith.constant 0 : i32
    %c0_i32_1 = arith.constant 0 : i32
    return %c0_i32, %c0_i32_0 : i32, i32
  }
}

module attributes {stable_mosaic.version = 11 : i64} {
  func.func @kernel(%arg0: i32, %arg1: memref<32x4xf32, #tpu.memory_space<vmem>>, %arg2: memref<4x2xf32, #tpu.memory_space<vmem>>, %arg3: memref<1x2xf32, #tpu.memory_space<vmem>>, %arg4: memref<32x2xf32, #tpu.memory_space<vmem>>) attributes {dimension_semantics = [#tpu.dimension_semantics<arbitrary>], iteration_bounds = array<i64: 1>, scalar_prefetch = 0 : i64, scratch_operands = 0 : i64, tpu.core_type = #tpu.core_type<tc>, window_params = [{pipeline_mode = #tpu.pipeline_mode<synchronous>, transform_indices = @transform_0, window_bounds = array<i64: 32, 4>}, {pipeline_mode = #tpu.pipeline_mode<synchronous>, transform_indices = @transform_1, window_bounds = array<i64: 4, 2>}, {pipeline_mode = #tpu.pipeline_mode<synchronous>, transform_indices = @transform_2, window_bounds = array<i64: 1, 2>}, {pipeline_mode = #tpu.pipeline_mode<synchronous>, transform_indices = @transform_3, window_bounds = array<i64: 32, 2>}]} {
    %c0 = arith.constant 0 : index
    %c0_0 = arith.constant 0 : index
    %0 = vector.load %arg1[%c0, %c0_0] : memref<32x4xf32, #tpu.memory_space<vmem>>, vector<32x4xf32>
    %c0_1 = arith.constant 0 : index
    %c0_2 = arith.constant 0 : index
    %1 = vector.load %arg2[%c0_1, %c0_2] : memref<4x2xf32, #tpu.memory_space<vmem>>, vector<4x2xf32>
    %cst = arith.constant dense<0.000000e+00> : vector<32x2xf32>
    %2 = tpu.matmul %0, %1, %cst {dimension_numbers = #tpu.dot_dimension_numbers<[1], [0], [0], [1], [0, 0, 1, 1], [], []>} : vector<32x4xf32>, vector<4x2xf32>, vector<32x2xf32> -> vector<32x2xf32>
    %c0_3 = arith.constant 0 : index
    %c0_4 = arith.constant 0 : index
    %3 = vector.load %arg3[%c0_3, %c0_4] : memref<1x2xf32, #tpu.memory_space<vmem>>, vector<1x2xf32>
    %4 = vector.broadcast %3 : vector<1x2xf32> to vector<32x2xf32>
    %5 = arith.addf %2, %4 : vector<32x2xf32>
    %cst_5 = arith.constant 5.000000e-01 : f32
    %6 = vector.broadcast %cst_5 : f32 to vector<32x2xf32>
    %7 = arith.mulf %6, %5 : vector<32x2xf32>
    %cst_6 = arith.constant 0.707106769 : f32
    %8 = vector.broadcast %cst_6 : f32 to vector<32x2xf32>
    %9 = arith.mulf %5, %8 : vector<32x2xf32>
    %cst_7 = arith.constant 0.000000e+00 : f32
    %10 = vector.broadcast %cst_7 : f32 to vector<32x2xf32>
    %11 = arith.cmpf oge, %9, %10 : vector<32x2xf32>
    %cst_8 = arith.constant 0.000000e+00 : f32
    %12 = vector.broadcast %cst_8 : f32 to vector<32x2xf32>
    %13 = arith.subf %12, %9 : vector<32x2xf32>
    %14 = arith.select %11, %9, %13 : vector<32x2xi1>, vector<32x2xf32>
    %cst_9 = arith.constant 0.327591091 : f32
    %15 = vector.broadcast %cst_9 : f32 to vector<32x2xf32>
    %16 = arith.mulf %15, %14 : vector<32x2xf32>
    %cst_10 = arith.constant 1.000000e+00 : f32
    %17 = vector.broadcast %cst_10 : f32 to vector<32x2xf32>
    %18 = arith.addf %17, %16 : vector<32x2xf32>
    %cst_11 = arith.constant 1.000000e+00 : f32
    %19 = vector.broadcast %cst_11 : f32 to vector<32x2xf32>
    %20 = arith.divf %19, %18 : vector<32x2xf32>
    %cst_12 = arith.constant 1.06140542 : f32
    %21 = vector.broadcast %cst_12 : f32 to vector<32x2xf32>
    %22 = arith.mulf %20, %21 : vector<32x2xf32>
    %cst_13 = arith.constant -1.45315206 : f32
    %23 = vector.broadcast %cst_13 : f32 to vector<32x2xf32>
    %24 = arith.addf %23, %22 : vector<32x2xf32>
    %25 = arith.mulf %20, %24 : vector<32x2xf32>
    %cst_14 = arith.constant 1.42141378 : f32
    %26 = vector.broadcast %cst_14 : f32 to vector<32x2xf32>
    %27 = arith.addf %26, %25 : vector<32x2xf32>
    %28 = arith.mulf %20, %27 : vector<32x2xf32>
    %cst_15 = arith.constant -0.284496725 : f32
    %29 = vector.broadcast %cst_15 : f32 to vector<32x2xf32>
    %30 = arith.addf %29, %28 : vector<32x2xf32>
    %31 = arith.mulf %20, %30 : vector<32x2xf32>
    %cst_16 = arith.constant 0.254829586 : f32
    %32 = vector.broadcast %cst_16 : f32 to vector<32x2xf32>
    %33 = arith.addf %32, %31 : vector<32x2xf32>
    %34 = arith.mulf %20, %33 : vector<32x2xf32>
    %cst_17 = arith.constant 0.000000e+00 : f32
    %35 = vector.broadcast %cst_17 : f32 to vector<32x2xf32>
    %36 = arith.subf %35, %14 : vector<32x2xf32>
    %37 = arith.mulf %36, %14 : vector<32x2xf32>
    %38 = math.exp %37 : vector<32x2xf32>
    %39 = arith.mulf %34, %38 : vector<32x2xf32>
    %cst_18 = arith.constant 1.000000e+00 : f32
    %40 = vector.broadcast %cst_18 : f32 to vector<32x2xf32>
    %41 = arith.subf %40, %39 : vector<32x2xf32>
    %cst_19 = arith.constant 0.000000e+00 : f32
    %42 = vector.broadcast %cst_19 : f32 to vector<32x2xf32>
    %43 = arith.cmpf oge, %9, %42 : vector<32x2xf32>
    %cst_20 = arith.constant 0.000000e+00 : f32
    %44 = vector.broadcast %cst_20 : f32 to vector<32x2xf32>
    %45 = arith.subf %44, %41 : vector<32x2xf32>
    %46 = arith.select %43, %41, %45 : vector<32x2xi1>, vector<32x2xf32>
    %cst_21 = arith.constant 1.000000e+00 : f32
    %47 = vector.broadcast %cst_21 : f32 to vector<32x2xf32>
    %48 = arith.addf %47, %46 : vector<32x2xf32>
    %49 = arith.mulf %7, %48 : vector<32x2xf32>
    %c0_22 = arith.constant 0 : index
    %c0_23 = arith.constant 0 : index
    %50 = vector.load %arg4[%c0_22, %c0_23] : memref<32x2xf32, #tpu.memory_space<vmem>>, vector<32x2xf32>
    tpu.vector_store %arg4[%c0_22, %c0_23], %49 {strides = array<i32>} : memref<32x2xf32, #tpu.memory_space<vmem>>, vector<32x2xf32>,
    return
  }
  func.func @transform_0(%arg0: i32) -> (i32, i32) {
    %c0_i32 = arith.constant 0 : i32
    %c0_i32_0 = arith.constant 0 : i32
    %c0_i32_1 = arith.constant 0 : i32
    return %c0_i32, %c0_i32_0 : i32, i32
  }
  func.func @transform_1(%arg0: i32) -> (i32, i32) {
    %c0_i32 = arith.constant 0 : i32
    %c0_i32_0 = arith.constant 0 : i32
    %c0_i32_1 = arith.constant 0 : i32
    return %c0_i32, %c0_i32_0 : i32, i32
  }
  func.func @transform_2(%arg0: i32) -> (i32, i32) {
    %c0_i32 = arith.constant 0 : i32
    %c0_i32_0 = arith.constant 0 : i32
    %c0_i32_1 = arith.constant 0 : i32
    return %c0_i32, %c0_i32_0 : i32, i32
  }
  func.func @transform_3(%arg0: i32) -> (i32, i32) {
    %c0_i32 = arith.constant 0 : i32
    %c0_i32_0 = arith.constant 0 : i32
    %c0_i32_1 = arith.constant 0 : i32
    return %c0_i32, %c0_i32_0 : i32, i32
  }
}

module attributes {stable_mosaic.version = 11 : i64} {
  func.func @_bmm_kernel(%arg0: i32, %arg1: memref<1x6x2xf32, #tpu.memory_space<vmem>>, %arg2: memref<1x2x16xf32, #tpu.memory_space<vmem>>, %arg3: memref<1x6x16xf32, #tpu.memory_space<vmem>>) attributes {dimension_semantics = [#tpu.dimension_semantics<parallel>], iteration_bounds = array<i64: 2>, scalar_prefetch = 0 : i64, scratch_operands = 0 : i64, tpu.core_type = #tpu.core_type<tc>, window_params = [{transform_indices = @transform_0, window_bounds = array<i64: 1, 6, 2>}, {transform_indices = @transform_1, window_bounds = array<i64: 1, 2, 16>}, {transform_indices = @transform_2, window_bounds = array<i64: 1, 6, 16>}]} {
    %c0 = arith.constant 0 : index
    %c0_0 = arith.constant 0 : index
    %c0_1 = arith.constant 0 : index
    %0 = vector.load %arg1[%c0, %c0_0, %c0_1] : memref<1x6x2xf32, #tpu.memory_space<vmem>>, vector<1x6x2xf32>
    %1 = vector.shape_cast %0 : vector<1x6x2xf32> to vector<6x2xf32>
    %c0_2 = arith.constant 0 : index
    %c0_3 = arith.constant 0 : index
    %c0_4 = arith.constant 0 : index
    %2 = vector.load %arg2[%c0_2, %c0_3, %c0_4] : memref<1x2x16xf32, #tpu.memory_space<vmem>>, vector<1x2x16xf32>
    %3 = vector.shape_cast %2 : vector<1x2x16xf32> to vector<2x16xf32>
    %cst = arith.constant dense<0.000000e+00> : vector<6x16xf32>
    %4 = tpu.matmul %1, %3, %cst {dimension_numbers = #tpu.dot_dimension_numbers<[1], [0], [0], [1], [0, 0, 1, 1], [], []>} : vector<6x2xf32>, vector<2x16xf32>, vector<6x16xf32> -> vector<6x16xf32>
    %c0_5 = arith.constant 0 : index
    %c0_6 = arith.constant 0 : index
    %c0_7 = arith.constant 0 : index
    %5 = vector.load %arg3[%c0_5, %c0_6, %c0_7] : memref<1x6x16xf32, #tpu.memory_space<vmem>>, vector<1x6x16xf32>
    %6 = vector.shape_cast %5 : vector<1x6x16xf32> to vector<6x16xf32>
    %7 = vector.shape_cast %4 : vector<6x16xf32> to vector<1x6x16xf32>
    tpu.vector_store %arg3[%c0_5, %c0_6, %c0_7], %7 {strides = array<i32>} : memref<1x6x16xf32, #tpu.memory_space<vmem>>, vector<1x6x16xf32>,
    return
  }
  func.func @transform_0(%arg0: i32) -> (i32, i32, i32) {
    %c0_i32 = arith.constant 0 : i32
    %c0_i32_0 = arith.constant 0 : i32
    %c0_i32_1 = arith.constant 0 : i32
    return %arg0, %c0_i32, %c0_i32_0 : i32, i32, i32
  }
  func.func @transform_1(%arg0: i32) -> (i32, i32, i32) {
    %c0_i32 = arith.constant 0 : i32
    %c0_i32_0 = arith.constant 0 : i32
    %c0_i32_1 = arith.constant 0 : i32
    return %arg0, %c0_i32, %c0_i32_0 : i32, i32, i32
  }
  func.func @transform_2(%arg0: i32) -> (i32, i32, i32) {
    %c0_i32 = arith.constant 0 : i32
    %c0_i32_0 = arith.constant 0 : i32
    %c0_i32_1 = arith.constant 0 : i32
    return %arg0, %c0_i32, %c0_i32_0 : i32, i32, i32
  }
}

module attributes {stable_mosaic.version = 11 : i64} {
  func.func @kernel(%arg0: i32, %arg1: memref<12x8xf32, #tpu.memory_space<vmem>>, %arg2: memref<8x2xf32, #tpu.memory_space<vmem>>, %arg3: memref<1x2xf32, #tpu.memory_space<vmem>>, %arg4: memref<12x2xf32, #tpu.memory_space<vmem>>) attributes {dimension_semantics = [#tpu.dimension_semantics<arbitrary>], iteration_bounds = array<i64: 1>, scalar_prefetch = 0 : i64, scratch_operands = 0 : i64, tpu.core_type = #tpu.core_type<tc>, window_params = [{pipeline_mode = #tpu.pipeline_mode<synchronous>, transform_indices = @transform_0, window_bounds = array<i64: 12, 8>}, {pipeline_mode = #tpu.pipeline_mode<synchronous>, transform_indices = @transform_1, window_bounds = array<i64: 8, 2>}, {pipeline_mode = #tpu.pipeline_mode<synchronous>, transform_indices = @transform_2, window_bounds = array<i64: 1, 2>}, {pipeline_mode = #tpu.pipeline_mode<synchronous>, transform_indices = @transform_3, window_bounds = array<i64: 12, 2>}]} {
    %c0 = arith.constant 0 : index
    %c0_0 = arith.constant 0 : index
    %0 = vector.load %arg1[%c0, %c0_0] : memref<12x8xf32, #tpu.memory_space<vmem>>, vector<12x8xf32>
    %c0_1 = arith.constant 0 : index
    %c0_2 = arith.constant 0 : index
    %1 = vector.load %arg2[%c0_1, %c0_2] : memref<8x2xf32, #tpu.memory_space<vmem>>, vector<8x2xf32>
    %cst = arith.constant dense<0.000000e+00> : vector<12x2xf32>
    %2 = tpu.matmul %0, %1, %cst {dimension_numbers = #tpu.dot_dimension_numbers<[1], [0], [0], [1], [0, 0, 1, 1], [], []>} : vector<12x8xf32>, vector<8x2xf32>, vector<12x2xf32> -> vector<12x2xf32>
    %c0_3 = arith.constant 0 : index
    %c0_4 = arith.constant 0 : index
    %3 = vector.load %arg3[%c0_3, %c0_4] : memref<1x2xf32, #tpu.memory_space<vmem>>, vector<1x2xf32>
    %4 = vector.broadcast %3 : vector<1x2xf32> to vector<12x2xf32>
    %5 = arith.addf %2, %4 : vector<12x2xf32>
    %c0_5 = arith.constant 0 : index
    %c0_6 = arith.constant 0 : index
    %6 = vector.load %arg4[%c0_5, %c0_6] : memref<12x2xf32, #tpu.memory_space<vmem>>, vector<12x2xf32>
    tpu.vector_store %arg4[%c0_5, %c0_6], %5 {strides = array<i32>} : memref<12x2xf32, #tpu.memory_space<vmem>>, vector<12x2xf32>,
    return
  }
  func.func @transform_0(%arg0: i32) -> (i32, i32) {
    %c0_i32 = arith.constant 0 : i32
    %c0_i32_0 = arith.constant 0 : i32
    %c0_i32_1 = arith.constant 0 : i32
    return %c0_i32, %c0_i32_0 : i32, i32
  }
  func.func @transform_1(%arg0: i32) -> (i32, i32) {
    %c0_i32 = arith.constant 0 : i32
    %c0_i32_0 = arith.constant 0 : i32
    %c0_i32_1 = arith.constant 0 : i32
    return %c0_i32, %c0_i32_0 : i32, i32
  }
  func.func @transform_2(%arg0: i32) -> (i32, i32) {
    %c0_i32 = arith.constant 0 : i32
    %c0_i32_0 = arith.constant 0 : i32
    %c0_i32_1 = arith.constant 0 : i32
    return %c0_i32, %c0_i32_0 : i32, i32
  }
  func.func @transform_3(%arg0: i32) -> (i32, i32) {
    %c0_i32 = arith.constant 0 : i32
    %c0_i32_0 = arith.constant 0 : i32
    %c0_i32_1 = arith.constant 0 : i32
    return %c0_i32, %c0_i32_0 : i32, i32
  }
}

module attributes {stable_mosaic.version = 11 : i64} {
  func.func @kernel(%arg0: i32, %arg1: memref<32x54xf32, #tpu.memory_space<vmem>>, %arg2: memref<54x12xf32, #tpu.memory_space<vmem>>, %arg3: memref<1x12xf32, #tpu.memory_space<vmem>>, %arg4: memref<1x12xf32, #tpu.memory_space<vmem>>, %arg5: memref<32x12xf32, #tpu.memory_space<vmem>>) attributes {dimension_semantics = [#tpu.dimension_semantics<arbitrary>], iteration_bounds = array<i64: 1>, scalar_prefetch = 0 : i64, scratch_operands = 0 : i64, tpu.core_type = #tpu.core_type<tc>, window_params = [{pipeline_mode = #tpu.pipeline_mode<synchronous>, transform_indices = @transform_0, window_bounds = array<i64: 32, 54>}, {pipeline_mode = #tpu.pipeline_mode<synchronous>, transform_indices = @transform_1, window_bounds = array<i64: 54, 12>}, {pipeline_mode = #tpu.pipeline_mode<synchronous>, transform_indices = @transform_2, window_bounds = array<i64: 1, 12>}, {pipeline_mode = #tpu.pipeline_mode<synchronous>, transform_indices = @transform_3, window_bounds = array<i64: 1, 12>}, {pipeline_mode = #tpu.pipeline_mode<synchronous>, transform_indices = @transform_4, window_bounds = array<i64: 32, 12>}]} {
    %c0 = arith.constant 0 : index
    %c0_0 = arith.constant 0 : index
    %0 = vector.load %arg1[%c0, %c0_0] : memref<32x54xf32, #tpu.memory_space<vmem>>, vector<32x54xf32>
    %c0_1 = arith.constant 0 : index
    %c0_2 = arith.constant 0 : index
    %1 = vector.load %arg2[%c0_1, %c0_2] : memref<54x12xf32, #tpu.memory_space<vmem>>, vector<54x12xf32>
    %cst = arith.constant dense<0.000000e+00> : vector<32x12xf32>
    %2 = tpu.matmul %0, %1, %cst {dimension_numbers = #tpu.dot_dimension_numbers<[1], [0], [0], [1], [0, 0, 1, 1], [], []>} : vector<32x54xf32>, vector<54x12xf32>, vector<32x12xf32> -> vector<32x12xf32>
    %c0_3 = arith.constant 0 : index
    %c0_4 = arith.constant 0 : index
    %3 = vector.load %arg3[%c0_3, %c0_4] : memref<1x12xf32, #tpu.memory_space<vmem>>, vector<1x12xf32>
    %c0_5 = arith.constant 0 : index
    %c0_6 = arith.constant 0 : index
    %4 = vector.load %arg4[%c0_5, %c0_6] : memref<1x12xf32, #tpu.memory_space<vmem>>, vector<1x12xf32>
    %cst_7 = arith.constant dense<0.000000e+00> : vector<32xf32>
    %5 = vector.multi_reduction <add>, %2, %cst_7 [1] : vector<32x12xf32> to vector<32xf32>
    %6 = vector.shape_cast %5 : vector<32xf32> to vector<32x1xf32>
    %cst_8 = arith.constant 1.200000e+01 : f32
    %7 = vector.broadcast %cst_8 : f32 to vector<32x1xf32>
    %8 = arith.divf %6, %7 : vector<32x1xf32>
    %9 = vector.broadcast %8 : vector<32x1xf32> to vector<32x12xf32>
    %10 = arith.subf %2, %9 : vector<32x12xf32>
    %11 = arith.mulf %10, %10 : vector<32x12xf32>
    %cst_9 = arith.constant dense<0.000000e+00> : vector<32xf32>
    %12 = vector.multi_reduction <add>, %11, %cst_9 [1] : vector<32x12xf32> to vector<32xf32>
    %13 = vector.shape_cast %12 : vector<32xf32> to vector<32x1xf32>
    %cst_10 = arith.constant 1.200000e+01 : f32
    %14 = vector.broadcast %cst_10 : f32 to vector<32x1xf32>
    %15 = arith.divf %13, %14 : vector<32x1xf32>
    %cst_11 = arith.constant 9.99999974E-6 : f32
    %16 = vector.broadcast %cst_11 : f32 to vector<32x1xf32>
    %17 = arith.addf %15, %16 : vector<32x1xf32>
    %18 = math.rsqrt %17 : vector<32x1xf32>
    %19 = vector.broadcast %18 : vector<32x1xf32> to vector<32x12xf32>
    %20 = arith.mulf %10, %19 : vector<32x12xf32>
    %21 = vector.broadcast %3 : vector<1x12xf32> to vector<32x12xf32>
    %22 = arith.mulf %20, %21 : vector<32x12xf32>
    %23 = vector.broadcast %4 : vector<1x12xf32> to vector<32x12xf32>
    %24 = arith.addf %22, %23 : vector<32x12xf32>
    %cst_12 = arith.constant 5.000000e-01 : f32
    %25 = vector.broadcast %cst_12 : f32 to vector<32x12xf32>
    %26 = arith.mulf %25, %24 : vector<32x12xf32>
    %cst_13 = arith.constant 0.707106769 : f32
    %27 = vector.broadcast %cst_13 : f32 to vector<32x12xf32>
    %28 = arith.mulf %24, %27 : vector<32x12xf32>
    %cst_14 = arith.constant 0.000000e+00 : f32
    %29 = vector.broadcast %cst_14 : f32 to vector<32x12xf32>
    %30 = arith.cmpf oge, %28, %29 : vector<32x12xf32>
    %cst_15 = arith.constant 0.000000e+00 : f32
    %31 = vector.broadcast %cst_15 : f32 to vector<32x12xf32>
    %32 = arith.subf %31, %28 : vector<32x12xf32>
    %33 = arith.select %30, %28, %32 : vector<32x12xi1>, vector<32x12xf32>
    %cst_16 = arith.constant 0.327591091 : f32
    %34 = vector.broadcast %cst_16 : f32 to vector<32x12xf32>
    %35 = arith.mulf %34, %33 : vector<32x12xf32>
    %cst_17 = arith.constant 1.000000e+00 : f32
    %36 = vector.broadcast %cst_17 : f32 to vector<32x12xf32>
    %37 = arith.addf %36, %35 : vector<32x12xf32>
    %cst_18 = arith.constant 1.000000e+00 : f32
    %38 = vector.broadcast %cst_18 : f32 to vector<32x12xf32>
    %39 = arith.divf %38, %37 : vector<32x12xf32>
    %cst_19 = arith.constant 1.06140542 : f32
    %40 = vector.broadcast %cst_19 : f32 to vector<32x12xf32>
    %41 = arith.mulf %39, %40 : vector<32x12xf32>
    %cst_20 = arith.constant -1.45315206 : f32
    %42 = vector.broadcast %cst_20 : f32 to vector<32x12xf32>
    %43 = arith.addf %42, %41 : vector<32x12xf32>
    %44 = arith.mulf %39, %43 : vector<32x12xf32>
    %cst_21 = arith.constant 1.42141378 : f32
    %45 = vector.broadcast %cst_21 : f32 to vector<32x12xf32>
    %46 = arith.addf %45, %44 : vector<32x12xf32>
    %47 = arith.mulf %39, %46 : vector<32x12xf32>
    %cst_22 = arith.constant -0.284496725 : f32
    %48 = vector.broadcast %cst_22 : f32 to vector<32x12xf32>
    %49 = arith.addf %48, %47 : vector<32x12xf32>
    %50 = arith.mulf %39, %49 : vector<32x12xf32>
    %cst_23 = arith.constant 0.254829586 : f32
    %51 = vector.broadcast %cst_23 : f32 to vector<32x12xf32>
    %52 = arith.addf %51, %50 : vector<32x12xf32>
    %53 = arith.mulf %39, %52 : vector<32x12xf32>
    %cst_24 = arith.constant 0.000000e+00 : f32
    %54 = vector.broadcast %cst_24 : f32 to vector<32x12xf32>
    %55 = arith.subf %54, %33 : vector<32x12xf32>
    %56 = arith.mulf %55, %33 : vector<32x12xf32>
    %57 = math.exp %56 : vector<32x12xf32>
    %58 = arith.mulf %53, %57 : vector<32x12xf32>
    %cst_25 = arith.constant 1.000000e+00 : f32
    %59 = vector.broadcast %cst_25 : f32 to vector<32x12xf32>
    %60 = arith.subf %59, %58 : vector<32x12xf32>
    %cst_26 = arith.constant 0.000000e+00 : f32
    %61 = vector.broadcast %cst_26 : f32 to vector<32x12xf32>
    %62 = arith.cmpf oge, %28, %61 : vector<32x12xf32>
    %cst_27 = arith.constant 0.000000e+00 : f32
    %63 = vector.broadcast %cst_27 : f32 to vector<32x12xf32>
    %64 = arith.subf %63, %60 : vector<32x12xf32>
    %65 = arith.select %62, %60, %64 : vector<32x12xi1>, vector<32x12xf32>
    %cst_28 = arith.constant 1.000000e+00 : f32
    %66 = vector.broadcast %cst_28 : f32 to vector<32x12xf32>
    %67 = arith.addf %66, %65 : vector<32x12xf32>
    %68 = arith.mulf %26, %67 : vector<32x12xf32>
    %c0_29 = arith.constant 0 : index
    %c0_30 = arith.constant 0 : index
    %69 = vector.load %arg5[%c0_29, %c0_30] : memref<32x12xf32, #tpu.memory_space<vmem>>, vector<32x12xf32>
    tpu.vector_store %arg5[%c0_29, %c0_30], %68 {strides = array<i32>} : memref<32x12xf32, #tpu.memory_space<vmem>>, vector<32x12xf32>,
    return
  }
  func.func @transform_0(%arg0: i32) -> (i32, i32) {
    %c0_i32 = arith.constant 0 : i32
    %c0_i32_0 = arith.constant 0 : i32
    %c0_i32_1 = arith.constant 0 : i32
    return %c0_i32, %c0_i32_0 : i32, i32
  }
  func.func @transform_1(%arg0: i32) -> (i32, i32) {
    %c0_i32 = arith.constant 0 : i32
    %c0_i32_0 = arith.constant 0 : i32
    %c0_i32_1 = arith.constant 0 : i32
    return %c0_i32, %c0_i32_0 : i32, i32
  }
  func.func @transform_2(%arg0: i32) -> (i32, i32) {
    %c0_i32 = arith.constant 0 : i32
    %c0_i32_0 = arith.constant 0 : i32
    %c0_i32_1 = arith.constant 0 : i32
    return %c0_i32, %c0_i32_0 : i32, i32
  }
  func.func @transform_3(%arg0: i32) -> (i32, i32) {
    %c0_i32 = arith.constant 0 : i32
    %c0_i32_0 = arith.constant 0 : i32
    %c0_i32_1 = arith.constant 0 : i32
    return %c0_i32, %c0_i32_0 : i32, i32
  }
  func.func @transform_4(%arg0: i32) -> (i32, i32) {
    %c0_i32 = arith.constant 0 : i32
    %c0_i32_0 = arith.constant 0 : i32
    %c0_i32_1 = arith.constant 0 : i32
    return %c0_i32, %c0_i32_0 : i32, i32
  }
}

module attributes {stable_mosaic.version = 11 : i64} {
  func.func @kernel(%arg0: i32, %arg1: memref<32x54xf32, #tpu.memory_space<vmem>>, %arg2: memref<54x6xf32, #tpu.memory_space<vmem>>, %arg3: memref<1x6xf32, #tpu.memory_space<vmem>>, %arg4: memref<1x6xf32, #tpu.memory_space<vmem>>, %arg5: memref<32x6xf32, #tpu.memory_space<vmem>>) attributes {dimension_semantics = [#tpu.dimension_semantics<arbitrary>], iteration_bounds = array<i64: 1>, scalar_prefetch = 0 : i64, scratch_operands = 0 : i64, tpu.core_type = #tpu.core_type<tc>, window_params = [{pipeline_mode = #tpu.pipeline_mode<synchronous>, transform_indices = @transform_0, window_bounds = array<i64: 32, 54>}, {pipeline_mode = #tpu.pipeline_mode<synchronous>, transform_indices = @transform_1, window_bounds = array<i64: 54, 6>}, {pipeline_mode = #tpu.pipeline_mode<synchronous>, transform_indices = @transform_2, window_bounds = array<i64: 1, 6>}, {pipeline_mode = #tpu.pipeline_mode<synchronous>, transform_indices = @transform_3, window_bounds = array<i64: 1, 6>}, {pipeline_mode = #tpu.pipeline_mode<synchronous>, transform_indices = @transform_4, window_bounds = array<i64: 32, 6>}]} {
    %c0 = arith.constant 0 : index
    %c0_0 = arith.constant 0 : index
    %0 = vector.load %arg1[%c0, %c0_0] : memref<32x54xf32, #tpu.memory_space<vmem>>, vector<32x54xf32>
    %c0_1 = arith.constant 0 : index
    %c0_2 = arith.constant 0 : index
    %1 = vector.load %arg2[%c0_1, %c0_2] : memref<54x6xf32, #tpu.memory_space<vmem>>, vector<54x6xf32>
    %cst = arith.constant dense<0.000000e+00> : vector<32x6xf32>
    %2 = tpu.matmul %0, %1, %cst {dimension_numbers = #tpu.dot_dimension_numbers<[1], [0], [0], [1], [0, 0, 1, 1], [], []>} : vector<32x54xf32>, vector<54x6xf32>, vector<32x6xf32> -> vector<32x6xf32>
    %c0_3 = arith.constant 0 : index
    %c0_4 = arith.constant 0 : index
    %3 = vector.load %arg3[%c0_3, %c0_4] : memref<1x6xf32, #tpu.memory_space<vmem>>, vector<1x6xf32>
    %c0_5 = arith.constant 0 : index
    %c0_6 = arith.constant 0 : index
    %4 = vector.load %arg4[%c0_5, %c0_6] : memref<1x6xf32, #tpu.memory_space<vmem>>, vector<1x6xf32>
    %cst_7 = arith.constant dense<0.000000e+00> : vector<32xf32>
    %5 = vector.multi_reduction <add>, %2, %cst_7 [1] : vector<32x6xf32> to vector<32xf32>
    %6 = vector.shape_cast %5 : vector<32xf32> to vector<32x1xf32>
    %cst_8 = arith.constant 6.000000e+00 : f32
    %7 = vector.broadcast %cst_8 : f32 to vector<32x1xf32>
    %8 = arith.divf %6, %7 : vector<32x1xf32>
    %9 = vector.broadcast %8 : vector<32x1xf32> to vector<32x6xf32>
    %10 = arith.subf %2, %9 : vector<32x6xf32>
    %11 = arith.mulf %10, %10 : vector<32x6xf32>
    %cst_9 = arith.constant dense<0.000000e+00> : vector<32xf32>
    %12 = vector.multi_reduction <add>, %11, %cst_9 [1] : vector<32x6xf32> to vector<32xf32>
    %13 = vector.shape_cast %12 : vector<32xf32> to vector<32x1xf32>
    %cst_10 = arith.constant 6.000000e+00 : f32
    %14 = vector.broadcast %cst_10 : f32 to vector<32x1xf32>
    %15 = arith.divf %13, %14 : vector<32x1xf32>
    %cst_11 = arith.constant 9.99999974E-6 : f32
    %16 = vector.broadcast %cst_11 : f32 to vector<32x1xf32>
    %17 = arith.addf %15, %16 : vector<32x1xf32>
    %18 = math.rsqrt %17 : vector<32x1xf32>
    %19 = vector.broadcast %18 : vector<32x1xf32> to vector<32x6xf32>
    %20 = arith.mulf %10, %19 : vector<32x6xf32>
    %21 = vector.broadcast %3 : vector<1x6xf32> to vector<32x6xf32>
    %22 = arith.mulf %20, %21 : vector<32x6xf32>
    %23 = vector.broadcast %4 : vector<1x6xf32> to vector<32x6xf32>
    %24 = arith.addf %22, %23 : vector<32x6xf32>
    %cst_12 = arith.constant 5.000000e-01 : f32
    %25 = vector.broadcast %cst_12 : f32 to vector<32x6xf32>
    %26 = arith.mulf %25, %24 : vector<32x6xf32>
    %cst_13 = arith.constant 0.707106769 : f32
    %27 = vector.broadcast %cst_13 : f32 to vector<32x6xf32>
    %28 = arith.mulf %24, %27 : vector<32x6xf32>
    %cst_14 = arith.constant 0.000000e+00 : f32
    %29 = vector.broadcast %cst_14 : f32 to vector<32x6xf32>
    %30 = arith.cmpf oge, %28, %29 : vector<32x6xf32>
    %cst_15 = arith.constant 0.000000e+00 : f32
    %31 = vector.broadcast %cst_15 : f32 to vector<32x6xf32>
    %32 = arith.subf %31, %28 : vector<32x6xf32>
    %33 = arith.select %30, %28, %32 : vector<32x6xi1>, vector<32x6xf32>
    %cst_16 = arith.constant 0.327591091 : f32
    %34 = vector.broadcast %cst_16 : f32 to vector<32x6xf32>
    %35 = arith.mulf %34, %33 : vector<32x6xf32>
    %cst_17 = arith.constant 1.000000e+00 : f32
    %36 = vector.broadcast %cst_17 : f32 to vector<32x6xf32>
    %37 = arith.addf %36, %35 : vector<32x6xf32>
    %cst_18 = arith.constant 1.000000e+00 : f32
    %38 = vector.broadcast %cst_18 : f32 to vector<32x6xf32>
    %39 = arith.divf %38, %37 : vector<32x6xf32>
    %cst_19 = arith.constant 1.06140542 : f32
    %40 = vector.broadcast %cst_19 : f32 to vector<32x6xf32>
    %41 = arith.mulf %39, %40 : vector<32x6xf32>
    %cst_20 = arith.constant -1.45315206 : f32
    %42 = vector.broadcast %cst_20 : f32 to vector<32x6xf32>
    %43 = arith.addf %42, %41 : vector<32x6xf32>
    %44 = arith.mulf %39, %43 : vector<32x6xf32>
    %cst_21 = arith.constant 1.42141378 : f32
    %45 = vector.broadcast %cst_21 : f32 to vector<32x6xf32>
    %46 = arith.addf %45, %44 : vector<32x6xf32>
    %47 = arith.mulf %39, %46 : vector<32x6xf32>
    %cst_22 = arith.constant -0.284496725 : f32
    %48 = vector.broadcast %cst_22 : f32 to vector<32x6xf32>
    %49 = arith.addf %48, %47 : vector<32x6xf32>
    %50 = arith.mulf %39, %49 : vector<32x6xf32>
    %cst_23 = arith.constant 0.254829586 : f32
    %51 = vector.broadcast %cst_23 : f32 to vector<32x6xf32>
    %52 = arith.addf %51, %50 : vector<32x6xf32>
    %53 = arith.mulf %39, %52 : vector<32x6xf32>
    %cst_24 = arith.constant 0.000000e+00 : f32
    %54 = vector.broadcast %cst_24 : f32 to vector<32x6xf32>
    %55 = arith.subf %54, %33 : vector<32x6xf32>
    %56 = arith.mulf %55, %33 : vector<32x6xf32>
    %57 = math.exp %56 : vector<32x6xf32>
    %58 = arith.mulf %53, %57 : vector<32x6xf32>
    %cst_25 = arith.constant 1.000000e+00 : f32
    %59 = vector.broadcast %cst_25 : f32 to vector<32x6xf32>
    %60 = arith.subf %59, %58 : vector<32x6xf32>
    %cst_26 = arith.constant 0.000000e+00 : f32
    %61 = vector.broadcast %cst_26 : f32 to vector<32x6xf32>
    %62 = arith.cmpf oge, %28, %61 : vector<32x6xf32>
    %cst_27 = arith.constant 0.000000e+00 : f32
    %63 = vector.broadcast %cst_27 : f32 to vector<32x6xf32>
    %64 = arith.subf %63, %60 : vector<32x6xf32>
    %65 = arith.select %62, %60, %64 : vector<32x6xi1>, vector<32x6xf32>
    %cst_28 = arith.constant 1.000000e+00 : f32
    %66 = vector.broadcast %cst_28 : f32 to vector<32x6xf32>
    %67 = arith.addf %66, %65 : vector<32x6xf32>
    %68 = arith.mulf %26, %67 : vector<32x6xf32>
    %c0_29 = arith.constant 0 : index
    %c0_30 = arith.constant 0 : index
    %69 = vector.load %arg5[%c0_29, %c0_30] : memref<32x6xf32, #tpu.memory_space<vmem>>, vector<32x6xf32>
    tpu.vector_store %arg5[%c0_29, %c0_30], %68 {strides = array<i32>} : memref<32x6xf32, #tpu.memory_space<vmem>>, vector<32x6xf32>,
    return
  }
  func.func @transform_0(%arg0: i32) -> (i32, i32) {
    %c0_i32 = arith.constant 0 : i32
    %c0_i32_0 = arith.constant 0 : i32
    %c0_i32_1 = arith.constant 0 : i32
    return %c0_i32, %c0_i32_0 : i32, i32
  }
  func.func @transform_1(%arg0: i32) -> (i32, i32) {
    %c0_i32 = arith.constant 0 : i32
    %c0_i32_0 = arith.constant 0 : i32
    %c0_i32_1 = arith.constant 0 : i32
    return %c0_i32, %c0_i32_0 : i32, i32
  }
  func.func @transform_2(%arg0: i32) -> (i32, i32) {
    %c0_i32 = arith.constant 0 : i32
    %c0_i32_0 = arith.constant 0 : i32
    %c0_i32_1 = arith.constant 0 : i32
    return %c0_i32, %c0_i32_0 : i32, i32
  }
  func.func @transform_3(%arg0: i32) -> (i32, i32) {
    %c0_i32 = arith.constant 0 : i32
    %c0_i32_0 = arith.constant 0 : i32
    %c0_i32_1 = arith.constant 0 : i32
    return %c0_i32, %c0_i32_0 : i32, i32
  }
  func.func @transform_4(%arg0: i32) -> (i32, i32) {
    %c0_i32 = arith.constant 0 : i32
    %c0_i32_0 = arith.constant 0 : i32
    %c0_i32_1 = arith.constant 0 : i32
    return %c0_i32, %c0_i32_0 : i32, i32
  }
}

module attributes {stable_mosaic.version = 11 : i64} {
  func.func @kernel(%arg0: i32, %arg1: memref<32x108xf32, #tpu.memory_space<vmem>>, %arg2: memref<108x12xf32, #tpu.memory_space<vmem>>, %arg3: memref<1x12xf32, #tpu.memory_space<vmem>>, %arg4: memref<1x12xf32, #tpu.memory_space<vmem>>, %arg5: memref<32x12xf32, #tpu.memory_space<vmem>>) attributes {dimension_semantics = [#tpu.dimension_semantics<arbitrary>], iteration_bounds = array<i64: 1>, scalar_prefetch = 0 : i64, scratch_operands = 0 : i64, tpu.core_type = #tpu.core_type<tc>, window_params = [{pipeline_mode = #tpu.pipeline_mode<synchronous>, transform_indices = @transform_0, window_bounds = array<i64: 32, 108>}, {pipeline_mode = #tpu.pipeline_mode<synchronous>, transform_indices = @transform_1, window_bounds = array<i64: 108, 12>}, {pipeline_mode = #tpu.pipeline_mode<synchronous>, transform_indices = @transform_2, window_bounds = array<i64: 1, 12>}, {pipeline_mode = #tpu.pipeline_mode<synchronous>, transform_indices = @transform_3, window_bounds = array<i64: 1, 12>}, {pipeline_mode = #tpu.pipeline_mode<synchronous>, transform_indices = @transform_4, window_bounds = array<i64: 32, 12>}]} {
    %c0 = arith.constant 0 : index
    %c0_0 = arith.constant 0 : index
    %0 = vector.load %arg1[%c0, %c0_0] : memref<32x108xf32, #tpu.memory_space<vmem>>, vector<32x108xf32>
    %c0_1 = arith.constant 0 : index
    %c0_2 = arith.constant 0 : index
    %1 = vector.load %arg2[%c0_1, %c0_2] : memref<108x12xf32, #tpu.memory_space<vmem>>, vector<108x12xf32>
    %cst = arith.constant dense<0.000000e+00> : vector<32x12xf32>
    %2 = tpu.matmul %0, %1, %cst {dimension_numbers = #tpu.dot_dimension_numbers<[1], [0], [0], [1], [0, 0, 1, 1], [], []>} : vector<32x108xf32>, vector<108x12xf32>, vector<32x12xf32> -> vector<32x12xf32>
    %c0_3 = arith.constant 0 : index
    %c0_4 = arith.constant 0 : index
    %3 = vector.load %arg3[%c0_3, %c0_4] : memref<1x12xf32, #tpu.memory_space<vmem>>, vector<1x12xf32>
    %c0_5 = arith.constant 0 : index
    %c0_6 = arith.constant 0 : index
    %4 = vector.load %arg4[%c0_5, %c0_6] : memref<1x12xf32, #tpu.memory_space<vmem>>, vector<1x12xf32>
    %cst_7 = arith.constant dense<0.000000e+00> : vector<32xf32>
    %5 = vector.multi_reduction <add>, %2, %cst_7 [1] : vector<32x12xf32> to vector<32xf32>
    %6 = vector.shape_cast %5 : vector<32xf32> to vector<32x1xf32>
    %cst_8 = arith.constant 1.200000e+01 : f32
    %7 = vector.broadcast %cst_8 : f32 to vector<32x1xf32>
    %8 = arith.divf %6, %7 : vector<32x1xf32>
    %9 = vector.broadcast %8 : vector<32x1xf32> to vector<32x12xf32>
    %10 = arith.subf %2, %9 : vector<32x12xf32>
    %11 = arith.mulf %10, %10 : vector<32x12xf32>
    %cst_9 = arith.constant dense<0.000000e+00> : vector<32xf32>
    %12 = vector.multi_reduction <add>, %11, %cst_9 [1] : vector<32x12xf32> to vector<32xf32>
    %13 = vector.shape_cast %12 : vector<32xf32> to vector<32x1xf32>
    %cst_10 = arith.constant 1.200000e+01 : f32
    %14 = vector.broadcast %cst_10 : f32 to vector<32x1xf32>
    %15 = arith.divf %13, %14 : vector<32x1xf32>
    %cst_11 = arith.constant 9.99999974E-6 : f32
    %16 = vector.broadcast %cst_11 : f32 to vector<32x1xf32>
    %17 = arith.addf %15, %16 : vector<32x1xf32>
    %18 = math.rsqrt %17 : vector<32x1xf32>
    %19 = vector.broadcast %18 : vector<32x1xf32> to vector<32x12xf32>
    %20 = arith.mulf %10, %19 : vector<32x12xf32>
    %21 = vector.broadcast %3 : vector<1x12xf32> to vector<32x12xf32>
    %22 = arith.mulf %20, %21 : vector<32x12xf32>
    %23 = vector.broadcast %4 : vector<1x12xf32> to vector<32x12xf32>
    %24 = arith.addf %22, %23 : vector<32x12xf32>
    %cst_12 = arith.constant 5.000000e-01 : f32
    %25 = vector.broadcast %cst_12 : f32 to vector<32x12xf32>
    %26 = arith.mulf %25, %24 : vector<32x12xf32>
    %cst_13 = arith.constant 0.707106769 : f32
    %27 = vector.broadcast %cst_13 : f32 to vector<32x12xf32>
    %28 = arith.mulf %24, %27 : vector<32x12xf32>
    %cst_14 = arith.constant 0.000000e+00 : f32
    %29 = vector.broadcast %cst_14 : f32 to vector<32x12xf32>
    %30 = arith.cmpf oge, %28, %29 : vector<32x12xf32>
    %cst_15 = arith.constant 0.000000e+00 : f32
    %31 = vector.broadcast %cst_15 : f32 to vector<32x12xf32>
    %32 = arith.subf %31, %28 : vector<32x12xf32>
    %33 = arith.select %30, %28, %32 : vector<32x12xi1>, vector<32x12xf32>
    %cst_16 = arith.constant 0.327591091 : f32
    %34 = vector.broadcast %cst_16 : f32 to vector<32x12xf32>
    %35 = arith.mulf %34, %33 : vector<32x12xf32>
    %cst_17 = arith.constant 1.000000e+00 : f32
    %36 = vector.broadcast %cst_17 : f32 to vector<32x12xf32>
    %37 = arith.addf %36, %35 : vector<32x12xf32>
    %cst_18 = arith.constant 1.000000e+00 : f32
    %38 = vector.broadcast %cst_18 : f32 to vector<32x12xf32>
    %39 = arith.divf %38, %37 : vector<32x12xf32>
    %cst_19 = arith.constant 1.06140542 : f32
    %40 = vector.broadcast %cst_19 : f32 to vector<32x12xf32>
    %41 = arith.mulf %39, %40 : vector<32x12xf32>
    %cst_20 = arith.constant -1.45315206 : f32
    %42 = vector.broadcast %cst_20 : f32 to vector<32x12xf32>
    %43 = arith.addf %42, %41 : vector<32x12xf32>
    %44 = arith.mulf %39, %43 : vector<32x12xf32>
    %cst_21 = arith.constant 1.42141378 : f32
    %45 = vector.broadcast %cst_21 : f32 to vector<32x12xf32>
    %46 = arith.addf %45, %44 : vector<32x12xf32>
    %47 = arith.mulf %39, %46 : vector<32x12xf32>
    %cst_22 = arith.constant -0.284496725 : f32
    %48 = vector.broadcast %cst_22 : f32 to vector<32x12xf32>
    %49 = arith.addf %48, %47 : vector<32x12xf32>
    %50 = arith.mulf %39, %49 : vector<32x12xf32>
    %cst_23 = arith.constant 0.254829586 : f32
    %51 = vector.broadcast %cst_23 : f32 to vector<32x12xf32>
    %52 = arith.addf %51, %50 : vector<32x12xf32>
    %53 = arith.mulf %39, %52 : vector<32x12xf32>
    %cst_24 = arith.constant 0.000000e+00 : f32
    %54 = vector.broadcast %cst_24 : f32 to vector<32x12xf32>
    %55 = arith.subf %54, %33 : vector<32x12xf32>
    %56 = arith.mulf %55, %33 : vector<32x12xf32>
    %57 = math.exp %56 : vector<32x12xf32>
    %58 = arith.mulf %53, %57 : vector<32x12xf32>
    %cst_25 = arith.constant 1.000000e+00 : f32
    %59 = vector.broadcast %cst_25 : f32 to vector<32x12xf32>
    %60 = arith.subf %59, %58 : vector<32x12xf32>
    %cst_26 = arith.constant 0.000000e+00 : f32
    %61 = vector.broadcast %cst_26 : f32 to vector<32x12xf32>
    %62 = arith.cmpf oge, %28, %61 : vector<32x12xf32>
    %cst_27 = arith.constant 0.000000e+00 : f32
    %63 = vector.broadcast %cst_27 : f32 to vector<32x12xf32>
    %64 = arith.subf %63, %60 : vector<32x12xf32>
    %65 = arith.select %62, %60, %64 : vector<32x12xi1>, vector<32x12xf32>
    %cst_28 = arith.constant 1.000000e+00 : f32
    %66 = vector.broadcast %cst_28 : f32 to vector<32x12xf32>
    %67 = arith.addf %66, %65 : vector<32x12xf32>
    %68 = arith.mulf %26, %67 : vector<32x12xf32>
    %c0_29 = arith.constant 0 : index
    %c0_30 = arith.constant 0 : index
    %69 = vector.load %arg5[%c0_29, %c0_30] : memref<32x12xf32, #tpu.memory_space<vmem>>, vector<32x12xf32>
    tpu.vector_store %arg5[%c0_29, %c0_30], %68 {strides = array<i32>} : memref<32x12xf32, #tpu.memory_space<vmem>>, vector<32x12xf32>,
    return
  }
  func.func @transform_0(%arg0: i32) -> (i32, i32) {
    %c0_i32 = arith.constant 0 : i32
    %c0_i32_0 = arith.constant 0 : i32
    %c0_i32_1 = arith.constant 0 : i32
    return %c0_i32, %c0_i32_0 : i32, i32
  }
  func.func @transform_1(%arg0: i32) -> (i32, i32) {
    %c0_i32 = arith.constant 0 : i32
    %c0_i32_0 = arith.constant 0 : i32
    %c0_i32_1 = arith.constant 0 : i32
    return %c0_i32, %c0_i32_0 : i32, i32
  }
  func.func @transform_2(%arg0: i32) -> (i32, i32) {
    %c0_i32 = arith.constant 0 : i32
    %c0_i32_0 = arith.constant 0 : i32
    %c0_i32_1 = arith.constant 0 : i32
    return %c0_i32, %c0_i32_0 : i32, i32
  }
  func.func @transform_3(%arg0: i32) -> (i32, i32) {
    %c0_i32 = arith.constant 0 : i32
    %c0_i32_0 = arith.constant 0 : i32
    %c0_i32_1 = arith.constant 0 : i32
    return %c0_i32, %c0_i32_0 : i32, i32
  }
  func.func @transform_4(%arg0: i32) -> (i32, i32) {
    %c0_i32 = arith.constant 0 : i32
    %c0_i32_0 = arith.constant 0 : i32
    %c0_i32_1 = arith.constant 0 : i32
    return %c0_i32, %c0_i32_0 : i32, i32
  }
}

module attributes {stable_mosaic.version = 11 : i64} {
  func.func @kernel(%arg0: i32, %arg1: memref<32x108xf32, #tpu.memory_space<vmem>>, %arg2: memref<108x12xf32, #tpu.memory_space<vmem>>, %arg3: memref<1x12xf32, #tpu.memory_space<vmem>>, %arg4: memref<1x12xf32, #tpu.memory_space<vmem>>, %arg5: memref<32x12xf32, #tpu.memory_space<vmem>>, %arg6: memref<32x12xf32, #tpu.memory_space<vmem>>) attributes {dimension_semantics = [#tpu.dimension_semantics<arbitrary>], iteration_bounds = array<i64: 1>, scalar_prefetch = 0 : i64, scratch_operands = 0 : i64, tpu.core_type = #tpu.core_type<tc>, window_params = [{pipeline_mode = #tpu.pipeline_mode<synchronous>, transform_indices = @transform_0, window_bounds = array<i64: 32, 108>}, {pipeline_mode = #tpu.pipeline_mode<synchronous>, transform_indices = @transform_1, window_bounds = array<i64: 108, 12>}, {pipeline_mode = #tpu.pipeline_mode<synchronous>, transform_indices = @transform_2, window_bounds = array<i64: 1, 12>}, {pipeline_mode = #tpu.pipeline_mode<synchronous>, transform_indices = @transform_3, window_bounds = array<i64: 1, 12>}, {pipeline_mode = #tpu.pipeline_mode<synchronous>, transform_indices = @transform_4, window_bounds = array<i64: 32, 12>}, {pipeline_mode = #tpu.pipeline_mode<synchronous>, transform_indices = @transform_5, window_bounds = array<i64: 32, 12>}]} {
    %c0 = arith.constant 0 : index
    %c0_0 = arith.constant 0 : index
    %0 = vector.load %arg1[%c0, %c0_0] : memref<32x108xf32, #tpu.memory_space<vmem>>, vector<32x108xf32>
    %c0_1 = arith.constant 0 : index
    %c0_2 = arith.constant 0 : index
    %1 = vector.load %arg2[%c0_1, %c0_2] : memref<108x12xf32, #tpu.memory_space<vmem>>, vector<108x12xf32>
    %cst = arith.constant dense<0.000000e+00> : vector<32x12xf32>
    %2 = tpu.matmul %0, %1, %cst {dimension_numbers = #tpu.dot_dimension_numbers<[1], [0], [0], [1], [0, 0, 1, 1], [], []>} : vector<32x108xf32>, vector<108x12xf32>, vector<32x12xf32> -> vector<32x12xf32>
    %c0_3 = arith.constant 0 : index
    %c0_4 = arith.constant 0 : index
    %3 = vector.load %arg3[%c0_3, %c0_4] : memref<1x12xf32, #tpu.memory_space<vmem>>, vector<1x12xf32>
    %c0_5 = arith.constant 0 : index
    %c0_6 = arith.constant 0 : index
    %4 = vector.load %arg4[%c0_5, %c0_6] : memref<1x12xf32, #tpu.memory_space<vmem>>, vector<1x12xf32>
    %cst_7 = arith.constant dense<0.000000e+00> : vector<32xf32>
    %5 = vector.multi_reduction <add>, %2, %cst_7 [1] : vector<32x12xf32> to vector<32xf32>
    %6 = vector.shape_cast %5 : vector<32xf32> to vector<32x1xf32>
    %cst_8 = arith.constant 1.200000e+01 : f32
    %7 = vector.broadcast %cst_8 : f32 to vector<32x1xf32>
    %8 = arith.divf %6, %7 : vector<32x1xf32>
    %9 = vector.broadcast %8 : vector<32x1xf32> to vector<32x12xf32>
    %10 = arith.subf %2, %9 : vector<32x12xf32>
    %11 = arith.mulf %10, %10 : vector<32x12xf32>
    %cst_9 = arith.constant dense<0.000000e+00> : vector<32xf32>
    %12 = vector.multi_reduction <add>, %11, %cst_9 [1] : vector<32x12xf32> to vector<32xf32>
    %13 = vector.shape_cast %12 : vector<32xf32> to vector<32x1xf32>
    %cst_10 = arith.constant 1.200000e+01 : f32
    %14 = vector.broadcast %cst_10 : f32 to vector<32x1xf32>
    %15 = arith.divf %13, %14 : vector<32x1xf32>
    %cst_11 = arith.constant 9.99999974E-6 : f32
    %16 = vector.broadcast %cst_11 : f32 to vector<32x1xf32>
    %17 = arith.addf %15, %16 : vector<32x1xf32>
    %18 = math.rsqrt %17 : vector<32x1xf32>
    %19 = vector.broadcast %18 : vector<32x1xf32> to vector<32x12xf32>
    %20 = arith.mulf %10, %19 : vector<32x12xf32>
    %21 = vector.broadcast %3 : vector<1x12xf32> to vector<32x12xf32>
    %22 = arith.mulf %20, %21 : vector<32x12xf32>
    %23 = vector.broadcast %4 : vector<1x12xf32> to vector<32x12xf32>
    %24 = arith.addf %22, %23 : vector<32x12xf32>
    %c0_12 = arith.constant 0 : index
    %c0_13 = arith.constant 0 : index
    %25 = vector.load %arg5[%c0_12, %c0_13] : memref<32x12xf32, #tpu.memory_space<vmem>>, vector<32x12xf32>
    %26 = arith.addf %24, %25 : vector<32x12xf32>
    %c0_14 = arith.constant 0 : index
    %c0_15 = arith.constant 0 : index
    %27 = vector.load %arg6[%c0_14, %c0_15] : memref<32x12xf32, #tpu.memory_space<vmem>>, vector<32x12xf32>
    tpu.vector_store %arg6[%c0_14, %c0_15], %26 {strides = array<i32>} : memref<32x12xf32, #tpu.memory_space<vmem>>, vector<32x12xf32>,
    return
  }
  func.func @transform_0(%arg0: i32) -> (i32, i32) {
    %c0_i32 = arith.constant 0 : i32
    %c0_i32_0 = arith.constant 0 : i32
    %c0_i32_1 = arith.constant 0 : i32
    return %c0_i32, %c0_i32_0 : i32, i32
  }
  func.func @transform_1(%arg0: i32) -> (i32, i32) {
    %c0_i32 = arith.constant 0 : i32
    %c0_i32_0 = arith.constant 0 : i32
    %c0_i32_1 = arith.constant 0 : i32
    return %c0_i32, %c0_i32_0 : i32, i32
  }
  func.func @transform_2(%arg0: i32) -> (i32, i32) {
    %c0_i32 = arith.constant 0 : i32
    %c0_i32_0 = arith.constant 0 : i32
    %c0_i32_1 = arith.constant 0 : i32
    return %c0_i32, %c0_i32_0 : i32, i32
  }
  func.func @transform_3(%arg0: i32) -> (i32, i32) {
    %c0_i32 = arith.constant 0 : i32
    %c0_i32_0 = arith.constant 0 : i32
    %c0_i32_1 = arith.constant 0 : i32
    return %c0_i32, %c0_i32_0 : i32, i32
  }
  func.func @transform_4(%arg0: i32) -> (i32, i32) {
    %c0_i32 = arith.constant 0 : i32
    %c0_i32_0 = arith.constant 0 : i32
    %c0_i32_1 = arith.constant 0 : i32
    return %c0_i32, %c0_i32_0 : i32, i32
  }
  func.func @transform_5(%arg0: i32) -> (i32, i32) {
    %c0_i32 = arith.constant 0 : i32
    %c0_i32_0 = arith.constant 0 : i32
    %c0_i32_1 = arith.constant 0 : i32
    return %c0_i32, %c0_i32_0 : i32, i32
  }
}

module attributes {stable_mosaic.version = 11 : i64} {
  func.func @kernel(%arg0: i32, %arg1: memref<8x108xf32, #tpu.memory_space<vmem>>, %arg2: memref<108x12xf32, #tpu.memory_space<vmem>>, %arg3: memref<1x12xf32, #tpu.memory_space<vmem>>, %arg4: memref<1x12xf32, #tpu.memory_space<vmem>>, %arg5: memref<8x12xf32, #tpu.memory_space<vmem>>) attributes {dimension_semantics = [#tpu.dimension_semantics<arbitrary>], iteration_bounds = array<i64: 1>, scalar_prefetch = 0 : i64, scratch_operands = 0 : i64, tpu.core_type = #tpu.core_type<tc>, window_params = [{pipeline_mode = #tpu.pipeline_mode<synchronous>, transform_indices = @transform_0, window_bounds = array<i64: 8, 108>}, {pipeline_mode = #tpu.pipeline_mode<synchronous>, transform_indices = @transform_1, window_bounds = array<i64: 108, 12>}, {pipeline_mode = #tpu.pipeline_mode<synchronous>, transform_indices = @transform_2, window_bounds = array<i64: 1, 12>}, {pipeline_mode = #tpu.pipeline_mode<synchronous>, transform_indices = @transform_3, window_bounds = array<i64: 1, 12>}, {pipeline_mode = #tpu.pipeline_mode<synchronous>, transform_indices = @transform_4, window_bounds = array<i64: 8, 12>}]} {
    %c0 = arith.constant 0 : index
    %c0_0 = arith.constant 0 : index
    %0 = vector.load %arg1[%c0, %c0_0] : memref<8x108xf32, #tpu.memory_space<vmem>>, vector<8x108xf32>
    %c0_1 = arith.constant 0 : index
    %c0_2 = arith.constant 0 : index
    %1 = vector.load %arg2[%c0_1, %c0_2] : memref<108x12xf32, #tpu.memory_space<vmem>>, vector<108x12xf32>
    %cst = arith.constant dense<0.000000e+00> : vector<8x12xf32>
    %2 = tpu.matmul %0, %1, %cst {dimension_numbers = #tpu.dot_dimension_numbers<[1], [0], [0], [1], [0, 0, 1, 1], [], []>} : vector<8x108xf32>, vector<108x12xf32>, vector<8x12xf32> -> vector<8x12xf32>
    %c0_3 = arith.constant 0 : index
    %c0_4 = arith.constant 0 : index
    %3 = vector.load %arg3[%c0_3, %c0_4] : memref<1x12xf32, #tpu.memory_space<vmem>>, vector<1x12xf32>
    %c0_5 = arith.constant 0 : index
    %c0_6 = arith.constant 0 : index
    %4 = vector.load %arg4[%c0_5, %c0_6] : memref<1x12xf32, #tpu.memory_space<vmem>>, vector<1x12xf32>
    %cst_7 = arith.constant dense<0.000000e+00> : vector<8xf32>
    %5 = vector.multi_reduction <add>, %2, %cst_7 [1] : vector<8x12xf32> to vector<8xf32>
    %6 = vector.shape_cast %5 : vector<8xf32> to vector<8x1xf32>
    %cst_8 = arith.constant 1.200000e+01 : f32
    %7 = vector.broadcast %cst_8 : f32 to vector<8x1xf32>
    %8 = arith.divf %6, %7 : vector<8x1xf32>
    %9 = vector.broadcast %8 : vector<8x1xf32> to vector<8x12xf32>
    %10 = arith.subf %2, %9 : vector<8x12xf32>
    %11 = arith.mulf %10, %10 : vector<8x12xf32>
    %cst_9 = arith.constant dense<0.000000e+00> : vector<8xf32>
    %12 = vector.multi_reduction <add>, %11, %cst_9 [1] : vector<8x12xf32> to vector<8xf32>
    %13 = vector.shape_cast %12 : vector<8xf32> to vector<8x1xf32>
    %cst_10 = arith.constant 1.200000e+01 : f32
    %14 = vector.broadcast %cst_10 : f32 to vector<8x1xf32>
    %15 = arith.divf %13, %14 : vector<8x1xf32>
    %cst_11 = arith.constant 9.99999974E-6 : f32
    %16 = vector.broadcast %cst_11 : f32 to vector<8x1xf32>
    %17 = arith.addf %15, %16 : vector<8x1xf32>
    %18 = math.rsqrt %17 : vector<8x1xf32>
    %19 = vector.broadcast %18 : vector<8x1xf32> to vector<8x12xf32>
    %20 = arith.mulf %10, %19 : vector<8x12xf32>
    %21 = vector.broadcast %3 : vector<1x12xf32> to vector<8x12xf32>
    %22 = arith.mulf %20, %21 : vector<8x12xf32>
    %23 = vector.broadcast %4 : vector<1x12xf32> to vector<8x12xf32>
    %24 = arith.addf %22, %23 : vector<8x12xf32>
    %cst_12 = arith.constant 5.000000e-01 : f32
    %25 = vector.broadcast %cst_12 : f32 to vector<8x12xf32>
    %26 = arith.mulf %25, %24 : vector<8x12xf32>
    %cst_13 = arith.constant 0.707106769 : f32
    %27 = vector.broadcast %cst_13 : f32 to vector<8x12xf32>
    %28 = arith.mulf %24, %27 : vector<8x12xf32>
    %cst_14 = arith.constant 0.000000e+00 : f32
    %29 = vector.broadcast %cst_14 : f32 to vector<8x12xf32>
    %30 = arith.cmpf oge, %28, %29 : vector<8x12xf32>
    %cst_15 = arith.constant 0.000000e+00 : f32
    %31 = vector.broadcast %cst_15 : f32 to vector<8x12xf32>
    %32 = arith.subf %31, %28 : vector<8x12xf32>
    %33 = arith.select %30, %28, %32 : vector<8x12xi1>, vector<8x12xf32>
    %cst_16 = arith.constant 0.327591091 : f32
    %34 = vector.broadcast %cst_16 : f32 to vector<8x12xf32>
    %35 = arith.mulf %34, %33 : vector<8x12xf32>
    %cst_17 = arith.constant 1.000000e+00 : f32
    %36 = vector.broadcast %cst_17 : f32 to vector<8x12xf32>
    %37 = arith.addf %36, %35 : vector<8x12xf32>
    %cst_18 = arith.constant 1.000000e+00 : f32
    %38 = vector.broadcast %cst_18 : f32 to vector<8x12xf32>
    %39 = arith.divf %38, %37 : vector<8x12xf32>
    %cst_19 = arith.constant 1.06140542 : f32
    %40 = vector.broadcast %cst_19 : f32 to vector<8x12xf32>
    %41 = arith.mulf %39, %40 : vector<8x12xf32>
    %cst_20 = arith.constant -1.45315206 : f32
    %42 = vector.broadcast %cst_20 : f32 to vector<8x12xf32>
    %43 = arith.addf %42, %41 : vector<8x12xf32>
    %44 = arith.mulf %39, %43 : vector<8x12xf32>
    %cst_21 = arith.constant 1.42141378 : f32
    %45 = vector.broadcast %cst_21 : f32 to vector<8x12xf32>
    %46 = arith.addf %45, %44 : vector<8x12xf32>
    %47 = arith.mulf %39, %46 : vector<8x12xf32>
    %cst_22 = arith.constant -0.284496725 : f32
    %48 = vector.broadcast %cst_22 : f32 to vector<8x12xf32>
    %49 = arith.addf %48, %47 : vector<8x12xf32>
    %50 = arith.mulf %39, %49 : vector<8x12xf32>
    %cst_23 = arith.constant 0.254829586 : f32
    %51 = vector.broadcast %cst_23 : f32 to vector<8x12xf32>
    %52 = arith.addf %51, %50 : vector<8x12xf32>
    %53 = arith.mulf %39, %52 : vector<8x12xf32>
    %cst_24 = arith.constant 0.000000e+00 : f32
    %54 = vector.broadcast %cst_24 : f32 to vector<8x12xf32>
    %55 = arith.subf %54, %33 : vector<8x12xf32>
    %56 = arith.mulf %55, %33 : vector<8x12xf32>
    %57 = math.exp %56 : vector<8x12xf32>
    %58 = arith.mulf %53, %57 : vector<8x12xf32>
    %cst_25 = arith.constant 1.000000e+00 : f32
    %59 = vector.broadcast %cst_25 : f32 to vector<8x12xf32>
    %60 = arith.subf %59, %58 : vector<8x12xf32>
    %cst_26 = arith.constant 0.000000e+00 : f32
    %61 = vector.broadcast %cst_26 : f32 to vector<8x12xf32>
    %62 = arith.cmpf oge, %28, %61 : vector<8x12xf32>
    %cst_27 = arith.constant 0.000000e+00 : f32
    %63 = vector.broadcast %cst_27 : f32 to vector<8x12xf32>
    %64 = arith.subf %63, %60 : vector<8x12xf32>
    %65 = arith.select %62, %60, %64 : vector<8x12xi1>, vector<8x12xf32>
    %cst_28 = arith.constant 1.000000e+00 : f32
    %66 = vector.broadcast %cst_28 : f32 to vector<8x12xf32>
    %67 = arith.addf %66, %65 : vector<8x12xf32>
    %68 = arith.mulf %26, %67 : vector<8x12xf32>
    %c0_29 = arith.constant 0 : index
    %c0_30 = arith.constant 0 : index
    %69 = vector.load %arg5[%c0_29, %c0_30] : memref<8x12xf32, #tpu.memory_space<vmem>>, vector<8x12xf32>
    tpu.vector_store %arg5[%c0_29, %c0_30], %68 {strides = array<i32>} : memref<8x12xf32, #tpu.memory_space<vmem>>, vector<8x12xf32>,
    return
  }
  func.func @transform_0(%arg0: i32) -> (i32, i32) {
    %c0_i32 = arith.constant 0 : i32
    %c0_i32_0 = arith.constant 0 : i32
    %c0_i32_1 = arith.constant 0 : i32
    return %c0_i32, %c0_i32_0 : i32, i32
  }
  func.func @transform_1(%arg0: i32) -> (i32, i32) {
    %c0_i32 = arith.constant 0 : i32
    %c0_i32_0 = arith.constant 0 : i32
    %c0_i32_1 = arith.constant 0 : i32
    return %c0_i32, %c0_i32_0 : i32, i32
  }
  func.func @transform_2(%arg0: i32) -> (i32, i32) {
    %c0_i32 = arith.constant 0 : i32
    %c0_i32_0 = arith.constant 0 : i32
    %c0_i32_1 = arith.constant 0 : i32
    return %c0_i32, %c0_i32_0 : i32, i32
  }
  func.func @transform_3(%arg0: i32) -> (i32, i32) {
    %c0_i32 = arith.constant 0 : i32
    %c0_i32_0 = arith.constant 0 : i32
    %c0_i32_1 = arith.constant 0 : i32
    return %c0_i32, %c0_i32_0 : i32, i32
  }
  func.func @transform_4(%arg0: i32) -> (i32, i32) {
    %c0_i32 = arith.constant 0 : i32
    %c0_i32_0 = arith.constant 0 : i32
    %c0_i32_1 = arith.constant 0 : i32
    return %c0_i32, %c0_i32_0 : i32, i32
  }
}

module attributes {stable_mosaic.version = 11 : i64} {
  func.func @kernel(%arg0: i32, %arg1: memref<32x540xf32, #tpu.memory_space<vmem>>, %arg2: memref<540x24xf32, #tpu.memory_space<vmem>>, %arg3: memref<1x24xf32, #tpu.memory_space<vmem>>, %arg4: memref<1x24xf32, #tpu.memory_space<vmem>>, %arg5: memref<32x24xf32, #tpu.memory_space<vmem>>) attributes {dimension_semantics = [#tpu.dimension_semantics<arbitrary>], iteration_bounds = array<i64: 1>, scalar_prefetch = 0 : i64, scratch_operands = 0 : i64, tpu.core_type = #tpu.core_type<tc>, window_params = [{pipeline_mode = #tpu.pipeline_mode<synchronous>, transform_indices = @transform_0, window_bounds = array<i64: 32, 540>}, {pipeline_mode = #tpu.pipeline_mode<synchronous>, transform_indices = @transform_1, window_bounds = array<i64: 540, 24>}, {pipeline_mode = #tpu.pipeline_mode<synchronous>, transform_indices = @transform_2, window_bounds = array<i64: 1, 24>}, {pipeline_mode = #tpu.pipeline_mode<synchronous>, transform_indices = @transform_3, window_bounds = array<i64: 1, 24>}, {pipeline_mode = #tpu.pipeline_mode<synchronous>, transform_indices = @transform_4, window_bounds = array<i64: 32, 24>}]} {
    %c0 = arith.constant 0 : index
    %c0_0 = arith.constant 0 : index
    %0 = vector.load %arg1[%c0, %c0_0] : memref<32x540xf32, #tpu.memory_space<vmem>>, vector<32x540xf32>
    %c0_1 = arith.constant 0 : index
    %c0_2 = arith.constant 0 : index
    %1 = vector.load %arg2[%c0_1, %c0_2] : memref<540x24xf32, #tpu.memory_space<vmem>>, vector<540x24xf32>
    %cst = arith.constant dense<0.000000e+00> : vector<32x24xf32>
    %2 = tpu.matmul %0, %1, %cst {dimension_numbers = #tpu.dot_dimension_numbers<[1], [0], [0], [1], [0, 0, 1, 1], [], []>} : vector<32x540xf32>, vector<540x24xf32>, vector<32x24xf32> -> vector<32x24xf32>
    %c0_3 = arith.constant 0 : index
    %c0_4 = arith.constant 0 : index
    %3 = vector.load %arg3[%c0_3, %c0_4] : memref<1x24xf32, #tpu.memory_space<vmem>>, vector<1x24xf32>
    %c0_5 = arith.constant 0 : index
    %c0_6 = arith.constant 0 : index
    %4 = vector.load %arg4[%c0_5, %c0_6] : memref<1x24xf32, #tpu.memory_space<vmem>>, vector<1x24xf32>
    %cst_7 = arith.constant dense<0.000000e+00> : vector<32xf32>
    %5 = vector.multi_reduction <add>, %2, %cst_7 [1] : vector<32x24xf32> to vector<32xf32>
    %6 = vector.shape_cast %5 : vector<32xf32> to vector<32x1xf32>
    %cst_8 = arith.constant 2.400000e+01 : f32
    %7 = vector.broadcast %cst_8 : f32 to vector<32x1xf32>
    %8 = arith.divf %6, %7 : vector<32x1xf32>
    %9 = vector.broadcast %8 : vector<32x1xf32> to vector<32x24xf32>
    %10 = arith.subf %2, %9 : vector<32x24xf32>
    %11 = arith.mulf %10, %10 : vector<32x24xf32>
    %cst_9 = arith.constant dense<0.000000e+00> : vector<32xf32>
    %12 = vector.multi_reduction <add>, %11, %cst_9 [1] : vector<32x24xf32> to vector<32xf32>
    %13 = vector.shape_cast %12 : vector<32xf32> to vector<32x1xf32>
    %cst_10 = arith.constant 2.400000e+01 : f32
    %14 = vector.broadcast %cst_10 : f32 to vector<32x1xf32>
    %15 = arith.divf %13, %14 : vector<32x1xf32>
    %cst_11 = arith.constant 9.99999974E-6 : f32
    %16 = vector.broadcast %cst_11 : f32 to vector<32x1xf32>
    %17 = arith.addf %15, %16 : vector<32x1xf32>
    %18 = math.rsqrt %17 : vector<32x1xf32>
    %19 = vector.broadcast %18 : vector<32x1xf32> to vector<32x24xf32>
    %20 = arith.mulf %10, %19 : vector<32x24xf32>
    %21 = vector.broadcast %3 : vector<1x24xf32> to vector<32x24xf32>
    %22 = arith.mulf %20, %21 : vector<32x24xf32>
    %23 = vector.broadcast %4 : vector<1x24xf32> to vector<32x24xf32>
    %24 = arith.addf %22, %23 : vector<32x24xf32>
    %cst_12 = arith.constant 5.000000e-01 : f32
    %25 = vector.broadcast %cst_12 : f32 to vector<32x24xf32>
    %26 = arith.mulf %25, %24 : vector<32x24xf32>
    %cst_13 = arith.constant 0.707106769 : f32
    %27 = vector.broadcast %cst_13 : f32 to vector<32x24xf32>
    %28 = arith.mulf %24, %27 : vector<32x24xf32>
    %cst_14 = arith.constant 0.000000e+00 : f32
    %29 = vector.broadcast %cst_14 : f32 to vector<32x24xf32>
    %30 = arith.cmpf oge, %28, %29 : vector<32x24xf32>
    %cst_15 = arith.constant 0.000000e+00 : f32
    %31 = vector.broadcast %cst_15 : f32 to vector<32x24xf32>
    %32 = arith.subf %31, %28 : vector<32x24xf32>
    %33 = arith.select %30, %28, %32 : vector<32x24xi1>, vector<32x24xf32>
    %cst_16 = arith.constant 0.327591091 : f32
    %34 = vector.broadcast %cst_16 : f32 to vector<32x24xf32>
    %35 = arith.mulf %34, %33 : vector<32x24xf32>
    %cst_17 = arith.constant 1.000000e+00 : f32
    %36 = vector.broadcast %cst_17 : f32 to vector<32x24xf32>
    %37 = arith.addf %36, %35 : vector<32x24xf32>
    %cst_18 = arith.constant 1.000000e+00 : f32
    %38 = vector.broadcast %cst_18 : f32 to vector<32x24xf32>
    %39 = arith.divf %38, %37 : vector<32x24xf32>
    %cst_19 = arith.constant 1.06140542 : f32
    %40 = vector.broadcast %cst_19 : f32 to vector<32x24xf32>
    %41 = arith.mulf %39, %40 : vector<32x24xf32>
    %cst_20 = arith.constant -1.45315206 : f32
    %42 = vector.broadcast %cst_20 : f32 to vector<32x24xf32>
    %43 = arith.addf %42, %41 : vector<32x24xf32>
    %44 = arith.mulf %39, %43 : vector<32x24xf32>
    %cst_21 = arith.constant 1.42141378 : f32
    %45 = vector.broadcast %cst_21 : f32 to vector<32x24xf32>
    %46 = arith.addf %45, %44 : vector<32x24xf32>
    %47 = arith.mulf %39, %46 : vector<32x24xf32>
    %cst_22 = arith.constant -0.284496725 : f32
    %48 = vector.broadcast %cst_22 : f32 to vector<32x24xf32>
    %49 = arith.addf %48, %47 : vector<32x24xf32>
    %50 = arith.mulf %39, %49 : vector<32x24xf32>
    %cst_23 = arith.constant 0.254829586 : f32
    %51 = vector.broadcast %cst_23 : f32 to vector<32x24xf32>
    %52 = arith.addf %51, %50 : vector<32x24xf32>
    %53 = arith.mulf %39, %52 : vector<32x24xf32>
    %cst_24 = arith.constant 0.000000e+00 : f32
    %54 = vector.broadcast %cst_24 : f32 to vector<32x24xf32>
    %55 = arith.subf %54, %33 : vector<32x24xf32>
    %56 = arith.mulf %55, %33 : vector<32x24xf32>
    %57 = math.exp %56 : vector<32x24xf32>
    %58 = arith.mulf %53, %57 : vector<32x24xf32>
    %cst_25 = arith.constant 1.000000e+00 : f32
    %59 = vector.broadcast %cst_25 : f32 to vector<32x24xf32>
    %60 = arith.subf %59, %58 : vector<32x24xf32>
    %cst_26 = arith.constant 0.000000e+00 : f32
    %61 = vector.broadcast %cst_26 : f32 to vector<32x24xf32>
    %62 = arith.cmpf oge, %28, %61 : vector<32x24xf32>
    %cst_27 = arith.constant 0.000000e+00 : f32
    %63 = vector.broadcast %cst_27 : f32 to vector<32x24xf32>
    %64 = arith.subf %63, %60 : vector<32x24xf32>
    %65 = arith.select %62, %60, %64 : vector<32x24xi1>, vector<32x24xf32>
    %cst_28 = arith.constant 1.000000e+00 : f32
    %66 = vector.broadcast %cst_28 : f32 to vector<32x24xf32>
    %67 = arith.addf %66, %65 : vector<32x24xf32>
    %68 = arith.mulf %26, %67 : vector<32x24xf32>
    %c0_29 = arith.constant 0 : index
    %c0_30 = arith.constant 0 : index
    %69 = vector.load %arg5[%c0_29, %c0_30] : memref<32x24xf32, #tpu.memory_space<vmem>>, vector<32x24xf32>
    tpu.vector_store %arg5[%c0_29, %c0_30], %68 {strides = array<i32>} : memref<32x24xf32, #tpu.memory_space<vmem>>, vector<32x24xf32>,
    return
  }
  func.func @transform_0(%arg0: i32) -> (i32, i32) {
    %c0_i32 = arith.constant 0 : i32
    %c0_i32_0 = arith.constant 0 : i32
    %c0_i32_1 = arith.constant 0 : i32
    return %c0_i32, %c0_i32_0 : i32, i32
  }
  func.func @transform_1(%arg0: i32) -> (i32, i32) {
    %c0_i32 = arith.constant 0 : i32
    %c0_i32_0 = arith.constant 0 : i32
    %c0_i32_1 = arith.constant 0 : i32
    return %c0_i32, %c0_i32_0 : i32, i32
  }
  func.func @transform_2(%arg0: i32) -> (i32, i32) {
    %c0_i32 = arith.constant 0 : i32
    %c0_i32_0 = arith.constant 0 : i32
    %c0_i32_1 = arith.constant 0 : i32
    return %c0_i32, %c0_i32_0 : i32, i32
  }
  func.func @transform_3(%arg0: i32) -> (i32, i32) {
    %c0_i32 = arith.constant 0 : i32
    %c0_i32_0 = arith.constant 0 : i32
    %c0_i32_1 = arith.constant 0 : i32
    return %c0_i32, %c0_i32_0 : i32, i32
  }
  func.func @transform_4(%arg0: i32) -> (i32, i32) {
    %c0_i32 = arith.constant 0 : i32
    %c0_i32_0 = arith.constant 0 : i32
    %c0_i32_1 = arith.constant 0 : i32
    return %c0_i32, %c0_i32_0 : i32, i32
  }
}

module attributes {stable_mosaic.version = 11 : i64} {
  func.func @kernel(%arg0: i32, %arg1: memref<32x24xf32, #tpu.memory_space<vmem>>, %arg2: memref<24x6xf32, #tpu.memory_space<vmem>>, %arg3: memref<32x6xf32, #tpu.memory_space<vmem>>) attributes {dimension_semantics = [#tpu.dimension_semantics<arbitrary>], iteration_bounds = array<i64: 1>, scalar_prefetch = 0 : i64, scratch_operands = 0 : i64, tpu.core_type = #tpu.core_type<tc>, window_params = [{pipeline_mode = #tpu.pipeline_mode<synchronous>, transform_indices = @transform_0, window_bounds = array<i64: 32, 24>}, {pipeline_mode = #tpu.pipeline_mode<synchronous>, transform_indices = @transform_1, window_bounds = array<i64: 24, 6>}, {pipeline_mode = #tpu.pipeline_mode<synchronous>, transform_indices = @transform_2, window_bounds = array<i64: 32, 6>}]} {
    %c0 = arith.constant 0 : index
    %c0_0 = arith.constant 0 : index
    %0 = vector.load %arg1[%c0, %c0_0] : memref<32x24xf32, #tpu.memory_space<vmem>>, vector<32x24xf32>
    %c0_1 = arith.constant 0 : index
    %c0_2 = arith.constant 0 : index
    %1 = vector.load %arg2[%c0_1, %c0_2] : memref<24x6xf32, #tpu.memory_space<vmem>>, vector<24x6xf32>
    %cst = arith.constant dense<0.000000e+00> : vector<32x6xf32>
    %2 = tpu.matmul %0, %1, %cst {dimension_numbers = #tpu.dot_dimension_numbers<[1], [0], [0], [1], [0, 0, 1, 1], [], []>} : vector<32x24xf32>, vector<24x6xf32>, vector<32x6xf32> -> vector<32x6xf32>
    %cst_3 = arith.constant 0.000000e+00 : f32
    %3 = vector.broadcast %cst_3 : f32 to vector<32x6xf32>
    %4 = arith.subf %3, %2 : vector<32x6xf32>
    %5 = math.exp %4 : vector<32x6xf32>
    %cst_4 = arith.constant 1.000000e+00 : f32
    %6 = vector.broadcast %cst_4 : f32 to vector<32x6xf32>
    %7 = arith.addf %6, %5 : vector<32x6xf32>
    %cst_5 = arith.constant 1.000000e+00 : f32
    %8 = vector.broadcast %cst_5 : f32 to vector<32x6xf32>
    %9 = arith.divf %8, %7 : vector<32x6xf32>
    %c0_6 = arith.constant 0 : index
    %c0_7 = arith.constant 0 : index
    %10 = vector.load %arg3[%c0_6, %c0_7] : memref<32x6xf32, #tpu.memory_space<vmem>>, vector<32x6xf32>
    tpu.vector_store %arg3[%c0_6, %c0_7], %9 {strides = array<i32>} : memref<32x6xf32, #tpu.memory_space<vmem>>, vector<32x6xf32>,
    return
  }
  func.func @transform_0(%arg0: i32) -> (i32, i32) {
    %c0_i32 = arith.constant 0 : i32
    %c0_i32_0 = arith.constant 0 : i32
    %c0_i32_1 = arith.constant 0 : i32
    return %c0_i32, %c0_i32_0 : i32, i32
  }
  func.func @transform_1(%arg0: i32) -> (i32, i32) {
    %c0_i32 = arith.constant 0 : i32
    %c0_i32_0 = arith.constant 0 : i32
    %c0_i32_1 = arith.constant 0 : i32
    return %c0_i32, %c0_i32_0 : i32, i32
  }
  func.func @transform_2(%arg0: i32) -> (i32, i32) {
    %c0_i32 = arith.constant 0 : i32
    %c0_i32_0 = arith.constant 0 : i32
    %c0_i32_1 = arith.constant 0 : i32
    return %c0_i32, %c0_i32_0 : i32, i32
  }
}

</mosaic_0001>

<llo_original>
// kernel: offset_generation_forward.33
$region0: #{offset_generation_forward.33}
  #allocation0 [shape = 'u32[]', space=smem, size = 0x4, offset = 0x4, fixed_abs, tag = 'smem constant byte address 0x4 - core index']
  #allocation1 [shape = 'u32[144,128]{1,0:T(1,128)}', space=vmem, size = 0x12000, scoped, tag = 'internal scratch']
  %s0 = inlined_call_operand.vmem [shape: f32[32,8], index: 0, kind: input, shape index: {}]
  %s1 = inlined_call_operand.vmem [shape: f32[1,8], index: 1, kind: input, shape index: {}]
  %s2 = inlined_call_operand.vmem [shape: f32[1,8], index: 2, kind: input, shape index: {}]
  %s3 = inlined_call_operand.vmem [shape: f32[32,8], index: 3, kind: output, shape index: {}]
  %s4 = sld [smem:[#allocation0]]
  $region22: #{offset_generation_forward.33} parent=0
    _
  %s6 = ssub.s32 1, %s4
  %s7 = scalar_select 0, %s6, %s4
  // Predicated region
  $region2: #{offset_generation_forward.33} parent=0 // pred_check
    _
  $region3: #{offset_generation_forward.33} parent=0 // pred_check_branch
    %9 = sbr.rel (0) target = $region5
  $region4: #{offset_generation_forward.33} parent=0 // pred_region
    _
  $region5: #{offset_generation_forward.33} parent=0 // pred_fallthru
    _
  // Predicated region
  $region6: #{offset_generation_forward.33} parent=0 // pred_check
    _
  $region7: #{offset_generation_forward.33} parent=0 // pred_check_branch
    %11 = sbr.rel (0) target = $region9
  $region8: #{offset_generation_forward.33} parent=0 // pred_region
    _
  $region9: #{offset_generation_forward.33} parent=0 // pred_fallthru
    _
  // Predicated region
  $region10: #{offset_generation_forward.33} parent=0 // pred_check
    _
  $region11: #{offset_generation_forward.33} parent=0 // pred_check_branch
    %13 = sbr.rel (0) target = $region13
  $region12: #{offset_generation_forward.33} parent=0 // pred_region
    _
  $region13: #{offset_generation_forward.33} parent=0 // pred_fallthru
    _
  %v14 = vld [vmem:[%s0] sm:$0xff]
  %v15 = vld [vmem:[%s0 + $0x8] sm:$0xff]
  %v16 = vld [vmem:[%s0 + $0x10] sm:$0xff]
  %v17 = vld [vmem:[%s0 + $0x18] sm:$0xff]
  %vm18 = vcmask 64512
  %v19 = vsel %vm18, %v14, 0.0
  %20 = vadd.xlane.f32.xlu0 %v19
  %v21 = vpop.xlane.xlu0 %20
  %v22 = vsel %vm18, %v15, 0.0
  %23 = vadd.xlane.f32.xlu0 %v22
  %v24 = vpop.xlane.xlu0 %23
  %v25 = vsel %vm18, %v16, 0.0
  %26 = vadd.xlane.f32.xlu0 %v25
  %v27 = vpop.xlane.xlu0 %26
  %v28 = vsel %vm18, %v17, 0.0
  %29 = vadd.xlane.f32.xlu0 %v28
  %v30 = vpop.xlane.xlu0 %29
  %v31 = vrcp.pop 8.0
  %v32 = vmul.f32 %v21, %v31
  %v33 = vmul.f32 %v24, %v31
  %v34 = vmul.f32 %v27, %v31
  %v35 = vmul.f32 %v30, %v31
  %v36 = vsub.f32 %v14, %v32
  %v37 = vsub.f32 %v15, %v33
  %v38 = vsub.f32 %v16, %v34
  %v39 = vsub.f32 %v17, %v35
  %v40 = vmul.f32 %v36, %v36
  %v41 = vmul.f32 %v37, %v37
  %v42 = vmul.f32 %v38, %v38
  %v43 = vmul.f32 %v39, %v39
  %v44 = vsel %vm18, %v40, 0.0
  %45 = vadd.xlane.f32.xlu0 %v44
  %v46 = vpop.xlane.xlu0 %45
  %v47 = vsel %vm18, %v41, 0.0
  %48 = vadd.xlane.f32.xlu0 %v47
  %v49 = vpop.xlane.xlu0 %48
  %v50 = vsel %vm18, %v42, 0.0
  %51 = vadd.xlane.f32.xlu0 %v50
  %v52 = vpop.xlane.xlu0 %51
  %v53 = vsel %vm18, %v43, 0.0
  %54 = vadd.xlane.f32.xlu0 %v53
  %v55 = vpop.xlane.xlu0 %54
  %v56 = vmul.f32 %v46, %v31
  %v57 = vmul.f32 %v49, %v31
  %v58 = vmul.f32 %v52, %v31
  %v59 = vmul.f32 %v55, %v31
  %v60 = vadd.f32 %v56, 1e-05
  %v61 = vadd.f32 %v57, 1e-05
  %v62 = vadd.f32 %v58, 1e-05
  %v63 = vadd.f32 %v59, 1e-05
  %v64 = vrsqrt.pop %v60
  %v65 = vrsqrt.pop %v61
  %v66 = vrsqrt.pop %v62
  %v67 = vrsqrt.pop %v63
  %v68 = vmul.f32 %v36, %v64
  %v69 = vmul.f32 %v37, %v65
  %v70 = vmul.f32 %v38, %v66
  %v71 = vmul.f32 %v39, %v67
  %v72 = vld [vmem:[%s1] sm:$0x1]
  %v74 = vlaneseq
  %v75 = vshrl.u32 %v74, 7
  %v76 = vsub.s32 0, %v75
  %v77 = vrot.slane %v72, %v76
  %v79 = vmul.f32 %v68, %v77
  %v80 = vmul.f32 %v69, %v77
  %v81 = vmul.f32 %v70, %v77
  %v82 = vmul.f32 %v71, %v77
  %v83 = vld [vmem:[%s2] sm:$0x1]
  %v85 = vlaneseq
  %v86 = vshrl.u32 %v85, 7
  %v87 = vsub.s32 0, %v86
  %v88 = vrot.slane %v83, %v87
  %v90 = vadd.f32 %v79, %v88
  %v91 = vadd.f32 %v80, %v88
  %v92 = vadd.f32 %v81, %v88
  %v93 = vadd.f32 %v82, %v88
  %94 = vst.msk [vmem:[%s3] sm:$0xff] %vm18, %v90
  %95 = vst.msk [vmem:[%s3 + $0x8] sm:$0xff] %vm18, %v91
  %96 = vst.msk [vmem:[%s3 + $0x10] sm:$0xff] %vm18, %v92
  %97 = vst.msk [vmem:[%s3 + $0x18] sm:$0xff] %vm18, %v93
  // Predicated region
  $region14: #{offset_generation_forward.33} parent=0 // pred_check
    _
  $region15: #{offset_generation_forward.33} parent=0 // pred_check_branch
    %99 = sbr.rel (0) target = $region17
  $region16: #{offset_generation_forward.33} parent=0 // pred_region
    _
  $region17: #{offset_generation_forward.33} parent=0 // pred_fallthru
    _
  // Predicated region
  $region18: #{offset_generation_forward.33} parent=0 // pred_check
    _
  $region19: #{offset_generation_forward.33} parent=0 // pred_check_branch
    %101 = sbr.rel (0) target = $region21
  $region20: #{offset_generation_forward.33} parent=0 // pred_region
    _
  $region21: #{offset_generation_forward.33} parent=0 // pred_fallthru
    _

// kernel: offset_generation_forward.32
$region0: #{offset_generation_forward.32}
  #allocation0 [shape = 'u32[]', space=smem, size = 0x4, offset = 0x4, fixed_abs, tag = 'smem constant byte address 0x4 - core index']
  #allocation1 [shape = 'u32[144,128]{1,0:T(1,128)}', space=vmem, size = 0x12000, scoped, tag = 'internal scratch']
  %s0 = inlined_call_operand.vmem [shape: f32[32,8], index: 0, kind: input, shape index: {}]
  %s1 = inlined_call_operand.vmem [shape: f32[8,8], index: 1, kind: input, shape index: {}]
  %s2 = inlined_call_operand.vmem [shape: f32[1,8], index: 2, kind: input, shape index: {}]
  %s3 = inlined_call_operand.vmem [shape: f32[32,8], index: 3, kind: output, shape index: {}]
  %s4 = sld [smem:[#allocation0]]
  $region22: #{offset_generation_forward.32} parent=0
    _
  %s6 = ssub.s32 1, %s4
  %s7 = scalar_select 0, %s6, %s4
  // Predicated region
  $region2: #{offset_generation_forward.32} parent=0 // pred_check
    _
  $region3: #{offset_generation_forward.32} parent=0 // pred_check_branch
    %9 = sbr.rel (0) target = $region5
  $region4: #{offset_generation_forward.32} parent=0 // pred_region
    _
  $region5: #{offset_generation_forward.32} parent=0 // pred_fallthru
    _
  // Predicated region
  $region6: #{offset_generation_forward.32} parent=0 // pred_check
    _
  $region7: #{offset_generation_forward.32} parent=0 // pred_check_branch
    %11 = sbr.rel (0) target = $region9
  $region8: #{offset_generation_forward.32} parent=0 // pred_region
    _
  $region9: #{offset_generation_forward.32} parent=0 // pred_fallthru
    _
  // Predicated region
  $region10: #{offset_generation_forward.32} parent=0 // pred_check
    _
  $region11: #{offset_generation_forward.32} parent=0 // pred_check_branch
    %13 = sbr.rel (0) target = $region13
  $region12: #{offset_generation_forward.32} parent=0 // pred_region
    _
  $region13: #{offset_generation_forward.32} parent=0 // pred_fallthru
    _
  %v14 = vld [vmem:[%s0] sm:$0xff]
  %v15 = vld [vmem:[%s0 + $0x8] sm:$0xff]
  %v16 = vld [vmem:[%s0 + $0x10] sm:$0xff]
  %v17 = vld [vmem:[%s0 + $0x18] sm:$0xff]
  %v18 = vld [vmem:[%s1] sm:$0xff]
  %v19 = vld [vmem:[%s2] sm:$0x1]
  %v21 = vlaneseq
  %v22 = vshrl.u32 %v21, 7
  %v23 = vsub.s32 0, %v22
  %v24 = vrot.slane %v19, %v23
  %vm26 = vcmask 64512
  %v28 = vsel %vm26, %v14, 0
  %v31 = vsel %vm26, %v15, 0
  %v34 = vsel %vm26, %v16, 0
  %v37 = vsel %vm26, %v17, 0
  %39 = vmatprep.subr.mxu0 0.0
  %40 = vmatpush1.msra.mxu0 0.0
  %41 = vmatprep.subr.mxu0 0.0
  %42 = vmatpush1.msra.mxu0 0.0
  %43 = vmatprep.subr.mxu0 0.0
  %44 = vmatpush1.msra.mxu0 0.0
  %45 = vmatprep.subr.mxu0 0.0
  %46 = vmatpush1.msra.mxu0 0.0
  %47 = vmatprep.subr.mxu0 0.0
  %48 = vmatpush1.msra.mxu0 0.0
  %49 = vmatprep.subr.mxu0 0.0
  %50 = vmatpush1.msra.mxu0 0.0
  %51 = vmatprep.subr.mxu0 0.0
  %52 = vmatpush1.msra.mxu0 0.0
  %53 = vmatprep.subr.mxu0 0.0
  %54 = vmatpush1.msra.mxu0 0.0
  %55 = vmatprep.subr.mxu0 0.0
  %56 = vmatpush1.msra.mxu0 0.0
  %57 = vmatprep.subr.mxu0 0.0
  %58 = vmatpush1.msra.mxu0 0.0
  %59 = vmatprep.subr.mxu0 0.0
  %60 = vmatpush1.msra.mxu0 0.0
  %61 = vmatprep.subr.mxu0 0.0
  %62 = vmatpush1.msra.mxu0 0.0
  %63 = vmatprep.subr.mxu0 0.0
  %64 = vmatpush1.msra.mxu0 0.0
  %65 = vmatprep.subr.mxu0 0.0
  %66 = vmatpush1.msra.mxu0 0.0
  %67 = vmatprep.subr.mxu0 0.0
  %68 = vmatpush1.msra.mxu0 0.0
  %69 = vmatprep.subr.mxu0 0.0
  %70 = vmatpush1.msra.mxu0 %v18
  %71 = vmatprep.subr.mxu0 0.0
  %72 = vmatpush2.msra.mxu0 0.0
  %73 = vmatprep.subr.mxu0 0.0
  %74 = vmatpush2.msra.mxu0 0.0
  %75 = vmatprep.subr.mxu0 0.0
  %76 = vmatpush2.msra.mxu0 0.0
  %77 = vmatprep.subr.mxu0 0.0
  %78 = vmatpush2.msra.mxu0 0.0
  %79 = vmatprep.subr.mxu0 0.0
  %80 = vmatpush2.msra.mxu0 0.0
  %81 = vmatprep.subr.mxu0 0.0
  %82 = vmatpush2.msra.mxu0 0.0
  %83 = vmatprep.subr.mxu0 0.0
  %84 = vmatpush2.msra.mxu0 0.0
  %85 = vmatprep.subr.mxu0 0.0
  %86 = vmatpush2.msra.mxu0 0.0
  %87 = vmatprep.subr.mxu0 0.0
  %88 = vmatpush2.msra.mxu0 0.0
  %89 = vmatprep.subr.mxu0 0.0
  %90 = vmatpush2.msra.mxu0 0.0
  %91 = vmatprep.subr.mxu0 0.0
  %92 = vmatpush2.msra.mxu0 0.0
  %93 = vmatprep.subr.mxu0 0.0
  %94 = vmatpush2.msra.mxu0 0.0
  %95 = vmatprep.subr.mxu0 0.0
  %96 = vmatpush2.msra.mxu0 0.0
  %97 = vmatprep.subr.mxu0 0.0
  %98 = vmatpush2.msra.mxu0 0.0
  %99 = vmatprep.subr.mxu0 0.0
  %100 = vmatpush2.msra.mxu0 0.0
  %101 = vmatprep.subr.mxu0 0.0
  %102 = vmatpush2.msra.mxu0 0.0
  %103 = vmatprep.mubr.f32.mxu0 0.0
  %104 = vmatmul.mubr.f32.gmra.mxu0 %v28
  %v105 = vpop.f32.mrf.mxu0
  %v106 = vadd.f32 %v24, %v105
  %v107 = vpop.f32.mrf.mxu0
  %108 = vmatprep.mubr.f32.mxu0 0.0
  %109 = vmatmul.mubr.f32.gmra.mxu0 %v31
  %v110 = vpop.f32.mrf.mxu0
  %v111 = vadd.f32 %v24, %v110
  %v112 = vpop.f32.mrf.mxu0
  %113 = vmatprep.mubr.f32.mxu0 0.0
  %114 = vmatmul.mubr.f32.gmra.mxu0 %v34
  %v115 = vpop.f32.mrf.mxu0
  %v116 = vadd.f32 %v24, %v115
  %v117 = vpop.f32.mrf.mxu0
  %118 = vmatprep.mubr.f32.mxu0 0.0
  %119 = vmatmul.mubr.f32.gmra.mxu0 %v37
  %v120 = vpop.f32.mrf.mxu0
  %v121 = vadd.f32 %v24, %v120
  %v122 = vpop.f32.mrf.mxu0
  %123 = vdwg.mxu0
  %v124 = vsel %vm26, %v106, -inf
  %125 = vmax.xlane.f32.xlu0 %v124
  %v126 = vpop.xlane.xlu0 %125
  %v127 = vsel %vm26, %v111, -inf
  %128 = vmax.xlane.f32.xlu0 %v127
  %v129 = vpop.xlane.xlu0 %128
  %v130 = vsel %vm26, %v116, -inf
  %131 = vmax.xlane.f32.xlu0 %v130
  %v132 = vpop.xlane.xlu0 %131
  %v133 = vsel %vm26, %v121, -inf
  %134 = vmax.xlane.f32.xlu0 %v133
  %v135 = vpop.xlane.xlu0 %134
  %v136 = vsub.f32 %v106, %v126
  %v137 = vsub.f32 %v111, %v129
  %v138 = vsub.f32 %v116, %v132
  %v139 = vsub.f32 %v121, %v135
  %v140 = vmul.f32 %v136, 1.442695
  %v141 = vpow.pop %v140
  %v142 = vmul.f32 %v137, 1.442695
  %v143 = vpow.pop %v142
  %v144 = vmul.f32 %v138, 1.442695
  %v145 = vpow.pop %v144
  %v146 = vmul.f32 %v139, 1.442695
  %v147 = vpow.pop %v146
  %v148 = vsel %vm26, %v141, 0.0
  %149 = vadd.xlane.f32.xlu0 %v148
  %v150 = vpop.xlane.xlu0 %149
  %v151 = vsel %vm26, %v143, 0.0
  %152 = vadd.xlane.f32.xlu0 %v151
  %v153 = vpop.xlane.xlu0 %152
  %v154 = vsel %vm26, %v145, 0.0
  %155 = vadd.xlane.f32.xlu0 %v154
  %v156 = vpop.xlane.xlu0 %155
  %v157 = vsel %vm26, %v147, 0.0
  %158 = vadd.xlane.f32.xlu0 %v157
  %v159 = vpop.xlane.xlu0 %158
  %v160 = vrcp.pop %v150
  %v161 = vrcp.pop %v153
  %v162 = vrcp.pop %v156
  %v163 = vrcp.pop %v159
  %v164 = vmul.f32 %v141, %v160
  %v165 = vmul.f32 %v143, %v161
  %v166 = vmul.f32 %v145, %v162
  %v167 = vmul.f32 %v147, %v163
  %168 = vst.msk [vmem:[%s3] sm:$0xff] %vm26, %v164
  %169 = vst.msk [vmem:[%s3 + $0x8] sm:$0xff] %vm26, %v165
  %170 = vst.msk [vmem:[%s3 + $0x10] sm:$0xff] %vm26, %v166
  %171 = vst.msk [vmem:[%s3 + $0x18] sm:$0xff] %vm26, %v167
  // Predicated region
  $region14: #{offset_generation_forward.32} parent=0 // pred_check
    _
  $region15: #{offset_generation_forward.32} parent=0 // pred_check_branch
    %173 = sbr.rel (0) target = $region17
  $region16: #{offset_generation_forward.32} parent=0 // pred_region
    _
  $region17: #{offset_generation_forward.32} parent=0 // pred_fallthru
    _
  // Predicated region
  $region18: #{offset_generation_forward.32} parent=0 // pred_check
    _
  $region19: #{offset_generation_forward.32} parent=0 // pred_check_branch
    %175 = sbr.rel (0) target = $region21
  $region20: #{offset_generation_forward.32} parent=0 // pred_region
    _
  $region21: #{offset_generation_forward.32} parent=0 // pred_fallthru
    _

// kernel: offset_generation_forward.34
$region0: #{offset_generation_forward.34}
  #allocation0 [shape = 'u32[]', space=smem, size = 0x4, offset = 0x4, fixed_abs, tag = 'smem constant byte address 0x4 - core index']
  #allocation1 [shape = 'u32[144,128]{1,0:T(1,128)}', space=vmem, size = 0x12000, scoped, tag = 'internal scratch']
  %s0 = inlined_call_operand.vmem [shape: f32[32,72], index: 0, kind: input, shape index: {}]
  %s1 = inlined_call_operand.vmem [shape: f32[72,4], index: 1, kind: input, shape index: {}]
  %s2 = inlined_call_operand.vmem [shape: f32[1,4], index: 2, kind: input, shape index: {}]
  %s3 = inlined_call_operand.vmem [shape: f32[32,4], index: 3, kind: output, shape index: {}]
  %s4 = sld [smem:[#allocation0]]
  $region22: #{offset_generation_forward.34} parent=0
    _
  %s6 = ssub.s32 1, %s4
  %s7 = scalar_select 0, %s6, %s4
  // Predicated region
  $region2: #{offset_generation_forward.34} parent=0 // pred_check
    _
  $region3: #{offset_generation_forward.34} parent=0 // pred_check_branch
    %9 = sbr.rel (0) target = $region5
  $region4: #{offset_generation_forward.34} parent=0 // pred_region
    _
  $region5: #{offset_generation_forward.34} parent=0 // pred_fallthru
    _
  // Predicated region
  $region6: #{offset_generation_forward.34} parent=0 // pred_check
    _
  $region7: #{offset_generation_forward.34} parent=0 // pred_check_branch
    %11 = sbr.rel (0) target = $region9
  $region8: #{offset_generation_forward.34} parent=0 // pred_region
    _
  $region9: #{offset_generation_forward.34} parent=0 // pred_fallthru
    _
  // Predicated region
  $region10: #{offset_generation_forward.34} parent=0 // pred_check
    _
  $region11: #{offset_generation_forward.34} parent=0 // pred_check_branch
    %13 = sbr.rel (0) target = $region13
  $region12: #{offset_generation_forward.34} parent=0 // pred_region
    _
  $region13: #{offset_generation_forward.34} parent=0 // pred_fallthru
    _
  %v14 = vld [vmem:[%s0] sm:$0xff]
  %v15 = vld [vmem:[%s0 + $0x8] sm:$0xff]
  %v16 = vld [vmem:[%s0 + $0x10] sm:$0xff]
  %v17 = vld [vmem:[%s0 + $0x18] sm:$0xff]
  %v18 = vld [vmem:[%s1] sm:$0xff]
  %v19 = vld [vmem:[%s1 + $0x8] sm:$0xff]
  %v20 = vld [vmem:[%s1 + $0x10] sm:$0xff]
  %v21 = vld [vmem:[%s1 + $0x18] sm:$0xff]
  %v22 = vld [vmem:[%s1 + $0x20] sm:$0xff]
  %v23 = vld [vmem:[%s1 + $0x28] sm:$0xff]
  %v24 = vld [vmem:[%s1 + $0x30] sm:$0xff]
  %v25 = vld [vmem:[%s1 + $0x38] sm:$0xff]
  %v26 = vld [vmem:[%s1 + $0x40] sm:$0xff]
  %v27 = vld [vmem:[%s2] sm:$0x1]
  %v29 = vlaneseq
  %v30 = vshrl.u32 %v29, 7
  %v31 = vsub.s32 0, %v30
  %v32 = vrot.slane %v27, %v31
  %vm34 = vcmask 588800
  %v36 = vsel %vm34, %v14, 0
  %v39 = vsel %vm34, %v15, 0
  %v42 = vsel %vm34, %v16, 0
  %v45 = vsel %vm34, %v17, 0
  %47 = vmatprep.subr.mxu0 0.0
  %48 = vmatpush1.msra.mxu0 0.0
  %49 = vmatprep.subr.mxu0 0.0
  %50 = vmatpush1.msra.mxu0 0.0
  %51 = vmatprep.subr.mxu0 0.0
  %52 = vmatpush1.msra.mxu0 0.0
  %53 = vmatprep.subr.mxu0 0.0
  %54 = vmatpush1.msra.mxu0 0.0
  %55 = vmatprep.subr.mxu0 0.0
  %56 = vmatpush1.msra.mxu0 0.0
  %57 = vmatprep.subr.mxu0 0.0
  %58 = vmatpush1.msra.mxu0 0.0
  %59 = vmatprep.subr.mxu0 0.0
  %60 = vmatpush1.msra.mxu0 0.0
  %61 = vmatprep.subr.mxu0 0.0
  %62 = vmatpush1.msra.mxu0 %v26
  %63 = vmatprep.subr.mxu0 0.0
  %64 = vmatpush1.msra.mxu0 %v25
  %65 = vmatprep.subr.mxu0 0.0
  %66 = vmatpush1.msra.mxu0 %v24
  %67 = vmatprep.subr.mxu0 0.0
  %68 = vmatpush1.msra.mxu0 %v23
  %69 = vmatprep.subr.mxu0 0.0
  %70 = vmatpush1.msra.mxu0 %v22
  %71 = vmatprep.subr.mxu0 0.0
  %72 = vmatpush1.msra.mxu0 %v21
  %73 = vmatprep.subr.mxu0 0.0
  %74 = vmatpush1.msra.mxu0 %v20
  %75 = vmatprep.subr.mxu0 0.0
  %76 = vmatpush1.msra.mxu0 %v19
  %77 = vmatprep.subr.mxu0 0.0
  %78 = vmatpush1.msra.mxu0 %v18
  %79 = vmatprep.subr.mxu0 0.0
  %80 = vmatpush2.msra.mxu0 0.0
  %81 = vmatprep.subr.mxu0 0.0
  %82 = vmatpush2.msra.mxu0 0.0
  %83 = vmatprep.subr.mxu0 0.0
  %84 = vmatpush2.msra.mxu0 0.0
  %85 = vmatprep.subr.mxu0 0.0
  %86 = vmatpush2.msra.mxu0 0.0
  %87 = vmatprep.subr.mxu0 0.0
  %88 = vmatpush2.msra.mxu0 0.0
  %89 = vmatprep.subr.mxu0 0.0
  %90 = vmatpush2.msra.mxu0 0.0
  %91 = vmatprep.subr.mxu0 0.0
  %92 = vmatpush2.msra.mxu0 0.0
  %93 = vmatprep.subr.mxu0 0.0
  %94 = vmatpush2.msra.mxu0 0.0
  %95 = vmatprep.subr.mxu0 0.0
  %96 = vmatpush2.msra.mxu0 0.0
  %97 = vmatprep.subr.mxu0 0.0
  %98 = vmatpush2.msra.mxu0 0.0
  %99 = vmatprep.subr.mxu0 0.0
  %100 = vmatpush2.msra.mxu0 0.0
  %101 = vmatprep.subr.mxu0 0.0
  %102 = vmatpush2.msra.mxu0 0.0
  %103 = vmatprep.subr.mxu0 0.0
  %104 = vmatpush2.msra.mxu0 0.0
  %105 = vmatprep.subr.mxu0 0.0
  %106 = vmatpush2.msra.mxu0 0.0
  %107 = vmatprep.subr.mxu0 0.0
  %108 = vmatpush2.msra.mxu0 0.0
  %109 = vmatprep.subr.mxu0 0.0
  %110 = vmatpush2.msra.mxu0 0.0
  %111 = vmatprep.mubr.f32.mxu0 0.0
  %112 = vmatmul.mubr.f32.gmra.mxu0 %v36
  %v113 = vpop.f32.mrf.mxu0
  %v114 = vadd.f32 %v32, %v113
  %v115 = vpop.f32.mrf.mxu0
  %116 = vmatprep.mubr.f32.mxu0 0.0
  %117 = vmatmul.mubr.f32.gmra.mxu0 %v39
  %v118 = vpop.f32.mrf.mxu0
  %v119 = vadd.f32 %v32, %v118
  %v120 = vpop.f32.mrf.mxu0
  %121 = vmatprep.mubr.f32.mxu0 0.0
  %122 = vmatmul.mubr.f32.gmra.mxu0 %v42
  %v123 = vpop.f32.mrf.mxu0
  %v124 = vadd.f32 %v32, %v123
  %v125 = vpop.f32.mrf.mxu0
  %126 = vmatprep.mubr.f32.mxu0 0.0
  %127 = vmatmul.mubr.f32.gmra.mxu0 %v45
  %v128 = vpop.f32.mrf.mxu0
  %v129 = vadd.f32 %v32, %v128
  %v130 = vpop.f32.mrf.mxu0
  %131 = vdwg.mxu0
  %v132 = vmul.f32 %v114, 0.5
  %v133 = vmul.f32 %v119, 0.5
  %v134 = vmul.f32 %v124, 0.5
  %v135 = vmul.f32 %v129, 0.5
  %v136 = vmul.f32 %v114, 0.70710677
  %v137 = vmul.f32 %v119, 0.70710677
  %v138 = vmul.f32 %v124, 0.70710677
  %v139 = vmul.f32 %v129, 0.70710677
  %vm140 = vcmp.ge.f32.partialorder %v136, 0.0
  %vm141 = vcmp.ge.f32.partialorder %v137, 0.0
  %vm142 = vcmp.ge.f32.partialorder %v138, 0.0
  %vm143 = vcmp.ge.f32.partialorder %v139, 0.0
  %v144 = vsub.f32 0.0, %v136
  %v145 = vsub.f32 0.0, %v137
  %v146 = vsub.f32 0.0, %v138
  %v147 = vsub.f32 0.0, %v139
  %v148 = vsel %vm140, %v136, %v144
  %v149 = vsel %vm141, %v137, %v145
  %v150 = vsel %vm142, %v138, %v146
  %v151 = vsel %vm143, %v139, %v147
  %v152 = vmul.f32 %v148, 0.3275911
  %v153 = vmul.f32 %v149, 0.3275911
  %v154 = vmul.f32 %v150, 0.3275911
  %v155 = vmul.f32 %v151, 0.3275911
  %v156 = vadd.f32 %v152, 1.0
  %v157 = vadd.f32 %v153, 1.0
  %v158 = vadd.f32 %v154, 1.0
  %v159 = vadd.f32 %v155, 1.0
  %v160 = vrcp.pop %v156
  %v161 = vmul.f32 1.0, %v160
  %v162 = vrcp.pop %v157
  %v163 = vmul.f32 1.0, %v162
  %v164 = vrcp.pop %v158
  %v165 = vmul.f32 1.0, %v164
  %v166 = vrcp.pop %v159
  %v167 = vmul.f32 1.0, %v166
  %v168 = vmul.f32 %v161, 1.0614054
  %v169 = vmul.f32 %v163, 1.0614054
  %v170 = vmul.f32 %v165, 1.0614054
  %v171 = vmul.f32 %v167, 1.0614054
  %v172 = vadd.f32 %v168, -1.4531521
  %v173 = vadd.f32 %v169, -1.4531521
  %v174 = vadd.f32 %v170, -1.4531521
  %v175 = vadd.f32 %v171, -1.4531521
  %v176 = vmul.f32 %v161, %v172
  %v177 = vmul.f32 %v163, %v173
  %v178 = vmul.f32 %v165, %v174
  %v179 = vmul.f32 %v167, %v175
  %v180 = vadd.f32 %v176, 1.4214138
  %v181 = vadd.f32 %v177, 1.4214138
  %v182 = vadd.f32 %v178, 1.4214138
  %v183 = vadd.f32 %v179, 1.4214138
  %v184 = vmul.f32 %v161, %v180
  %v185 = vmul.f32 %v163, %v181
  %v186 = vmul.f32 %v165, %v182
  %v187 = vmul.f32 %v167, %v183
  %v188 = vadd.f32 %v184, -0.28449672
  %v189 = vadd.f32 %v185, -0.28449672
  %v190 = vadd.f32 %v186, -0.28449672
  %v191 = vadd.f32 %v187, -0.28449672
  %v192 = vmul.f32 %v161, %v188
  %v193 = vmul.f32 %v163, %v189
  %v194 = vmul.f32 %v165, %v190
  %v195 = vmul.f32 %v167, %v191
  %v196 = vadd.f32 %v192, 0.2548296
  %v197 = vadd.f32 %v193, 0.2548296
  %v198 = vadd.f32 %v194, 0.2548296
  %v199 = vadd.f32 %v195, 0.2548296
  %v200 = vmul.f32 %v161, %v196
  %v201 = vmul.f32 %v163, %v197
  %v202 = vmul.f32 %v165, %v198
  %v203 = vmul.f32 %v167, %v199
  %v204 = vsub.f32 0.0, %v148
  %v205 = vsub.f32 0.0, %v149
  %v206 = vsub.f32 0.0, %v150
  %v207 = vsub.f32 0.0, %v151
  %v208 = vmul.f32 %v204, %v148
  %v209 = vmul.f32 %v205, %v149
  %v210 = vmul.f32 %v206, %v150
  %v211 = vmul.f32 %v207, %v151
  %v212 = vmul.f32 %v208, 1.442695
  %v213 = vpow.pop %v212
  %v214 = vmul.f32 %v209, 1.442695
  %v215 = vpow.pop %v214
  %v216 = vmul.f32 %v210, 1.442695
  %v217 = vpow.pop %v216
  %v218 = vmul.f32 %v211, 1.442695
  %v219 = vpow.pop %v218
  %v220 = vmul.f32 %v200, %v213
  %v221 = vmul.f32 %v201, %v215
  %v222 = vmul.f32 %v202, %v217
  %v223 = vmul.f32 %v203, %v219
  %v224 = vsub.f32 1.0, %v220
  %v225 = vsub.f32 1.0, %v221
  %v226 = vsub.f32 1.0, %v222
  %v227 = vsub.f32 1.0, %v223
  %v228 = vsub.f32 0.0, %v224
  %v229 = vsub.f32 0.0, %v225
  %v230 = vsub.f32 0.0, %v226
  %v231 = vsub.f32 0.0, %v227
  %v232 = vsel %vm140, %v224, %v228
  %v233 = vsel %vm141, %v225, %v229
  %v234 = vsel %vm142, %v226, %v230
  %v235 = vsel %vm143, %v227, %v231
  %v236 = vadd.f32 %v232, 1.0
  %v237 = vadd.f32 %v233, 1.0
  %v238 = vadd.f32 %v234, 1.0
  %v239 = vadd.f32 %v235, 1.0
  %v240 = vmul.f32 %v132, %v236
  %v241 = vmul.f32 %v133, %v237
  %v242 = vmul.f32 %v134, %v238
  %v243 = vmul.f32 %v135, %v239
  %vm244 = vcmask 31744
  %245 = vst.msk [vmem:[%s3] sm:$0xff] %vm244, %v240
  %246 = vst.msk [vmem:[%s3 + $0x8] sm:$0xff] %vm244, %v241
  %247 = vst.msk [vmem:[%s3 + $0x10] sm:$0xff] %vm244, %v242
  %248 = vst.msk [vmem:[%s3 + $0x18] sm:$0xff] %vm244, %v243
  // Predicated region
  $region14: #{offset_generation_forward.34} parent=0 // pred_check
    _
  $region15: #{offset_generation_forward.34} parent=0 // pred_check_branch
    %250 = sbr.rel (0) target = $region17
  $region16: #{offset_generation_forward.34} parent=0 // pred_region
    _
  $region17: #{offset_generation_forward.34} parent=0 // pred_fallthru
    _
  // Predicated region
  $region18: #{offset_generation_forward.34} parent=0 // pred_check
    _
  $region19: #{offset_generation_forward.34} parent=0 // pred_check_branch
    %252 = sbr.rel (0) target = $region21
  $region20: #{offset_generation_forward.34} parent=0 // pred_region
    _
  $region21: #{offset_generation_forward.34} parent=0 // pred_fallthru
    _

// kernel: offset_generation_forward.35
$region0: #{offset_generation_forward.35}
  #allocation0 [shape = 'u32[]', space=smem, size = 0x4, offset = 0x4, fixed_abs, tag = 'smem constant byte address 0x4 - core index']
  #allocation1 [shape = 'u32[144,128]{1,0:T(1,128)}', space=vmem, size = 0x12000, scoped, tag = 'internal scratch']
  %s0 = inlined_call_operand.vmem [shape: f32[32,4], index: 0, kind: input, shape index: {}]
  %s1 = inlined_call_operand.vmem [shape: f32[4,8], index: 1, kind: input, shape index: {}]
  %s2 = inlined_call_operand.vmem [shape: f32[1,8], index: 2, kind: input, shape index: {}]
  %s3 = inlined_call_operand.vmem [shape: f32[32,8], index: 3, kind: output, shape index: {}]
  %s4 = sld [smem:[#allocation0]]
  $region22: #{offset_generation_forward.35} parent=0
    _
  %s6 = ssub.s32 1, %s4
  %s7 = scalar_select 0, %s6, %s4
  // Predicated region
  $region2: #{offset_generation_forward.35} parent=0 // pred_check
    _
  $region3: #{offset_generation_forward.35} parent=0 // pred_check_branch
    %9 = sbr.rel (0) target = $region5
  $region4: #{offset_generation_forward.35} parent=0 // pred_region
    _
  $region5: #{offset_generation_forward.35} parent=0 // pred_fallthru
    _
  // Predicated region
  $region6: #{offset_generation_forward.35} parent=0 // pred_check
    _
  $region7: #{offset_generation_forward.35} parent=0 // pred_check_branch
    %11 = sbr.rel (0) target = $region9
  $region8: #{offset_generation_forward.35} parent=0 // pred_region
    _
  $region9: #{offset_generation_forward.35} parent=0 // pred_fallthru
    _
  // Predicated region
  $region10: #{offset_generation_forward.35} parent=0 // pred_check
    _
  $region11: #{offset_generation_forward.35} parent=0 // pred_check_branch
    %13 = sbr.rel (0) target = $region13
  $region12: #{offset_generation_forward.35} parent=0 // pred_region
    _
  $region13: #{offset_generation_forward.35} parent=0 // pred_fallthru
    _
  %v14 = vld [vmem:[%s0] sm:$0xff]
  %v15 = vld [vmem:[%s0 + $0x8] sm:$0xff]
  %v16 = vld [vmem:[%s0 + $0x10] sm:$0xff]
  %v17 = vld [vmem:[%s0 + $0x18] sm:$0xff]
  %v18 = vld [vmem:[%s1] sm:$0xf]
  %v19 = vld [vmem:[%s2] sm:$0x1]
  %v21 = vlaneseq
  %v22 = vshrl.u32 %v21, 7
  %v23 = vsub.s32 0, %v22
  %v24 = vrot.slane %v19, %v23
  %vm26 = vcmask 31744
  %v28 = vsel %vm26, %v14, 0
  %v31 = vsel %vm26, %v15, 0
  %v34 = vsel %vm26, %v16, 0
  %v37 = vsel %vm26, %v17, 0
  %vm39 = vcmask 1043456
  %v41 = vsel %vm39, %v18, 0
  %43 = vmatprep.subr.mxu0 0.0
  %44 = vmatpush1.msra.mxu0 0.0
  %45 = vmatprep.subr.mxu0 0.0
  %46 = vmatpush1.msra.mxu0 0.0
  %47 = vmatprep.subr.mxu0 0.0
  %48 = vmatpush1.msra.mxu0 0.0
  %49 = vmatprep.subr.mxu0 0.0
  %50 = vmatpush1.msra.mxu0 0.0
  %51 = vmatprep.subr.mxu0 0.0
  %52 = vmatpush1.msra.mxu0 0.0
  %53 = vmatprep.subr.mxu0 0.0
  %54 = vmatpush1.msra.mxu0 0.0
  %55 = vmatprep.subr.mxu0 0.0
  %56 = vmatpush1.msra.mxu0 0.0
  %57 = vmatprep.subr.mxu0 0.0
  %58 = vmatpush1.msra.mxu0 0.0
  %59 = vmatprep.subr.mxu0 0.0
  %60 = vmatpush1.msra.mxu0 0.0
  %61 = vmatprep.subr.mxu0 0.0
  %62 = vmatpush1.msra.mxu0 0.0
  %63 = vmatprep.subr.mxu0 0.0
  %64 = vmatpush1.msra.mxu0 0.0
  %65 = vmatprep.subr.mxu0 0.0
  %66 = vmatpush1.msra.mxu0 0.0
  %67 = vmatprep.subr.mxu0 0.0
  %68 = vmatpush1.msra.mxu0 0.0
  %69 = vmatprep.subr.mxu0 0.0
  %70 = vmatpush1.msra.mxu0 0.0
  %71 = vmatprep.subr.mxu0 0.0
  %72 = vmatpush1.msra.mxu0 0.0
  %73 = vmatprep.subr.mxu0 0.0
  %74 = vmatpush1.msra.mxu0 %v41
  %75 = vmatprep.subr.mxu0 0.0
  %76 = vmatpush2.msra.mxu0 0.0
  %77 = vmatprep.subr.mxu0 0.0
  %78 = vmatpush2.msra.mxu0 0.0
  %79 = vmatprep.subr.mxu0 0.0
  %80 = vmatpush2.msra.mxu0 0.0
  %81 = vmatprep.subr.mxu0 0.0
  %82 = vmatpush2.msra.mxu0 0.0
  %83 = vmatprep.subr.mxu0 0.0
  %84 = vmatpush2.msra.mxu0 0.0
  %85 = vmatprep.subr.mxu0 0.0
  %86 = vmatpush2.msra.mxu0 0.0
  %87 = vmatprep.subr.mxu0 0.0
  %88 = vmatpush2.msra.mxu0 0.0
  %89 = vmatprep.subr.mxu0 0.0
  %90 = vmatpush2.msra.mxu0 0.0
  %91 = vmatprep.subr.mxu0 0.0
  %92 = vmatpush2.msra.mxu0 0.0
  %93 = vmatprep.subr.mxu0 0.0
  %94 = vmatpush2.msra.mxu0 0.0
  %95 = vmatprep.subr.mxu0 0.0
  %96 = vmatpush2.msra.mxu0 0.0
  %97 = vmatprep.subr.mxu0 0.0
  %98 = vmatpush2.msra.mxu0 0.0
  %99 = vmatprep.subr.mxu0 0.0
  %100 = vmatpush2.msra.mxu0 0.0
  %101 = vmatprep.subr.mxu0 0.0
  %102 = vmatpush2.msra.mxu0 0.0
  %103 = vmatprep.subr.mxu0 0.0
  %104 = vmatpush2.msra.mxu0 0.0
  %105 = vmatprep.subr.mxu0 0.0
  %106 = vmatpush2.msra.mxu0 0.0
  %107 = vmatprep.mubr.f32.mxu0 0.0
  %108 = vmatmul.mubr.f32.gmra.mxu0 %v28
  %v109 = vpop.f32.mrf.mxu0
  %v110 = vadd.f32 %v24, %v109
  %v111 = vpop.f32.mrf.mxu0
  %112 = vmatprep.mubr.f32.mxu0 0.0
  %113 = vmatmul.mubr.f32.gmra.mxu0 %v31
  %v114 = vpop.f32.mrf.mxu0
  %v115 = vadd.f32 %v24, %v114
  %v116 = vpop.f32.mrf.mxu0
  %117 = vmatprep.mubr.f32.mxu0 0.0
  %118 = vmatmul.mubr.f32.gmra.mxu0 %v34
  %v119 = vpop.f32.mrf.mxu0
  %v120 = vadd.f32 %v24, %v119
  %v121 = vpop.f32.mrf.mxu0
  %122 = vmatprep.mubr.f32.mxu0 0.0
  %123 = vmatmul.mubr.f32.gmra.mxu0 %v37
  %v124 = vpop.f32.mrf.mxu0
  %v125 = vadd.f32 %v24, %v124
  %v126 = vpop.f32.mrf.mxu0
  %127 = vdwg.mxu0
  %v128 = vmul.f32 %v110, 0.5
  %v129 = vmul.f32 %v115, 0.5
  %v130 = vmul.f32 %v120, 0.5
  %v131 = vmul.f32 %v125, 0.5
  %v132 = vmul.f32 %v110, 0.70710677
  %v133 = vmul.f32 %v115, 0.70710677
  %v134 = vmul.f32 %v120, 0.70710677
  %v135 = vmul.f32 %v125, 0.70710677
  %vm136 = vcmp.ge.f32.partialorder %v132, 0.0
  %vm137 = vcmp.ge.f32.partialorder %v133, 0.0
  %vm138 = vcmp.ge.f32.partialorder %v134, 0.0
  %vm139 = vcmp.ge.f32.partialorder %v135, 0.0
  %v140 = vsub.f32 0.0, %v132
  %v141 = vsub.f32 0.0, %v133
  %v142 = vsub.f32 0.0, %v134
  %v143 = vsub.f32 0.0, %v135
  %v144 = vsel %vm136, %v132, %v140
  %v145 = vsel %vm137, %v133, %v141
  %v146 = vsel %vm138, %v134, %v142
  %v147 = vsel %vm139, %v135, %v143
  %v148 = vmul.f32 %v144, 0.3275911
  %v149 = vmul.f32 %v145, 0.3275911
  %v150 = vmul.f32 %v146, 0.3275911
  %v151 = vmul.f32 %v147, 0.3275911
  %v152 = vadd.f32 %v148, 1.0
  %v153 = vadd.f32 %v149, 1.0
  %v154 = vadd.f32 %v150, 1.0
  %v155 = vadd.f32 %v151, 1.0
  %v156 = vrcp.pop %v152
  %v157 = vmul.f32 1.0, %v156
  %v158 = vrcp.pop %v153
  %v159 = vmul.f32 1.0, %v158
  %v160 = vrcp.pop %v154
  %v161 = vmul.f32 1.0, %v160
  %v162 = vrcp.pop %v155
  %v163 = vmul.f32 1.0, %v162
  %v164 = vmul.f32 %v157, 1.0614054
  %v165 = vmul.f32 %v159, 1.0614054
  %v166 = vmul.f32 %v161, 1.0614054
  %v167 = vmul.f32 %v163, 1.0614054
  %v168 = vadd.f32 %v164, -1.4531521
  %v169 = vadd.f32 %v165, -1.4531521
  %v170 = vadd.f32 %v166, -1.4531521
  %v171 = vadd.f32 %v167, -1.4531521
  %v172 = vmul.f32 %v157, %v168
  %v173 = vmul.f32 %v159, %v169
  %v174 = vmul.f32 %v161, %v170
  %v175 = vmul.f32 %v163, %v171
  %v176 = vadd.f32 %v172, 1.4214138
  %v177 = vadd.f32 %v173, 1.4214138
  %v178 = vadd.f32 %v174, 1.4214138
  %v179 = vadd.f32 %v175, 1.4214138
  %v180 = vmul.f32 %v157, %v176
  %v181 = vmul.f32 %v159, %v177
  %v182 = vmul.f32 %v161, %v178
  %v183 = vmul.f32 %v163, %v179
  %v184 = vadd.f32 %v180, -0.28449672
  %v185 = vadd.f32 %v181, -0.28449672
  %v186 = vadd.f32 %v182, -0.28449672
  %v187 = vadd.f32 %v183, -0.28449672
  %v188 = vmul.f32 %v157, %v184
  %v189 = vmul.f32 %v159, %v185
  %v190 = vmul.f32 %v161, %v186
  %v191 = vmul.f32 %v163, %v187
  %v192 = vadd.f32 %v188, 0.2548296
  %v193 = vadd.f32 %v189, 0.2548296
  %v194 = vadd.f32 %v190, 0.2548296
  %v195 = vadd.f32 %v191, 0.2548296
  %v196 = vmul.f32 %v157, %v192
  %v197 = vmul.f32 %v159, %v193
  %v198 = vmul.f32 %v161, %v194
  %v199 = vmul.f32 %v163, %v195
  %v200 = vsub.f32 0.0, %v144
  %v201 = vsub.f32 0.0, %v145
  %v202 = vsub.f32 0.0, %v146
  %v203 = vsub.f32 0.0, %v147
  %v204 = vmul.f32 %v200, %v144
  %v205 = vmul.f32 %v201, %v145
  %v206 = vmul.f32 %v202, %v146
  %v207 = vmul.f32 %v203, %v147
  %v208 = vmul.f32 %v204, 1.442695
  %v209 = vpow.pop %v208
  %v210 = vmul.f32 %v205, 1.442695
  %v211 = vpow.pop %v210
  %v212 = vmul.f32 %v206, 1.442695
  %v213 = vpow.pop %v212
  %v214 = vmul.f32 %v207, 1.442695
  %v215 = vpow.pop %v214
  %v216 = vmul.f32 %v196, %v209
  %v217 = vmul.f32 %v197, %v211
  %v218 = vmul.f32 %v198, %v213
  %v219 = vmul.f32 %v199, %v215
  %v220 = vsub.f32 1.0, %v216
  %v221 = vsub.f32 1.0, %v217
  %v222 = vsub.f32 1.0, %v218
  %v223 = vsub.f32 1.0, %v219
  %v224 = vsub.f32 0.0, %v220
  %v225 = vsub.f32 0.0, %v221
  %v226 = vsub.f32 0.0, %v222
  %v227 = vsub.f32 0.0, %v223
  %v228 = vsel %vm136, %v220, %v224
  %v229 = vsel %vm137, %v221, %v225
  %v230 = vsel %vm138, %v222, %v226
  %v231 = vsel %vm139, %v223, %v227
  %v232 = vadd.f32 %v228, 1.0
  %v233 = vadd.f32 %v229, 1.0
  %v234 = vadd.f32 %v230, 1.0
  %v235 = vadd.f32 %v231, 1.0
  %v236 = vmul.f32 %v128, %v232
  %v237 = vmul.f32 %v129, %v233
  %v238 = vmul.f32 %v130, %v234
  %v239 = vmul.f32 %v131, %v235
  %vm240 = vcmask 64512
  %241 = vst.msk [vmem:[%s3] sm:$0xff] %vm240, %v236
  %242 = vst.msk [vmem:[%s3 + $0x8] sm:$0xff] %vm240, %v237
  %243 = vst.msk [vmem:[%s3 + $0x10] sm:$0xff] %vm240, %v238
  %244 = vst.msk [vmem:[%s3 + $0x18] sm:$0xff] %vm240, %v239
  // Predicated region
  $region14: #{offset_generation_forward.35} parent=0 // pred_check
    _
  $region15: #{offset_generation_forward.35} parent=0 // pred_check_branch
    %246 = sbr.rel (0) target = $region17
  $region16: #{offset_generation_forward.35} parent=0 // pred_region
    _
  $region17: #{offset_generation_forward.35} parent=0 // pred_fallthru
    _
  // Predicated region
  $region18: #{offset_generation_forward.35} parent=0 // pred_check
    _
  $region19: #{offset_generation_forward.35} parent=0 // pred_check_branch
    %248 = sbr.rel (0) target = $region21
  $region20: #{offset_generation_forward.35} parent=0 // pred_region
    _
  $region21: #{offset_generation_forward.35} parent=0 // pred_fallthru
    _

// kernel: offset_generation_forward.36
$region0: #{offset_generation_forward.36}
  #allocation0 [shape = 'u32[]', space=smem, size = 0x4, offset = 0x4, fixed_abs, tag = 'smem constant byte address 0x4 - core index']
  #allocation1 [shape = 'u32[144,128]{1,0:T(1,128)}', space=vmem, size = 0x12000, scoped, tag = 'internal scratch']
  %s0 = inlined_call_operand.vmem [shape: f32[32,8], index: 0, kind: input, shape index: {}]
  %s1 = inlined_call_operand.vmem [shape: f32[32,8], index: 1, kind: input, shape index: {}]
  %s2 = inlined_call_operand.vmem [shape: f32[1,8], index: 2, kind: input, shape index: {}]
  %s3 = inlined_call_operand.vmem [shape: f32[1,8], index: 3, kind: input, shape index: {}]
  %s4 = inlined_call_operand.vmem [shape: f32[32,8], index: 4, kind: output, shape index: {}]
  %s5 = sld [smem:[#allocation0]]
  $region26: #{offset_generation_forward.36} parent=0
    _
  %s7 = ssub.s32 1, %s5
  %s8 = scalar_select 0, %s7, %s5
  // Predicated region
  $region2: #{offset_generation_forward.36} parent=0 // pred_check
    _
  $region3: #{offset_generation_forward.36} parent=0 // pred_check_branch
    %10 = sbr.rel (0) target = $region5
  $region4: #{offset_generation_forward.36} parent=0 // pred_region
    _
  $region5: #{offset_generation_forward.36} parent=0 // pred_fallthru
    _
  // Predicated region
  $region6: #{offset_generation_forward.36} parent=0 // pred_check
    _
  $region7: #{offset_generation_forward.36} parent=0 // pred_check_branch
    %12 = sbr.rel (0) target = $region9
  $region8: #{offset_generation_forward.36} parent=0 // pred_region
    _
  $region9: #{offset_generation_forward.36} parent=0 // pred_fallthru
    _
  // Predicated region
  $region10: #{offset_generation_forward.36} parent=0 // pred_check
    _
  $region11: #{offset_generation_forward.36} parent=0 // pred_check_branch
    %14 = sbr.rel (0) target = $region13
  $region12: #{offset_generation_forward.36} parent=0 // pred_region
    _
  $region13: #{offset_generation_forward.36} parent=0 // pred_fallthru
    _
  // Predicated region
  $region14: #{offset_generation_forward.36} parent=0 // pred_check
    _
  $region15: #{offset_generation_forward.36} parent=0 // pred_check_branch
    %16 = sbr.rel (0) target = $region17
  $region16: #{offset_generation_forward.36} parent=0 // pred_region
    _
  $region17: #{offset_generation_forward.36} parent=0 // pred_fallthru
    _
  %v17 = vld [vmem:[%s0] sm:$0xff]
  %v18 = vld [vmem:[%s0 + $0x8] sm:$0xff]
  %v19 = vld [vmem:[%s0 + $0x10] sm:$0xff]
  %v20 = vld [vmem:[%s0 + $0x18] sm:$0xff]
  %v21 = vadd.f32 %v17, 1.0
  %v22 = vadd.f32 %v18, 1.0
  %v23 = vadd.f32 %v19, 1.0
  %v24 = vadd.f32 %v20, 1.0
  %v25 = vld [vmem:[%s1] sm:$0xff]
  %v26 = vld [vmem:[%s1 + $0x8] sm:$0xff]
  %v27 = vld [vmem:[%s1 + $0x10] sm:$0xff]
  %v28 = vld [vmem:[%s1 + $0x18] sm:$0xff]
  %v29 = vmul.f32 %v21, %v25
  %v30 = vmul.f32 %v22, %v26
  %v31 = vmul.f32 %v23, %v27
  %v32 = vmul.f32 %v24, %v28
  %vm33 = vcmask 64512
  %v34 = vsel %vm33, %v29, 0.0
  %35 = vadd.xlane.f32.xlu0 %v34
  %v36 = vpop.xlane.xlu0 %35
  %v37 = vsel %vm33, %v30, 0.0
  %38 = vadd.xlane.f32.xlu0 %v37
  %v39 = vpop.xlane.xlu0 %38
  %v40 = vsel %vm33, %v31, 0.0
  %41 = vadd.xlane.f32.xlu0 %v40
  %v42 = vpop.xlane.xlu0 %41
  %v43 = vsel %vm33, %v32, 0.0
  %44 = vadd.xlane.f32.xlu0 %v43
  %v45 = vpop.xlane.xlu0 %44
  %v46 = vrcp.pop 8.0
  %v47 = vmul.f32 %v36, %v46
  %v48 = vmul.f32 %v39, %v46
  %v49 = vmul.f32 %v42, %v46
  %v50 = vmul.f32 %v45, %v46
  %v51 = vsub.f32 %v29, %v47
  %v52 = vsub.f32 %v30, %v48
  %v53 = vsub.f32 %v31, %v49
  %v54 = vsub.f32 %v32, %v50
  %v55 = vmul.f32 %v51, %v51
  %v56 = vmul.f32 %v52, %v52
  %v57 = vmul.f32 %v53, %v53
  %v58 = vmul.f32 %v54, %v54
  %v59 = vsel %vm33, %v55, 0.0
  %60 = vadd.xlane.f32.xlu0 %v59
  %v61 = vpop.xlane.xlu0 %60
  %v62 = vsel %vm33, %v56, 0.0
  %63 = vadd.xlane.f32.xlu0 %v62
  %v64 = vpop.xlane.xlu0 %63
  %v65 = vsel %vm33, %v57, 0.0
  %66 = vadd.xlane.f32.xlu0 %v65
  %v67 = vpop.xlane.xlu0 %66
  %v68 = vsel %vm33, %v58, 0.0
  %69 = vadd.xlane.f32.xlu0 %v68
  %v70 = vpop.xlane.xlu0 %69
  %v71 = vmul.f32 %v61, %v46
  %v72 = vmul.f32 %v64, %v46
  %v73 = vmul.f32 %v67, %v46
  %v74 = vmul.f32 %v70, %v46
  %v75 = vadd.f32 %v71, 1e-05
  %v76 = vadd.f32 %v72, 1e-05
  %v77 = vadd.f32 %v73, 1e-05
  %v78 = vadd.f32 %v74, 1e-05
  %v79 = vrsqrt.pop %v75
  %v80 = vrsqrt.pop %v76
  %v81 = vrsqrt.pop %v77
  %v82 = vrsqrt.pop %v78
  %v83 = vmul.f32 %v51, %v79
  %v84 = vmul.f32 %v52, %v80
  %v85 = vmul.f32 %v53, %v81
  %v86 = vmul.f32 %v54, %v82
  %v87 = vld [vmem:[%s2] sm:$0x1]
  %v89 = vlaneseq
  %v90 = vshrl.u32 %v89, 7
  %v91 = vsub.s32 0, %v90
  %v92 = vrot.slane %v87, %v91
  %v94 = vmul.f32 %v83, %v92
  %v95 = vmul.f32 %v84, %v92
  %v96 = vmul.f32 %v85, %v92
  %v97 = vmul.f32 %v86, %v92
  %v98 = vld [vmem:[%s3] sm:$0x1]
  %v100 = vlaneseq
  %v101 = vshrl.u32 %v100, 7
  %v102 = vsub.s32 0, %v101
  %v103 = vrot.slane %v98, %v102
  %v105 = vadd.f32 %v94, %v103
  %v106 = vadd.f32 %v95, %v103
  %v107 = vadd.f32 %v96, %v103
  %v108 = vadd.f32 %v97, %v103
  %109 = vst.msk [vmem:[%s4] sm:$0xff] %vm33, %v105
  %110 = vst.msk [vmem:[%s4 + $0x8] sm:$0xff] %vm33, %v106
  %111 = vst.msk [vmem:[%s4 + $0x10] sm:$0xff] %vm33, %v107
  %112 = vst.msk [vmem:[%s4 + $0x18] sm:$0xff] %vm33, %v108
  // Predicated region
  $region18: #{offset_generation_forward.36} parent=0 // pred_check
    _
  $region19: #{offset_generation_forward.36} parent=0 // pred_check_branch
    %114 = sbr.rel (0) target = $region21
  $region20: #{offset_generation_forward.36} parent=0 // pred_region
    _
  $region21: #{offset_generation_forward.36} parent=0 // pred_fallthru
    _
  // Predicated region
  $region22: #{offset_generation_forward.36} parent=0 // pred_check
    _
  $region23: #{offset_generation_forward.36} parent=0 // pred_check_branch
    %116 = sbr.rel (0) target = $region25
  $region24: #{offset_generation_forward.36} parent=0 // pred_region
    _
  $region25: #{offset_generation_forward.36} parent=0 // pred_fallthru
    _

// kernel: offset_generation_forward.37
$region0: #{offset_generation_forward.37}
  #allocation0 [shape = 'u32[]', space=smem, size = 0x4, offset = 0x4, fixed_abs, tag = 'smem constant byte address 0x4 - core index']
  #allocation1 [shape = 'u32[144,128]{1,0:T(1,128)}', space=vmem, size = 0x12000, scoped, tag = 'internal scratch']
  %s0 = inlined_call_operand.vmem [shape: f32[32,8], index: 0, kind: input, shape index: {}]
  %s1 = inlined_call_operand.vmem [shape: f32[8,4], index: 1, kind: input, shape index: {}]
  %s2 = inlined_call_operand.vmem [shape: f32[1,4], index: 2, kind: input, shape index: {}]
  %s3 = inlined_call_operand.vmem [shape: f32[32,4], index: 3, kind: output, shape index: {}]
  %s4 = sld [smem:[#allocation0]]
  $region22: #{offset_generation_forward.37} parent=0
    _
  %s6 = ssub.s32 1, %s4
  %s7 = scalar_select 0, %s6, %s4
  // Predicated region
  $region2: #{offset_generation_forward.37} parent=0 // pred_check
    _
  $region3: #{offset_generation_forward.37} parent=0 // pred_check_branch
    %9 = sbr.rel (0) target = $region5
  $region4: #{offset_generation_forward.37} parent=0 // pred_region
    _
  $region5: #{offset_generation_forward.37} parent=0 // pred_fallthru
    _
  // Predicated region
  $region6: #{offset_generation_forward.37} parent=0 // pred_check
    _
  $region7: #{offset_generation_forward.37} parent=0 // pred_check_branch
    %11 = sbr.rel (0) target = $region9
  $region8: #{offset_generation_forward.37} parent=0 // pred_region
    _
  $region9: #{offset_generation_forward.37} parent=0 // pred_fallthru
    _
  // Predicated region
  $region10: #{offset_generation_forward.37} parent=0 // pred_check
    _
  $region11: #{offset_generation_forward.37} parent=0 // pred_check_branch
    %13 = sbr.rel (0) target = $region13
  $region12: #{offset_generation_forward.37} parent=0 // pred_region
    _
  $region13: #{offset_generation_forward.37} parent=0 // pred_fallthru
    _
  %v14 = vld [vmem:[%s0] sm:$0xff]
  %v15 = vld [vmem:[%s0 + $0x8] sm:$0xff]
  %v16 = vld [vmem:[%s0 + $0x10] sm:$0xff]
  %v17 = vld [vmem:[%s0 + $0x18] sm:$0xff]
  %v18 = vld [vmem:[%s1] sm:$0xff]
  %v19 = vld [vmem:[%s2] sm:$0x1]
  %v21 = vlaneseq
  %v22 = vshrl.u32 %v21, 7
  %v23 = vsub.s32 0, %v22
  %v24 = vrot.slane %v19, %v23
  %vm26 = vcmask 64512
  %v28 = vsel %vm26, %v14, 0
  %v31 = vsel %vm26, %v15, 0
  %v34 = vsel %vm26, %v16, 0
  %v37 = vsel %vm26, %v17, 0
  %39 = vmatprep.subr.mxu0 0.0
  %40 = vmatpush1.msra.mxu0 0.0
  %41 = vmatprep.subr.mxu0 0.0
  %42 = vmatpush1.msra.mxu0 0.0
  %43 = vmatprep.subr.mxu0 0.0
  %44 = vmatpush1.msra.mxu0 0.0
  %45 = vmatprep.subr.mxu0 0.0
  %46 = vmatpush1.msra.mxu0 0.0
  %47 = vmatprep.subr.mxu0 0.0
  %48 = vmatpush1.msra.mxu0 0.0
  %49 = vmatprep.subr.mxu0 0.0
  %50 = vmatpush1.msra.mxu0 0.0
  %51 = vmatprep.subr.mxu0 0.0
  %52 = vmatpush1.msra.mxu0 0.0
  %53 = vmatprep.subr.mxu0 0.0
  %54 = vmatpush1.msra.mxu0 0.0
  %55 = vmatprep.subr.mxu0 0.0
  %56 = vmatpush1.msra.mxu0 0.0
  %57 = vmatprep.subr.mxu0 0.0
  %58 = vmatpush1.msra.mxu0 0.0
  %59 = vmatprep.subr.mxu0 0.0
  %60 = vmatpush1.msra.mxu0 0.0
  %61 = vmatprep.subr.mxu0 0.0
  %62 = vmatpush1.msra.mxu0 0.0
  %63 = vmatprep.subr.mxu0 0.0
  %64 = vmatpush1.msra.mxu0 0.0
  %65 = vmatprep.subr.mxu0 0.0
  %66 = vmatpush1.msra.mxu0 0.0
  %67 = vmatprep.subr.mxu0 0.0
  %68 = vmatpush1.msra.mxu0 0.0
  %69 = vmatprep.subr.mxu0 0.0
  %70 = vmatpush1.msra.mxu0 %v18
  %71 = vmatprep.subr.mxu0 0.0
  %72 = vmatpush2.msra.mxu0 0.0
  %73 = vmatprep.subr.mxu0 0.0
  %74 = vmatpush2.msra.mxu0 0.0
  %75 = vmatprep.subr.mxu0 0.0
  %76 = vmatpush2.msra.mxu0 0.0
  %77 = vmatprep.subr.mxu0 0.0
  %78 = vmatpush2.msra.mxu0 0.0
  %79 = vmatprep.subr.mxu0 0.0
  %80 = vmatpush2.msra.mxu0 0.0
  %81 = vmatprep.subr.mxu0 0.0
  %82 = vmatpush2.msra.mxu0 0.0
  %83 = vmatprep.subr.mxu0 0.0
  %84 = vmatpush2.msra.mxu0 0.0
  %85 = vmatprep.subr.mxu0 0.0
  %86 = vmatpush2.msra.mxu0 0.0
  %87 = vmatprep.subr.mxu0 0.0
  %88 = vmatpush2.msra.mxu0 0.0
  %89 = vmatprep.subr.mxu0 0.0
  %90 = vmatpush2.msra.mxu0 0.0
  %91 = vmatprep.subr.mxu0 0.0
  %92 = vmatpush2.msra.mxu0 0.0
  %93 = vmatprep.subr.mxu0 0.0
  %94 = vmatpush2.msra.mxu0 0.0
  %95 = vmatprep.subr.mxu0 0.0
  %96 = vmatpush2.msra.mxu0 0.0
  %97 = vmatprep.subr.mxu0 0.0
  %98 = vmatpush2.msra.mxu0 0.0
  %99 = vmatprep.subr.mxu0 0.0
  %100 = vmatpush2.msra.mxu0 0.0
  %101 = vmatprep.subr.mxu0 0.0
  %102 = vmatpush2.msra.mxu0 0.0
  %103 = vmatprep.mubr.f32.mxu0 0.0
  %104 = vmatmul.mubr.f32.gmra.mxu0 %v28
  %v105 = vpop.f32.mrf.mxu0
  %v106 = vadd.f32 %v24, %v105
  %v107 = vpop.f32.mrf.mxu0
  %108 = vmatprep.mubr.f32.mxu0 0.0
  %109 = vmatmul.mubr.f32.gmra.mxu0 %v31
  %v110 = vpop.f32.mrf.mxu0
  %v111 = vadd.f32 %v24, %v110
  %v112 = vpop.f32.mrf.mxu0
  %113 = vmatprep.mubr.f32.mxu0 0.0
  %114 = vmatmul.mubr.f32.gmra.mxu0 %v34
  %v115 = vpop.f32.mrf.mxu0
  %v116 = vadd.f32 %v24, %v115
  %v117 = vpop.f32.mrf.mxu0
  %118 = vmatprep.mubr.f32.mxu0 0.0
  %119 = vmatmul.mubr.f32.gmra.mxu0 %v37
  %v120 = vpop.f32.mrf.mxu0
  %v121 = vadd.f32 %v24, %v120
  %v122 = vpop.f32.mrf.mxu0
  %123 = vdwg.mxu0
  %v124 = vmul.f32 %v106, 0.5
  %v125 = vmul.f32 %v111, 0.5
  %v126 = vmul.f32 %v116, 0.5
  %v127 = vmul.f32 %v121, 0.5
  %v128 = vmul.f32 %v106, 0.70710677
  %v129 = vmul.f32 %v111, 0.70710677
  %v130 = vmul.f32 %v116, 0.70710677
  %v131 = vmul.f32 %v121, 0.70710677
  %vm132 = vcmp.ge.f32.partialorder %v128, 0.0
  %vm133 = vcmp.ge.f32.partialorder %v129, 0.0
  %vm134 = vcmp.ge.f32.partialorder %v130, 0.0
  %vm135 = vcmp.ge.f32.partialorder %v131, 0.0
  %v136 = vsub.f32 0.0, %v128
  %v137 = vsub.f32 0.0, %v129
  %v138 = vsub.f32 0.0, %v130
  %v139 = vsub.f32 0.0, %v131
  %v140 = vsel %vm132, %v128, %v136
  %v141 = vsel %vm133, %v129, %v137
  %v142 = vsel %vm134, %v130, %v138
  %v143 = vsel %vm135, %v131, %v139
  %v144 = vmul.f32 %v140, 0.3275911
  %v145 = vmul.f32 %v141, 0.3275911
  %v146 = vmul.f32 %v142, 0.3275911
  %v147 = vmul.f32 %v143, 0.3275911
  %v148 = vadd.f32 %v144, 1.0
  %v149 = vadd.f32 %v145, 1.0
  %v150 = vadd.f32 %v146, 1.0
  %v151 = vadd.f32 %v147, 1.0
  %v152 = vrcp.pop %v148
  %v153 = vmul.f32 1.0, %v152
  %v154 = vrcp.pop %v149
  %v155 = vmul.f32 1.0, %v154
  %v156 = vrcp.pop %v150
  %v157 = vmul.f32 1.0, %v156
  %v158 = vrcp.pop %v151
  %v159 = vmul.f32 1.0, %v158
  %v160 = vmul.f32 %v153, 1.0614054
  %v161 = vmul.f32 %v155, 1.0614054
  %v162 = vmul.f32 %v157, 1.0614054
  %v163 = vmul.f32 %v159, 1.0614054
  %v164 = vadd.f32 %v160, -1.4531521
  %v165 = vadd.f32 %v161, -1.4531521
  %v166 = vadd.f32 %v162, -1.4531521
  %v167 = vadd.f32 %v163, -1.4531521
  %v168 = vmul.f32 %v153, %v164
  %v169 = vmul.f32 %v155, %v165
  %v170 = vmul.f32 %v157, %v166
  %v171 = vmul.f32 %v159, %v167
  %v172 = vadd.f32 %v168, 1.4214138
  %v173 = vadd.f32 %v169, 1.4214138
  %v174 = vadd.f32 %v170, 1.4214138
  %v175 = vadd.f32 %v171, 1.4214138
  %v176 = vmul.f32 %v153, %v172
  %v177 = vmul.f32 %v155, %v173
  %v178 = vmul.f32 %v157, %v174
  %v179 = vmul.f32 %v159, %v175
  %v180 = vadd.f32 %v176, -0.28449672
  %v181 = vadd.f32 %v177, -0.28449672
  %v182 = vadd.f32 %v178, -0.28449672
  %v183 = vadd.f32 %v179, -0.28449672
  %v184 = vmul.f32 %v153, %v180
  %v185 = vmul.f32 %v155, %v181
  %v186 = vmul.f32 %v157, %v182
  %v187 = vmul.f32 %v159, %v183
  %v188 = vadd.f32 %v184, 0.2548296
  %v189 = vadd.f32 %v185, 0.2548296
  %v190 = vadd.f32 %v186, 0.2548296
  %v191 = vadd.f32 %v187, 0.2548296
  %v192 = vmul.f32 %v153, %v188
  %v193 = vmul.f32 %v155, %v189
  %v194 = vmul.f32 %v157, %v190
  %v195 = vmul.f32 %v159, %v191
  %v196 = vsub.f32 0.0, %v140
  %v197 = vsub.f32 0.0, %v141
  %v198 = vsub.f32 0.0, %v142
  %v199 = vsub.f32 0.0, %v143
  %v200 = vmul.f32 %v196, %v140
  %v201 = vmul.f32 %v197, %v141
  %v202 = vmul.f32 %v198, %v142
  %v203 = vmul.f32 %v199, %v143
  %v204 = vmul.f32 %v200, 1.442695
  %v205 = vpow.pop %v204
  %v206 = vmul.f32 %v201, 1.442695
  %v207 = vpow.pop %v206
  %v208 = vmul.f32 %v202, 1.442695
  %v209 = vpow.pop %v208
  %v210 = vmul.f32 %v203, 1.442695
  %v211 = vpow.pop %v210
  %v212 = vmul.f32 %v192, %v205
  %v213 = vmul.f32 %v193, %v207
  %v214 = vmul.f32 %v194, %v209
  %v215 = vmul.f32 %v195, %v211
  %v216 = vsub.f32 1.0, %v212
  %v217 = vsub.f32 1.0, %v213
  %v218 = vsub.f32 1.0, %v214
  %v219 = vsub.f32 1.0, %v215
  %v220 = vsub.f32 0.0, %v216
  %v221 = vsub.f32 0.0, %v217
  %v222 = vsub.f32 0.0, %v218
  %v223 = vsub.f32 0.0, %v219
  %v224 = vsel %vm132, %v216, %v220
  %v225 = vsel %vm133, %v217, %v221
  %v226 = vsel %vm134, %v218, %v222
  %v227 = vsel %vm135, %v219, %v223
  %v228 = vadd.f32 %v224, 1.0
  %v229 = vadd.f32 %v225, 1.0
  %v230 = vadd.f32 %v226, 1.0
  %v231 = vadd.f32 %v227, 1.0
  %v232 = vmul.f32 %v124, %v228
  %v233 = vmul.f32 %v125, %v229
  %v234 = vmul.f32 %v126, %v230
  %v235 = vmul.f32 %v127, %v231
  %vm236 = vcmask 31744
  %237 = vst.msk [vmem:[%s3] sm:$0xff] %vm236, %v232
  %238 = vst.msk [vmem:[%s3 + $0x8] sm:$0xff] %vm236, %v233
  %239 = vst.msk [vmem:[%s3 + $0x10] sm:$0xff] %vm236, %v234
  %240 = vst.msk [vmem:[%s3 + $0x18] sm:$0xff] %vm236, %v235
  // Predicated region
  $region14: #{offset_generation_forward.37} parent=0 // pred_check
    _
  $region15: #{offset_generation_forward.37} parent=0 // pred_check_branch
    %242 = sbr.rel (0) target = $region17
  $region16: #{offset_generation_forward.37} parent=0 // pred_region
    _
  $region17: #{offset_generation_forward.37} parent=0 // pred_fallthru
    _
  // Predicated region
  $region18: #{offset_generation_forward.37} parent=0 // pred_check
    _
  $region19: #{offset_generation_forward.37} parent=0 // pred_check_branch
    %244 = sbr.rel (0) target = $region21
  $region20: #{offset_generation_forward.37} parent=0 // pred_region
    _
  $region21: #{offset_generation_forward.37} parent=0 // pred_fallthru
    _

// kernel: offset_generation_forward.38
$region0: #{offset_generation_forward.38}
  #allocation0 [shape = 'u32[]', space=smem, size = 0x4, offset = 0x4, fixed_abs, tag = 'smem constant byte address 0x4 - core index']
  #allocation1 [shape = 'u32[144,128]{1,0:T(1,128)}', space=vmem, size = 0x12000, scoped, tag = 'internal scratch']
  %s0 = inlined_call_operand.vmem [shape: f32[32,36], index: 0, kind: input, shape index: {}]
  %s1 = inlined_call_operand.vmem [shape: f32[36,4], index: 1, kind: input, shape index: {}]
  %s2 = inlined_call_operand.vmem [shape: f32[1,4], index: 2, kind: input, shape index: {}]
  %s3 = inlined_call_operand.vmem [shape: f32[32,4], index: 3, kind: output, shape index: {}]
  %s4 = sld [smem:[#allocation0]]
  $region22: #{offset_generation_forward.38} parent=0
    _
  %s6 = ssub.s32 1, %s4
  %s7 = scalar_select 0, %s6, %s4
  // Predicated region
  $region2: #{offset_generation_forward.38} parent=0 // pred_check
    _
  $region3: #{offset_generation_forward.38} parent=0 // pred_check_branch
    %9 = sbr.rel (0) target = $region5
  $region4: #{offset_generation_forward.38} parent=0 // pred_region
    _
  $region5: #{offset_generation_forward.38} parent=0 // pred_fallthru
    _
  // Predicated region
  $region6: #{offset_generation_forward.38} parent=0 // pred_check
    _
  $region7: #{offset_generation_forward.38} parent=0 // pred_check_branch
    %11 = sbr.rel (0) target = $region9
  $region8: #{offset_generation_forward.38} parent=0 // pred_region
    _
  $region9: #{offset_generation_forward.38} parent=0 // pred_fallthru
    _
  // Predicated region
  $region10: #{offset_generation_forward.38} parent=0 // pred_check
    _
  $region11: #{offset_generation_forward.38} parent=0 // pred_check_branch
    %13 = sbr.rel (0) target = $region13
  $region12: #{offset_generation_forward.38} parent=0 // pred_region
    _
  $region13: #{offset_generation_forward.38} parent=0 // pred_fallthru
    _
  %v14 = vld [vmem:[%s0] sm:$0xff]
  %v15 = vld [vmem:[%s0 + $0x8] sm:$0xff]
  %v16 = vld [vmem:[%s0 + $0x10] sm:$0xff]
  %v17 = vld [vmem:[%s0 + $0x18] sm:$0xff]
  %v18 = vld [vmem:[%s1] sm:$0xff]
  %v19 = vld [vmem:[%s1 + $0x8] sm:$0xff]
  %v20 = vld [vmem:[%s1 + $0x10] sm:$0xff]
  %v21 = vld [vmem:[%s1 + $0x18] sm:$0xff]
  %v22 = vld [vmem:[%s1 + $0x20] sm:$0xf]
  %v23 = vld [vmem:[%s2] sm:$0x1]
  %v25 = vlaneseq
  %v26 = vshrl.u32 %v25, 7
  %v27 = vsub.s32 0, %v26
  %v28 = vrot.slane %v23, %v27
  %vm30 = vcmask 293888
  %v32 = vsel %vm30, %v14, 0
  %v35 = vsel %vm30, %v15, 0
  %v38 = vsel %vm30, %v16, 0
  %v41 = vsel %vm30, %v17, 0
  %vm43 = vcmask 1043456
  %v45 = vsel %vm43, %v22, 0
  %47 = vmatprep.subr.mxu0 0.0
  %48 = vmatpush1.msra.mxu0 0.0
  %49 = vmatprep.subr.mxu0 0.0
  %50 = vmatpush1.msra.mxu0 0.0
  %51 = vmatprep.subr.mxu0 0.0
  %52 = vmatpush1.msra.mxu0 0.0
  %53 = vmatprep.subr.mxu0 0.0
  %54 = vmatpush1.msra.mxu0 0.0
  %55 = vmatprep.subr.mxu0 0.0
  %56 = vmatpush1.msra.mxu0 0.0
  %57 = vmatprep.subr.mxu0 0.0
  %58 = vmatpush1.msra.mxu0 0.0
  %59 = vmatprep.subr.mxu0 0.0
  %60 = vmatpush1.msra.mxu0 0.0
  %61 = vmatprep.subr.mxu0 0.0
  %62 = vmatpush1.msra.mxu0 0.0
  %63 = vmatprep.subr.mxu0 0.0
  %64 = vmatpush1.msra.mxu0 0.0
  %65 = vmatprep.subr.mxu0 0.0
  %66 = vmatpush1.msra.mxu0 0.0
  %67 = vmatprep.subr.mxu0 0.0
  %68 = vmatpush1.msra.mxu0 0.0
  %69 = vmatprep.subr.mxu0 0.0
  %70 = vmatpush1.msra.mxu0 %v45
  %71 = vmatprep.subr.mxu0 0.0
  %72 = vmatpush1.msra.mxu0 %v21
  %73 = vmatprep.subr.mxu0 0.0
  %74 = vmatpush1.msra.mxu0 %v20
  %75 = vmatprep.subr.mxu0 0.0
  %76 = vmatpush1.msra.mxu0 %v19
  %77 = vmatprep.subr.mxu0 0.0
  %78 = vmatpush1.msra.mxu0 %v18
  %79 = vmatprep.subr.mxu0 0.0
  %80 = vmatpush2.msra.mxu0 0.0
  %81 = vmatprep.subr.mxu0 0.0
  %82 = vmatpush2.msra.mxu0 0.0
  %83 = vmatprep.subr.mxu0 0.0
  %84 = vmatpush2.msra.mxu0 0.0
  %85 = vmatprep.subr.mxu0 0.0
  %86 = vmatpush2.msra.mxu0 0.0
  %87 = vmatprep.subr.mxu0 0.0
  %88 = vmatpush2.msra.mxu0 0.0
  %89 = vmatprep.subr.mxu0 0.0
  %90 = vmatpush2.msra.mxu0 0.0
  %91 = vmatprep.subr.mxu0 0.0
  %92 = vmatpush2.msra.mxu0 0.0
  %93 = vmatprep.subr.mxu0 0.0
  %94 = vmatpush2.msra.mxu0 0.0
  %95 = vmatprep.subr.mxu0 0.0
  %96 = vmatpush2.msra.mxu0 0.0
  %97 = vmatprep.subr.mxu0 0.0
  %98 = vmatpush2.msra.mxu0 0.0
  %99 = vmatprep.subr.mxu0 0.0
  %100 = vmatpush2.msra.mxu0 0.0
  %101 = vmatprep.subr.mxu0 0.0
  %102 = vmatpush2.msra.mxu0 0.0
  %103 = vmatprep.subr.mxu0 0.0
  %104 = vmatpush2.msra.mxu0 0.0
  %105 = vmatprep.subr.mxu0 0.0
  %106 = vmatpush2.msra.mxu0 0.0
  %107 = vmatprep.subr.mxu0 0.0
  %108 = vmatpush2.msra.mxu0 0.0
  %109 = vmatprep.subr.mxu0 0.0
  %110 = vmatpush2.msra.mxu0 0.0
  %111 = vmatprep.mubr.f32.mxu0 0.0
  %112 = vmatmul.mubr.f32.gmra.mxu0 %v32
  %v113 = vpop.f32.mrf.mxu0
  %v114 = vadd.f32 %v28, %v113
  %v115 = vpop.f32.mrf.mxu0
  %116 = vmatprep.mubr.f32.mxu0 0.0
  %117 = vmatmul.mubr.f32.gmra.mxu0 %v35
  %v118 = vpop.f32.mrf.mxu0
  %v119 = vadd.f32 %v28, %v118
  %v120 = vpop.f32.mrf.mxu0
  %121 = vmatprep.mubr.f32.mxu0 0.0
  %122 = vmatmul.mubr.f32.gmra.mxu0 %v38
  %v123 = vpop.f32.mrf.mxu0
  %v124 = vadd.f32 %v28, %v123
  %v125 = vpop.f32.mrf.mxu0
  %126 = vmatprep.mubr.f32.mxu0 0.0
  %127 = vmatmul.mubr.f32.gmra.mxu0 %v41
  %v128 = vpop.f32.mrf.mxu0
  %v129 = vadd.f32 %v28, %v128
  %v130 = vpop.f32.mrf.mxu0
  %131 = vdwg.mxu0
  %vm132 = vcmask 31744
  %133 = vst.msk [vmem:[%s3] sm:$0xff] %vm132, %v114
  %134 = vst.msk [vmem:[%s3 + $0x8] sm:$0xff] %vm132, %v119
  %135 = vst.msk [vmem:[%s3 + $0x10] sm:$0xff] %vm132, %v124
  %136 = vst.msk [vmem:[%s3 + $0x18] sm:$0xff] %vm132, %v129
  // Predicated region
  $region14: #{offset_generation_forward.38} parent=0 // pred_check
    _
  $region15: #{offset_generation_forward.38} parent=0 // pred_check_branch
    %138 = sbr.rel (0) target = $region17
  $region16: #{offset_generation_forward.38} parent=0 // pred_region
    _
  $region17: #{offset_generation_forward.38} parent=0 // pred_fallthru
    _
  // Predicated region
  $region18: #{offset_generation_forward.38} parent=0 // pred_check
    _
  $region19: #{offset_generation_forward.38} parent=0 // pred_check_branch
    %140 = sbr.rel (0) target = $region21
  $region20: #{offset_generation_forward.38} parent=0 // pred_region
    _
  $region21: #{offset_generation_forward.38} parent=0 // pred_fallthru
    _

// kernel: offset_generation_forward.43
$region0: #{offset_generation_forward.43}
  #allocation0 [shape = 'u32[]', space=smem, size = 0x4, offset = 0x4, fixed_abs, tag = 'smem constant byte address 0x4 - core index']
  #allocation1 [shape = 'u32[144,128]{1,0:T(1,128)}', space=vmem, size = 0x12000, scoped, tag = 'internal scratch']
  %s0 = inlined_call_operand.vmem [shape: f32[32,2], index: 0, kind: input, shape index: {}]
  %s1 = inlined_call_operand.vmem [shape: f32[2,2], index: 1, kind: input, shape index: {}]
  %s2 = inlined_call_operand.vmem [shape: f32[1,2], index: 2, kind: input, shape index: {}]
  %s3 = inlined_call_operand.vmem [shape: f32[32,2], index: 3, kind: output, shape index: {}]
  %s4 = sld [smem:[#allocation0]]
  $region22: #{offset_generation_forward.43} parent=0
    _
  %s6 = ssub.s32 1, %s4
  %s7 = scalar_select 0, %s6, %s4
  // Predicated region
  $region2: #{offset_generation_forward.43} parent=0 // pred_check
    _
  $region3: #{offset_generation_forward.43} parent=0 // pred_check_branch
    %9 = sbr.rel (0) target = $region5
  $region4: #{offset_generation_forward.43} parent=0 // pred_region
    _
  $region5: #{offset_generation_forward.43} parent=0 // pred_fallthru
    _
  // Predicated region
  $region6: #{offset_generation_forward.43} parent=0 // pred_check
    _
  $region7: #{offset_generation_forward.43} parent=0 // pred_check_branch
    %11 = sbr.rel (0) target = $region9
  $region8: #{offset_generation_forward.43} parent=0 // pred_region
    _
  $region9: #{offset_generation_forward.43} parent=0 // pred_fallthru
    _
  // Predicated region
  $region10: #{offset_generation_forward.43} parent=0 // pred_check
    _
  $region11: #{offset_generation_forward.43} parent=0 // pred_check_branch
    %13 = sbr.rel (0) target = $region13
  $region12: #{offset_generation_forward.43} parent=0 // pred_region
    _
  $region13: #{offset_generation_forward.43} parent=0 // pred_fallthru
    _
  %v14 = vld [vmem:[%s0] sm:$0xff]
  %v15 = vld [vmem:[%s0 + $0x8] sm:$0xff]
  %v16 = vld [vmem:[%s0 + $0x10] sm:$0xff]
  %v17 = vld [vmem:[%s0 + $0x18] sm:$0xff]
  %v18 = vld [vmem:[%s1] sm:$0x3]
  %v19 = vld [vmem:[%s2] sm:$0x1]
  %v21 = vlaneseq
  %v22 = vshrl.u32 %v21, 7
  %v23 = vsub.s32 0, %v22
  %v24 = vrot.slane %v19, %v23
  %vm26 = vcmask 15360
  %v28 = vsel %vm26, %v14, 0
  %v31 = vsel %vm26, %v15, 0
  %v34 = vsel %vm26, %v16, 0
  %v37 = vsel %vm26, %v17, 0
  %vm39 = vcmask 1041408
  %v41 = vsel %vm39, %v18, 0
  %43 = vmatprep.subr.mxu0 0.0
  %44 = vmatpush1.msra.mxu0 0.0
  %45 = vmatprep.subr.mxu0 0.0
  %46 = vmatpush1.msra.mxu0 0.0
  %47 = vmatprep.subr.mxu0 0.0
  %48 = vmatpush1.msra.mxu0 0.0
  %49 = vmatprep.subr.mxu0 0.0
  %50 = vmatpush1.msra.mxu0 0.0
  %51 = vmatprep.subr.mxu0 0.0
  %52 = vmatpush1.msra.mxu0 0.0
  %53 = vmatprep.subr.mxu0 0.0
  %54 = vmatpush1.msra.mxu0 0.0
  %55 = vmatprep.subr.mxu0 0.0
  %56 = vmatpush1.msra.mxu0 0.0
  %57 = vmatprep.subr.mxu0 0.0
  %58 = vmatpush1.msra.mxu0 0.0
  %59 = vmatprep.subr.mxu0 0.0
  %60 = vmatpush1.msra.mxu0 0.0
  %61 = vmatprep.subr.mxu0 0.0
  %62 = vmatpush1.msra.mxu0 0.0
  %63 = vmatprep.subr.mxu0 0.0
  %64 = vmatpush1.msra.mxu0 0.0
  %65 = vmatprep.subr.mxu0 0.0
  %66 = vmatpush1.msra.mxu0 0.0
  %67 = vmatprep.subr.mxu0 0.0
  %68 = vmatpush1.msra.mxu0 0.0
  %69 = vmatprep.subr.mxu0 0.0
  %70 = vmatpush1.msra.mxu0 0.0
  %71 = vmatprep.subr.mxu0 0.0
  %72 = vmatpush1.msra.mxu0 0.0
  %73 = vmatprep.subr.mxu0 0.0
  %74 = vmatpush1.msra.mxu0 %v41
  %75 = vmatprep.subr.mxu0 0.0
  %76 = vmatpush2.msra.mxu0 0.0
  %77 = vmatprep.subr.mxu0 0.0
  %78 = vmatpush2.msra.mxu0 0.0
  %79 = vmatprep.subr.mxu0 0.0
  %80 = vmatpush2.msra.mxu0 0.0
  %81 = vmatprep.subr.mxu0 0.0
  %82 = vmatpush2.msra.mxu0 0.0
  %83 = vmatprep.subr.mxu0 0.0
  %84 = vmatpush2.msra.mxu0 0.0
  %85 = vmatprep.subr.mxu0 0.0
  %86 = vmatpush2.msra.mxu0 0.0
  %87 = vmatprep.subr.mxu0 0.0
  %88 = vmatpush2.msra.mxu0 0.0
  %89 = vmatprep.subr.mxu0 0.0
  %90 = vmatpush2.msra.mxu0 0.0
  %91 = vmatprep.subr.mxu0 0.0
  %92 = vmatpush2.msra.mxu0 0.0
  %93 = vmatprep.subr.mxu0 0.0
  %94 = vmatpush2.msra.mxu0 0.0
  %95 = vmatprep.subr.mxu0 0.0
  %96 = vmatpush2.msra.mxu0 0.0
  %97 = vmatprep.subr.mxu0 0.0
  %98 = vmatpush2.msra.mxu0 0.0
  %99 = vmatprep.subr.mxu0 0.0
  %100 = vmatpush2.msra.mxu0 0.0
  %101 = vmatprep.subr.mxu0 0.0
  %102 = vmatpush2.msra.mxu0 0.0
  %103 = vmatprep.subr.mxu0 0.0
  %104 = vmatpush2.msra.mxu0 0.0
  %105 = vmatprep.subr.mxu0 0.0
  %106 = vmatpush2.msra.mxu0 0.0
  %107 = vmatprep.mubr.f32.mxu0 0.0
  %108 = vmatmul.mubr.f32.gmra.mxu0 %v28
  %v109 = vpop.f32.mrf.mxu0
  %v110 = vadd.f32 %v24, %v109
  %v111 = vpop.f32.mrf.mxu0
  %112 = vmatprep.mubr.f32.mxu0 0.0
  %113 = vmatmul.mubr.f32.gmra.mxu0 %v31
  %v114 = vpop.f32.mrf.mxu0
  %v115 = vadd.f32 %v24, %v114
  %v116 = vpop.f32.mrf.mxu0
  %117 = vmatprep.mubr.f32.mxu0 0.0
  %118 = vmatmul.mubr.f32.gmra.mxu0 %v34
  %v119 = vpop.f32.mrf.mxu0
  %v120 = vadd.f32 %v24, %v119
  %v121 = vpop.f32.mrf.mxu0
  %122 = vmatprep.mubr.f32.mxu0 0.0
  %123 = vmatmul.mubr.f32.gmra.mxu0 %v37
  %v124 = vpop.f32.mrf.mxu0
  %v125 = vadd.f32 %v24, %v124
  %v126 = vpop.f32.mrf.mxu0
  %127 = vdwg.mxu0
  %128 = vst.msk [vmem:[%s3] sm:$0xff] %vm26, %v110
  %129 = vst.msk [vmem:[%s3 + $0x8] sm:$0xff] %vm26, %v115
  %130 = vst.msk [vmem:[%s3 + $0x10] sm:$0xff] %vm26, %v120
  %131 = vst.msk [vmem:[%s3 + $0x18] sm:$0xff] %vm26, %v125
  // Predicated region
  $region14: #{offset_generation_forward.43} parent=0 // pred_check
    _
  $region15: #{offset_generation_forward.43} parent=0 // pred_check_branch
    %133 = sbr.rel (0) target = $region17
  $region16: #{offset_generation_forward.43} parent=0 // pred_region
    _
  $region17: #{offset_generation_forward.43} parent=0 // pred_fallthru
    _
  // Predicated region
  $region18: #{offset_generation_forward.43} parent=0 // pred_check
    _
  $region19: #{offset_generation_forward.43} parent=0 // pred_check_branch
    %135 = sbr.rel (0) target = $region21
  $region20: #{offset_generation_forward.43} parent=0 // pred_region
    _
  $region21: #{offset_generation_forward.43} parent=0 // pred_fallthru
    _

// kernel: offset_generation_forward.42
$region0: #{offset_generation_forward.42}
  #allocation0 [shape = 'u32[]', space=smem, size = 0x4, offset = 0x4, fixed_abs, tag = 'smem constant byte address 0x4 - core index']
  #allocation1 [shape = 'u32[144,128]{1,0:T(1,128)}', space=vmem, size = 0x12000, scoped, tag = 'internal scratch']
  %s0 = inlined_call_operand.vmem [shape: f32[32,4], index: 0, kind: input, shape index: {}]
  %s1 = inlined_call_operand.vmem [shape: f32[4,2], index: 1, kind: input, shape index: {}]
  %s2 = inlined_call_operand.vmem [shape: f32[1,2], index: 2, kind: input, shape index: {}]
  %s3 = inlined_call_operand.vmem [shape: f32[32,2], index: 3, kind: output, shape index: {}]
  %s4 = sld [smem:[#allocation0]]
  $region22: #{offset_generation_forward.42} parent=0
    _
  %s6 = ssub.s32 1, %s4
  %s7 = scalar_select 0, %s6, %s4
  // Predicated region
  $region2: #{offset_generation_forward.42} parent=0 // pred_check
    _
  $region3: #{offset_generation_forward.42} parent=0 // pred_check_branch
    %9 = sbr.rel (0) target = $region5
  $region4: #{offset_generation_forward.42} parent=0 // pred_region
    _
  $region5: #{offset_generation_forward.42} parent=0 // pred_fallthru
    _
  // Predicated region
  $region6: #{offset_generation_forward.42} parent=0 // pred_check
    _
  $region7: #{offset_generation_forward.42} parent=0 // pred_check_branch
    %11 = sbr.rel (0) target = $region9
  $region8: #{offset_generation_forward.42} parent=0 // pred_region
    _
  $region9: #{offset_generation_forward.42} parent=0 // pred_fallthru
    _
  // Predicated region
  $region10: #{offset_generation_forward.42} parent=0 // pred_check
    _
  $region11: #{offset_generation_forward.42} parent=0 // pred_check_branch
    %13 = sbr.rel (0) target = $region13
  $region12: #{offset_generation_forward.42} parent=0 // pred_region
    _
  $region13: #{offset_generation_forward.42} parent=0 // pred_fallthru
    _
  %v14 = vld [vmem:[%s0] sm:$0xff]
  %v15 = vld [vmem:[%s0 + $0x8] sm:$0xff]
  %v16 = vld [vmem:[%s0 + $0x10] sm:$0xff]
  %v17 = vld [vmem:[%s0 + $0x18] sm:$0xff]
  %v18 = vld [vmem:[%s1] sm:$0xf]
  %v19 = vld [vmem:[%s2] sm:$0x1]
  %v21 = vlaneseq
  %v22 = vshrl.u32 %v21, 7
  %v23 = vsub.s32 0, %v22
  %v24 = vrot.slane %v19, %v23
  %vm26 = vcmask 31744
  %v28 = vsel %vm26, %v14, 0
  %v31 = vsel %vm26, %v15, 0
  %v34 = vsel %vm26, %v16, 0
  %v37 = vsel %vm26, %v17, 0
  %vm39 = vcmask 1043456
  %v41 = vsel %vm39, %v18, 0
  %43 = vmatprep.subr.mxu0 0.0
  %44 = vmatpush1.msra.mxu0 0.0
  %45 = vmatprep.subr.mxu0 0.0
  %46 = vmatpush1.msra.mxu0 0.0
  %47 = vmatprep.subr.mxu0 0.0
  %48 = vmatpush1.msra.mxu0 0.0
  %49 = vmatprep.subr.mxu0 0.0
  %50 = vmatpush1.msra.mxu0 0.0
  %51 = vmatprep.subr.mxu0 0.0
  %52 = vmatpush1.msra.mxu0 0.0
  %53 = vmatprep.subr.mxu0 0.0
  %54 = vmatpush1.msra.mxu0 0.0
  %55 = vmatprep.subr.mxu0 0.0
  %56 = vmatpush1.msra.mxu0 0.0
  %57 = vmatprep.subr.mxu0 0.0
  %58 = vmatpush1.msra.mxu0 0.0
  %59 = vmatprep.subr.mxu0 0.0
  %60 = vmatpush1.msra.mxu0 0.0
  %61 = vmatprep.subr.mxu0 0.0
  %62 = vmatpush1.msra.mxu0 0.0
  %63 = vmatprep.subr.mxu0 0.0
  %64 = vmatpush1.msra.mxu0 0.0
  %65 = vmatprep.subr.mxu0 0.0
  %66 = vmatpush1.msra.mxu0 0.0
  %67 = vmatprep.subr.mxu0 0.0
  %68 = vmatpush1.msra.mxu0 0.0
  %69 = vmatprep.subr.mxu0 0.0
  %70 = vmatpush1.msra.mxu0 0.0
  %71 = vmatprep.subr.mxu0 0.0
  %72 = vmatpush1.msra.mxu0 0.0
  %73 = vmatprep.subr.mxu0 0.0
  %74 = vmatpush1.msra.mxu0 %v41
  %75 = vmatprep.subr.mxu0 0.0
  %76 = vmatpush2.msra.mxu0 0.0
  %77 = vmatprep.subr.mxu0 0.0
  %78 = vmatpush2.msra.mxu0 0.0
  %79 = vmatprep.subr.mxu0 0.0
  %80 = vmatpush2.msra.mxu0 0.0
  %81 = vmatprep.subr.mxu0 0.0
  %82 = vmatpush2.msra.mxu0 0.0
  %83 = vmatprep.subr.mxu0 0.0
  %84 = vmatpush2.msra.mxu0 0.0
  %85 = vmatprep.subr.mxu0 0.0
  %86 = vmatpush2.msra.mxu0 0.0
  %87 = vmatprep.subr.mxu0 0.0
  %88 = vmatpush2.msra.mxu0 0.0
  %89 = vmatprep.subr.mxu0 0.0
  %90 = vmatpush2.msra.mxu0 0.0
  %91 = vmatprep.subr.mxu0 0.0
  %92 = vmatpush2.msra.mxu0 0.0
  %93 = vmatprep.subr.mxu0 0.0
  %94 = vmatpush2.msra.mxu0 0.0
  %95 = vmatprep.subr.mxu0 0.0
  %96 = vmatpush2.msra.mxu0 0.0
  %97 = vmatprep.subr.mxu0 0.0
  %98 = vmatpush2.msra.mxu0 0.0
  %99 = vmatprep.subr.mxu0 0.0
  %100 = vmatpush2.msra.mxu0 0.0
  %101 = vmatprep.subr.mxu0 0.0
  %102 = vmatpush2.msra.mxu0 0.0
  %103 = vmatprep.subr.mxu0 0.0
  %104 = vmatpush2.msra.mxu0 0.0
  %105 = vmatprep.subr.mxu0 0.0
  %106 = vmatpush2.msra.mxu0 0.0
  %107 = vmatprep.mubr.f32.mxu0 0.0
  %108 = vmatmul.mubr.f32.gmra.mxu0 %v28
  %v109 = vpop.f32.mrf.mxu0
  %v110 = vadd.f32 %v24, %v109
  %v111 = vpop.f32.mrf.mxu0
  %112 = vmatprep.mubr.f32.mxu0 0.0
  %113 = vmatmul.mubr.f32.gmra.mxu0 %v31
  %v114 = vpop.f32.mrf.mxu0
  %v115 = vadd.f32 %v24, %v114
  %v116 = vpop.f32.mrf.mxu0
  %117 = vmatprep.mubr.f32.mxu0 0.0
  %118 = vmatmul.mubr.f32.gmra.mxu0 %v34
  %v119 = vpop.f32.mrf.mxu0
  %v120 = vadd.f32 %v24, %v119
  %v121 = vpop.f32.mrf.mxu0
  %122 = vmatprep.mubr.f32.mxu0 0.0
  %123 = vmatmul.mubr.f32.gmra.mxu0 %v37
  %v124 = vpop.f32.mrf.mxu0
  %v125 = vadd.f32 %v24, %v124
  %v126 = vpop.f32.mrf.mxu0
  %127 = vdwg.mxu0
  %v128 = vmul.f32 %v110, 0.5
  %v129 = vmul.f32 %v115, 0.5
  %v130 = vmul.f32 %v120, 0.5
  %v131 = vmul.f32 %v125, 0.5
  %v132 = vmul.f32 %v110, 0.70710677
  %v133 = vmul.f32 %v115, 0.70710677
  %v134 = vmul.f32 %v120, 0.70710677
  %v135 = vmul.f32 %v125, 0.70710677
  %vm136 = vcmp.ge.f32.partialorder %v132, 0.0
  %vm137 = vcmp.ge.f32.partialorder %v133, 0.0
  %vm138 = vcmp.ge.f32.partialorder %v134, 0.0
  %vm139 = vcmp.ge.f32.partialorder %v135, 0.0
  %v140 = vsub.f32 0.0, %v132
  %v141 = vsub.f32 0.0, %v133
  %v142 = vsub.f32 0.0, %v134
  %v143 = vsub.f32 0.0, %v135
  %v144 = vsel %vm136, %v132, %v140
  %v145 = vsel %vm137, %v133, %v141
  %v146 = vsel %vm138, %v134, %v142
  %v147 = vsel %vm139, %v135, %v143
  %v148 = vmul.f32 %v144, 0.3275911
  %v149 = vmul.f32 %v145, 0.3275911
  %v150 = vmul.f32 %v146, 0.3275911
  %v151 = vmul.f32 %v147, 0.3275911
  %v152 = vadd.f32 %v148, 1.0
  %v153 = vadd.f32 %v149, 1.0
  %v154 = vadd.f32 %v150, 1.0
  %v155 = vadd.f32 %v151, 1.0
  %v156 = vrcp.pop %v152
  %v157 = vmul.f32 1.0, %v156
  %v158 = vrcp.pop %v153
  %v159 = vmul.f32 1.0, %v158
  %v160 = vrcp.pop %v154
  %v161 = vmul.f32 1.0, %v160
  %v162 = vrcp.pop %v155
  %v163 = vmul.f32 1.0, %v162
  %v164 = vmul.f32 %v157, 1.0614054
  %v165 = vmul.f32 %v159, 1.0614054
  %v166 = vmul.f32 %v161, 1.0614054
  %v167 = vmul.f32 %v163, 1.0614054
  %v168 = vadd.f32 %v164, -1.4531521
  %v169 = vadd.f32 %v165, -1.4531521
  %v170 = vadd.f32 %v166, -1.4531521
  %v171 = vadd.f32 %v167, -1.4531521
  %v172 = vmul.f32 %v157, %v168
  %v173 = vmul.f32 %v159, %v169
  %v174 = vmul.f32 %v161, %v170
  %v175 = vmul.f32 %v163, %v171
  %v176 = vadd.f32 %v172, 1.4214138
  %v177 = vadd.f32 %v173, 1.4214138
  %v178 = vadd.f32 %v174, 1.4214138
  %v179 = vadd.f32 %v175, 1.4214138
  %v180 = vmul.f32 %v157, %v176
  %v181 = vmul.f32 %v159, %v177
  %v182 = vmul.f32 %v161, %v178
  %v183 = vmul.f32 %v163, %v179
  %v184 = vadd.f32 %v180, -0.28449672
  %v185 = vadd.f32 %v181, -0.28449672
  %v186 = vadd.f32 %v182, -0.28449672
  %v187 = vadd.f32 %v183, -0.28449672
  %v188 = vmul.f32 %v157, %v184
  %v189 = vmul.f32 %v159, %v185
  %v190 = vmul.f32 %v161, %v186
  %v191 = vmul.f32 %v163, %v187
  %v192 = vadd.f32 %v188, 0.2548296
  %v193 = vadd.f32 %v189, 0.2548296
  %v194 = vadd.f32 %v190, 0.2548296
  %v195 = vadd.f32 %v191, 0.2548296
  %v196 = vmul.f32 %v157, %v192
  %v197 = vmul.f32 %v159, %v193
  %v198 = vmul.f32 %v161, %v194
  %v199 = vmul.f32 %v163, %v195
  %v200 = vsub.f32 0.0, %v144
  %v201 = vsub.f32 0.0, %v145
  %v202 = vsub.f32 0.0, %v146
  %v203 = vsub.f32 0.0, %v147
  %v204 = vmul.f32 %v200, %v144
  %v205 = vmul.f32 %v201, %v145
  %v206 = vmul.f32 %v202, %v146
  %v207 = vmul.f32 %v203, %v147
  %v208 = vmul.f32 %v204, 1.442695
  %v209 = vpow.pop %v208
  %v210 = vmul.f32 %v205, 1.442695
  %v211 = vpow.pop %v210
  %v212 = vmul.f32 %v206, 1.442695
  %v213 = vpow.pop %v212
  %v214 = vmul.f32 %v207, 1.442695
  %v215 = vpow.pop %v214
  %v216 = vmul.f32 %v196, %v209
  %v217 = vmul.f32 %v197, %v211
  %v218 = vmul.f32 %v198, %v213
  %v219 = vmul.f32 %v199, %v215
  %v220 = vsub.f32 1.0, %v216
  %v221 = vsub.f32 1.0, %v217
  %v222 = vsub.f32 1.0, %v218
  %v223 = vsub.f32 1.0, %v219
  %v224 = vsub.f32 0.0, %v220
  %v225 = vsub.f32 0.0, %v221
  %v226 = vsub.f32 0.0, %v222
  %v227 = vsub.f32 0.0, %v223
  %v228 = vsel %vm136, %v220, %v224
  %v229 = vsel %vm137, %v221, %v225
  %v230 = vsel %vm138, %v222, %v226
  %v231 = vsel %vm139, %v223, %v227
  %v232 = vadd.f32 %v228, 1.0
  %v233 = vadd.f32 %v229, 1.0
  %v234 = vadd.f32 %v230, 1.0
  %v235 = vadd.f32 %v231, 1.0
  %v236 = vmul.f32 %v128, %v232
  %v237 = vmul.f32 %v129, %v233
  %v238 = vmul.f32 %v130, %v234
  %v239 = vmul.f32 %v131, %v235
  %vm240 = vcmask 15360
  %241 = vst.msk [vmem:[%s3] sm:$0xff] %vm240, %v236
  %242 = vst.msk [vmem:[%s3 + $0x8] sm:$0xff] %vm240, %v237
  %243 = vst.msk [vmem:[%s3 + $0x10] sm:$0xff] %vm240, %v238
  %244 = vst.msk [vmem:[%s3 + $0x18] sm:$0xff] %vm240, %v239
  // Predicated region
  $region14: #{offset_generation_forward.42} parent=0 // pred_check
    _
  $region15: #{offset_generation_forward.42} parent=0 // pred_check_branch
    %246 = sbr.rel (0) target = $region17
  $region16: #{offset_generation_forward.42} parent=0 // pred_region
    _
  $region17: #{offset_generation_forward.42} parent=0 // pred_fallthru
    _
  // Predicated region
  $region18: #{offset_generation_forward.42} parent=0 // pred_check
    _
  $region19: #{offset_generation_forward.42} parent=0 // pred_check_branch
    %248 = sbr.rel (0) target = $region21
  $region20: #{offset_generation_forward.42} parent=0 // pred_region
    _
  $region21: #{offset_generation_forward.42} parent=0 // pred_fallthru
    _

// kernel: offset_generation_forward.45
$region0: #{offset_generation_forward.45}
  #allocation0 [shape = 'u32[]', space=smem, size = 0x4, offset = 0x4, fixed_abs, tag = 'smem constant byte address 0x4 - core index']
  #allocation1 [shape = 'u32[144,128]{1,0:T(1,128)}', space=vmem, size = 0x12000, scoped, tag = 'internal scratch']
  %s0 = inlined_call_operand.vmem [shape: f32[2,6,2], index: 0, kind: input, shape index: {}]
  %s1 = inlined_call_operand.vmem [shape: f32[2,2,16], index: 1, kind: input, shape index: {}]
  %s2 = inlined_call_operand.vmem [shape: f32[2,6,16], index: 2, kind: output, shape index: {}]
  %s3 = sld [smem:[#allocation0]]
  $region41: #{offset_generation_forward.45} parent=0
    _
  %s5 = ssub.s32 1, %s3
  %s6 = scalar_select 0, %s5, %s3
  loop: start=0, step=1, limit=4
  $region2: #{offset_generation_forward.45} parent=0 // loop_pre_header
    _
  $region3: #{offset_generation_forward.45} parent=0 // loop_header
    %s8 = sphi 0, %s12
    %p9 = scmp.ge.s32.totalorder %s8, 4
    %s18 = sphi 0, %s20
    %s21 = sphi 0, %s18
    %s22 = sphi 0, %s21
    %s38 = sphi 0, %s22
    %s44 = sphi 0, %s46
    %s47 = sphi 0, %s44
    %s48 = sphi 0, %s47
    %s64 = sphi 0, %s48
    %s70 = sphi 0, %s72
    %s73 = sphi 0, %s70
    %s74 = sphi 0, %s73
    %s90 = sphi 0, %s74
  $region4: #{offset_generation_forward.45} parent=0 // loop_header_branch
    %11 = sbr.rel (%p9) target = $region8
  $region5: #{offset_generation_forward.45} parent=0 // loop_body
    %s13 = ssub.s32 %s8, 1
    %s14 = ssub.s32 %s8, 2
    %s15 = sadd.s32 %s8, 1
    %s16 = ssub.s32 %s8, %s15
    %p17 = scmp.eq.s32.totalorder %s16, 0
    %s19 = sadd.s32 %s18, 1
    %s20 = scalar_select %p17, %s18, %s19
    %p23 = pneg %p17
    %p24 = scmp.eq.s32.totalorder %s8, 1
    %p25 = por %p23, %p24
    %p26 = scmp.ne.s32.totalorder %s18, %s21
    %p27 = scmp.eq.s32.totalorder %s8, 0
    %p28 = por %p26, %p27
    %p29 = scmp.ne.s32.totalorder %s18, %s21
    %p30 = scmp.eq.s32.totalorder %s13, 1
    %p31 = por %p29, %p30
    %p32 = scmp.ne.s32.totalorder %s21, %s22
    %p33 = scmp.eq.s32.totalorder %s13, 0
    %p34 = por %p32, %p33
    %p35 = scmp.ne.s32.totalorder %s21, %s22
    %p36 = scmp.eq.s32.totalorder %s14, 1
    %p37 = por %p35, %p36
    %p39 = scmp.ne.s32.totalorder %s22, %s38
    %p40 = scmp.eq.s32.totalorder %s14, 0
    %p41 = por %p39, %p40
    %s42 = ssub.s32 %s8, %s15
    %p43 = scmp.eq.s32.totalorder %s42, 0
    %s45 = sadd.s32 %s44, 1
    %s46 = scalar_select %p43, %s44, %s45
    %p49 = pneg %p43
    %p50 = scmp.eq.s32.totalorder %s8, 1
    %p51 = por %p49, %p50
    %p52 = scmp.ne.s32.totalorder %s44, %s47
    %p53 = scmp.eq.s32.totalorder %s8, 0
    %p54 = por %p52, %p53
    %p55 = scmp.ne.s32.totalorder %s44, %s47
    %p56 = scmp.eq.s32.totalorder %s13, 1
    %p57 = por %p55, %p56
    %p58 = scmp.ne.s32.totalorder %s47, %s48
    %p59 = scmp.eq.s32.totalorder %s13, 0
    %p60 = por %p58, %p59
    %p61 = scmp.ne.s32.totalorder %s47, %s48
    %p62 = scmp.eq.s32.totalorder %s14, 1
    %p63 = por %p61, %p62
    %p65 = scmp.ne.s32.totalorder %s48, %s64
    %p66 = scmp.eq.s32.totalorder %s14, 0
    %p67 = por %p65, %p66
    %s68 = ssub.s32 %s8, %s15
    %p69 = scmp.eq.s32.totalorder %s68, 0
    %s71 = sadd.s32 %s70, 1
    %s72 = scalar_select %p69, %s70, %s71
    %p75 = pneg %p69
    %p76 = scmp.eq.s32.totalorder %s8, 1
    %p77 = por %p75, %p76
    %p78 = scmp.ne.s32.totalorder %s70, %s73
    %p79 = scmp.eq.s32.totalorder %s8, 0
    %p80 = por %p78, %p79
    %p81 = scmp.ne.s32.totalorder %s70, %s73
    %p82 = scmp.eq.s32.totalorder %s13, 1
    %p83 = por %p81, %p82
    %p84 = scmp.ne.s32.totalorder %s73, %s74
    %p85 = scmp.eq.s32.totalorder %s13, 0
    %p86 = por %p84, %p85
    %p87 = scmp.ne.s32.totalorder %s73, %s74
    %p88 = scmp.eq.s32.totalorder %s14, 1
    %p89 = por %p87, %p88
    %p91 = scmp.ne.s32.totalorder %s74, %s90
    %p92 = scmp.eq.s32.totalorder %s14, 0
    %p93 = por %p91, %p92
    %p94 = scmp.le.s32.totalorder 1, %s8
    %p95 = scmp.lt.s32.totalorder %s8, 3
    %p96 = pnand %p94, %p95
    %p97 = pneg %p96
    // Predicated region
    $region9: #{offset_generation_forward.45} parent=5 // pred_check
      _
    $region10: #{offset_generation_forward.45} parent=5 // pred_check_branch
      %99 = sbr.rel (%p96) target = $region12
    $region11: #{offset_generation_forward.45} parent=5 // pred_region
      %s100 = ssub.s32 %s8, 1
    $region12: #{offset_generation_forward.45} parent=5 // pred_fallthru
      _
    %p101 = scmp.lt.s32.totalorder %s8, 2
    // Predicated region
    $region13: #{offset_generation_forward.45} parent=5 // pred_check
      %p102 = pneg %p101
    $region14: #{offset_generation_forward.45} parent=5 // pred_check_branch
      %104 = sbr.rel (%p102) target = $region16
    $region15: #{offset_generation_forward.45} parent=5 // pred_region
      // Predicated region
      $region17: #{offset_generation_forward.45} parent=15 // pred_check
        %p105 = pneg %p28
      $region18: #{offset_generation_forward.45} parent=15 // pred_check_branch
        %107 = sbr.rel (%p105) target = $region20
      $region19: #{offset_generation_forward.45} parent=15 // pred_region
        %p108 = scmp.lt.s32.totalorder %s8, 1
        %s109 = scalar_select %p108, %s8, 1
        %s110 = smul.addr %s109, 8
        %s111 = scalar_lea.vmem %s0, %s110
      $region20: #{offset_generation_forward.45} parent=15 // pred_fallthru
        _
      // Predicated region
      $region21: #{offset_generation_forward.45} parent=15 // pred_check
        %p112 = pneg %p54
      $region22: #{offset_generation_forward.45} parent=15 // pred_check_branch
        %114 = sbr.rel (%p112) target = $region24
      $region23: #{offset_generation_forward.45} parent=15 // pred_region
        %p115 = scmp.lt.s32.totalorder %s8, 1
        %s116 = scalar_select %p115, %s8, 1
        %s117 = smul.addr %s116, 2
        %s118 = scalar_lea.vmem %s1, %s117
      $region24: #{offset_generation_forward.45} parent=15 // pred_fallthru
        _
    $region16: #{offset_generation_forward.45} parent=5 // pred_fallthru
      _
    %p119 = scmp.le.s32.totalorder 1, %s8
    %p120 = scmp.lt.s32.totalorder %s8, 3
    %p121 = pnand %p119, %p120
    %p122 = pneg %p121
    // Predicated region
    $region25: #{offset_generation_forward.45} parent=5 // pred_check
      _
    $region26: #{offset_generation_forward.45} parent=5 // pred_check_branch
      %124 = sbr.rel (%p121) target = $region28
    $region27: #{offset_generation_forward.45} parent=5 // pred_region
      %s125 = ssub.s32 %s8, 1
      %p126 = scmp.lt.s32.totalorder %s13, 1
      %s127 = scalar_select %p126, %s13, 1
      %s128 = smul.addr %s127, 8
      %s129 = scalar_lea.vmem %s0, %s128
      %p130 = pneg %p34
      %p131 = pneg %p31
      %p132 = scmp.lt.s32.totalorder %s13, 1
      %s133 = scalar_select %p132, %s13, 1
      %s134 = smul.addr %s133, 2
      %s135 = scalar_lea.vmem %s1, %s134
      %p136 = pneg %p60
      %p137 = pneg %p57
      %p138 = pneg %p86
      %p139 = pneg %p83
      %p140 = scmp.lt.s32.totalorder %s13, 1
      %s141 = scalar_select %p140, %s13, 1
      %s142 = smul.addr %s141, 8
      %s143 = scalar_lea.vmem %s2, %s142
      %p144 = scmp.lt.s32.totalorder %s13, 1
      %s145 = scalar_select %p144, %s13, 1
      %s146 = smul.addr %s145, 8
      %s147 = scalar_lea.vmem %s0, %s146
      %p148 = scmp.lt.s32.totalorder %s13, 1
      %s149 = scalar_select %p148, %s13, 1
      %s150 = smul.addr %s149, 2
      %s151 = scalar_lea.vmem %s1, %s150
      %p152 = scmp.lt.s32.totalorder %s13, 1
      %s153 = scalar_select %p152, %s13, 1
      %s154 = smul.addr %s153, 8
      %s155 = scalar_lea.vmem %s2, %s154
      %v156 = vld [vmem:[%s147] sm:$0x3f]
      %v157 = vld [vmem:[%s151] sm:$0x3]
      %vm158 = vcmask 15360
      %v160 = vsel %vm158, %v156, 0
      %vm162 = vcmask 1041408
      %v164 = vsel %vm162, %v157, 0
      %166 = vmatprep.subr.mxu0 0.0
      %167 = vmatpush1.msra.mxu0 0.0
      %168 = vmatprep.subr.mxu0 0.0
      %169 = vmatpush1.msra.mxu0 0.0
      %170 = vmatprep.subr.mxu0 0.0
      %171 = vmatpush1.msra.mxu0 0.0
      %172 = vmatprep.subr.mxu0 0.0
      %173 = vmatpush1.msra.mxu0 0.0
      %174 = vmatprep.subr.mxu0 0.0
      %175 = vmatpush1.msra.mxu0 0.0
      %176 = vmatprep.subr.mxu0 0.0
      %177 = vmatpush1.msra.mxu0 0.0
      %178 = vmatprep.subr.mxu0 0.0
      %179 = vmatpush1.msra.mxu0 0.0
      %180 = vmatprep.subr.mxu0 0.0
      %181 = vmatpush1.msra.mxu0 0.0
      %182 = vmatprep.subr.mxu0 0.0
      %183 = vmatpush1.msra.mxu0 0.0
      %184 = vmatprep.subr.mxu0 0.0
      %185 = vmatpush1.msra.mxu0 0.0
      %186 = vmatprep.subr.mxu0 0.0
      %187 = vmatpush1.msra.mxu0 0.0
      %188 = vmatprep.subr.mxu0 0.0
      %189 = vmatpush1.msra.mxu0 0.0
      %190 = vmatprep.subr.mxu0 0.0
      %191 = vmatpush1.msra.mxu0 0.0
      %192 = vmatprep.subr.mxu0 0.0
      %193 = vmatpush1.msra.mxu0 0.0
      %194 = vmatprep.subr.mxu0 0.0
      %195 = vmatpush1.msra.mxu0 0.0
      %196 = vmatprep.subr.mxu0 0.0
      %197 = vmatpush1.msra.mxu0 %v164
      %198 = vmatprep.subr.mxu0 0.0
      %199 = vmatpush2.msra.mxu0 0.0
      %200 = vmatprep.subr.mxu0 0.0
      %201 = vmatpush2.msra.mxu0 0.0
      %202 = vmatprep.subr.mxu0 0.0
      %203 = vmatpush2.msra.mxu0 0.0
      %204 = vmatprep.subr.mxu0 0.0
      %205 = vmatpush2.msra.mxu0 0.0
      %206 = vmatprep.subr.mxu0 0.0
      %207 = vmatpush2.msra.mxu0 0.0
      %208 = vmatprep.subr.mxu0 0.0
      %209 = vmatpush2.msra.mxu0 0.0
      %210 = vmatprep.subr.mxu0 0.0
      %211 = vmatpush2.msra.mxu0 0.0
      %212 = vmatprep.subr.mxu0 0.0
      %213 = vmatpush2.msra.mxu0 0.0
      %214 = vmatprep.subr.mxu0 0.0
      %215 = vmatpush2.msra.mxu0 0.0
      %216 = vmatprep.subr.mxu0 0.0
      %217 = vmatpush2.msra.mxu0 0.0
      %218 = vmatprep.subr.mxu0 0.0
      %219 = vmatpush2.msra.mxu0 0.0
      %220 = vmatprep.subr.mxu0 0.0
      %221 = vmatpush2.msra.mxu0 0.0
      %222 = vmatprep.subr.mxu0 0.0
      %223 = vmatpush2.msra.mxu0 0.0
      %224 = vmatprep.subr.mxu0 0.0
      %225 = vmatpush2.msra.mxu0 0.0
      %226 = vmatprep.subr.mxu0 0.0
      %227 = vmatpush2.msra.mxu0 0.0
      %228 = vmatprep.subr.mxu0 0.0
      %229 = vmatpush2.msra.mxu0 0.0
      %230 = vmatprep.mubr.f32.mxu0 0.0
      %231 = vmatmul.mubr.f32.gmra.mxu0 %v160
      %v232 = vpop.f32.mrf.mxu0
      %v233 = vadd.f32 0.0, %v232
      %v234 = vpop.f32.mrf.mxu0
      %235 = vdwg.mxu0
      %vm236 = vcmask 128000
      %237 = vst.msk [vmem:[%s155] sm:$0x3f] %vm236, %v233
      %p238 = scmp.lt.s32.totalorder %s13, 1
      %s239 = scalar_select %p238, %s13, 1
      %s240 = smul.addr %s239, 8
      %s241 = scalar_lea.vmem %s2, %s240
      // Predicated region
      $region29: #{offset_generation_forward.45} parent=27 // pred_check
        %p242 = pneg %p83
      $region30: #{offset_generation_forward.45} parent=27 // pred_check_branch
        %244 = sbr.rel (%p242) target = $region32
      $region31: #{offset_generation_forward.45} parent=27 // pred_region
        _
      $region32: #{offset_generation_forward.45} parent=27 // pred_fallthru
        _
    $region28: #{offset_generation_forward.45} parent=5 // pred_fallthru
      _
    %p245 = scmp.le.s32.totalorder 2, %s8
    // Predicated region
    $region33: #{offset_generation_forward.45} parent=5 // pred_check
      %p246 = pneg %p245
    $region34: #{offset_generation_forward.45} parent=5 // pred_check_branch
      %248 = sbr.rel (%p246) target = $region36
    $region35: #{offset_generation_forward.45} parent=5 // pred_region
      %s249 = ssub.s32 %s8, 2
      // Predicated region
      $region37: #{offset_generation_forward.45} parent=35 // pred_check
        %p250 = pneg %p89
      $region38: #{offset_generation_forward.45} parent=35 // pred_check_branch
        %252 = sbr.rel (%p250) target = $region40
      $region39: #{offset_generation_forward.45} parent=35 // pred_region
        %p253 = scmp.lt.s32.totalorder %s14, 1
        %s254 = scalar_select %p253, %s14, 1
        %s255 = smul.addr %s254, 8
        %s256 = scalar_lea.vmem %s2, %s255
      $region40: #{offset_generation_forward.45} parent=35 // pred_fallthru
        _
    $region36: #{offset_generation_forward.45} parent=5 // pred_fallthru
      _
  $region6: #{offset_generation_forward.45} parent=0 // loop_footer
    %s12 = sadd.s32 1, %s8
  $region7: #{offset_generation_forward.45} parent=0 // loop_footer_branch
    %7 = sbr.rel target = $region3
  $region8: #{offset_generation_forward.45} parent=0 // loop_exit
    _

// kernel: offset_generation_forward.44
$region0: #{offset_generation_forward.44}
  #allocation0 [shape = 'u32[]', space=smem, size = 0x4, offset = 0x4, fixed_abs, tag = 'smem constant byte address 0x4 - core index']
  #allocation1 [shape = 'u32[144,128]{1,0:T(1,128)}', space=vmem, size = 0x12000, scoped, tag = 'internal scratch']
  %s0 = inlined_call_operand.vmem [shape: f32[12,8], index: 0, kind: input, shape index: {}]
  %s1 = inlined_call_operand.vmem [shape: f32[8,2], index: 1, kind: input, shape index: {}]
  %s2 = inlined_call_operand.vmem [shape: f32[1,2], index: 2, kind: input, shape index: {}]
  %s3 = inlined_call_operand.vmem [shape: f32[12,2], index: 3, kind: output, shape index: {}]
  %s4 = sld [smem:[#allocation0]]
  $region22: #{offset_generation_forward.44} parent=0
    _
  %s6 = ssub.s32 1, %s4
  %s7 = scalar_select 0, %s6, %s4
  // Predicated region
  $region2: #{offset_generation_forward.44} parent=0 // pred_check
    _
  $region3: #{offset_generation_forward.44} parent=0 // pred_check_branch
    %9 = sbr.rel (0) target = $region5
  $region4: #{offset_generation_forward.44} parent=0 // pred_region
    _
  $region5: #{offset_generation_forward.44} parent=0 // pred_fallthru
    _
  // Predicated region
  $region6: #{offset_generation_forward.44} parent=0 // pred_check
    _
  $region7: #{offset_generation_forward.44} parent=0 // pred_check_branch
    %11 = sbr.rel (0) target = $region9
  $region8: #{offset_generation_forward.44} parent=0 // pred_region
    _
  $region9: #{offset_generation_forward.44} parent=0 // pred_fallthru
    _
  // Predicated region
  $region10: #{offset_generation_forward.44} parent=0 // pred_check
    _
  $region11: #{offset_generation_forward.44} parent=0 // pred_check_branch
    %13 = sbr.rel (0) target = $region13
  $region12: #{offset_generation_forward.44} parent=0 // pred_region
    _
  $region13: #{offset_generation_forward.44} parent=0 // pred_fallthru
    _
  %v14 = vld [vmem:[%s0] sm:$0xff]
  %v15 = vld [vmem:[%s0 + $0x8] sm:$0xf]
  %v16 = vld [vmem:[%s1] sm:$0xff]
  %v17 = vld [vmem:[%s2] sm:$0x1]
  %v19 = vlaneseq
  %v20 = vshrl.u32 %v19, 7
  %v21 = vsub.s32 0, %v20
  %v22 = vrot.slane %v17, %v21
  %vm24 = vcmask 64512
  %v26 = vsel %vm24, %v14, 0
  %v29 = vsel %vm24, %v15, 0
  %31 = vmatprep.subr.mxu0 0.0
  %32 = vmatpush1.msra.mxu0 0.0
  %33 = vmatprep.subr.mxu0 0.0
  %34 = vmatpush1.msra.mxu0 0.0
  %35 = vmatprep.subr.mxu0 0.0
  %36 = vmatpush1.msra.mxu0 0.0
  %37 = vmatprep.subr.mxu0 0.0
  %38 = vmatpush1.msra.mxu0 0.0
  %39 = vmatprep.subr.mxu0 0.0
  %40 = vmatpush1.msra.mxu0 0.0
  %41 = vmatprep.subr.mxu0 0.0
  %42 = vmatpush1.msra.mxu0 0.0
  %43 = vmatprep.subr.mxu0 0.0
  %44 = vmatpush1.msra.mxu0 0.0
  %45 = vmatprep.subr.mxu0 0.0
  %46 = vmatpush1.msra.mxu0 0.0
  %47 = vmatprep.subr.mxu0 0.0
  %48 = vmatpush1.msra.mxu0 0.0
  %49 = vmatprep.subr.mxu0 0.0
  %50 = vmatpush1.msra.mxu0 0.0
  %51 = vmatprep.subr.mxu0 0.0
  %52 = vmatpush1.msra.mxu0 0.0
  %53 = vmatprep.subr.mxu0 0.0
  %54 = vmatpush1.msra.mxu0 0.0
  %55 = vmatprep.subr.mxu0 0.0
  %56 = vmatpush1.msra.mxu0 0.0
  %57 = vmatprep.subr.mxu0 0.0
  %58 = vmatpush1.msra.mxu0 0.0
  %59 = vmatprep.subr.mxu0 0.0
  %60 = vmatpush1.msra.mxu0 0.0
  %61 = vmatprep.subr.mxu0 0.0
  %62 = vmatpush1.msra.mxu0 %v16
  %63 = vmatprep.subr.mxu0 0.0
  %64 = vmatpush2.msra.mxu0 0.0
  %65 = vmatprep.subr.mxu0 0.0
  %66 = vmatpush2.msra.mxu0 0.0
  %67 = vmatprep.subr.mxu0 0.0
  %68 = vmatpush2.msra.mxu0 0.0
  %69 = vmatprep.subr.mxu0 0.0
  %70 = vmatpush2.msra.mxu0 0.0
  %71 = vmatprep.subr.mxu0 0.0
  %72 = vmatpush2.msra.mxu0 0.0
  %73 = vmatprep.subr.mxu0 0.0
  %74 = vmatpush2.msra.mxu0 0.0
  %75 = vmatprep.subr.mxu0 0.0
  %76 = vmatpush2.msra.mxu0 0.0
  %77 = vmatprep.subr.mxu0 0.0
  %78 = vmatpush2.msra.mxu0 0.0
  %79 = vmatprep.subr.mxu0 0.0
  %80 = vmatpush2.msra.mxu0 0.0
  %81 = vmatprep.subr.mxu0 0.0
  %82 = vmatpush2.msra.mxu0 0.0
  %83 = vmatprep.subr.mxu0 0.0
  %84 = vmatpush2.msra.mxu0 0.0
  %85 = vmatprep.subr.mxu0 0.0
  %86 = vmatpush2.msra.mxu0 0.0
  %87 = vmatprep.subr.mxu0 0.0
  %88 = vmatpush2.msra.mxu0 0.0
  %89 = vmatprep.subr.mxu0 0.0
  %90 = vmatpush2.msra.mxu0 0.0
  %91 = vmatprep.subr.mxu0 0.0
  %92 = vmatpush2.msra.mxu0 0.0
  %93 = vmatprep.subr.mxu0 0.0
  %94 = vmatpush2.msra.mxu0 0.0
  %95 = vmatprep.mubr.f32.mxu0 0.0
  %96 = vmatmul.mubr.f32.gmra.mxu0 %v26
  %v97 = vpop.f32.mrf.mxu0
  %v98 = vadd.f32 %v22, %v97
  %v99 = vpop.f32.mrf.mxu0
  %100 = vmatprep.mubr.f32.mxu0 0.0
  %101 = vmatmul.mubr.f32.gmra.mxu0 %v29
  %v102 = vpop.f32.mrf.mxu0
  %v103 = vadd.f32 %v22, %v102
  %v104 = vpop.f32.mrf.mxu0
  %105 = vdwg.mxu0
  %vm106 = vcmask 15360
  %107 = vst.msk [vmem:[%s3] sm:$0xff] %vm106, %v98
  %vm108 = vcmask 11264
  %109 = vst.msk [vmem:[%s3 + $0x8] sm:$0xf] %vm108, %v103
  // Predicated region
  $region14: #{offset_generation_forward.44} parent=0 // pred_check
    _
  $region15: #{offset_generation_forward.44} parent=0 // pred_check_branch
    %111 = sbr.rel (0) target = $region17
  $region16: #{offset_generation_forward.44} parent=0 // pred_region
    _
  $region17: #{offset_generation_forward.44} parent=0 // pred_fallthru
    _
  // Predicated region
  $region18: #{offset_generation_forward.44} parent=0 // pred_check
    _
  $region19: #{offset_generation_forward.44} parent=0 // pred_check_branch
    %113 = sbr.rel (0) target = $region21
  $region20: #{offset_generation_forward.44} parent=0 // pred_region
    _
  $region21: #{offset_generation_forward.44} parent=0 // pred_fallthru
    _

// kernel: offset_generation_forward.47
$region0: #{offset_generation_forward.47}
  #allocation0 [shape = 'u32[]', space=smem, size = 0x4, offset = 0x4, fixed_abs, tag = 'smem constant byte address 0x4 - core index']
  #allocation1 [shape = 'u32[144,128]{1,0:T(1,128)}', space=vmem, size = 0x12000, scoped, tag = 'internal scratch']
  %s0 = inlined_call_operand.vmem [shape: f32[32,54], index: 0, kind: input, shape index: {}]
  %s1 = inlined_call_operand.vmem [shape: f32[54,12], index: 1, kind: input, shape index: {}]
  %s2 = inlined_call_operand.vmem [shape: f32[1,12], index: 2, kind: input, shape index: {}]
  %s3 = inlined_call_operand.vmem [shape: f32[1,12], index: 3, kind: input, shape index: {}]
  %s4 = inlined_call_operand.vmem [shape: f32[32,12], index: 4, kind: output, shape index: {}]
  %s5 = sld [smem:[#allocation0]]
  $region26: #{offset_generation_forward.47} parent=0
    _
  %s7 = ssub.s32 1, %s5
  %s8 = scalar_select 0, %s7, %s5
  // Predicated region
  $region2: #{offset_generation_forward.47} parent=0 // pred_check
    _
  $region3: #{offset_generation_forward.47} parent=0 // pred_check_branch
    %10 = sbr.rel (0) target = $region5
  $region4: #{offset_generation_forward.47} parent=0 // pred_region
    _
  $region5: #{offset_generation_forward.47} parent=0 // pred_fallthru
    _
  // Predicated region
  $region6: #{offset_generation_forward.47} parent=0 // pred_check
    _
  $region7: #{offset_generation_forward.47} parent=0 // pred_check_branch
    %12 = sbr.rel (0) target = $region9
  $region8: #{offset_generation_forward.47} parent=0 // pred_region
    _
  $region9: #{offset_generation_forward.47} parent=0 // pred_fallthru
    _
  // Predicated region
  $region10: #{offset_generation_forward.47} parent=0 // pred_check
    _
  $region11: #{offset_generation_forward.47} parent=0 // pred_check_branch
    %14 = sbr.rel (0) target = $region13
  $region12: #{offset_generation_forward.47} parent=0 // pred_region
    _
  $region13: #{offset_generation_forward.47} parent=0 // pred_fallthru
    _
  // Predicated region
  $region14: #{offset_generation_forward.47} parent=0 // pred_check
    _
  $region15: #{offset_generation_forward.47} parent=0 // pred_check_branch
    %16 = sbr.rel (0) target = $region17
  $region16: #{offset_generation_forward.47} parent=0 // pred_region
    _
  $region17: #{offset_generation_forward.47} parent=0 // pred_fallthru
    _
  %v17 = vld [vmem:[%s0] sm:$0xff]
  %v18 = vld [vmem:[%s0 + $0x8] sm:$0xff]
  %v19 = vld [vmem:[%s0 + $0x10] sm:$0xff]
  %v20 = vld [vmem:[%s0 + $0x18] sm:$0xff]
  %v21 = vld [vmem:[%s1] sm:$0xff]
  %v22 = vld [vmem:[%s1 + $0x8] sm:$0xff]
  %v23 = vld [vmem:[%s1 + $0x10] sm:$0xff]
  %v24 = vld [vmem:[%s1 + $0x18] sm:$0xff]
  %v25 = vld [vmem:[%s1 + $0x20] sm:$0xff]
  %v26 = vld [vmem:[%s1 + $0x28] sm:$0xff]
  %v27 = vld [vmem:[%s1 + $0x30] sm:$0x3f]
  %vm28 = vcmask 441344
  %v30 = vsel %vm28, %v17, 0
  %v33 = vsel %vm28, %v18, 0
  %v36 = vsel %vm28, %v19, 0
  %v39 = vsel %vm28, %v20, 0
  %vm41 = vcmask 1045504
  %v43 = vsel %vm41, %v27, 0
  %45 = vmatprep.subr.mxu0 0.0
  %46 = vmatpush1.msra.mxu0 0.0
  %47 = vmatprep.subr.mxu0 0.0
  %48 = vmatpush1.msra.mxu0 0.0
  %49 = vmatprep.subr.mxu0 0.0
  %50 = vmatpush1.msra.mxu0 0.0
  %51 = vmatprep.subr.mxu0 0.0
  %52 = vmatpush1.msra.mxu0 0.0
  %53 = vmatprep.subr.mxu0 0.0
  %54 = vmatpush1.msra.mxu0 0.0
  %55 = vmatprep.subr.mxu0 0.0
  %56 = vmatpush1.msra.mxu0 0.0
  %57 = vmatprep.subr.mxu0 0.0
  %58 = vmatpush1.msra.mxu0 0.0
  %59 = vmatprep.subr.mxu0 0.0
  %60 = vmatpush1.msra.mxu0 0.0
  %61 = vmatprep.subr.mxu0 0.0
  %62 = vmatpush1.msra.mxu0 0.0
  %63 = vmatprep.subr.mxu0 0.0
  %64 = vmatpush1.msra.mxu0 %v43
  %65 = vmatprep.subr.mxu0 0.0
  %66 = vmatpush1.msra.mxu0 %v26
  %67 = vmatprep.subr.mxu0 0.0
  %68 = vmatpush1.msra.mxu0 %v25
  %69 = vmatprep.subr.mxu0 0.0
  %70 = vmatpush1.msra.mxu0 %v24
  %71 = vmatprep.subr.mxu0 0.0
  %72 = vmatpush1.msra.mxu0 %v23
  %73 = vmatprep.subr.mxu0 0.0
  %74 = vmatpush1.msra.mxu0 %v22
  %75 = vmatprep.subr.mxu0 0.0
  %76 = vmatpush1.msra.mxu0 %v21
  %77 = vmatprep.subr.mxu0 0.0
  %78 = vmatpush2.msra.mxu0 0.0
  %79 = vmatprep.subr.mxu0 0.0
  %80 = vmatpush2.msra.mxu0 0.0
  %81 = vmatprep.subr.mxu0 0.0
  %82 = vmatpush2.msra.mxu0 0.0
  %83 = vmatprep.subr.mxu0 0.0
  %84 = vmatpush2.msra.mxu0 0.0
  %85 = vmatprep.subr.mxu0 0.0
  %86 = vmatpush2.msra.mxu0 0.0
  %87 = vmatprep.subr.mxu0 0.0
  %88 = vmatpush2.msra.mxu0 0.0
  %89 = vmatprep.subr.mxu0 0.0
  %90 = vmatpush2.msra.mxu0 0.0
  %91 = vmatprep.subr.mxu0 0.0
  %92 = vmatpush2.msra.mxu0 0.0
  %93 = vmatprep.subr.mxu0 0.0
  %94 = vmatpush2.msra.mxu0 0.0
  %95 = vmatprep.subr.mxu0 0.0
  %96 = vmatpush2.msra.mxu0 0.0
  %97 = vmatprep.subr.mxu0 0.0
  %98 = vmatpush2.msra.mxu0 0.0
  %99 = vmatprep.subr.mxu0 0.0
  %100 = vmatpush2.msra.mxu0 0.0
  %101 = vmatprep.subr.mxu0 0.0
  %102 = vmatpush2.msra.mxu0 0.0
  %103 = vmatprep.subr.mxu0 0.0
  %104 = vmatpush2.msra.mxu0 0.0
  %105 = vmatprep.subr.mxu0 0.0
  %106 = vmatpush2.msra.mxu0 0.0
  %107 = vmatprep.subr.mxu0 0.0
  %108 = vmatpush2.msra.mxu0 0.0
  %109 = vmatprep.mubr.f32.mxu0 0.0
  %110 = vmatmul.mubr.f32.gmra.mxu0 %v30
  %v111 = vpop.f32.mrf.mxu0
  %v112 = vadd.f32 0.0, %v111
  %v113 = vpop.f32.mrf.mxu0
  %114 = vmatprep.mubr.f32.mxu0 0.0
  %115 = vmatmul.mubr.f32.gmra.mxu0 %v33
  %v116 = vpop.f32.mrf.mxu0
  %v117 = vadd.f32 0.0, %v116
  %v118 = vpop.f32.mrf.mxu0
  %119 = vmatprep.mubr.f32.mxu0 0.0
  %120 = vmatmul.mubr.f32.gmra.mxu0 %v36
  %v121 = vpop.f32.mrf.mxu0
  %v122 = vadd.f32 0.0, %v121
  %v123 = vpop.f32.mrf.mxu0
  %124 = vmatprep.mubr.f32.mxu0 0.0
  %125 = vmatmul.mubr.f32.gmra.mxu0 %v39
  %v126 = vpop.f32.mrf.mxu0
  %v127 = vadd.f32 0.0, %v126
  %v128 = vpop.f32.mrf.mxu0
  %129 = vdwg.mxu0
  %v130 = vld [vmem:[%s2] sm:$0x1]
  %v131 = vld [vmem:[%s3] sm:$0x1]
  %vm132 = vcmask 97280
  %v133 = vsel %vm132, %v112, 0.0
  %134 = vadd.xlane.f32.xlu0 %v133
  %v135 = vpop.xlane.xlu0 %134
  %v136 = vsel %vm132, %v117, 0.0
  %137 = vadd.xlane.f32.xlu0 %v136
  %v138 = vpop.xlane.xlu0 %137
  %v139 = vsel %vm132, %v122, 0.0
  %140 = vadd.xlane.f32.xlu0 %v139
  %v141 = vpop.xlane.xlu0 %140
  %v142 = vsel %vm132, %v127, 0.0
  %143 = vadd.xlane.f32.xlu0 %v142
  %v144 = vpop.xlane.xlu0 %143
  %v145 = vrcp.pop 12.0
  %v146 = vmul.f32 %v135, %v145
  %v147 = vmul.f32 %v138, %v145
  %v148 = vmul.f32 %v141, %v145
  %v149 = vmul.f32 %v144, %v145
  %v150 = vsub.f32 %v112, %v146
  %v151 = vsub.f32 %v117, %v147
  %v152 = vsub.f32 %v122, %v148
  %v153 = vsub.f32 %v127, %v149
  %v154 = vmul.f32 %v150, %v150
  %v155 = vmul.f32 %v151, %v151
  %v156 = vmul.f32 %v152, %v152
  %v157 = vmul.f32 %v153, %v153
  %v158 = vsel %vm132, %v154, 0.0
  %159 = vadd.xlane.f32.xlu0 %v158
  %v160 = vpop.xlane.xlu0 %159
  %v161 = vsel %vm132, %v155, 0.0
  %162 = vadd.xlane.f32.xlu0 %v161
  %v163 = vpop.xlane.xlu0 %162
  %v164 = vsel %vm132, %v156, 0.0
  %165 = vadd.xlane.f32.xlu0 %v164
  %v166 = vpop.xlane.xlu0 %165
  %v167 = vsel %vm132, %v157, 0.0
  %168 = vadd.xlane.f32.xlu0 %v167
  %v169 = vpop.xlane.xlu0 %168
  %v170 = vmul.f32 %v160, %v145
  %v171 = vmul.f32 %v163, %v145
  %v172 = vmul.f32 %v166, %v145
  %v173 = vmul.f32 %v169, %v145
  %v174 = vadd.f32 %v170, 1e-05
  %v175 = vadd.f32 %v171, 1e-05
  %v176 = vadd.f32 %v172, 1e-05
  %v177 = vadd.f32 %v173, 1e-05
  %v178 = vrsqrt.pop %v174
  %v179 = vrsqrt.pop %v175
  %v180 = vrsqrt.pop %v176
  %v181 = vrsqrt.pop %v177
  %v182 = vmul.f32 %v150, %v178
  %v183 = vmul.f32 %v151, %v179
  %v184 = vmul.f32 %v152, %v180
  %v185 = vmul.f32 %v153, %v181
  %v187 = vlaneseq
  %v188 = vshrl.u32 %v187, 7
  %v189 = vsub.s32 0, %v188
  %v190 = vrot.slane %v130, %v189
  %v192 = vmul.f32 %v182, %v190
  %v193 = vmul.f32 %v183, %v190
  %v194 = vmul.f32 %v184, %v190
  %v195 = vmul.f32 %v185, %v190
  %v197 = vlaneseq
  %v198 = vshrl.u32 %v197, 7
  %v199 = vsub.s32 0, %v198
  %v200 = vrot.slane %v131, %v199
  %v202 = vadd.f32 %v192, %v200
  %v203 = vadd.f32 %v193, %v200
  %v204 = vadd.f32 %v194, %v200
  %v205 = vadd.f32 %v195, %v200
  %v206 = vmul.f32 %v202, 0.5
  %v207 = vmul.f32 %v203, 0.5
  %v208 = vmul.f32 %v204, 0.5
  %v209 = vmul.f32 %v205, 0.5
  %v210 = vmul.f32 %v202, 0.70710677
  %v211 = vmul.f32 %v203, 0.70710677
  %v212 = vmul.f32 %v204, 0.70710677
  %v213 = vmul.f32 %v205, 0.70710677
  %vm214 = vcmp.ge.f32.partialorder %v210, 0.0
  %vm215 = vcmp.ge.f32.partialorder %v211, 0.0
  %vm216 = vcmp.ge.f32.partialorder %v212, 0.0
  %vm217 = vcmp.ge.f32.partialorder %v213, 0.0
  %v218 = vsub.f32 0.0, %v210
  %v219 = vsub.f32 0.0, %v211
  %v220 = vsub.f32 0.0, %v212
  %v221 = vsub.f32 0.0, %v213
  %v222 = vsel %vm214, %v210, %v218
  %v223 = vsel %vm215, %v211, %v219
  %v224 = vsel %vm216, %v212, %v220
  %v225 = vsel %vm217, %v213, %v221
  %v226 = vmul.f32 %v222, 0.3275911
  %v227 = vmul.f32 %v223, 0.3275911
  %v228 = vmul.f32 %v224, 0.3275911
  %v229 = vmul.f32 %v225, 0.3275911
  %v230 = vadd.f32 %v226, 1.0
  %v231 = vadd.f32 %v227, 1.0
  %v232 = vadd.f32 %v228, 1.0
  %v233 = vadd.f32 %v229, 1.0
  %v234 = vrcp.pop %v230
  %v235 = vmul.f32 1.0, %v234
  %v236 = vrcp.pop %v231
  %v237 = vmul.f32 1.0, %v236
  %v238 = vrcp.pop %v232
  %v239 = vmul.f32 1.0, %v238
  %v240 = vrcp.pop %v233
  %v241 = vmul.f32 1.0, %v240
  %v242 = vmul.f32 %v235, 1.0614054
  %v243 = vmul.f32 %v237, 1.0614054
  %v244 = vmul.f32 %v239, 1.0614054
  %v245 = vmul.f32 %v241, 1.0614054
  %v246 = vadd.f32 %v242, -1.4531521
  %v247 = vadd.f32 %v243, -1.4531521
  %v248 = vadd.f32 %v244, -1.4531521
  %v249 = vadd.f32 %v245, -1.4531521
  %v250 = vmul.f32 %v235, %v246
  %v251 = vmul.f32 %v237, %v247
  %v252 = vmul.f32 %v239, %v248
  %v253 = vmul.f32 %v241, %v249
  %v254 = vadd.f32 %v250, 1.4214138
  %v255 = vadd.f32 %v251, 1.4214138
  %v256 = vadd.f32 %v252, 1.4214138
  %v257 = vadd.f32 %v253, 1.4214138
  %v258 = vmul.f32 %v235, %v254
  %v259 = vmul.f32 %v237, %v255
  %v260 = vmul.f32 %v239, %v256
  %v261 = vmul.f32 %v241, %v257
  %v262 = vadd.f32 %v258, -0.28449672
  %v263 = vadd.f32 %v259, -0.28449672
  %v264 = vadd.f32 %v260, -0.28449672
  %v265 = vadd.f32 %v261, -0.28449672
  %v266 = vmul.f32 %v235, %v262
  %v267 = vmul.f32 %v237, %v263
  %v268 = vmul.f32 %v239, %v264
  %v269 = vmul.f32 %v241, %v265
  %v270 = vadd.f32 %v266, 0.2548296
  %v271 = vadd.f32 %v267, 0.2548296
  %v272 = vadd.f32 %v268, 0.2548296
  %v273 = vadd.f32 %v269, 0.2548296
  %v274 = vmul.f32 %v235, %v270
  %v275 = vmul.f32 %v237, %v271
  %v276 = vmul.f32 %v239, %v272
  %v277 = vmul.f32 %v241, %v273
  %v278 = vsub.f32 0.0, %v222
  %v279 = vsub.f32 0.0, %v223
  %v280 = vsub.f32 0.0, %v224
  %v281 = vsub.f32 0.0, %v225
  %v282 = vmul.f32 %v278, %v222
  %v283 = vmul.f32 %v279, %v223
  %v284 = vmul.f32 %v280, %v224
  %v285 = vmul.f32 %v281, %v225
  %v286 = vmul.f32 %v282, 1.442695
  %v287 = vpow.pop %v286
  %v288 = vmul.f32 %v283, 1.442695
  %v289 = vpow.pop %v288
  %v290 = vmul.f32 %v284, 1.442695
  %v291 = vpow.pop %v290
  %v292 = vmul.f32 %v285, 1.442695
  %v293 = vpow.pop %v292
  %v294 = vmul.f32 %v274, %v287
  %v295 = vmul.f32 %v275, %v289
  %v296 = vmul.f32 %v276, %v291
  %v297 = vmul.f32 %v277, %v293
  %v298 = vsub.f32 1.0, %v294
  %v299 = vsub.f32 1.0, %v295
  %v300 = vsub.f32 1.0, %v296
  %v301 = vsub.f32 1.0, %v297
  %v302 = vsub.f32 0.0, %v298
  %v303 = vsub.f32 0.0, %v299
  %v304 = vsub.f32 0.0, %v300
  %v305 = vsub.f32 0.0, %v301
  %v306 = vsel %vm214, %v298, %v302
  %v307 = vsel %vm215, %v299, %v303
  %v308 = vsel %vm216, %v300, %v304
  %v309 = vsel %vm217, %v301, %v305
  %v310 = vadd.f32 %v306, 1.0
  %v311 = vadd.f32 %v307, 1.0
  %v312 = vadd.f32 %v308, 1.0
  %v313 = vadd.f32 %v309, 1.0
  %v314 = vmul.f32 %v206, %v310
  %v315 = vmul.f32 %v207, %v311
  %v316 = vmul.f32 %v208, %v312
  %v317 = vmul.f32 %v209, %v313
  %318 = vst.msk [vmem:[%s4] sm:$0xff] %vm132, %v314
  %319 = vst.msk [vmem:[%s4 + $0x8] sm:$0xff] %vm132, %v315
  %320 = vst.msk [vmem:[%s4 + $0x10] sm:$0xff] %vm132, %v316
  %321 = vst.msk [vmem:[%s4 + $0x18] sm:$0xff] %vm132, %v317
  // Predicated region
  $region18: #{offset_generation_forward.47} parent=0 // pred_check
    _
  $region19: #{offset_generation_forward.47} parent=0 // pred_check_branch
    %323 = sbr.rel (0) target = $region21
  $region20: #{offset_generation_forward.47} parent=0 // pred_region
    _
  $region21: #{offset_generation_forward.47} parent=0 // pred_fallthru
    _
  // Predicated region
  $region22: #{offset_generation_forward.47} parent=0 // pred_check
    _
  $region23: #{offset_generation_forward.47} parent=0 // pred_check_branch
    %325 = sbr.rel (0) target = $region25
  $region24: #{offset_generation_forward.47} parent=0 // pred_region
    _
  $region25: #{offset_generation_forward.47} parent=0 // pred_fallthru
    _

// kernel: offset_generation_forward.46
$region0: #{offset_generation_forward.46}
  #allocation0 [shape = 'u32[]', space=smem, size = 0x4, offset = 0x4, fixed_abs, tag = 'smem constant byte address 0x4 - core index']
  #allocation1 [shape = 'u32[144,128]{1,0:T(1,128)}', space=vmem, size = 0x12000, scoped, tag = 'internal scratch']
  %s0 = inlined_call_operand.vmem [shape: f32[32,54], index: 0, kind: input, shape index: {}]
  %s1 = inlined_call_operand.vmem [shape: f32[54,6], index: 1, kind: input, shape index: {}]
  %s2 = inlined_call_operand.vmem [shape: f32[1,6], index: 2, kind: input, shape index: {}]
  %s3 = inlined_call_operand.vmem [shape: f32[1,6], index: 3, kind: input, shape index: {}]
  %s4 = inlined_call_operand.vmem [shape: f32[32,6], index: 4, kind: output, shape index: {}]
  %s5 = sld [smem:[#allocation0]]
  $region26: #{offset_generation_forward.46} parent=0
    _
  %s7 = ssub.s32 1, %s5
  %s8 = scalar_select 0, %s7, %s5
  // Predicated region
  $region2: #{offset_generation_forward.46} parent=0 // pred_check
    _
  $region3: #{offset_generation_forward.46} parent=0 // pred_check_branch
    %10 = sbr.rel (0) target = $region5
  $region4: #{offset_generation_forward.46} parent=0 // pred_region
    _
  $region5: #{offset_generation_forward.46} parent=0 // pred_fallthru
    _
  // Predicated region
  $region6: #{offset_generation_forward.46} parent=0 // pred_check
    _
  $region7: #{offset_generation_forward.46} parent=0 // pred_check_branch
    %12 = sbr.rel (0) target = $region9
  $region8: #{offset_generation_forward.46} parent=0 // pred_region
    _
  $region9: #{offset_generation_forward.46} parent=0 // pred_fallthru
    _
  // Predicated region
  $region10: #{offset_generation_forward.46} parent=0 // pred_check
    _
  $region11: #{offset_generation_forward.46} parent=0 // pred_check_branch
    %14 = sbr.rel (0) target = $region13
  $region12: #{offset_generation_forward.46} parent=0 // pred_region
    _
  $region13: #{offset_generation_forward.46} parent=0 // pred_fallthru
    _
  // Predicated region
  $region14: #{offset_generation_forward.46} parent=0 // pred_check
    _
  $region15: #{offset_generation_forward.46} parent=0 // pred_check_branch
    %16 = sbr.rel (0) target = $region17
  $region16: #{offset_generation_forward.46} parent=0 // pred_region
    _
  $region17: #{offset_generation_forward.46} parent=0 // pred_fallthru
    _
  %v17 = vld [vmem:[%s0] sm:$0xff]
  %v18 = vld [vmem:[%s0 + $0x8] sm:$0xff]
  %v19 = vld [vmem:[%s0 + $0x10] sm:$0xff]
  %v20 = vld [vmem:[%s0 + $0x18] sm:$0xff]
  %v21 = vld [vmem:[%s1] sm:$0xff]
  %v22 = vld [vmem:[%s1 + $0x8] sm:$0xff]
  %v23 = vld [vmem:[%s1 + $0x10] sm:$0xff]
  %v24 = vld [vmem:[%s1 + $0x18] sm:$0xff]
  %v25 = vld [vmem:[%s1 + $0x20] sm:$0xff]
  %v26 = vld [vmem:[%s1 + $0x28] sm:$0xff]
  %v27 = vld [vmem:[%s1 + $0x30] sm:$0x3f]
  %vm28 = vcmask 441344
  %v30 = vsel %vm28, %v17, 0
  %v33 = vsel %vm28, %v18, 0
  %v36 = vsel %vm28, %v19, 0
  %v39 = vsel %vm28, %v20, 0
  %vm41 = vcmask 1045504
  %v43 = vsel %vm41, %v27, 0
  %45 = vmatprep.subr.mxu0 0.0
  %46 = vmatpush1.msra.mxu0 0.0
  %47 = vmatprep.subr.mxu0 0.0
  %48 = vmatpush1.msra.mxu0 0.0
  %49 = vmatprep.subr.mxu0 0.0
  %50 = vmatpush1.msra.mxu0 0.0
  %51 = vmatprep.subr.mxu0 0.0
  %52 = vmatpush1.msra.mxu0 0.0
  %53 = vmatprep.subr.mxu0 0.0
  %54 = vmatpush1.msra.mxu0 0.0
  %55 = vmatprep.subr.mxu0 0.0
  %56 = vmatpush1.msra.mxu0 0.0
  %57 = vmatprep.subr.mxu0 0.0
  %58 = vmatpush1.msra.mxu0 0.0
  %59 = vmatprep.subr.mxu0 0.0
  %60 = vmatpush1.msra.mxu0 0.0
  %61 = vmatprep.subr.mxu0 0.0
  %62 = vmatpush1.msra.mxu0 0.0
  %63 = vmatprep.subr.mxu0 0.0
  %64 = vmatpush1.msra.mxu0 %v43
  %65 = vmatprep.subr.mxu0 0.0
  %66 = vmatpush1.msra.mxu0 %v26
  %67 = vmatprep.subr.mxu0 0.0
  %68 = vmatpush1.msra.mxu0 %v25
  %69 = vmatprep.subr.mxu0 0.0
  %70 = vmatpush1.msra.mxu0 %v24
  %71 = vmatprep.subr.mxu0 0.0
  %72 = vmatpush1.msra.mxu0 %v23
  %73 = vmatprep.subr.mxu0 0.0
  %74 = vmatpush1.msra.mxu0 %v22
  %75 = vmatprep.subr.mxu0 0.0
  %76 = vmatpush1.msra.mxu0 %v21
  %77 = vmatprep.subr.mxu0 0.0
  %78 = vmatpush2.msra.mxu0 0.0
  %79 = vmatprep.subr.mxu0 0.0
  %80 = vmatpush2.msra.mxu0 0.0
  %81 = vmatprep.subr.mxu0 0.0
  %82 = vmatpush2.msra.mxu0 0.0
  %83 = vmatprep.subr.mxu0 0.0
  %84 = vmatpush2.msra.mxu0 0.0
  %85 = vmatprep.subr.mxu0 0.0
  %86 = vmatpush2.msra.mxu0 0.0
  %87 = vmatprep.subr.mxu0 0.0
  %88 = vmatpush2.msra.mxu0 0.0
  %89 = vmatprep.subr.mxu0 0.0
  %90 = vmatpush2.msra.mxu0 0.0
  %91 = vmatprep.subr.mxu0 0.0
  %92 = vmatpush2.msra.mxu0 0.0
  %93 = vmatprep.subr.mxu0 0.0
  %94 = vmatpush2.msra.mxu0 0.0
  %95 = vmatprep.subr.mxu0 0.0
  %96 = vmatpush2.msra.mxu0 0.0
  %97 = vmatprep.subr.mxu0 0.0
  %98 = vmatpush2.msra.mxu0 0.0
  %99 = vmatprep.subr.mxu0 0.0
  %100 = vmatpush2.msra.mxu0 0.0
  %101 = vmatprep.subr.mxu0 0.0
  %102 = vmatpush2.msra.mxu0 0.0
  %103 = vmatprep.subr.mxu0 0.0
  %104 = vmatpush2.msra.mxu0 0.0
  %105 = vmatprep.subr.mxu0 0.0
  %106 = vmatpush2.msra.mxu0 0.0
  %107 = vmatprep.subr.mxu0 0.0
  %108 = vmatpush2.msra.mxu0 0.0
  %109 = vmatprep.mubr.f32.mxu0 0.0
  %110 = vmatmul.mubr.f32.gmra.mxu0 %v30
  %v111 = vpop.f32.mrf.mxu0
  %v112 = vadd.f32 0.0, %v111
  %v113 = vpop.f32.mrf.mxu0
  %114 = vmatprep.mubr.f32.mxu0 0.0
  %115 = vmatmul.mubr.f32.gmra.mxu0 %v33
  %v116 = vpop.f32.mrf.mxu0
  %v117 = vadd.f32 0.0, %v116
  %v118 = vpop.f32.mrf.mxu0
  %119 = vmatprep.mubr.f32.mxu0 0.0
  %120 = vmatmul.mubr.f32.gmra.mxu0 %v36
  %v121 = vpop.f32.mrf.mxu0
  %v122 = vadd.f32 0.0, %v121
  %v123 = vpop.f32.mrf.mxu0
  %124 = vmatprep.mubr.f32.mxu0 0.0
  %125 = vmatmul.mubr.f32.gmra.mxu0 %v39
  %v126 = vpop.f32.mrf.mxu0
  %v127 = vadd.f32 0.0, %v126
  %v128 = vpop.f32.mrf.mxu0
  %129 = vdwg.mxu0
  %v130 = vld [vmem:[%s2] sm:$0x1]
  %v131 = vld [vmem:[%s3] sm:$0x1]
  %vm132 = vcmask 48128
  %v133 = vsel %vm132, %v112, 0.0
  %134 = vadd.xlane.f32.xlu0 %v133
  %v135 = vpop.xlane.xlu0 %134
  %v136 = vsel %vm132, %v117, 0.0
  %137 = vadd.xlane.f32.xlu0 %v136
  %v138 = vpop.xlane.xlu0 %137
  %v139 = vsel %vm132, %v122, 0.0
  %140 = vadd.xlane.f32.xlu0 %v139
  %v141 = vpop.xlane.xlu0 %140
  %v142 = vsel %vm132, %v127, 0.0
  %143 = vadd.xlane.f32.xlu0 %v142
  %v144 = vpop.xlane.xlu0 %143
  %v145 = vrcp.pop 6.0
  %v146 = vmul.f32 %v135, %v145
  %v147 = vmul.f32 %v138, %v145
  %v148 = vmul.f32 %v141, %v145
  %v149 = vmul.f32 %v144, %v145
  %v150 = vsub.f32 %v112, %v146
  %v151 = vsub.f32 %v117, %v147
  %v152 = vsub.f32 %v122, %v148
  %v153 = vsub.f32 %v127, %v149
  %v154 = vmul.f32 %v150, %v150
  %v155 = vmul.f32 %v151, %v151
  %v156 = vmul.f32 %v152, %v152
  %v157 = vmul.f32 %v153, %v153
  %v158 = vsel %vm132, %v154, 0.0
  %159 = vadd.xlane.f32.xlu0 %v158
  %v160 = vpop.xlane.xlu0 %159
  %v161 = vsel %vm132, %v155, 0.0
  %162 = vadd.xlane.f32.xlu0 %v161
  %v163 = vpop.xlane.xlu0 %162
  %v164 = vsel %vm132, %v156, 0.0
  %165 = vadd.xlane.f32.xlu0 %v164
  %v166 = vpop.xlane.xlu0 %165
  %v167 = vsel %vm132, %v157, 0.0
  %168 = vadd.xlane.f32.xlu0 %v167
  %v169 = vpop.xlane.xlu0 %168
  %v170 = vmul.f32 %v160, %v145
  %v171 = vmul.f32 %v163, %v145
  %v172 = vmul.f32 %v166, %v145
  %v173 = vmul.f32 %v169, %v145
  %v174 = vadd.f32 %v170, 1e-05
  %v175 = vadd.f32 %v171, 1e-05
  %v176 = vadd.f32 %v172, 1e-05
  %v177 = vadd.f32 %v173, 1e-05
  %v178 = vrsqrt.pop %v174
  %v179 = vrsqrt.pop %v175
  %v180 = vrsqrt.pop %v176
  %v181 = vrsqrt.pop %v177
  %v182 = vmul.f32 %v150, %v178
  %v183 = vmul.f32 %v151, %v179
  %v184 = vmul.f32 %v152, %v180
  %v185 = vmul.f32 %v153, %v181
  %v187 = vlaneseq
  %v188 = vshrl.u32 %v187, 7
  %v189 = vsub.s32 0, %v188
  %v190 = vrot.slane %v130, %v189
  %v192 = vmul.f32 %v182, %v190
  %v193 = vmul.f32 %v183, %v190
  %v194 = vmul.f32 %v184, %v190
  %v195 = vmul.f32 %v185, %v190
  %v197 = vlaneseq
  %v198 = vshrl.u32 %v197, 7
  %v199 = vsub.s32 0, %v198
  %v200 = vrot.slane %v131, %v199
  %v202 = vadd.f32 %v192, %v200
  %v203 = vadd.f32 %v193, %v200
  %v204 = vadd.f32 %v194, %v200
  %v205 = vadd.f32 %v195, %v200
  %v206 = vmul.f32 %v202, 0.5
  %v207 = vmul.f32 %v203, 0.5
  %v208 = vmul.f32 %v204, 0.5
  %v209 = vmul.f32 %v205, 0.5
  %v210 = vmul.f32 %v202, 0.70710677
  %v211 = vmul.f32 %v203, 0.70710677
  %v212 = vmul.f32 %v204, 0.70710677
  %v213 = vmul.f32 %v205, 0.70710677
  %vm214 = vcmp.ge.f32.partialorder %v210, 0.0
  %vm215 = vcmp.ge.f32.partialorder %v211, 0.0
  %vm216 = vcmp.ge.f32.partialorder %v212, 0.0
  %vm217 = vcmp.ge.f32.partialorder %v213, 0.0
  %v218 = vsub.f32 0.0, %v210
  %v219 = vsub.f32 0.0, %v211
  %v220 = vsub.f32 0.0, %v212
  %v221 = vsub.f32 0.0, %v213
  %v222 = vsel %vm214, %v210, %v218
  %v223 = vsel %vm215, %v211, %v219
  %v224 = vsel %vm216, %v212, %v220
  %v225 = vsel %vm217, %v213, %v221
  %v226 = vmul.f32 %v222, 0.3275911
  %v227 = vmul.f32 %v223, 0.3275911
  %v228 = vmul.f32 %v224, 0.3275911
  %v229 = vmul.f32 %v225, 0.3275911
  %v230 = vadd.f32 %v226, 1.0
  %v231 = vadd.f32 %v227, 1.0
  %v232 = vadd.f32 %v228, 1.0
  %v233 = vadd.f32 %v229, 1.0
  %v234 = vrcp.pop %v230
  %v235 = vmul.f32 1.0, %v234
  %v236 = vrcp.pop %v231
  %v237 = vmul.f32 1.0, %v236
  %v238 = vrcp.pop %v232
  %v239 = vmul.f32 1.0, %v238
  %v240 = vrcp.pop %v233
  %v241 = vmul.f32 1.0, %v240
  %v242 = vmul.f32 %v235, 1.0614054
  %v243 = vmul.f32 %v237, 1.0614054
  %v244 = vmul.f32 %v239, 1.0614054
  %v245 = vmul.f32 %v241, 1.0614054
  %v246 = vadd.f32 %v242, -1.4531521
  %v247 = vadd.f32 %v243, -1.4531521
  %v248 = vadd.f32 %v244, -1.4531521
  %v249 = vadd.f32 %v245, -1.4531521
  %v250 = vmul.f32 %v235, %v246
  %v251 = vmul.f32 %v237, %v247
  %v252 = vmul.f32 %v239, %v248
  %v253 = vmul.f32 %v241, %v249
  %v254 = vadd.f32 %v250, 1.4214138
  %v255 = vadd.f32 %v251, 1.4214138
  %v256 = vadd.f32 %v252, 1.4214138
  %v257 = vadd.f32 %v253, 1.4214138
  %v258 = vmul.f32 %v235, %v254
  %v259 = vmul.f32 %v237, %v255
  %v260 = vmul.f32 %v239, %v256
  %v261 = vmul.f32 %v241, %v257
  %v262 = vadd.f32 %v258, -0.28449672
  %v263 = vadd.f32 %v259, -0.28449672
  %v264 = vadd.f32 %v260, -0.28449672
  %v265 = vadd.f32 %v261, -0.28449672
  %v266 = vmul.f32 %v235, %v262
  %v267 = vmul.f32 %v237, %v263
  %v268 = vmul.f32 %v239, %v264
  %v269 = vmul.f32 %v241, %v265
  %v270 = vadd.f32 %v266, 0.2548296
  %v271 = vadd.f32 %v267, 0.2548296
  %v272 = vadd.f32 %v268, 0.2548296
  %v273 = vadd.f32 %v269, 0.2548296
  %v274 = vmul.f32 %v235, %v270
  %v275 = vmul.f32 %v237, %v271
  %v276 = vmul.f32 %v239, %v272
  %v277 = vmul.f32 %v241, %v273
  %v278 = vsub.f32 0.0, %v222
  %v279 = vsub.f32 0.0, %v223
  %v280 = vsub.f32 0.0, %v224
  %v281 = vsub.f32 0.0, %v225
  %v282 = vmul.f32 %v278, %v222
  %v283 = vmul.f32 %v279, %v223
  %v284 = vmul.f32 %v280, %v224
  %v285 = vmul.f32 %v281, %v225
  %v286 = vmul.f32 %v282, 1.442695
  %v287 = vpow.pop %v286
  %v288 = vmul.f32 %v283, 1.442695
  %v289 = vpow.pop %v288
  %v290 = vmul.f32 %v284, 1.442695
  %v291 = vpow.pop %v290
  %v292 = vmul.f32 %v285, 1.442695
  %v293 = vpow.pop %v292
  %v294 = vmul.f32 %v274, %v287
  %v295 = vmul.f32 %v275, %v289
  %v296 = vmul.f32 %v276, %v291
  %v297 = vmul.f32 %v277, %v293
  %v298 = vsub.f32 1.0, %v294
  %v299 = vsub.f32 1.0, %v295
  %v300 = vsub.f32 1.0, %v296
  %v301 = vsub.f32 1.0, %v297
  %v302 = vsub.f32 0.0, %v298
  %v303 = vsub.f32 0.0, %v299
  %v304 = vsub.f32 0.0, %v300
  %v305 = vsub.f32 0.0, %v301
  %v306 = vsel %vm214, %v298, %v302
  %v307 = vsel %vm215, %v299, %v303
  %v308 = vsel %vm216, %v300, %v304
  %v309 = vsel %vm217, %v301, %v305
  %v310 = vadd.f32 %v306, 1.0
  %v311 = vadd.f32 %v307, 1.0
  %v312 = vadd.f32 %v308, 1.0
  %v313 = vadd.f32 %v309, 1.0
  %v314 = vmul.f32 %v206, %v310
  %v315 = vmul.f32 %v207, %v311
  %v316 = vmul.f32 %v208, %v312
  %v317 = vmul.f32 %v209, %v313
  %318 = vst.msk [vmem:[%s4] sm:$0xff] %vm132, %v314
  %319 = vst.msk [vmem:[%s4 + $0x8] sm:$0xff] %vm132, %v315
  %320 = vst.msk [vmem:[%s4 + $0x10] sm:$0xff] %vm132, %v316
  %321 = vst.msk [vmem:[%s4 + $0x18] sm:$0xff] %vm132, %v317
  // Predicated region
  $region18: #{offset_generation_forward.46} parent=0 // pred_check
    _
  $region19: #{offset_generation_forward.46} parent=0 // pred_check_branch
    %323 = sbr.rel (0) target = $region21
  $region20: #{offset_generation_forward.46} parent=0 // pred_region
    _
  $region21: #{offset_generation_forward.46} parent=0 // pred_fallthru
    _
  // Predicated region
  $region22: #{offset_generation_forward.46} parent=0 // pred_check
    _
  $region23: #{offset_generation_forward.46} parent=0 // pred_check_branch
    %325 = sbr.rel (0) target = $region25
  $region24: #{offset_generation_forward.46} parent=0 // pred_region
    _
  $region25: #{offset_generation_forward.46} parent=0 // pred_fallthru
    _

// kernel: offset_generation_forward.48
$region0: #{offset_generation_forward.48}
  #allocation0 [shape = 'u32[]', space=smem, size = 0x4, offset = 0x4, fixed_abs, tag = 'smem constant byte address 0x4 - core index']
  #allocation1 [shape = 'u32[144,128]{1,0:T(1,128)}', space=vmem, size = 0x12000, scoped, tag = 'internal scratch']
  %s0 = inlined_call_operand.vmem [shape: f32[32,108], index: 0, kind: input, shape index: {}]
  %s1 = inlined_call_operand.vmem [shape: f32[108,12], index: 1, kind: input, shape index: {}]
  %s2 = inlined_call_operand.vmem [shape: f32[1,12], index: 2, kind: input, shape index: {}]
  %s3 = inlined_call_operand.vmem [shape: f32[1,12], index: 3, kind: input, shape index: {}]
  %s4 = inlined_call_operand.vmem [shape: f32[32,12], index: 4, kind: output, shape index: {}]
  %s5 = sld [smem:[#allocation0]]
  $region26: #{offset_generation_forward.48} parent=0
    _
  %s7 = ssub.s32 1, %s5
  %s8 = scalar_select 0, %s7, %s5
  // Predicated region
  $region2: #{offset_generation_forward.48} parent=0 // pred_check
    _
  $region3: #{offset_generation_forward.48} parent=0 // pred_check_branch
    %10 = sbr.rel (0) target = $region5
  $region4: #{offset_generation_forward.48} parent=0 // pred_region
    _
  $region5: #{offset_generation_forward.48} parent=0 // pred_fallthru
    _
  // Predicated region
  $region6: #{offset_generation_forward.48} parent=0 // pred_check
    _
  $region7: #{offset_generation_forward.48} parent=0 // pred_check_branch
    %12 = sbr.rel (0) target = $region9
  $region8: #{offset_generation_forward.48} parent=0 // pred_region
    _
  $region9: #{offset_generation_forward.48} parent=0 // pred_fallthru
    _
  // Predicated region
  $region10: #{offset_generation_forward.48} parent=0 // pred_check
    _
  $region11: #{offset_generation_forward.48} parent=0 // pred_check_branch
    %14 = sbr.rel (0) target = $region13
  $region12: #{offset_generation_forward.48} parent=0 // pred_region
    _
  $region13: #{offset_generation_forward.48} parent=0 // pred_fallthru
    _
  // Predicated region
  $region14: #{offset_generation_forward.48} parent=0 // pred_check
    _
  $region15: #{offset_generation_forward.48} parent=0 // pred_check_branch
    %16 = sbr.rel (0) target = $region17
  $region16: #{offset_generation_forward.48} parent=0 // pred_region
    _
  $region17: #{offset_generation_forward.48} parent=0 // pred_fallthru
    _
  %v17 = vld [vmem:[%s0] sm:$0xff]
  %v18 = vld [vmem:[%s0 + $0x8] sm:$0xff]
  %v19 = vld [vmem:[%s0 + $0x10] sm:$0xff]
  %v20 = vld [vmem:[%s0 + $0x18] sm:$0xff]
  %v21 = vld [vmem:[%s1] sm:$0xff]
  %v22 = vld [vmem:[%s1 + $0x8] sm:$0xff]
  %v23 = vld [vmem:[%s1 + $0x10] sm:$0xff]
  %v24 = vld [vmem:[%s1 + $0x18] sm:$0xff]
  %v25 = vld [vmem:[%s1 + $0x20] sm:$0xff]
  %v26 = vld [vmem:[%s1 + $0x28] sm:$0xff]
  %v27 = vld [vmem:[%s1 + $0x30] sm:$0xff]
  %v28 = vld [vmem:[%s1 + $0x38] sm:$0xff]
  %v29 = vld [vmem:[%s1 + $0x40] sm:$0xff]
  %v30 = vld [vmem:[%s1 + $0x48] sm:$0xff]
  %v31 = vld [vmem:[%s1 + $0x50] sm:$0xff]
  %v32 = vld [vmem:[%s1 + $0x58] sm:$0xff]
  %v33 = vld [vmem:[%s1 + $0x60] sm:$0xff]
  %v34 = vld [vmem:[%s1 + $0x68] sm:$0xf]
  %vm35 = vcmask 883712
  %v37 = vsel %vm35, %v17, 0
  %v40 = vsel %vm35, %v18, 0
  %v43 = vsel %vm35, %v19, 0
  %v46 = vsel %vm35, %v20, 0
  %vm48 = vcmask 1043456
  %v50 = vsel %vm48, %v34, 0
  %52 = vmatprep.subr.mxu0 0.0
  %53 = vmatpush1.msra.mxu0 0.0
  %54 = vmatprep.subr.mxu0 0.0
  %55 = vmatpush1.msra.mxu0 0.0
  %56 = vmatprep.subr.mxu0 0.0
  %57 = vmatpush1.msra.mxu0 %v50
  %58 = vmatprep.subr.mxu0 0.0
  %59 = vmatpush1.msra.mxu0 %v33
  %60 = vmatprep.subr.mxu0 0.0
  %61 = vmatpush1.msra.mxu0 %v32
  %62 = vmatprep.subr.mxu0 0.0
  %63 = vmatpush1.msra.mxu0 %v31
  %64 = vmatprep.subr.mxu0 0.0
  %65 = vmatpush1.msra.mxu0 %v30
  %66 = vmatprep.subr.mxu0 0.0
  %67 = vmatpush1.msra.mxu0 %v29
  %68 = vmatprep.subr.mxu0 0.0
  %69 = vmatpush1.msra.mxu0 %v28
  %70 = vmatprep.subr.mxu0 0.0
  %71 = vmatpush1.msra.mxu0 %v27
  %72 = vmatprep.subr.mxu0 0.0
  %73 = vmatpush1.msra.mxu0 %v26
  %74 = vmatprep.subr.mxu0 0.0
  %75 = vmatpush1.msra.mxu0 %v25
  %76 = vmatprep.subr.mxu0 0.0
  %77 = vmatpush1.msra.mxu0 %v24
  %78 = vmatprep.subr.mxu0 0.0
  %79 = vmatpush1.msra.mxu0 %v23
  %80 = vmatprep.subr.mxu0 0.0
  %81 = vmatpush1.msra.mxu0 %v22
  %82 = vmatprep.subr.mxu0 0.0
  %83 = vmatpush1.msra.mxu0 %v21
  %84 = vmatprep.subr.mxu0 0.0
  %85 = vmatpush2.msra.mxu0 0.0
  %86 = vmatprep.subr.mxu0 0.0
  %87 = vmatpush2.msra.mxu0 0.0
  %88 = vmatprep.subr.mxu0 0.0
  %89 = vmatpush2.msra.mxu0 0.0
  %90 = vmatprep.subr.mxu0 0.0
  %91 = vmatpush2.msra.mxu0 0.0
  %92 = vmatprep.subr.mxu0 0.0
  %93 = vmatpush2.msra.mxu0 0.0
  %94 = vmatprep.subr.mxu0 0.0
  %95 = vmatpush2.msra.mxu0 0.0
  %96 = vmatprep.subr.mxu0 0.0
  %97 = vmatpush2.msra.mxu0 0.0
  %98 = vmatprep.subr.mxu0 0.0
  %99 = vmatpush2.msra.mxu0 0.0
  %100 = vmatprep.subr.mxu0 0.0
  %101 = vmatpush2.msra.mxu0 0.0
  %102 = vmatprep.subr.mxu0 0.0
  %103 = vmatpush2.msra.mxu0 0.0
  %104 = vmatprep.subr.mxu0 0.0
  %105 = vmatpush2.msra.mxu0 0.0
  %106 = vmatprep.subr.mxu0 0.0
  %107 = vmatpush2.msra.mxu0 0.0
  %108 = vmatprep.subr.mxu0 0.0
  %109 = vmatpush2.msra.mxu0 0.0
  %110 = vmatprep.subr.mxu0 0.0
  %111 = vmatpush2.msra.mxu0 0.0
  %112 = vmatprep.subr.mxu0 0.0
  %113 = vmatpush2.msra.mxu0 0.0
  %114 = vmatprep.subr.mxu0 0.0
  %115 = vmatpush2.msra.mxu0 0.0
  %116 = vmatprep.mubr.f32.mxu0 0.0
  %117 = vmatmul.mubr.f32.gmra.mxu0 %v37
  %v118 = vpop.f32.mrf.mxu0
  %v119 = vadd.f32 0.0, %v118
  %v120 = vpop.f32.mrf.mxu0
  %121 = vmatprep.mubr.f32.mxu0 0.0
  %122 = vmatmul.mubr.f32.gmra.mxu0 %v40
  %v123 = vpop.f32.mrf.mxu0
  %v124 = vadd.f32 0.0, %v123
  %v125 = vpop.f32.mrf.mxu0
  %126 = vmatprep.mubr.f32.mxu0 0.0
  %127 = vmatmul.mubr.f32.gmra.mxu0 %v43
  %v128 = vpop.f32.mrf.mxu0
  %v129 = vadd.f32 0.0, %v128
  %v130 = vpop.f32.mrf.mxu0
  %131 = vmatprep.mubr.f32.mxu0 0.0
  %132 = vmatmul.mubr.f32.gmra.mxu0 %v46
  %v133 = vpop.f32.mrf.mxu0
  %v134 = vadd.f32 0.0, %v133
  %v135 = vpop.f32.mrf.mxu0
  %136 = vdwg.mxu0
  %v137 = vld [vmem:[%s2] sm:$0x1]
  %v138 = vld [vmem:[%s3] sm:$0x1]
  %vm139 = vcmask 97280
  %v140 = vsel %vm139, %v119, 0.0
  %141 = vadd.xlane.f32.xlu0 %v140
  %v142 = vpop.xlane.xlu0 %141
  %v143 = vsel %vm139, %v124, 0.0
  %144 = vadd.xlane.f32.xlu0 %v143
  %v145 = vpop.xlane.xlu0 %144
  %v146 = vsel %vm139, %v129, 0.0
  %147 = vadd.xlane.f32.xlu0 %v146
  %v148 = vpop.xlane.xlu0 %147
  %v149 = vsel %vm139, %v134, 0.0
  %150 = vadd.xlane.f32.xlu0 %v149
  %v151 = vpop.xlane.xlu0 %150
  %v152 = vrcp.pop 12.0
  %v153 = vmul.f32 %v142, %v152
  %v154 = vmul.f32 %v145, %v152
  %v155 = vmul.f32 %v148, %v152
  %v156 = vmul.f32 %v151, %v152
  %v157 = vsub.f32 %v119, %v153
  %v158 = vsub.f32 %v124, %v154
  %v159 = vsub.f32 %v129, %v155
  %v160 = vsub.f32 %v134, %v156
  %v161 = vmul.f32 %v157, %v157
  %v162 = vmul.f32 %v158, %v158
  %v163 = vmul.f32 %v159, %v159
  %v164 = vmul.f32 %v160, %v160
  %v165 = vsel %vm139, %v161, 0.0
  %166 = vadd.xlane.f32.xlu0 %v165
  %v167 = vpop.xlane.xlu0 %166
  %v168 = vsel %vm139, %v162, 0.0
  %169 = vadd.xlane.f32.xlu0 %v168
  %v170 = vpop.xlane.xlu0 %169
  %v171 = vsel %vm139, %v163, 0.0
  %172 = vadd.xlane.f32.xlu0 %v171
  %v173 = vpop.xlane.xlu0 %172
  %v174 = vsel %vm139, %v164, 0.0
  %175 = vadd.xlane.f32.xlu0 %v174
  %v176 = vpop.xlane.xlu0 %175
  %v177 = vmul.f32 %v167, %v152
  %v178 = vmul.f32 %v170, %v152
  %v179 = vmul.f32 %v173, %v152
  %v180 = vmul.f32 %v176, %v152
  %v181 = vadd.f32 %v177, 1e-05
  %v182 = vadd.f32 %v178, 1e-05
  %v183 = vadd.f32 %v179, 1e-05
  %v184 = vadd.f32 %v180, 1e-05
  %v185 = vrsqrt.pop %v181
  %v186 = vrsqrt.pop %v182
  %v187 = vrsqrt.pop %v183
  %v188 = vrsqrt.pop %v184
  %v189 = vmul.f32 %v157, %v185
  %v190 = vmul.f32 %v158, %v186
  %v191 = vmul.f32 %v159, %v187
  %v192 = vmul.f32 %v160, %v188
  %v194 = vlaneseq
  %v195 = vshrl.u32 %v194, 7
  %v196 = vsub.s32 0, %v195
  %v197 = vrot.slane %v137, %v196
  %v199 = vmul.f32 %v189, %v197
  %v200 = vmul.f32 %v190, %v197
  %v201 = vmul.f32 %v191, %v197
  %v202 = vmul.f32 %v192, %v197
  %v204 = vlaneseq
  %v205 = vshrl.u32 %v204, 7
  %v206 = vsub.s32 0, %v205
  %v207 = vrot.slane %v138, %v206
  %v209 = vadd.f32 %v199, %v207
  %v210 = vadd.f32 %v200, %v207
  %v211 = vadd.f32 %v201, %v207
  %v212 = vadd.f32 %v202, %v207
  %v213 = vmul.f32 %v209, 0.5
  %v214 = vmul.f32 %v210, 0.5
  %v215 = vmul.f32 %v211, 0.5
  %v216 = vmul.f32 %v212, 0.5
  %v217 = vmul.f32 %v209, 0.70710677
  %v218 = vmul.f32 %v210, 0.70710677
  %v219 = vmul.f32 %v211, 0.70710677
  %v220 = vmul.f32 %v212, 0.70710677
  %vm221 = vcmp.ge.f32.partialorder %v217, 0.0
  %vm222 = vcmp.ge.f32.partialorder %v218, 0.0
  %vm223 = vcmp.ge.f32.partialorder %v219, 0.0
  %vm224 = vcmp.ge.f32.partialorder %v220, 0.0
  %v225 = vsub.f32 0.0, %v217
  %v226 = vsub.f32 0.0, %v218
  %v227 = vsub.f32 0.0, %v219
  %v228 = vsub.f32 0.0, %v220
  %v229 = vsel %vm221, %v217, %v225
  %v230 = vsel %vm222, %v218, %v226
  %v231 = vsel %vm223, %v219, %v227
  %v232 = vsel %vm224, %v220, %v228
  %v233 = vmul.f32 %v229, 0.3275911
  %v234 = vmul.f32 %v230, 0.3275911
  %v235 = vmul.f32 %v231, 0.3275911
  %v236 = vmul.f32 %v232, 0.3275911
  %v237 = vadd.f32 %v233, 1.0
  %v238 = vadd.f32 %v234, 1.0
  %v239 = vadd.f32 %v235, 1.0
  %v240 = vadd.f32 %v236, 1.0
  %v241 = vrcp.pop %v237
  %v242 = vmul.f32 1.0, %v241
  %v243 = vrcp.pop %v238
  %v244 = vmul.f32 1.0, %v243
  %v245 = vrcp.pop %v239
  %v246 = vmul.f32 1.0, %v245
  %v247 = vrcp.pop %v240
  %v248 = vmul.f32 1.0, %v247
  %v249 = vmul.f32 %v242, 1.0614054
  %v250 = vmul.f32 %v244, 1.0614054
  %v251 = vmul.f32 %v246, 1.0614054
  %v252 = vmul.f32 %v248, 1.0614054
  %v253 = vadd.f32 %v249, -1.4531521
  %v254 = vadd.f32 %v250, -1.4531521
  %v255 = vadd.f32 %v251, -1.4531521
  %v256 = vadd.f32 %v252, -1.4531521
  %v257 = vmul.f32 %v242, %v253
  %v258 = vmul.f32 %v244, %v254
  %v259 = vmul.f32 %v246, %v255
  %v260 = vmul.f32 %v248, %v256
  %v261 = vadd.f32 %v257, 1.4214138
  %v262 = vadd.f32 %v258, 1.4214138
  %v263 = vadd.f32 %v259, 1.4214138
  %v264 = vadd.f32 %v260, 1.4214138
  %v265 = vmul.f32 %v242, %v261
  %v266 = vmul.f32 %v244, %v262
  %v267 = vmul.f32 %v246, %v263
  %v268 = vmul.f32 %v248, %v264
  %v269 = vadd.f32 %v265, -0.28449672
  %v270 = vadd.f32 %v266, -0.28449672
  %v271 = vadd.f32 %v267, -0.28449672
  %v272 = vadd.f32 %v268, -0.28449672
  %v273 = vmul.f32 %v242, %v269
  %v274 = vmul.f32 %v244, %v270
  %v275 = vmul.f32 %v246, %v271
  %v276 = vmul.f32 %v248, %v272
  %v277 = vadd.f32 %v273, 0.2548296
  %v278 = vadd.f32 %v274, 0.2548296
  %v279 = vadd.f32 %v275, 0.2548296
  %v280 = vadd.f32 %v276, 0.2548296
  %v281 = vmul.f32 %v242, %v277
  %v282 = vmul.f32 %v244, %v278
  %v283 = vmul.f32 %v246, %v279
  %v284 = vmul.f32 %v248, %v280
  %v285 = vsub.f32 0.0, %v229
  %v286 = vsub.f32 0.0, %v230
  %v287 = vsub.f32 0.0, %v231
  %v288 = vsub.f32 0.0, %v232
  %v289 = vmul.f32 %v285, %v229
  %v290 = vmul.f32 %v286, %v230
  %v291 = vmul.f32 %v287, %v231
  %v292 = vmul.f32 %v288, %v232
  %v293 = vmul.f32 %v289, 1.442695
  %v294 = vpow.pop %v293
  %v295 = vmul.f32 %v290, 1.442695
  %v296 = vpow.pop %v295
  %v297 = vmul.f32 %v291, 1.442695
  %v298 = vpow.pop %v297
  %v299 = vmul.f32 %v292, 1.442695
  %v300 = vpow.pop %v299
  %v301 = vmul.f32 %v281, %v294
  %v302 = vmul.f32 %v282, %v296
  %v303 = vmul.f32 %v283, %v298
  %v304 = vmul.f32 %v284, %v300
  %v305 = vsub.f32 1.0, %v301
  %v306 = vsub.f32 1.0, %v302
  %v307 = vsub.f32 1.0, %v303
  %v308 = vsub.f32 1.0, %v304
  %v309 = vsub.f32 0.0, %v305
  %v310 = vsub.f32 0.0, %v306
  %v311 = vsub.f32 0.0, %v307
  %v312 = vsub.f32 0.0, %v308
  %v313 = vsel %vm221, %v305, %v309
  %v314 = vsel %vm222, %v306, %v310
  %v315 = vsel %vm223, %v307, %v311
  %v316 = vsel %vm224, %v308, %v312
  %v317 = vadd.f32 %v313, 1.0
  %v318 = vadd.f32 %v314, 1.0
  %v319 = vadd.f32 %v315, 1.0
  %v320 = vadd.f32 %v316, 1.0
  %v321 = vmul.f32 %v213, %v317
  %v322 = vmul.f32 %v214, %v318
  %v323 = vmul.f32 %v215, %v319
  %v324 = vmul.f32 %v216, %v320
  %325 = vst.msk [vmem:[%s4] sm:$0xff] %vm139, %v321
  %326 = vst.msk [vmem:[%s4 + $0x8] sm:$0xff] %vm139, %v322
  %327 = vst.msk [vmem:[%s4 + $0x10] sm:$0xff] %vm139, %v323
  %328 = vst.msk [vmem:[%s4 + $0x18] sm:$0xff] %vm139, %v324
  // Predicated region
  $region18: #{offset_generation_forward.48} parent=0 // pred_check
    _
  $region19: #{offset_generation_forward.48} parent=0 // pred_check_branch
    %330 = sbr.rel (0) target = $region21
  $region20: #{offset_generation_forward.48} parent=0 // pred_region
    _
  $region21: #{offset_generation_forward.48} parent=0 // pred_fallthru
    _
  // Predicated region
  $region22: #{offset_generation_forward.48} parent=0 // pred_check
    _
  $region23: #{offset_generation_forward.48} parent=0 // pred_check_branch
    %332 = sbr.rel (0) target = $region25
  $region24: #{offset_generation_forward.48} parent=0 // pred_region
    _
  $region25: #{offset_generation_forward.48} parent=0 // pred_fallthru
    _

// kernel: offset_generation_forward.49
$region0: #{offset_generation_forward.49}
  #allocation0 [shape = 'u32[]', space=smem, size = 0x4, offset = 0x4, fixed_abs, tag = 'smem constant byte address 0x4 - core index']
  #allocation1 [shape = 'u32[144,128]{1,0:T(1,128)}', space=vmem, size = 0x12000, scoped, tag = 'internal scratch']
  %s0 = inlined_call_operand.vmem [shape: f32[32,108], index: 0, kind: input, shape index: {}]
  %s1 = inlined_call_operand.vmem [shape: f32[108,12], index: 1, kind: input, shape index: {}]
  %s2 = inlined_call_operand.vmem [shape: f32[1,12], index: 2, kind: input, shape index: {}]
  %s3 = inlined_call_operand.vmem [shape: f32[1,12], index: 3, kind: input, shape index: {}]
  %s4 = inlined_call_operand.vmem [shape: f32[32,12], index: 4, kind: input, shape index: {}]
  %s5 = inlined_call_operand.vmem [shape: f32[32,12], index: 5, kind: output, shape index: {}]
  %s6 = sld [smem:[#allocation0]]
  $region30: #{offset_generation_forward.49} parent=0
    _
  %s8 = ssub.s32 1, %s6
  %s9 = scalar_select 0, %s8, %s6
  // Predicated region
  $region2: #{offset_generation_forward.49} parent=0 // pred_check
    _
  $region3: #{offset_generation_forward.49} parent=0 // pred_check_branch
    %11 = sbr.rel (0) target = $region5
  $region4: #{offset_generation_forward.49} parent=0 // pred_region
    _
  $region5: #{offset_generation_forward.49} parent=0 // pred_fallthru
    _
  // Predicated region
  $region6: #{offset_generation_forward.49} parent=0 // pred_check
    _
  $region7: #{offset_generation_forward.49} parent=0 // pred_check_branch
    %13 = sbr.rel (0) target = $region9
  $region8: #{offset_generation_forward.49} parent=0 // pred_region
    _
  $region9: #{offset_generation_forward.49} parent=0 // pred_fallthru
    _
  // Predicated region
  $region10: #{offset_generation_forward.49} parent=0 // pred_check
    _
  $region11: #{offset_generation_forward.49} parent=0 // pred_check_branch
    %15 = sbr.rel (0) target = $region13
  $region12: #{offset_generation_forward.49} parent=0 // pred_region
    _
  $region13: #{offset_generation_forward.49} parent=0 // pred_fallthru
    _
  // Predicated region
  $region14: #{offset_generation_forward.49} parent=0 // pred_check
    _
  $region15: #{offset_generation_forward.49} parent=0 // pred_check_branch
    %17 = sbr.rel (0) target = $region17
  $region16: #{offset_generation_forward.49} parent=0 // pred_region
    _
  $region17: #{offset_generation_forward.49} parent=0 // pred_fallthru
    _
  // Predicated region
  $region18: #{offset_generation_forward.49} parent=0 // pred_check
    _
  $region19: #{offset_generation_forward.49} parent=0 // pred_check_branch
    %19 = sbr.rel (0) target = $region21
  $region20: #{offset_generation_forward.49} parent=0 // pred_region
    _
  $region21: #{offset_generation_forward.49} parent=0 // pred_fallthru
    _
  %v20 = vld [vmem:[%s0] sm:$0xff]
  %v21 = vld [vmem:[%s0 + $0x8] sm:$0xff]
  %v22 = vld [vmem:[%s0 + $0x10] sm:$0xff]
  %v23 = vld [vmem:[%s0 + $0x18] sm:$0xff]
  %v24 = vld [vmem:[%s1] sm:$0xff]
  %v25 = vld [vmem:[%s1 + $0x8] sm:$0xff]
  %v26 = vld [vmem:[%s1 + $0x10] sm:$0xff]
  %v27 = vld [vmem:[%s1 + $0x18] sm:$0xff]
  %v28 = vld [vmem:[%s1 + $0x20] sm:$0xff]
  %v29 = vld [vmem:[%s1 + $0x28] sm:$0xff]
  %v30 = vld [vmem:[%s1 + $0x30] sm:$0xff]
  %v31 = vld [vmem:[%s1 + $0x38] sm:$0xff]
  %v32 = vld [vmem:[%s1 + $0x40] sm:$0xff]
  %v33 = vld [vmem:[%s1 + $0x48] sm:$0xff]
  %v34 = vld [vmem:[%s1 + $0x50] sm:$0xff]
  %v35 = vld [vmem:[%s1 + $0x58] sm:$0xff]
  %v36 = vld [vmem:[%s1 + $0x60] sm:$0xff]
  %v37 = vld [vmem:[%s1 + $0x68] sm:$0xf]
  %vm38 = vcmask 883712
  %v40 = vsel %vm38, %v20, 0
  %v43 = vsel %vm38, %v21, 0
  %v46 = vsel %vm38, %v22, 0
  %v49 = vsel %vm38, %v23, 0
  %vm51 = vcmask 1043456
  %v53 = vsel %vm51, %v37, 0
  %55 = vmatprep.subr.mxu0 0.0
  %56 = vmatpush1.msra.mxu0 0.0
  %57 = vmatprep.subr.mxu0 0.0
  %58 = vmatpush1.msra.mxu0 0.0
  %59 = vmatprep.subr.mxu0 0.0
  %60 = vmatpush1.msra.mxu0 %v53
  %61 = vmatprep.subr.mxu0 0.0
  %62 = vmatpush1.msra.mxu0 %v36
  %63 = vmatprep.subr.mxu0 0.0
  %64 = vmatpush1.msra.mxu0 %v35
  %65 = vmatprep.subr.mxu0 0.0
  %66 = vmatpush1.msra.mxu0 %v34
  %67 = vmatprep.subr.mxu0 0.0
  %68 = vmatpush1.msra.mxu0 %v33
  %69 = vmatprep.subr.mxu0 0.0
  %70 = vmatpush1.msra.mxu0 %v32
  %71 = vmatprep.subr.mxu0 0.0
  %72 = vmatpush1.msra.mxu0 %v31
  %73 = vmatprep.subr.mxu0 0.0
  %74 = vmatpush1.msra.mxu0 %v30
  %75 = vmatprep.subr.mxu0 0.0
  %76 = vmatpush1.msra.mxu0 %v29
  %77 = vmatprep.subr.mxu0 0.0
  %78 = vmatpush1.msra.mxu0 %v28
  %79 = vmatprep.subr.mxu0 0.0
  %80 = vmatpush1.msra.mxu0 %v27
  %81 = vmatprep.subr.mxu0 0.0
  %82 = vmatpush1.msra.mxu0 %v26
  %83 = vmatprep.subr.mxu0 0.0
  %84 = vmatpush1.msra.mxu0 %v25
  %85 = vmatprep.subr.mxu0 0.0
  %86 = vmatpush1.msra.mxu0 %v24
  %87 = vmatprep.subr.mxu0 0.0
  %88 = vmatpush2.msra.mxu0 0.0
  %89 = vmatprep.subr.mxu0 0.0
  %90 = vmatpush2.msra.mxu0 0.0
  %91 = vmatprep.subr.mxu0 0.0
  %92 = vmatpush2.msra.mxu0 0.0
  %93 = vmatprep.subr.mxu0 0.0
  %94 = vmatpush2.msra.mxu0 0.0
  %95 = vmatprep.subr.mxu0 0.0
  %96 = vmatpush2.msra.mxu0 0.0
  %97 = vmatprep.subr.mxu0 0.0
  %98 = vmatpush2.msra.mxu0 0.0
  %99 = vmatprep.subr.mxu0 0.0
  %100 = vmatpush2.msra.mxu0 0.0
  %101 = vmatprep.subr.mxu0 0.0
  %102 = vmatpush2.msra.mxu0 0.0
  %103 = vmatprep.subr.mxu0 0.0
  %104 = vmatpush2.msra.mxu0 0.0
  %105 = vmatprep.subr.mxu0 0.0
  %106 = vmatpush2.msra.mxu0 0.0
  %107 = vmatprep.subr.mxu0 0.0
  %108 = vmatpush2.msra.mxu0 0.0
  %109 = vmatprep.subr.mxu0 0.0
  %110 = vmatpush2.msra.mxu0 0.0
  %111 = vmatprep.subr.mxu0 0.0
  %112 = vmatpush2.msra.mxu0 0.0
  %113 = vmatprep.subr.mxu0 0.0
  %114 = vmatpush2.msra.mxu0 0.0
  %115 = vmatprep.subr.mxu0 0.0
  %116 = vmatpush2.msra.mxu0 0.0
  %117 = vmatprep.subr.mxu0 0.0
  %118 = vmatpush2.msra.mxu0 0.0
  %119 = vmatprep.mubr.f32.mxu0 0.0
  %120 = vmatmul.mubr.f32.gmra.mxu0 %v40
  %v121 = vpop.f32.mrf.mxu0
  %v122 = vadd.f32 0.0, %v121
  %v123 = vpop.f32.mrf.mxu0
  %124 = vmatprep.mubr.f32.mxu0 0.0
  %125 = vmatmul.mubr.f32.gmra.mxu0 %v43
  %v126 = vpop.f32.mrf.mxu0
  %v127 = vadd.f32 0.0, %v126
  %v128 = vpop.f32.mrf.mxu0
  %129 = vmatprep.mubr.f32.mxu0 0.0
  %130 = vmatmul.mubr.f32.gmra.mxu0 %v46
  %v131 = vpop.f32.mrf.mxu0
  %v132 = vadd.f32 0.0, %v131
  %v133 = vpop.f32.mrf.mxu0
  %134 = vmatprep.mubr.f32.mxu0 0.0
  %135 = vmatmul.mubr.f32.gmra.mxu0 %v49
  %v136 = vpop.f32.mrf.mxu0
  %v137 = vadd.f32 0.0, %v136
  %v138 = vpop.f32.mrf.mxu0
  %139 = vdwg.mxu0
  %v140 = vld [vmem:[%s2] sm:$0x1]
  %v141 = vld [vmem:[%s3] sm:$0x1]
  %vm142 = vcmask 97280
  %v143 = vsel %vm142, %v122, 0.0
  %144 = vadd.xlane.f32.xlu0 %v143
  %v145 = vpop.xlane.xlu0 %144
  %v146 = vsel %vm142, %v127, 0.0
  %147 = vadd.xlane.f32.xlu0 %v146
  %v148 = vpop.xlane.xlu0 %147
  %v149 = vsel %vm142, %v132, 0.0
  %150 = vadd.xlane.f32.xlu0 %v149
  %v151 = vpop.xlane.xlu0 %150
  %v152 = vsel %vm142, %v137, 0.0
  %153 = vadd.xlane.f32.xlu0 %v152
  %v154 = vpop.xlane.xlu0 %153
  %v155 = vrcp.pop 12.0
  %v156 = vmul.f32 %v145, %v155
  %v157 = vmul.f32 %v148, %v155
  %v158 = vmul.f32 %v151, %v155
  %v159 = vmul.f32 %v154, %v155
  %v160 = vsub.f32 %v122, %v156
  %v161 = vsub.f32 %v127, %v157
  %v162 = vsub.f32 %v132, %v158
  %v163 = vsub.f32 %v137, %v159
  %v164 = vmul.f32 %v160, %v160
  %v165 = vmul.f32 %v161, %v161
  %v166 = vmul.f32 %v162, %v162
  %v167 = vmul.f32 %v163, %v163
  %v168 = vsel %vm142, %v164, 0.0
  %169 = vadd.xlane.f32.xlu0 %v168
  %v170 = vpop.xlane.xlu0 %169
  %v171 = vsel %vm142, %v165, 0.0
  %172 = vadd.xlane.f32.xlu0 %v171
  %v173 = vpop.xlane.xlu0 %172
  %v174 = vsel %vm142, %v166, 0.0
  %175 = vadd.xlane.f32.xlu0 %v174
  %v176 = vpop.xlane.xlu0 %175
  %v177 = vsel %vm142, %v167, 0.0
  %178 = vadd.xlane.f32.xlu0 %v177
  %v179 = vpop.xlane.xlu0 %178
  %v180 = vmul.f32 %v170, %v155
  %v181 = vmul.f32 %v173, %v155
  %v182 = vmul.f32 %v176, %v155
  %v183 = vmul.f32 %v179, %v155
  %v184 = vadd.f32 %v180, 1e-05
  %v185 = vadd.f32 %v181, 1e-05
  %v186 = vadd.f32 %v182, 1e-05
  %v187 = vadd.f32 %v183, 1e-05
  %v188 = vrsqrt.pop %v184
  %v189 = vrsqrt.pop %v185
  %v190 = vrsqrt.pop %v186
  %v191 = vrsqrt.pop %v187
  %v192 = vmul.f32 %v160, %v188
  %v193 = vmul.f32 %v161, %v189
  %v194 = vmul.f32 %v162, %v190
  %v195 = vmul.f32 %v163, %v191
  %v197 = vlaneseq
  %v198 = vshrl.u32 %v197, 7
  %v199 = vsub.s32 0, %v198
  %v200 = vrot.slane %v140, %v199
  %v202 = vmul.f32 %v192, %v200
  %v203 = vmul.f32 %v193, %v200
  %v204 = vmul.f32 %v194, %v200
  %v205 = vmul.f32 %v195, %v200
  %v207 = vlaneseq
  %v208 = vshrl.u32 %v207, 7
  %v209 = vsub.s32 0, %v208
  %v210 = vrot.slane %v141, %v209
  %v212 = vadd.f32 %v202, %v210
  %v213 = vadd.f32 %v203, %v210
  %v214 = vadd.f32 %v204, %v210
  %v215 = vadd.f32 %v205, %v210
  %v216 = vld [vmem:[%s4] sm:$0xff]
  %v217 = vld [vmem:[%s4 + $0x8] sm:$0xff]
  %v218 = vld [vmem:[%s4 + $0x10] sm:$0xff]
  %v219 = vld [vmem:[%s4 + $0x18] sm:$0xff]
  %v220 = vadd.f32 %v212, %v216
  %v221 = vadd.f32 %v213, %v217
  %v222 = vadd.f32 %v214, %v218
  %v223 = vadd.f32 %v215, %v219
  %224 = vst.msk [vmem:[%s5] sm:$0xff] %vm142, %v220
  %225 = vst.msk [vmem:[%s5 + $0x8] sm:$0xff] %vm142, %v221
  %226 = vst.msk [vmem:[%s5 + $0x10] sm:$0xff] %vm142, %v222
  %227 = vst.msk [vmem:[%s5 + $0x18] sm:$0xff] %vm142, %v223
  // Predicated region
  $region22: #{offset_generation_forward.49} parent=0 // pred_check
    _
  $region23: #{offset_generation_forward.49} parent=0 // pred_check_branch
    %229 = sbr.rel (0) target = $region25
  $region24: #{offset_generation_forward.49} parent=0 // pred_region
    _
  $region25: #{offset_generation_forward.49} parent=0 // pred_fallthru
    _
  // Predicated region
  $region26: #{offset_generation_forward.49} parent=0 // pred_check
    _
  $region27: #{offset_generation_forward.49} parent=0 // pred_check_branch
    %231 = sbr.rel (0) target = $region29
  $region28: #{offset_generation_forward.49} parent=0 // pred_region
    _
  $region29: #{offset_generation_forward.49} parent=0 // pred_fallthru
    _

// kernel: offset_generation_forward.58
$region0: #{offset_generation_forward.58}
  #allocation0 [shape = 'u32[]', space=smem, size = 0x4, offset = 0x4, fixed_abs, tag = 'smem constant byte address 0x4 - core index']
  #allocation1 [shape = 'u32[144,128]{1,0:T(1,128)}', space=vmem, size = 0x12000, scoped, tag = 'internal scratch']
  %s0 = inlined_call_operand.vmem [shape: f32[8,108], index: 0, kind: input, shape index: {}]
  %s1 = inlined_call_operand.vmem [shape: f32[108,12], index: 1, kind: input, shape index: {}]
  %s2 = inlined_call_operand.vmem [shape: f32[1,12], index: 2, kind: input, shape index: {}]
  %s3 = inlined_call_operand.vmem [shape: f32[1,12], index: 3, kind: input, shape index: {}]
  %s4 = inlined_call_operand.vmem [shape: f32[8,12], index: 4, kind: output, shape index: {}]
  %s5 = sld [smem:[#allocation0]]
  $region26: #{offset_generation_forward.58} parent=0
    _
  %s7 = ssub.s32 1, %s5
  %s8 = scalar_select 0, %s7, %s5
  // Predicated region
  $region2: #{offset_generation_forward.58} parent=0 // pred_check
    _
  $region3: #{offset_generation_forward.58} parent=0 // pred_check_branch
    %10 = sbr.rel (0) target = $region5
  $region4: #{offset_generation_forward.58} parent=0 // pred_region
    _
  $region5: #{offset_generation_forward.58} parent=0 // pred_fallthru
    _
  // Predicated region
  $region6: #{offset_generation_forward.58} parent=0 // pred_check
    _
  $region7: #{offset_generation_forward.58} parent=0 // pred_check_branch
    %12 = sbr.rel (0) target = $region9
  $region8: #{offset_generation_forward.58} parent=0 // pred_region
    _
  $region9: #{offset_generation_forward.58} parent=0 // pred_fallthru
    _
  // Predicated region
  $region10: #{offset_generation_forward.58} parent=0 // pred_check
    _
  $region11: #{offset_generation_forward.58} parent=0 // pred_check_branch
    %14 = sbr.rel (0) target = $region13
  $region12: #{offset_generation_forward.58} parent=0 // pred_region
    _
  $region13: #{offset_generation_forward.58} parent=0 // pred_fallthru
    _
  // Predicated region
  $region14: #{offset_generation_forward.58} parent=0 // pred_check
    _
  $region15: #{offset_generation_forward.58} parent=0 // pred_check_branch
    %16 = sbr.rel (0) target = $region17
  $region16: #{offset_generation_forward.58} parent=0 // pred_region
    _
  $region17: #{offset_generation_forward.58} parent=0 // pred_fallthru
    _
  %v17 = vld [vmem:[%s0] sm:$0xff]
  %v18 = vld [vmem:[%s1] sm:$0xff]
  %v19 = vld [vmem:[%s1 + $0x8] sm:$0xff]
  %v20 = vld [vmem:[%s1 + $0x10] sm:$0xff]
  %v21 = vld [vmem:[%s1 + $0x18] sm:$0xff]
  %v22 = vld [vmem:[%s1 + $0x20] sm:$0xff]
  %v23 = vld [vmem:[%s1 + $0x28] sm:$0xff]
  %v24 = vld [vmem:[%s1 + $0x30] sm:$0xff]
  %v25 = vld [vmem:[%s1 + $0x38] sm:$0xff]
  %v26 = vld [vmem:[%s1 + $0x40] sm:$0xff]
  %v27 = vld [vmem:[%s1 + $0x48] sm:$0xff]
  %v28 = vld [vmem:[%s1 + $0x50] sm:$0xff]
  %v29 = vld [vmem:[%s1 + $0x58] sm:$0xff]
  %v30 = vld [vmem:[%s1 + $0x60] sm:$0xff]
  %v31 = vld [vmem:[%s1 + $0x68] sm:$0xf]
  %vm32 = vcmask 883712
  %v34 = vsel %vm32, %v17, 0
  %vm36 = vcmask 1043456
  %v38 = vsel %vm36, %v31, 0
  %40 = vmatprep.subr.mxu0 0.0
  %41 = vmatpush1.msra.mxu0 0.0
  %42 = vmatprep.subr.mxu0 0.0
  %43 = vmatpush1.msra.mxu0 0.0
  %44 = vmatprep.subr.mxu0 0.0
  %45 = vmatpush1.msra.mxu0 %v38
  %46 = vmatprep.subr.mxu0 0.0
  %47 = vmatpush1.msra.mxu0 %v30
  %48 = vmatprep.subr.mxu0 0.0
  %49 = vmatpush1.msra.mxu0 %v29
  %50 = vmatprep.subr.mxu0 0.0
  %51 = vmatpush1.msra.mxu0 %v28
  %52 = vmatprep.subr.mxu0 0.0
  %53 = vmatpush1.msra.mxu0 %v27
  %54 = vmatprep.subr.mxu0 0.0
  %55 = vmatpush1.msra.mxu0 %v26
  %56 = vmatprep.subr.mxu0 0.0
  %57 = vmatpush1.msra.mxu0 %v25
  %58 = vmatprep.subr.mxu0 0.0
  %59 = vmatpush1.msra.mxu0 %v24
  %60 = vmatprep.subr.mxu0 0.0
  %61 = vmatpush1.msra.mxu0 %v23
  %62 = vmatprep.subr.mxu0 0.0
  %63 = vmatpush1.msra.mxu0 %v22
  %64 = vmatprep.subr.mxu0 0.0
  %65 = vmatpush1.msra.mxu0 %v21
  %66 = vmatprep.subr.mxu0 0.0
  %67 = vmatpush1.msra.mxu0 %v20
  %68 = vmatprep.subr.mxu0 0.0
  %69 = vmatpush1.msra.mxu0 %v19
  %70 = vmatprep.subr.mxu0 0.0
  %71 = vmatpush1.msra.mxu0 %v18
  %72 = vmatprep.subr.mxu0 0.0
  %73 = vmatpush2.msra.mxu0 0.0
  %74 = vmatprep.subr.mxu0 0.0
  %75 = vmatpush2.msra.mxu0 0.0
  %76 = vmatprep.subr.mxu0 0.0
  %77 = vmatpush2.msra.mxu0 0.0
  %78 = vmatprep.subr.mxu0 0.0
  %79 = vmatpush2.msra.mxu0 0.0
  %80 = vmatprep.subr.mxu0 0.0
  %81 = vmatpush2.msra.mxu0 0.0
  %82 = vmatprep.subr.mxu0 0.0
  %83 = vmatpush2.msra.mxu0 0.0
  %84 = vmatprep.subr.mxu0 0.0
  %85 = vmatpush2.msra.mxu0 0.0
  %86 = vmatprep.subr.mxu0 0.0
  %87 = vmatpush2.msra.mxu0 0.0
  %88 = vmatprep.subr.mxu0 0.0
  %89 = vmatpush2.msra.mxu0 0.0
  %90 = vmatprep.subr.mxu0 0.0
  %91 = vmatpush2.msra.mxu0 0.0
  %92 = vmatprep.subr.mxu0 0.0
  %93 = vmatpush2.msra.mxu0 0.0
  %94 = vmatprep.subr.mxu0 0.0
  %95 = vmatpush2.msra.mxu0 0.0
  %96 = vmatprep.subr.mxu0 0.0
  %97 = vmatpush2.msra.mxu0 0.0
  %98 = vmatprep.subr.mxu0 0.0
  %99 = vmatpush2.msra.mxu0 0.0
  %100 = vmatprep.subr.mxu0 0.0
  %101 = vmatpush2.msra.mxu0 0.0
  %102 = vmatprep.subr.mxu0 0.0
  %103 = vmatpush2.msra.mxu0 0.0
  %104 = vmatprep.mubr.f32.mxu0 0.0
  %105 = vmatmul.mubr.f32.gmra.mxu0 %v34
  %v106 = vpop.f32.mrf.mxu0
  %v107 = vadd.f32 0.0, %v106
  %v108 = vpop.f32.mrf.mxu0
  %109 = vdwg.mxu0
  %v110 = vld [vmem:[%s2] sm:$0x1]
  %v111 = vld [vmem:[%s3] sm:$0x1]
  %vm112 = vcmask 97280
  %v113 = vsel %vm112, %v107, 0.0
  %114 = vadd.xlane.f32.xlu0 %v113
  %v115 = vpop.xlane.xlu0 %114
  %v116 = vrcp.pop 12.0
  %v117 = vmul.f32 %v115, %v116
  %v118 = vsub.f32 %v107, %v117
  %v119 = vmul.f32 %v118, %v118
  %v120 = vsel %vm112, %v119, 0.0
  %121 = vadd.xlane.f32.xlu0 %v120
  %v122 = vpop.xlane.xlu0 %121
  %v123 = vmul.f32 %v122, %v116
  %v124 = vadd.f32 %v123, 1e-05
  %v125 = vrsqrt.pop %v124
  %v126 = vmul.f32 %v118, %v125
  %v128 = vlaneseq
  %v129 = vshrl.u32 %v128, 7
  %v130 = vsub.s32 0, %v129
  %v131 = vrot.slane %v110, %v130
  %v133 = vmul.f32 %v126, %v131
  %v135 = vlaneseq
  %v136 = vshrl.u32 %v135, 7
  %v137 = vsub.s32 0, %v136
  %v138 = vrot.slane %v111, %v137
  %v140 = vadd.f32 %v133, %v138
  %v141 = vmul.f32 %v140, 0.5
  %v142 = vmul.f32 %v140, 0.70710677
  %vm143 = vcmp.ge.f32.partialorder %v142, 0.0
  %v144 = vsub.f32 0.0, %v142
  %v145 = vsel %vm143, %v142, %v144
  %v146 = vmul.f32 %v145, 0.3275911
  %v147 = vadd.f32 %v146, 1.0
  %v148 = vrcp.pop %v147
  %v149 = vmul.f32 1.0, %v148
  %v150 = vmul.f32 %v149, 1.0614054
  %v151 = vadd.f32 %v150, -1.4531521
  %v152 = vmul.f32 %v149, %v151
  %v153 = vadd.f32 %v152, 1.4214138
  %v154 = vmul.f32 %v149, %v153
  %v155 = vadd.f32 %v154, -0.28449672
  %v156 = vmul.f32 %v149, %v155
  %v157 = vadd.f32 %v156, 0.2548296
  %v158 = vmul.f32 %v149, %v157
  %v159 = vsub.f32 0.0, %v145
  %v160 = vmul.f32 %v159, %v145
  %v161 = vmul.f32 %v160, 1.442695
  %v162 = vpow.pop %v161
  %v163 = vmul.f32 %v158, %v162
  %v164 = vsub.f32 1.0, %v163
  %v165 = vsub.f32 0.0, %v164
  %v166 = vsel %vm143, %v164, %v165
  %v167 = vadd.f32 %v166, 1.0
  %v168 = vmul.f32 %v141, %v167
  %169 = vst.msk [vmem:[%s4] sm:$0xff] %vm112, %v168
  // Predicated region
  $region18: #{offset_generation_forward.58} parent=0 // pred_check
    _
  $region19: #{offset_generation_forward.58} parent=0 // pred_check_branch
    %171 = sbr.rel (0) target = $region21
  $region20: #{offset_generation_forward.58} parent=0 // pred_region
    _
  $region21: #{offset_generation_forward.58} parent=0 // pred_fallthru
    _
  // Predicated region
  $region22: #{offset_generation_forward.58} parent=0 // pred_check
    _
  $region23: #{offset_generation_forward.58} parent=0 // pred_check_branch
    %173 = sbr.rel (0) target = $region25
  $region24: #{offset_generation_forward.58} parent=0 // pred_region
    _
  $region25: #{offset_generation_forward.58} parent=0 // pred_fallthru
    _

// kernel: offset_generation_forward.63
$region0: #{offset_generation_forward.63}
  #allocation0 [shape = 'u32[]', space=smem, size = 0x4, offset = 0x4, fixed_abs, tag = 'smem constant byte address 0x4 - core index']
  #allocation1 [shape = 'u32[144,128]{1,0:T(1,128)}', space=vmem, size = 0x12000, scoped, tag = 'internal scratch']
  %s0 = inlined_call_operand.vmem [shape: f32[32,24], index: 0, kind: input, shape index: {}]
  %s1 = inlined_call_operand.vmem [shape: f32[24,6], index: 1, kind: input, shape index: {}]
  %s2 = inlined_call_operand.vmem [shape: f32[32,6], index: 2, kind: output, shape index: {}]
  %s3 = sld [smem:[#allocation0]]
  $region18: #{offset_generation_forward.63} parent=0
    _
  %s5 = ssub.s32 1, %s3
  %s6 = scalar_select 0, %s5, %s3
  // Predicated region
  $region2: #{offset_generation_forward.63} parent=0 // pred_check
    _
  $region3: #{offset_generation_forward.63} parent=0 // pred_check_branch
    %8 = sbr.rel (0) target = $region5
  $region4: #{offset_generation_forward.63} parent=0 // pred_region
    _
  $region5: #{offset_generation_forward.63} parent=0 // pred_fallthru
    _
  // Predicated region
  $region6: #{offset_generation_forward.63} parent=0 // pred_check
    _
  $region7: #{offset_generation_forward.63} parent=0 // pred_check_branch
    %10 = sbr.rel (0) target = $region9
  $region8: #{offset_generation_forward.63} parent=0 // pred_region
    _
  $region9: #{offset_generation_forward.63} parent=0 // pred_fallthru
    _
  %v11 = vld [vmem:[%s0] sm:$0xff]
  %v12 = vld [vmem:[%s0 + $0x8] sm:$0xff]
  %v13 = vld [vmem:[%s0 + $0x10] sm:$0xff]
  %v14 = vld [vmem:[%s0 + $0x18] sm:$0xff]
  %v15 = vld [vmem:[%s1] sm:$0xff]
  %v16 = vld [vmem:[%s1 + $0x8] sm:$0xff]
  %v17 = vld [vmem:[%s1 + $0x10] sm:$0xff]
  %vm18 = vcmask 195584
  %v20 = vsel %vm18, %v11, 0
  %v23 = vsel %vm18, %v12, 0
  %v26 = vsel %vm18, %v13, 0
  %v29 = vsel %vm18, %v14, 0
  %31 = vmatprep.subr.mxu0 0.0
  %32 = vmatpush1.msra.mxu0 0.0
  %33 = vmatprep.subr.mxu0 0.0
  %34 = vmatpush1.msra.mxu0 0.0
  %35 = vmatprep.subr.mxu0 0.0
  %36 = vmatpush1.msra.mxu0 0.0
  %37 = vmatprep.subr.mxu0 0.0
  %38 = vmatpush1.msra.mxu0 0.0
  %39 = vmatprep.subr.mxu0 0.0
  %40 = vmatpush1.msra.mxu0 0.0
  %41 = vmatprep.subr.mxu0 0.0
  %42 = vmatpush1.msra.mxu0 0.0
  %43 = vmatprep.subr.mxu0 0.0
  %44 = vmatpush1.msra.mxu0 0.0
  %45 = vmatprep.subr.mxu0 0.0
  %46 = vmatpush1.msra.mxu0 0.0
  %47 = vmatprep.subr.mxu0 0.0
  %48 = vmatpush1.msra.mxu0 0.0
  %49 = vmatprep.subr.mxu0 0.0
  %50 = vmatpush1.msra.mxu0 0.0
  %51 = vmatprep.subr.mxu0 0.0
  %52 = vmatpush1.msra.mxu0 0.0
  %53 = vmatprep.subr.mxu0 0.0
  %54 = vmatpush1.msra.mxu0 0.0
  %55 = vmatprep.subr.mxu0 0.0
  %56 = vmatpush1.msra.mxu0 0.0
  %57 = vmatprep.subr.mxu0 0.0
  %58 = vmatpush1.msra.mxu0 %v17
  %59 = vmatprep.subr.mxu0 0.0
  %60 = vmatpush1.msra.mxu0 %v16
  %61 = vmatprep.subr.mxu0 0.0
  %62 = vmatpush1.msra.mxu0 %v15
  %63 = vmatprep.subr.mxu0 0.0
  %64 = vmatpush2.msra.mxu0 0.0
  %65 = vmatprep.subr.mxu0 0.0
  %66 = vmatpush2.msra.mxu0 0.0
  %67 = vmatprep.subr.mxu0 0.0
  %68 = vmatpush2.msra.mxu0 0.0
  %69 = vmatprep.subr.mxu0 0.0
  %70 = vmatpush2.msra.mxu0 0.0
  %71 = vmatprep.subr.mxu0 0.0
  %72 = vmatpush2.msra.mxu0 0.0
  %73 = vmatprep.subr.mxu0 0.0
  %74 = vmatpush2.msra.mxu0 0.0
  %75 = vmatprep.subr.mxu0 0.0
  %76 = vmatpush2.msra.mxu0 0.0
  %77 = vmatprep.subr.mxu0 0.0
  %78 = vmatpush2.msra.mxu0 0.0
  %79 = vmatprep.subr.mxu0 0.0
  %80 = vmatpush2.msra.mxu0 0.0
  %81 = vmatprep.subr.mxu0 0.0
  %82 = vmatpush2.msra.mxu0 0.0
  %83 = vmatprep.subr.mxu0 0.0
  %84 = vmatpush2.msra.mxu0 0.0
  %85 = vmatprep.subr.mxu0 0.0
  %86 = vmatpush2.msra.mxu0 0.0
  %87 = vmatprep.subr.mxu0 0.0
  %88 = vmatpush2.msra.mxu0 0.0
  %89 = vmatprep.subr.mxu0 0.0
  %90 = vmatpush2.msra.mxu0 0.0
  %91 = vmatprep.subr.mxu0 0.0
  %92 = vmatpush2.msra.mxu0 0.0
  %93 = vmatprep.subr.mxu0 0.0
  %94 = vmatpush2.msra.mxu0 0.0
  %95 = vmatprep.mubr.f32.mxu0 0.0
  %96 = vmatmul.mubr.f32.gmra.mxu0 %v20
  %v97 = vpop.f32.mrf.mxu0
  %v98 = vadd.f32 0.0, %v97
  %v99 = vpop.f32.mrf.mxu0
  %100 = vmatprep.mubr.f32.mxu0 0.0
  %101 = vmatmul.mubr.f32.gmra.mxu0 %v23
  %v102 = vpop.f32.mrf.mxu0
  %v103 = vadd.f32 0.0, %v102
  %v104 = vpop.f32.mrf.mxu0
  %105 = vmatprep.mubr.f32.mxu0 0.0
  %106 = vmatmul.mubr.f32.gmra.mxu0 %v26
  %v107 = vpop.f32.mrf.mxu0
  %v108 = vadd.f32 0.0, %v107
  %v109 = vpop.f32.mrf.mxu0
  %110 = vmatprep.mubr.f32.mxu0 0.0
  %111 = vmatmul.mubr.f32.gmra.mxu0 %v29
  %v112 = vpop.f32.mrf.mxu0
  %v113 = vadd.f32 0.0, %v112
  %v114 = vpop.f32.mrf.mxu0
  %115 = vdwg.mxu0
  %v116 = vsub.f32 0.0, %v98
  %v117 = vsub.f32 0.0, %v103
  %v118 = vsub.f32 0.0, %v108
  %v119 = vsub.f32 0.0, %v113
  %v120 = vmul.f32 %v116, 1.442695
  %v121 = vpow.pop %v120
  %v122 = vmul.f32 %v117, 1.442695
  %v123 = vpow.pop %v122
  %v124 = vmul.f32 %v118, 1.442695
  %v125 = vpow.pop %v124
  %v126 = vmul.f32 %v119, 1.442695
  %v127 = vpow.pop %v126
  %v128 = vadd.f32 %v121, 1.0
  %v129 = vadd.f32 %v123, 1.0
  %v130 = vadd.f32 %v125, 1.0
  %v131 = vadd.f32 %v127, 1.0
  %v132 = vrcp.pop %v128
  %v133 = vmul.f32 1.0, %v132
  %v134 = vrcp.pop %v129
  %v135 = vmul.f32 1.0, %v134
  %v136 = vrcp.pop %v130
  %v137 = vmul.f32 1.0, %v136
  %v138 = vrcp.pop %v131
  %v139 = vmul.f32 1.0, %v138
  %vm140 = vcmask 48128
  %141 = vst.msk [vmem:[%s2] sm:$0xff] %vm140, %v133
  %142 = vst.msk [vmem:[%s2 + $0x8] sm:$0xff] %vm140, %v135
  %143 = vst.msk [vmem:[%s2 + $0x10] sm:$0xff] %vm140, %v137
  %144 = vst.msk [vmem:[%s2 + $0x18] sm:$0xff] %vm140, %v139
  // Predicated region
  $region10: #{offset_generation_forward.63} parent=0 // pred_check
    _
  $region11: #{offset_generation_forward.63} parent=0 // pred_check_branch
    %146 = sbr.rel (0) target = $region13
  $region12: #{offset_generation_forward.63} parent=0 // pred_region
    _
  $region13: #{offset_generation_forward.63} parent=0 // pred_fallthru
    _
  // Predicated region
  $region14: #{offset_generation_forward.63} parent=0 // pred_check
    _
  $region15: #{offset_generation_forward.63} parent=0 // pred_check_branch
    %148 = sbr.rel (0) target = $region17
  $region16: #{offset_generation_forward.63} parent=0 // pred_region
    _
  $region17: #{offset_generation_forward.63} parent=0 // pred_fallthru
    _

// kernel: offset_generation_forward.62
$region0: #{offset_generation_forward.62}
  #allocation0 [shape = 'u32[]', space=smem, size = 0x4, offset = 0x4, fixed_abs, tag = 'smem constant byte address 0x4 - core index']
  #allocation1 [shape = 'u32[144,128]{1,0:T(1,128)}', space=vmem, size = 0x12000, scoped, tag = 'internal scratch']
  %s0 = inlined_call_operand.vmem [shape: f32[32,540], index: 0, kind: input, shape index: {}]
  %s1 = inlined_call_operand.vmem [shape: f32[540,24], index: 1, kind: input, shape index: {}]
  %s2 = inlined_call_operand.vmem [shape: f32[1,24], index: 2, kind: input, shape index: {}]
  %s3 = inlined_call_operand.vmem [shape: f32[1,24], index: 3, kind: input, shape index: {}]
  %s4 = inlined_call_operand.vmem [shape: f32[32,24], index: 4, kind: output, shape index: {}]
  %s5 = sld [smem:[#allocation0]]
  $region26: #{offset_generation_forward.62} parent=0
    _
  %s7 = ssub.s32 1, %s5
  %s8 = scalar_select 0, %s7, %s5
  // Predicated region
  $region2: #{offset_generation_forward.62} parent=0 // pred_check
    _
  $region3: #{offset_generation_forward.62} parent=0 // pred_check_branch
    %10 = sbr.rel (0) target = $region5
  $region4: #{offset_generation_forward.62} parent=0 // pred_region
    _
  $region5: #{offset_generation_forward.62} parent=0 // pred_fallthru
    _
  // Predicated region
  $region6: #{offset_generation_forward.62} parent=0 // pred_check
    _
  $region7: #{offset_generation_forward.62} parent=0 // pred_check_branch
    %12 = sbr.rel (0) target = $region9
  $region8: #{offset_generation_forward.62} parent=0 // pred_region
    _
  $region9: #{offset_generation_forward.62} parent=0 // pred_fallthru
    _
  // Predicated region
  $region10: #{offset_generation_forward.62} parent=0 // pred_check
    _
  $region11: #{offset_generation_forward.62} parent=0 // pred_check_branch
    %14 = sbr.rel (0) target = $region13
  $region12: #{offset_generation_forward.62} parent=0 // pred_region
    _
  $region13: #{offset_generation_forward.62} parent=0 // pred_fallthru
    _
  // Predicated region
  $region14: #{offset_generation_forward.62} parent=0 // pred_check
    _
  $region15: #{offset_generation_forward.62} parent=0 // pred_check_branch
    %16 = sbr.rel (0) target = $region17
  $region16: #{offset_generation_forward.62} parent=0 // pred_region
    _
  $region17: #{offset_generation_forward.62} parent=0 // pred_fallthru
    _
  %v17 = vld [vmem:[%s0] sm:$0xff]
  %v18 = vld [vmem:[%s0 + $0x8] sm:$0xff]
  %v19 = vld [vmem:[%s0 + $0x10] sm:$0xff]
  %v20 = vld [vmem:[%s0 + $0x18] sm:$0xff]
  %v21 = vld [vmem:[%s0 + $0x20] sm:$0xff]
  %v22 = vld [vmem:[%s0 + $0x28] sm:$0xff]
  %v23 = vld [vmem:[%s0 + $0x30] sm:$0xff]
  %v24 = vld [vmem:[%s0 + $0x38] sm:$0xff]
  %v25 = vld [vmem:[%s0 + $0x40] sm:$0xff]
  %v26 = vld [vmem:[%s0 + $0x48] sm:$0xff]
  %v27 = vld [vmem:[%s0 + $0x50] sm:$0xff]
  %v28 = vld [vmem:[%s0 + $0x58] sm:$0xff]
  %v29 = vld [vmem:[%s0 + $0x60] sm:$0xff]
  %v30 = vld [vmem:[%s0 + $0x68] sm:$0xff]
  %v31 = vld [vmem:[%s0 + $0x70] sm:$0xff]
  %v32 = vld [vmem:[%s0 + $0x78] sm:$0xff]
  %v33 = vld [vmem:[%s0 + $0x80] sm:$0xff]
  %v34 = vld [vmem:[%s0 + $0x88] sm:$0xff]
  %v35 = vld [vmem:[%s0 + $0x90] sm:$0xff]
  %v36 = vld [vmem:[%s0 + $0x98] sm:$0xff]
  %v37 = vld [vmem:[%s1] sm:$0xff]
  %v38 = vld [vmem:[%s1 + $0x8] sm:$0xff]
  %v39 = vld [vmem:[%s1 + $0x10] sm:$0xff]
  %v40 = vld [vmem:[%s1 + $0x18] sm:$0xff]
  %v41 = vld [vmem:[%s1 + $0x20] sm:$0xff]
  %v42 = vld [vmem:[%s1 + $0x28] sm:$0xff]
  %v43 = vld [vmem:[%s1 + $0x30] sm:$0xff]
  %v44 = vld [vmem:[%s1 + $0x38] sm:$0xff]
  %v45 = vld [vmem:[%s1 + $0x40] sm:$0xff]
  %v46 = vld [vmem:[%s1 + $0x48] sm:$0xff]
  %v47 = vld [vmem:[%s1 + $0x50] sm:$0xff]
  %v48 = vld [vmem:[%s1 + $0x58] sm:$0xff]
  %v49 = vld [vmem:[%s1 + $0x60] sm:$0xff]
  %v50 = vld [vmem:[%s1 + $0x68] sm:$0xff]
  %v51 = vld [vmem:[%s1 + $0x70] sm:$0xff]
  %v52 = vld [vmem:[%s1 + $0x78] sm:$0xff]
  %v53 = vld [vmem:[%s1 + $0x80] sm:$0xff]
  %v54 = vld [vmem:[%s1 + $0x88] sm:$0xff]
  %v55 = vld [vmem:[%s1 + $0x90] sm:$0xff]
  %v56 = vld [vmem:[%s1 + $0x98] sm:$0xff]
  %v57 = vld [vmem:[%s1 + $0xa0] sm:$0xff]
  %v58 = vld [vmem:[%s1 + $0xa8] sm:$0xff]
  %v59 = vld [vmem:[%s1 + $0xb0] sm:$0xff]
  %v60 = vld [vmem:[%s1 + $0xb8] sm:$0xff]
  %v61 = vld [vmem:[%s1 + $0xc0] sm:$0xff]
  %v62 = vld [vmem:[%s1 + $0xc8] sm:$0xff]
  %v63 = vld [vmem:[%s1 + $0xd0] sm:$0xff]
  %v64 = vld [vmem:[%s1 + $0xd8] sm:$0xff]
  %v65 = vld [vmem:[%s1 + $0xe0] sm:$0xff]
  %v66 = vld [vmem:[%s1 + $0xe8] sm:$0xff]
  %v67 = vld [vmem:[%s1 + $0xf0] sm:$0xff]
  %v68 = vld [vmem:[%s1 + $0xf8] sm:$0xff]
  %v69 = vld [vmem:[%s1 + $0x100] sm:$0xff]
  %v70 = vld [vmem:[%s1 + $0x108] sm:$0xff]
  %v71 = vld [vmem:[%s1 + $0x110] sm:$0xff]
  %v72 = vld [vmem:[%s1 + $0x118] sm:$0xff]
  %v73 = vld [vmem:[%s1 + $0x120] sm:$0xff]
  %v74 = vld [vmem:[%s1 + $0x128] sm:$0xff]
  %v75 = vld [vmem:[%s1 + $0x130] sm:$0xff]
  %v76 = vld [vmem:[%s1 + $0x138] sm:$0xff]
  %v77 = vld [vmem:[%s1 + $0x140] sm:$0xff]
  %v78 = vld [vmem:[%s1 + $0x148] sm:$0xff]
  %v79 = vld [vmem:[%s1 + $0x150] sm:$0xff]
  %v80 = vld [vmem:[%s1 + $0x158] sm:$0xff]
  %v81 = vld [vmem:[%s1 + $0x160] sm:$0xff]
  %v82 = vld [vmem:[%s1 + $0x168] sm:$0xff]
  %v83 = vld [vmem:[%s1 + $0x170] sm:$0xff]
  %v84 = vld [vmem:[%s1 + $0x178] sm:$0xff]
  %v85 = vld [vmem:[%s1 + $0x180] sm:$0xff]
  %v86 = vld [vmem:[%s1 + $0x188] sm:$0xff]
  %v87 = vld [vmem:[%s1 + $0x190] sm:$0xff]
  %v88 = vld [vmem:[%s1 + $0x198] sm:$0xff]
  %v89 = vld [vmem:[%s1 + $0x1a0] sm:$0xff]
  %v90 = vld [vmem:[%s1 + $0x1a8] sm:$0xff]
  %v91 = vld [vmem:[%s1 + $0x1b0] sm:$0xff]
  %v92 = vld [vmem:[%s1 + $0x1b8] sm:$0xff]
  %v93 = vld [vmem:[%s1 + $0x1c0] sm:$0xff]
  %v94 = vld [vmem:[%s1 + $0x1c8] sm:$0xff]
  %v95 = vld [vmem:[%s1 + $0x1d0] sm:$0xff]
  %v96 = vld [vmem:[%s1 + $0x1d8] sm:$0xff]
  %v97 = vld [vmem:[%s1 + $0x1e0] sm:$0xff]
  %v98 = vld [vmem:[%s1 + $0x1e8] sm:$0xff]
  %v99 = vld [vmem:[%s1 + $0x1f0] sm:$0xff]
  %v100 = vld [vmem:[%s1 + $0x1f8] sm:$0xff]
  %v101 = vld [vmem:[%s1 + $0x200] sm:$0xff]
  %v102 = vld [vmem:[%s1 + $0x208] sm:$0xff]
  %v103 = vld [vmem:[%s1 + $0x210] sm:$0xff]
  %v104 = vld [vmem:[%s1 + $0x218] sm:$0xf]
  %vm105 = vcmask 228352
  %v107 = vsel %vm105, %v21, 0
  %v110 = vsel %vm105, %v26, 0
  %v113 = vsel %vm105, %v31, 0
  %v116 = vsel %vm105, %v36, 0
  %vm118 = vcmask 1043456
  %v120 = vsel %vm118, %v104, 0
  %122 = vmatprep.subr.mxu0 0.0
  %123 = vmatpush1.msra.mxu0 %v52
  %124 = vmatprep.subr.mxu0 0.0
  %125 = vmatpush1.msra.mxu0 %v51
  %126 = vmatprep.subr.mxu0 0.0
  %127 = vmatpush1.msra.mxu0 %v50
  %128 = vmatprep.subr.mxu0 0.0
  %129 = vmatpush1.msra.mxu0 %v49
  %130 = vmatprep.subr.mxu0 0.0
  %131 = vmatpush1.msra.mxu0 %v48
  %132 = vmatprep.subr.mxu0 0.0
  %133 = vmatpush1.msra.mxu0 %v47
  %134 = vmatprep.subr.mxu0 0.0
  %135 = vmatpush1.msra.mxu0 %v46
  %136 = vmatprep.subr.mxu0 0.0
  %137 = vmatpush1.msra.mxu0 %v45
  %138 = vmatprep.subr.mxu0 0.0
  %139 = vmatpush1.msra.mxu0 %v44
  %140 = vmatprep.subr.mxu0 0.0
  %141 = vmatpush1.msra.mxu0 %v43
  %142 = vmatprep.subr.mxu0 0.0
  %143 = vmatpush1.msra.mxu0 %v42
  %144 = vmatprep.subr.mxu0 0.0
  %145 = vmatpush1.msra.mxu0 %v41
  %146 = vmatprep.subr.mxu0 0.0
  %147 = vmatpush1.msra.mxu0 %v40
  %148 = vmatprep.subr.mxu0 0.0
  %149 = vmatpush1.msra.mxu0 %v39
  %150 = vmatprep.subr.mxu0 0.0
  %151 = vmatpush1.msra.mxu0 %v38
  %152 = vmatprep.subr.mxu0 0.0
  %153 = vmatpush1.msra.mxu0 %v37
  %154 = vmatprep.subr.mxu0 0.0
  %155 = vmatpush2.msra.mxu0 %v68
  %156 = vmatprep.subr.mxu0 0.0
  %157 = vmatpush2.msra.mxu0 %v67
  %158 = vmatprep.subr.mxu0 0.0
  %159 = vmatpush2.msra.mxu0 %v66
  %160 = vmatprep.subr.mxu0 0.0
  %161 = vmatpush2.msra.mxu0 %v65
  %162 = vmatprep.subr.mxu0 0.0
  %163 = vmatpush2.msra.mxu0 %v64
  %164 = vmatprep.subr.mxu0 0.0
  %165 = vmatpush2.msra.mxu0 %v63
  %166 = vmatprep.subr.mxu0 0.0
  %167 = vmatpush2.msra.mxu0 %v62
  %168 = vmatprep.subr.mxu0 0.0
  %169 = vmatpush2.msra.mxu0 %v61
  %170 = vmatprep.subr.mxu0 0.0
  %171 = vmatpush2.msra.mxu0 %v60
  %172 = vmatprep.subr.mxu0 0.0
  %173 = vmatpush2.msra.mxu0 %v59
  %174 = vmatprep.subr.mxu0 0.0
  %175 = vmatpush2.msra.mxu0 %v58
  %176 = vmatprep.subr.mxu0 0.0
  %177 = vmatpush2.msra.mxu0 %v57
  %178 = vmatprep.subr.mxu0 0.0
  %179 = vmatpush2.msra.mxu0 %v56
  %180 = vmatprep.subr.mxu0 0.0
  %181 = vmatpush2.msra.mxu0 %v55
  %182 = vmatprep.subr.mxu0 0.0
  %183 = vmatpush2.msra.mxu0 %v54
  %184 = vmatprep.subr.mxu0 0.0
  %185 = vmatpush2.msra.mxu0 %v53
  %186 = vmatprep.mubr.f32.mxu0 %v18
  %187 = vmatmul.mubr.f32.gmra.mxu0 %v17
  %v188 = vpop.f32.mrf.mxu0
  %v189 = vadd.f32 0.0, %v188
  %v190 = vpop.f32.mrf.mxu0
  %191 = vmatprep.mubr.f32.mxu0 %v23
  %192 = vmatmul.mubr.f32.gmra.mxu0 %v22
  %v193 = vpop.f32.mrf.mxu0
  %v194 = vadd.f32 0.0, %v193
  %v195 = vpop.f32.mrf.mxu0
  %196 = vmatprep.mubr.f32.mxu0 %v28
  %197 = vmatmul.mubr.f32.gmra.mxu0 %v27
  %v198 = vpop.f32.mrf.mxu0
  %v199 = vadd.f32 0.0, %v198
  %v200 = vpop.f32.mrf.mxu0
  %201 = vmatprep.mubr.f32.mxu0 %v33
  %202 = vmatmul.mubr.f32.gmra.mxu0 %v32
  %v203 = vpop.f32.mrf.mxu0
  %v204 = vadd.f32 0.0, %v203
  %v205 = vpop.f32.mrf.mxu0
  %206 = vdwg.mxu0
  %207 = vmatprep.subr.mxu0 0.0
  %208 = vmatpush1.msra.mxu0 %v84
  %209 = vmatprep.subr.mxu0 0.0
  %210 = vmatpush1.msra.mxu0 %v83
  %211 = vmatprep.subr.mxu0 0.0
  %212 = vmatpush1.msra.mxu0 %v82
  %213 = vmatprep.subr.mxu0 0.0
  %214 = vmatpush1.msra.mxu0 %v81
  %215 = vmatprep.subr.mxu0 0.0
  %216 = vmatpush1.msra.mxu0 %v80
  %217 = vmatprep.subr.mxu0 0.0
  %218 = vmatpush1.msra.mxu0 %v79
  %219 = vmatprep.subr.mxu0 0.0
  %220 = vmatpush1.msra.mxu0 %v78
  %221 = vmatprep.subr.mxu0 0.0
  %222 = vmatpush1.msra.mxu0 %v77
  %223 = vmatprep.subr.mxu0 0.0
  %224 = vmatpush1.msra.mxu0 %v76
  %225 = vmatprep.subr.mxu0 0.0
  %226 = vmatpush1.msra.mxu0 %v75
  %227 = vmatprep.subr.mxu0 0.0
  %228 = vmatpush1.msra.mxu0 %v74
  %229 = vmatprep.subr.mxu0 0.0
  %230 = vmatpush1.msra.mxu0 %v73
  %231 = vmatprep.subr.mxu0 0.0
  %232 = vmatpush1.msra.mxu0 %v72
  %233 = vmatprep.subr.mxu0 0.0
  %234 = vmatpush1.msra.mxu0 %v71
  %235 = vmatprep.subr.mxu0 0.0
  %236 = vmatpush1.msra.mxu0 %v70
  %237 = vmatprep.subr.mxu0 0.0
  %238 = vmatpush1.msra.mxu0 %v69
  %239 = vmatprep.subr.mxu0 0.0
  %240 = vmatpush2.msra.mxu0 %v100
  %241 = vmatprep.subr.mxu0 0.0
  %242 = vmatpush2.msra.mxu0 %v99
  %243 = vmatprep.subr.mxu0 0.0
  %244 = vmatpush2.msra.mxu0 %v98
  %245 = vmatprep.subr.mxu0 0.0
  %246 = vmatpush2.msra.mxu0 %v97
  %247 = vmatprep.subr.mxu0 0.0
  %248 = vmatpush2.msra.mxu0 %v96
  %249 = vmatprep.subr.mxu0 0.0
  %250 = vmatpush2.msra.mxu0 %v95
  %251 = vmatprep.subr.mxu0 0.0
  %252 = vmatpush2.msra.mxu0 %v94
  %253 = vmatprep.subr.mxu0 0.0
  %254 = vmatpush2.msra.mxu0 %v93
  %255 = vmatprep.subr.mxu0 0.0
  %256 = vmatpush2.msra.mxu0 %v92
  %257 = vmatprep.subr.mxu0 0.0
  %258 = vmatpush2.msra.mxu0 %v91
  %259 = vmatprep.subr.mxu0 0.0
  %260 = vmatpush2.msra.mxu0 %v90
  %261 = vmatprep.subr.mxu0 0.0
  %262 = vmatpush2.msra.mxu0 %v89
  %263 = vmatprep.subr.mxu0 0.0
  %264 = vmatpush2.msra.mxu0 %v88
  %265 = vmatprep.subr.mxu0 0.0
  %266 = vmatpush2.msra.mxu0 %v87
  %267 = vmatprep.subr.mxu0 0.0
  %268 = vmatpush2.msra.mxu0 %v86
  %269 = vmatprep.subr.mxu0 0.0
  %270 = vmatpush2.msra.mxu0 %v85
  %271 = vmatprep.mubr.f32.mxu0 %v20
  %272 = vmatmul.mubr.f32.gmra.mxu0 %v19
  %v273 = vpop.f32.mrf.mxu0
  %v274 = vadd.f32 %v189, %v273
  %v275 = vpop.f32.mrf.mxu0
  %276 = vmatprep.mubr.f32.mxu0 %v25
  %277 = vmatmul.mubr.f32.gmra.mxu0 %v24
  %v278 = vpop.f32.mrf.mxu0
  %v279 = vadd.f32 %v194, %v278
  %v280 = vpop.f32.mrf.mxu0
  %281 = vmatprep.mubr.f32.mxu0 %v30
  %282 = vmatmul.mubr.f32.gmra.mxu0 %v29
  %v283 = vpop.f32.mrf.mxu0
  %v284 = vadd.f32 %v199, %v283
  %v285 = vpop.f32.mrf.mxu0
  %286 = vmatprep.mubr.f32.mxu0 %v35
  %287 = vmatmul.mubr.f32.gmra.mxu0 %v34
  %v288 = vpop.f32.mrf.mxu0
  %v289 = vadd.f32 %v204, %v288
  %v290 = vpop.f32.mrf.mxu0
  %291 = vdwg.mxu0
  %292 = vmatprep.subr.mxu0 0.0
  %293 = vmatpush1.msra.mxu0 0.0
  %294 = vmatprep.subr.mxu0 0.0
  %295 = vmatpush1.msra.mxu0 0.0
  %296 = vmatprep.subr.mxu0 0.0
  %297 = vmatpush1.msra.mxu0 0.0
  %298 = vmatprep.subr.mxu0 0.0
  %299 = vmatpush1.msra.mxu0 0.0
  %300 = vmatprep.subr.mxu0 0.0
  %301 = vmatpush1.msra.mxu0 0.0
  %302 = vmatprep.subr.mxu0 0.0
  %303 = vmatpush1.msra.mxu0 0.0
  %304 = vmatprep.subr.mxu0 0.0
  %305 = vmatpush1.msra.mxu0 0.0
  %306 = vmatprep.subr.mxu0 0.0
  %307 = vmatpush1.msra.mxu0 0.0
  %308 = vmatprep.subr.mxu0 0.0
  %309 = vmatpush1.msra.mxu0 0.0
  %310 = vmatprep.subr.mxu0 0.0
  %311 = vmatpush1.msra.mxu0 0.0
  %312 = vmatprep.subr.mxu0 0.0
  %313 = vmatpush1.msra.mxu0 0.0
  %314 = vmatprep.subr.mxu0 0.0
  %315 = vmatpush1.msra.mxu0 0.0
  %316 = vmatprep.subr.mxu0 0.0
  %317 = vmatpush1.msra.mxu0 %v120
  %318 = vmatprep.subr.mxu0 0.0
  %319 = vmatpush1.msra.mxu0 %v103
  %320 = vmatprep.subr.mxu0 0.0
  %321 = vmatpush1.msra.mxu0 %v102
  %322 = vmatprep.subr.mxu0 0.0
  %323 = vmatpush1.msra.mxu0 %v101
  %324 = vmatprep.subr.mxu0 0.0
  %325 = vmatpush2.msra.mxu0 0.0
  %326 = vmatprep.subr.mxu0 0.0
  %327 = vmatpush2.msra.mxu0 0.0
  %328 = vmatprep.subr.mxu0 0.0
  %329 = vmatpush2.msra.mxu0 0.0
  %330 = vmatprep.subr.mxu0 0.0
  %331 = vmatpush2.msra.mxu0 0.0
  %332 = vmatprep.subr.mxu0 0.0
  %333 = vmatpush2.msra.mxu0 0.0
  %334 = vmatprep.subr.mxu0 0.0
  %335 = vmatpush2.msra.mxu0 0.0
  %336 = vmatprep.subr.mxu0 0.0
  %337 = vmatpush2.msra.mxu0 0.0
  %338 = vmatprep.subr.mxu0 0.0
  %339 = vmatpush2.msra.mxu0 0.0
  %340 = vmatprep.subr.mxu0 0.0
  %341 = vmatpush2.msra.mxu0 0.0
  %342 = vmatprep.subr.mxu0 0.0
  %343 = vmatpush2.msra.mxu0 0.0
  %344 = vmatprep.subr.mxu0 0.0
  %345 = vmatpush2.msra.mxu0 0.0
  %346 = vmatprep.subr.mxu0 0.0
  %347 = vmatpush2.msra.mxu0 0.0
  %348 = vmatprep.subr.mxu0 0.0
  %349 = vmatpush2.msra.mxu0 0.0
  %350 = vmatprep.subr.mxu0 0.0
  %351 = vmatpush2.msra.mxu0 0.0
  %352 = vmatprep.subr.mxu0 0.0
  %353 = vmatpush2.msra.mxu0 0.0
  %354 = vmatprep.subr.mxu0 0.0
  %355 = vmatpush2.msra.mxu0 0.0
  %356 = vmatprep.mubr.f32.mxu0 0.0
  %357 = vmatmul.mubr.f32.gmra.mxu0 %v107
  %v358 = vpop.f32.mrf.mxu0
  %v359 = vadd.f32 %v274, %v358
  %v360 = vpop.f32.mrf.mxu0
  %361 = vmatprep.mubr.f32.mxu0 0.0
  %362 = vmatmul.mubr.f32.gmra.mxu0 %v110
  %v363 = vpop.f32.mrf.mxu0
  %v364 = vadd.f32 %v279, %v363
  %v365 = vpop.f32.mrf.mxu0
  %366 = vmatprep.mubr.f32.mxu0 0.0
  %367 = vmatmul.mubr.f32.gmra.mxu0 %v113
  %v368 = vpop.f32.mrf.mxu0
  %v369 = vadd.f32 %v284, %v368
  %v370 = vpop.f32.mrf.mxu0
  %371 = vmatprep.mubr.f32.mxu0 0.0
  %372 = vmatmul.mubr.f32.gmra.mxu0 %v116
  %v373 = vpop.f32.mrf.mxu0
  %v374 = vadd.f32 %v289, %v373
  %v375 = vpop.f32.mrf.mxu0
  %376 = vdwg.mxu0
  %v377 = vld [vmem:[%s2] sm:$0x1]
  %v378 = vld [vmem:[%s3] sm:$0x1]
  %vm379 = vcmask 195584
  %v380 = vsel %vm379, %v359, 0.0
  %381 = vadd.xlane.f32.xlu0 %v380
  %v382 = vpop.xlane.xlu0 %381
  %v383 = vsel %vm379, %v364, 0.0
  %384 = vadd.xlane.f32.xlu0 %v383
  %v385 = vpop.xlane.xlu0 %384
  %v386 = vsel %vm379, %v369, 0.0
  %387 = vadd.xlane.f32.xlu0 %v386
  %v388 = vpop.xlane.xlu0 %387
  %v389 = vsel %vm379, %v374, 0.0
  %390 = vadd.xlane.f32.xlu0 %v389
  %v391 = vpop.xlane.xlu0 %390
  %v392 = vrcp.pop 24.0
  %v393 = vmul.f32 %v382, %v392
  %v394 = vmul.f32 %v385, %v392
  %v395 = vmul.f32 %v388, %v392
  %v396 = vmul.f32 %v391, %v392
  %v397 = vsub.f32 %v359, %v393
  %v398 = vsub.f32 %v364, %v394
  %v399 = vsub.f32 %v369, %v395
  %v400 = vsub.f32 %v374, %v396
  %v401 = vmul.f32 %v397, %v397
  %v402 = vmul.f32 %v398, %v398
  %v403 = vmul.f32 %v399, %v399
  %v404 = vmul.f32 %v400, %v400
  %v405 = vsel %vm379, %v401, 0.0
  %406 = vadd.xlane.f32.xlu0 %v405
  %v407 = vpop.xlane.xlu0 %406
  %v408 = vsel %vm379, %v402, 0.0
  %409 = vadd.xlane.f32.xlu0 %v408
  %v410 = vpop.xlane.xlu0 %409
  %v411 = vsel %vm379, %v403, 0.0
  %412 = vadd.xlane.f32.xlu0 %v411
  %v413 = vpop.xlane.xlu0 %412
  %v414 = vsel %vm379, %v404, 0.0
  %415 = vadd.xlane.f32.xlu0 %v414
  %v416 = vpop.xlane.xlu0 %415
  %v417 = vmul.f32 %v407, %v392
  %v418 = vmul.f32 %v410, %v392
  %v419 = vmul.f32 %v413, %v392
  %v420 = vmul.f32 %v416, %v392
  %v421 = vadd.f32 %v417, 1e-05
  %v422 = vadd.f32 %v418, 1e-05
  %v423 = vadd.f32 %v419, 1e-05
  %v424 = vadd.f32 %v420, 1e-05
  %v425 = vrsqrt.pop %v421
  %v426 = vrsqrt.pop %v422
  %v427 = vrsqrt.pop %v423
  %v428 = vrsqrt.pop %v424
  %v429 = vmul.f32 %v397, %v425
  %v430 = vmul.f32 %v398, %v426
  %v431 = vmul.f32 %v399, %v427
  %v432 = vmul.f32 %v400, %v428
  %v434 = vlaneseq
  %v435 = vshrl.u32 %v434, 7
  %v436 = vsub.s32 0, %v435
  %v437 = vrot.slane %v377, %v436
  %v439 = vmul.f32 %v429, %v437
  %v440 = vmul.f32 %v430, %v437
  %v441 = vmul.f32 %v431, %v437
  %v442 = vmul.f32 %v432, %v437
  %v444 = vlaneseq
  %v445 = vshrl.u32 %v444, 7
  %v446 = vsub.s32 0, %v445
  %v447 = vrot.slane %v378, %v446
  %v449 = vadd.f32 %v439, %v447
  %v450 = vadd.f32 %v440, %v447
  %v451 = vadd.f32 %v441, %v447
  %v452 = vadd.f32 %v442, %v447
  %v453 = vmul.f32 %v449, 0.5
  %v454 = vmul.f32 %v450, 0.5
  %v455 = vmul.f32 %v451, 0.5
  %v456 = vmul.f32 %v452, 0.5
  %v457 = vmul.f32 %v449, 0.70710677
  %v458 = vmul.f32 %v450, 0.70710677
  %v459 = vmul.f32 %v451, 0.70710677
  %v460 = vmul.f32 %v452, 0.70710677
  %vm461 = vcmp.ge.f32.partialorder %v457, 0.0
  %vm462 = vcmp.ge.f32.partialorder %v458, 0.0
  %vm463 = vcmp.ge.f32.partialorder %v459, 0.0
  %vm464 = vcmp.ge.f32.partialorder %v460, 0.0
  %v465 = vsub.f32 0.0, %v457
  %v466 = vsub.f32 0.0, %v458
  %v467 = vsub.f32 0.0, %v459
  %v468 = vsub.f32 0.0, %v460
  %v469 = vsel %vm461, %v457, %v465
  %v470 = vsel %vm462, %v458, %v466
  %v471 = vsel %vm463, %v459, %v467
  %v472 = vsel %vm464, %v460, %v468
  %v473 = vmul.f32 %v469, 0.3275911
  %v474 = vmul.f32 %v470, 0.3275911
  %v475 = vmul.f32 %v471, 0.3275911
  %v476 = vmul.f32 %v472, 0.3275911
  %v477 = vadd.f32 %v473, 1.0
  %v478 = vadd.f32 %v474, 1.0
  %v479 = vadd.f32 %v475, 1.0
  %v480 = vadd.f32 %v476, 1.0
  %v481 = vrcp.pop %v477
  %v482 = vmul.f32 1.0, %v481
  %v483 = vrcp.pop %v478
  %v484 = vmul.f32 1.0, %v483
  %v485 = vrcp.pop %v479
  %v486 = vmul.f32 1.0, %v485
  %v487 = vrcp.pop %v480
  %v488 = vmul.f32 1.0, %v487
  %v489 = vmul.f32 %v482, 1.0614054
  %v490 = vmul.f32 %v484, 1.0614054
  %v491 = vmul.f32 %v486, 1.0614054
  %v492 = vmul.f32 %v488, 1.0614054
  %v493 = vadd.f32 %v489, -1.4531521
  %v494 = vadd.f32 %v490, -1.4531521
  %v495 = vadd.f32 %v491, -1.4531521
  %v496 = vadd.f32 %v492, -1.4531521
  %v497 = vmul.f32 %v482, %v493
  %v498 = vmul.f32 %v484, %v494
  %v499 = vmul.f32 %v486, %v495
  %v500 = vmul.f32 %v488, %v496
  %v501 = vadd.f32 %v497, 1.4214138
  %v502 = vadd.f32 %v498, 1.4214138
  %v503 = vadd.f32 %v499, 1.4214138
  %v504 = vadd.f32 %v500, 1.4214138
  %v505 = vmul.f32 %v482, %v501
  %v506 = vmul.f32 %v484, %v502
  %v507 = vmul.f32 %v486, %v503
  %v508 = vmul.f32 %v488, %v504
  %v509 = vadd.f32 %v505, -0.28449672
  %v510 = vadd.f32 %v506, -0.28449672
  %v511 = vadd.f32 %v507, -0.28449672
  %v512 = vadd.f32 %v508, -0.28449672
  %v513 = vmul.f32 %v482, %v509
  %v514 = vmul.f32 %v484, %v510
  %v515 = vmul.f32 %v486, %v511
  %v516 = vmul.f32 %v488, %v512
  %v517 = vadd.f32 %v513, 0.2548296
  %v518 = vadd.f32 %v514, 0.2548296
  %v519 = vadd.f32 %v515, 0.2548296
  %v520 = vadd.f32 %v516, 0.2548296
  %v521 = vmul.f32 %v482, %v517
  %v522 = vmul.f32 %v484, %v518
  %v523 = vmul.f32 %v486, %v519
  %v524 = vmul.f32 %v488, %v520
  %v525 = vsub.f32 0.0, %v469
  %v526 = vsub.f32 0.0, %v470
  %v527 = vsub.f32 0.0, %v471
  %v528 = vsub.f32 0.0, %v472
  %v529 = vmul.f32 %v525, %v469
  %v530 = vmul.f32 %v526, %v470
  %v531 = vmul.f32 %v527, %v471
  %v532 = vmul.f32 %v528, %v472
  %v533 = vmul.f32 %v529, 1.442695
  %v534 = vpow.pop %v533
  %v535 = vmul.f32 %v530, 1.442695
  %v536 = vpow.pop %v535
  %v537 = vmul.f32 %v531, 1.442695
  %v538 = vpow.pop %v537
  %v539 = vmul.f32 %v532, 1.442695
  %v540 = vpow.pop %v539
  %v541 = vmul.f32 %v521, %v534
  %v542 = vmul.f32 %v522, %v536
  %v543 = vmul.f32 %v523, %v538
  %v544 = vmul.f32 %v524, %v540
  %v545 = vsub.f32 1.0, %v541
  %v546 = vsub.f32 1.0, %v542
  %v547 = vsub.f32 1.0, %v543
  %v548 = vsub.f32 1.0, %v544
  %v549 = vsub.f32 0.0, %v545
  %v550 = vsub.f32 0.0, %v546
  %v551 = vsub.f32 0.0, %v547
  %v552 = vsub.f32 0.0, %v548
  %v553 = vsel %vm461, %v545, %v549
  %v554 = vsel %vm462, %v546, %v550
  %v555 = vsel %vm463, %v547, %v551
  %v556 = vsel %vm464, %v548, %v552
  %v557 = vadd.f32 %v553, 1.0
  %v558 = vadd.f32 %v554, 1.0
  %v559 = vadd.f32 %v555, 1.0
  %v560 = vadd.f32 %v556, 1.0
  %v561 = vmul.f32 %v453, %v557
  %v562 = vmul.f32 %v454, %v558
  %v563 = vmul.f32 %v455, %v559
  %v564 = vmul.f32 %v456, %v560
  %565 = vst.msk [vmem:[%s4] sm:$0xff] %vm379, %v561
  %566 = vst.msk [vmem:[%s4 + $0x8] sm:$0xff] %vm379, %v562
  %567 = vst.msk [vmem:[%s4 + $0x10] sm:$0xff] %vm379, %v563
  %568 = vst.msk [vmem:[%s4 + $0x18] sm:$0xff] %vm379, %v564
  // Predicated region
  $region18: #{offset_generation_forward.62} parent=0 // pred_check
    _
  $region19: #{offset_generation_forward.62} parent=0 // pred_check_branch
    %570 = sbr.rel (0) target = $region21
  $region20: #{offset_generation_forward.62} parent=0 // pred_region
    _
  $region21: #{offset_generation_forward.62} parent=0 // pred_fallthru
    _
  // Predicated region
  $region22: #{offset_generation_forward.62} parent=0 // pred_check
    _
  $region23: #{offset_generation_forward.62} parent=0 // pred_check_branch
    %572 = sbr.rel (0) target = $region25
  $region24: #{offset_generation_forward.62} parent=0 // pred_region
    _
  $region25: #{offset_generation_forward.62} parent=0 // pred_fallthru
    _

</llo_original>
